<compile_context>
chip_gen: v7x
topology: tpu7x:2x2x1
jax: 0.10.0
libtpu: 0.0.40
codegen_flags: <defaults>
</compile_context>

<pallas_src>
import jax
import jax.numpy as jnp
from jax.experimental import pallas as pl
from jax.experimental.pallas import tpu as pltpu

D_MODEL = 128                      # DINN default input_dim
N_HEADS = 4                        # nn.TransformerEncoderLayer(nhead=4)
HEAD_DIM = D_MODEL // N_HEADS
FFN_DIM = 2048                     # nn.TransformerEncoderLayer default dim_feedforward
N_LAYERS = 2
NUM_ASSETS = 30
FC_PAD = 128                       # lane-dense padding for the fc output
LN_EPS = 1e-5
RISK_AVERSION = 0.1
SEQ_LEN = 64


def _softmax_last(x):
    x = x - jnp.max(x, axis=-1, keepdims=True)
    e = jnp.exp(x)
    return e * pl.reciprocal(jnp.sum(e, axis=-1, keepdims=True), approx=True)


def _layer_norm(x, gamma, beta):
    mu = jnp.mean(x, axis=-1, keepdims=True)
    var = jnp.mean((x - mu) ** 2, axis=-1, keepdims=True)
    return (x - mu) * jax.lax.rsqrt(var + LN_EPS) * gamma + beta


def fused_dinn_kernel(x_ref, wqkv_ref, bqkv_ref, wo_ref, bo_ref,
                      g1_ref, beta1_ref, w1_ref, b1_ref, w2_ref, b2_ref,
                      g2_ref, beta2_ref, wfc_ref, bfc_ref,
                      cov_ref, mean_ref, x_carry):
    """One grid step == one post-norm encoder layer (eval mode; dropout == id).

    The activation carry lives in `x_carry` (VMEM scratch, persistent across
    grid steps).  The last step also runs the fc + covariance/mean epilogue.
    """
    layer = pl.program_id(0)

    @pl.when(layer == 0)
    def _():
        x_carry[...] = x_ref[...]

    x = x_carry[...]                              # f32 (64, 128)
    xb = x.astype(jnp.bfloat16)

    # --- multi-head self attention (scale pre-folded into Q weights) ---------
    qkv = jnp.dot(xb, wqkv_ref[...], preferred_element_type=jnp.float32) + bqkv_ref[...]
    q = qkv[:, 0 * D_MODEL:1 * D_MODEL]
    k = qkv[:, 1 * D_MODEL:2 * D_MODEL]
    v = qkv[:, 2 * D_MODEL:3 * D_MODEL]

    wo = wo_ref[...]                              # bf16 (128, 128)
    attn = jnp.zeros((SEQ_LEN, D_MODEL), jnp.float32)
    for h in range(N_HEADS):                      # static unrolled 4-head loop
        lo, hi = h * HEAD_DIM, (h + 1) * HEAD_DIM
        qh = q[:, lo:hi].astype(jnp.bfloat16)
        kh = k[:, lo:hi].astype(jnp.bfloat16)
        vh = v[:, lo:hi].astype(jnp.bfloat16)
        # scores = qh @ kh^T  (contract over head dim, no explicit transpose)
        s = jax.lax.dot_general(qh, kh, (((1,), (1,)), ((), ())),
                                preferred_element_type=jnp.float32)
        p = _softmax_last(s)
        ho = jnp.dot(p.astype(jnp.bfloat16), vh, preferred_element_type=jnp.float32)
        # fold the output projection into the head loop -> lane-dense (64, 128)
        attn = attn + jnp.dot(ho.astype(jnp.bfloat16), wo[lo:hi, :],
                              preferred_element_type=jnp.float32)
    attn = attn + bo_ref[...]

    # --- residual + LayerNorm 1 ----------------------------------------------
    h1 = _layer_norm(x + attn, g1_ref[...], beta1_ref[...])

    # --- feed-forward (Linear -> ReLU -> Linear) ------------------------------
    f = jnp.dot(h1.astype(jnp.bfloat16), w1_ref[...],
                preferred_element_type=jnp.float32) + b1_ref[...]
    f = jnp.maximum(f, 0.0)
    f = jnp.dot(f.astype(jnp.bfloat16), w2_ref[...],
                preferred_element_type=jnp.float32) + b2_ref[...]

    # --- residual + LayerNorm 2 ----------------------------------------------
    out = _layer_norm(h1 + f, g2_ref[...], beta2_ref[...])
    x_carry[...] = out

    # --- epilogue on the last layer: fc + sample mean / covariance -----------
    @pl.when(layer == N_LAYERS - 1)
    def _():
        preds = jnp.dot(out.astype(jnp.bfloat16), wfc_ref[...],
                        preferred_element_type=jnp.float32) + bfc_ref[...]
        n = preds.shape[0]
        mean = jnp.mean(preds, axis=0, keepdims=True)        # (1, 128)
        xc = preds - mean
        # cov = xc^T @ xc / (n - 1); padded zero columns give zero rows/cols.
        cov = jax.lax.dot_general(xc, xc, (((0,), (0,)), ((), ())),
                                  preferred_element_type=jnp.float32) / float(n - 1)
        cov_ref[...] = cov
        mean_ref[...] = mean


# ------------------------------- wrappers -------------------------------------

def dinn_forward(time_series_data, kp):
    # TODO(synk): LLMBasedEmbedding (pretrained BERT via AutoModel) is skipped —
    # it requires a checkpoint and its output never affects DINN.forward's
    # returned value.
    x = time_series_data.astype(jnp.float32)

    per_layer_w = lambda shape: pl.BlockSpec((None,) + shape, lambda l: (l, 0, 0))
    shared = lambda shape: pl.BlockSpec(shape, lambda l: (0, 0))

    cov_pad, mean_pad = pl.pallas_call(
        fused_dinn_kernel,
        out_shape=(jax.ShapeDtypeStruct((FC_PAD, FC_PAD), jnp.float32),
                   jax.ShapeDtypeStruct((1, FC_PAD), jnp.float32)),
        grid_spec=pltpu.PrefetchScalarGridSpec(
            num_scalar_prefetch=0,
            grid=(N_LAYERS,),
            in_specs=[
                shared((SEQ_LEN, D_MODEL)),                  # x
                per_layer_w((D_MODEL, 3 * D_MODEL)),         # wqkv (bf16)
                per_layer_w((1, 3 * D_MODEL)),               # bqkv
                per_layer_w((D_MODEL, D_MODEL)),             # wo   (bf16)
                per_layer_w((1, D_MODEL)),                   # bo
                per_layer_w((1, D_MODEL)),                   # g1
                per_layer_w((1, D_MODEL)),                   # beta1
                per_layer_w((D_MODEL, FFN_DIM)),             # w1   (bf16)
                per_layer_w((1, FFN_DIM)),                   # b1
                per_layer_w((FFN_DIM, D_MODEL)),             # w2   (bf16)
                per_layer_w((1, D_MODEL)),                   # b2
                per_layer_w((1, D_MODEL)),                   # g2
                per_layer_w((1, D_MODEL)),                   # beta2
                shared((D_MODEL, FC_PAD)),                   # wfc (bf16, padded)
                shared((1, FC_PAD)),                         # bfc (padded)
            ],
            out_specs=(shared((FC_PAD, FC_PAD)),
                       shared((1, FC_PAD))),
            scratch_shapes=[pltpu.VMEM((SEQ_LEN, D_MODEL), jnp.float32)],
        ),
        compiler_params=pltpu.CompilerParams(
            dimension_semantics=("arbitrary",)),
    )(x, kp["wqkv"], kp["bqkv"], kp["wo"], kp["bo"],
      kp["g1"], kp["beta1"], kp["w1"], kp["b1"], kp["w2"], kp["b2"],
      kp["g2"], kp["beta2"], kp["wfc"], kp["bfc"])

    # Slice the padded stats back to 30 assets BEFORE regularizing/inverting so
    # the zero-variance padding columns never reach the inverse.
    mean = mean_pad[0, :NUM_ASSETS]                               # (30,)
    cov = cov_pad[:NUM_ASSETS, :NUM_ASSETS] + 1e-6 * jnp.eye(NUM_ASSETS,
                                                             dtype=jnp.float32)
    # TODO(synk): torch.inverse has no clean Pallas equivalent; the (30, 30)
    # regularized covariance is inverted with jnp.linalg.inv in JAX glue.
    inv_cov = jnp.linalg.inv(cov)
    w = (inv_cov @ mean) / RISK_AVERSION                          # tiny matvec
    return jax.nn.softmax(w)                                      # (num_assets,)


# ------------------------------- parameters -----------------------------------

def init_params(key):
    """PyTorch-layout f32 params (weights stored pre-transposed: x @ W^T + b)."""
    ks = jax.random.split(key, 8)

    def w(k, shape, scale=0.02):
        return (scale * jax.random.normal(k, shape)).astype(jnp.float32)

    # nn.TransformerEncoder deep-copies the same encoder layer num_layers times,
    # so both layers share identical initial weights.
    layer = dict(
        wqkv=w(ks[0], (D_MODEL, 3 * D_MODEL)),            # in_proj_weight^T
        bqkv=jnp.zeros((1, 3 * D_MODEL), jnp.float32),
        wo=w(ks[1], (D_MODEL, D_MODEL)),                  # out_proj.weight^T
        bo=jnp.zeros((1, D_MODEL), jnp.float32),
        g1=jnp.ones((1, D_MODEL), jnp.float32),
        beta1=jnp.zeros((1, D_MODEL), jnp.float32),
        w1=w(ks[2], (D_MODEL, FFN_DIM)),                  # linear1.weight^T
        b1=jnp.zeros((1, FFN_DIM), jnp.float32),
        w2=w(ks[3], (FFN_DIM, D_MODEL)),                  # linear2.weight^T
        b2=jnp.zeros((1, D_MODEL), jnp.float32),
        g2=jnp.ones((1, D_MODEL), jnp.float32),
        beta2=jnp.zeros((1, D_MODEL), jnp.float32),
    )
    return dict(
        layers=[dict(layer) for _ in range(N_LAYERS)],
        wfc=w(ks[4], (D_MODEL, NUM_ASSETS)),              # fc.weight^T
        bfc=jnp.zeros((1, NUM_ASSETS), jnp.float32),
    )


def prepare_params(params):
    """Host-side (one-time) prep: fold Q scale, cast big weights to bf16,
    stack per-layer tensors on a leading axis, zero-pad fc to 128 lanes."""
    scale = 1.0 / (HEAD_DIM ** 0.5)
    qscale = jnp.concatenate([jnp.full((D_MODEL,), scale, jnp.float32),
                              jnp.ones((2 * D_MODEL,), jnp.float32)])

    def prep_layer(p):
        wqkv = p["wqkv"] * qscale[None, :]                 # fold 1/sqrt(head_dim)
        bqkv = p["bqkv"] * qscale[None, :]
        return dict(
            wqkv=wqkv.astype(jnp.bfloat16), bqkv=bqkv,
            wo=p["wo"].astype(jnp.bfloat16), bo=p["bo"],
            g1=p["g1"], beta1=p["beta1"],
            w1=p["w1"].astype(jnp.bfloat16), b1=p["b1"],
            w2=p["w2"].astype(jnp.bfloat16), b2=p["b2"],
            g2=p["g2"], beta2=p["beta2"],
        )

    layers = [prep_layer(p) for p in params["layers"]]
    kp = {k: jnp.stack([lyr[k] for lyr in layers], axis=0) for k in layers[0]}

    wfc_pad = jnp.zeros((D_MODEL, FC_PAD), jnp.float32).at[:, :NUM_ASSETS].set(
        params["wfc"])
    bfc_pad = jnp.zeros((1, FC_PAD), jnp.float32).at[:, :NUM_ASSETS].set(
        params["bfc"])
    kp["wfc"] = wfc_pad.astype(jnp.bfloat16)
    kp["bfc"] = bfc_pad
    return kp


if __name__ == "__main__":
    key = jax.random.PRNGKey(0)
    pkey, xkey = jax.random.split(key)
    params = init_params(pkey)
    kparams = prepare_params(params)                      # host-side, outside jit
    time_series_data = jax.random.normal(xkey, (SEQ_LEN, D_MODEL),
                                         dtype=jnp.float32)

    out = jax.jit(dinn_forward)(time_series_data, kparams)
    out = jax.block_until_ready(out)

    assert out.shape == (NUM_ASSETS,), out.shape
    assert bool(jnp.isfinite(out).all())
    assert abs(float(out.sum()) - 1.0) < 1e-3             # softmax sums to 1
    print("KERNEL_OK")
</pallas_src>

<mosaic_0001>
module attributes {stable_mosaic.version = 11 : i64} {
  func.func @fused_dinn_kernel(%arg0: i32, %arg1: memref<64x128xf32, #tpu.memory_space<vmem>>, %arg2: memref<1x128x384xbf16, #tpu.memory_space<vmem>>, %arg3: memref<1x1x384xf32, #tpu.memory_space<vmem>>, %arg4: memref<1x128x128xbf16, #tpu.memory_space<vmem>>, %arg5: memref<1x1x128xf32, #tpu.memory_space<vmem>>, %arg6: memref<1x1x128xf32, #tpu.memory_space<vmem>>, %arg7: memref<1x1x128xf32, #tpu.memory_space<vmem>>, %arg8: memref<1x128x2048xbf16, #tpu.memory_space<vmem>>, %arg9: memref<1x1x2048xf32, #tpu.memory_space<vmem>>, %arg10: memref<1x2048x128xbf16, #tpu.memory_space<vmem>>, %arg11: memref<1x1x128xf32, #tpu.memory_space<vmem>>, %arg12: memref<1x1x128xf32, #tpu.memory_space<vmem>>, %arg13: memref<1x1x128xf32, #tpu.memory_space<vmem>>, %arg14: memref<128x128xbf16, #tpu.memory_space<vmem>>, %arg15: memref<1x128xf32, #tpu.memory_space<vmem>>, %arg16: memref<128x128xf32, #tpu.memory_space<vmem>>, %arg17: memref<1x128xf32, #tpu.memory_space<vmem>>, %arg18: memref<64x128xf32, #tpu.memory_space<vmem>>) attributes {dimension_semantics = [#tpu.dimension_semantics<arbitrary>], iteration_bounds = array<i64: 2>, scalar_prefetch = 0 : i64, scratch_operands = 1 : i64, tpu.core_type = #tpu.core_type<tc>, window_params = [{pipeline_mode = #tpu.pipeline_mode<synchronous>, transform_indices = @transform_0, window_bounds = array<i64: 64, 128>}, {transform_indices = @transform_1, window_bounds = array<i64: 1, 128, 384>}, {transform_indices = @transform_2, window_bounds = array<i64: 1, 1, 384>}, {transform_indices = @transform_3, window_bounds = array<i64: 1, 128, 128>}, {transform_indices = @transform_4, window_bounds = array<i64: 1, 1, 128>}, {transform_indices = @transform_5, window_bounds = array<i64: 1, 1, 128>}, {transform_indices = @transform_6, window_bounds = array<i64: 1, 1, 128>}, {transform_indices = @transform_7, window_bounds = array<i64: 1, 128, 2048>}, {transform_indices = @transform_8, window_bounds = array<i64: 1, 1, 2048>}, {transform_indices = @transform_9, window_bounds = array<i64: 1, 2048, 128>}, {transform_indices = @transform_10, window_bounds = array<i64: 1, 1, 128>}, {transform_indices = @transform_11, window_bounds = array<i64: 1, 1, 128>}, {transform_indices = @transform_12, window_bounds = array<i64: 1, 1, 128>}, {pipeline_mode = #tpu.pipeline_mode<synchronous>, transform_indices = @transform_13, window_bounds = array<i64: 128, 128>}, {pipeline_mode = #tpu.pipeline_mode<synchronous>, transform_indices = @transform_14, window_bounds = array<i64: 1, 128>}, {pipeline_mode = #tpu.pipeline_mode<synchronous>, transform_indices = @transform_15, window_bounds = array<i64: 128, 128>}, {pipeline_mode = #tpu.pipeline_mode<synchronous>, transform_indices = @transform_16, window_bounds = array<i64: 1, 128>}]} {
    %c0_i32 = arith.constant 0 : i32
    %0 = arith.cmpi eq, %arg0, %c0_i32 : i32
    %1 = arith.extui %0 : i1 to i32
    %c0_i32_0 = arith.constant 0 : i32
    %2 = arith.cmpi ne, %1, %c0_i32_0 : i32
    scf.if %2 {
      %c0_75 = arith.constant 0 : index
      %c0_76 = arith.constant 0 : index
      %190 = vector.load %arg1[%c0_75, %c0_76] : memref<64x128xf32, #tpu.memory_space<vmem>>, vector<64x128xf32>
      %c0_77 = arith.constant 0 : index
      %c0_78 = arith.constant 0 : index
      %191 = vector.load %arg18[%c0_77, %c0_78] : memref<64x128xf32, #tpu.memory_space<vmem>>, vector<64x128xf32>
      tpu.vector_store %arg18[%c0_77, %c0_78], %190 {strides = array<i32>} : memref<64x128xf32, #tpu.memory_space<vmem>>, vector<64x128xf32>,
    } else {
    }
    %c0 = arith.constant 0 : index
    %c0_1 = arith.constant 0 : index
    %3 = vector.load %arg18[%c0, %c0_1] : memref<64x128xf32, #tpu.memory_space<vmem>>, vector<64x128xf32>
    %4 = arith.truncf %3 : vector<64x128xf32> to vector<64x128xbf16>
    %c0_2 = arith.constant 0 : index
    %c0_3 = arith.constant 0 : index
    %c0_4 = arith.constant 0 : index
    %5 = vector.load %arg2[%c0_2, %c0_3, %c0_4] : memref<1x128x384xbf16, #tpu.memory_space<vmem>>, vector<1x128x384xbf16>
    %6 = vector.shape_cast %5 : vector<1x128x384xbf16> to vector<128x384xbf16>
    %cst = arith.constant dense<0.000000e+00> : vector<64x384xf32>
    %7 = tpu.matmul %4, %6, %cst {dimension_numbers = #tpu.dot_dimension_numbers<[1], [0], [0], [1], [0, 0, 1, 1], [], []>} : vector<64x128xbf16>, vector<128x384xbf16>, vector<64x384xf32> -> vector<64x384xf32>
    %c0_5 = arith.constant 0 : index
    %c0_6 = arith.constant 0 : index
    %c0_7 = arith.constant 0 : index
    %8 = vector.load %arg3[%c0_5, %c0_6, %c0_7] : memref<1x1x384xf32, #tpu.memory_space<vmem>>, vector<1x1x384xf32>
    %9 = vector.shape_cast %8 : vector<1x1x384xf32> to vector<1x384xf32>
    %10 = vector.broadcast %9 : vector<1x384xf32> to vector<64x384xf32>
    %11 = arith.addf %7, %10 : vector<64x384xf32>
    %12 = vector.extract_strided_slice %11 {offsets = [0, 0], sizes = [64, 128], strides = [1, 1]} : vector<64x384xf32> to vector<64x128xf32>
    %13 = vector.extract_strided_slice %11 {offsets = [0, 128], sizes = [64, 128], strides = [1, 1]} : vector<64x384xf32> to vector<64x128xf32>
    %14 = vector.extract_strided_slice %11 {offsets = [0, 256], sizes = [64, 128], strides = [1, 1]} : vector<64x384xf32> to vector<64x128xf32>
    %c0_8 = arith.constant 0 : index
    %c0_9 = arith.constant 0 : index
    %c0_10 = arith.constant 0 : index
    %15 = vector.load %arg4[%c0_8, %c0_9, %c0_10] : memref<1x128x128xbf16, #tpu.memory_space<vmem>>, vector<1x128x128xbf16>
    %16 = vector.shape_cast %15 : vector<1x128x128xbf16> to vector<128x128xbf16>
    %cst_11 = arith.constant 0.000000e+00 : f32
    %17 = vector.broadcast %cst_11 : f32 to vector<64x128xf32>
    %18 = vector.extract_strided_slice %12 {offsets = [0, 0], sizes = [64, 32], strides = [1, 1]} : vector<64x128xf32> to vector<64x32xf32>
    %19 = arith.truncf %18 : vector<64x32xf32> to vector<64x32xbf16>
    %20 = vector.extract_strided_slice %13 {offsets = [0, 0], sizes = [64, 32], strides = [1, 1]} : vector<64x128xf32> to vector<64x32xf32>
    %21 = arith.truncf %20 : vector<64x32xf32> to vector<64x32xbf16>
    %22 = vector.extract_strided_slice %14 {offsets = [0, 0], sizes = [64, 32], strides = [1, 1]} : vector<64x128xf32> to vector<64x32xf32>
    %23 = arith.truncf %22 : vector<64x32xf32> to vector<64x32xbf16>
    %cst_12 = arith.constant dense<0.000000e+00> : vector<64x64xf32>
    %24 = tpu.matmul %19, %21, %cst_12 {dimension_numbers = #tpu.dot_dimension_numbers<[1], [1], [0], [0], [0, 0, 1, 0], [], []>} : vector<64x32xbf16>, vector<64x32xbf16>, vector<64x64xf32> -> vector<64x64xf32>
    %cst_13 = arith.constant dense<0xFF800000> : vector<64xf32>
    %25 = vector.multi_reduction <maximumf>, %24, %cst_13 [1] : vector<64x64xf32> to vector<64xf32>
    %26 = vector.shape_cast %25 : vector<64xf32> to vector<64x1xf32>
    %27 = vector.broadcast %26 : vector<64x1xf32> to vector<64x64xf32>
    %28 = arith.subf %24, %27 : vector<64x64xf32>
    %29 = math.exp %28 : vector<64x64xf32>
    %cst_14 = arith.constant dense<0.000000e+00> : vector<64xf32>
    %30 = vector.multi_reduction <add>, %29, %cst_14 [1] : vector<64x64xf32> to vector<64xf32>
    %31 = vector.shape_cast %30 : vector<64xf32> to vector<64x1xf32>
    %32 = tpu.reciprocal %31 {approx = true} : vector<64x1xf32> -> vector<64x1xf32>
    %33 = vector.broadcast %32 : vector<64x1xf32> to vector<64x64xf32>
    %34 = arith.mulf %29, %33 : vector<64x64xf32>
    %35 = arith.truncf %34 : vector<64x64xf32> to vector<64x64xbf16>
    %cst_15 = arith.constant dense<0.000000e+00> : vector<64x32xf32>
    %36 = tpu.matmul %35, %23, %cst_15 {dimension_numbers = #tpu.dot_dimension_numbers<[1], [0], [0], [1], [0, 0, 1, 1], [], []>} : vector<64x64xbf16>, vector<64x32xbf16>, vector<64x32xf32> -> vector<64x32xf32>
    %37 = arith.truncf %36 : vector<64x32xf32> to vector<64x32xbf16>
    %38 = vector.extract_strided_slice %16 {offsets = [0, 0], sizes = [32, 128], strides = [1, 1]} : vector<128x128xbf16> to vector<32x128xbf16>
    %cst_16 = arith.constant dense<0.000000e+00> : vector<64x128xf32>
    %39 = tpu.matmul %37, %38, %cst_16 {dimension_numbers = #tpu.dot_dimension_numbers<[1], [0], [0], [1], [0, 0, 1, 1], [], []>} : vector<64x32xbf16>, vector<32x128xbf16>, vector<64x128xf32> -> vector<64x128xf32>
    %40 = arith.addf %17, %39 : vector<64x128xf32>
    %41 = vector.extract_strided_slice %12 {offsets = [0, 32], sizes = [64, 32], strides = [1, 1]} : vector<64x128xf32> to vector<64x32xf32>
    %42 = arith.truncf %41 : vector<64x32xf32> to vector<64x32xbf16>
    %43 = vector.extract_strided_slice %13 {offsets = [0, 32], sizes = [64, 32], strides = [1, 1]} : vector<64x128xf32> to vector<64x32xf32>
    %44 = arith.truncf %43 : vector<64x32xf32> to vector<64x32xbf16>
    %45 = vector.extract_strided_slice %14 {offsets = [0, 32], sizes = [64, 32], strides = [1, 1]} : vector<64x128xf32> to vector<64x32xf32>
    %46 = arith.truncf %45 : vector<64x32xf32> to vector<64x32xbf16>
    %cst_17 = arith.constant dense<0.000000e+00> : vector<64x64xf32>
    %47 = tpu.matmul %42, %44, %cst_17 {dimension_numbers = #tpu.dot_dimension_numbers<[1], [1], [0], [0], [0, 0, 1, 0], [], []>} : vector<64x32xbf16>, vector<64x32xbf16>, vector<64x64xf32> -> vector<64x64xf32>
    %cst_18 = arith.constant dense<0xFF800000> : vector<64xf32>
    %48 = vector.multi_reduction <maximumf>, %47, %cst_18 [1] : vector<64x64xf32> to vector<64xf32>
    %49 = vector.shape_cast %48 : vector<64xf32> to vector<64x1xf32>
    %50 = vector.broadcast %49 : vector<64x1xf32> to vector<64x64xf32>
    %51 = arith.subf %47, %50 : vector<64x64xf32>
    %52 = math.exp %51 : vector<64x64xf32>
    %cst_19 = arith.constant dense<0.000000e+00> : vector<64xf32>
    %53 = vector.multi_reduction <add>, %52, %cst_19 [1] : vector<64x64xf32> to vector<64xf32>
    %54 = vector.shape_cast %53 : vector<64xf32> to vector<64x1xf32>
    %55 = tpu.reciprocal %54 {approx = true} : vector<64x1xf32> -> vector<64x1xf32>
    %56 = vector.broadcast %55 : vector<64x1xf32> to vector<64x64xf32>
    %57 = arith.mulf %52, %56 : vector<64x64xf32>
    %58 = arith.truncf %57 : vector<64x64xf32> to vector<64x64xbf16>
    %cst_20 = arith.constant dense<0.000000e+00> : vector<64x32xf32>
    %59 = tpu.matmul %58, %46, %cst_20 {dimension_numbers = #tpu.dot_dimension_numbers<[1], [0], [0], [1], [0, 0, 1, 1], [], []>} : vector<64x64xbf16>, vector<64x32xbf16>, vector<64x32xf32> -> vector<64x32xf32>
    %60 = arith.truncf %59 : vector<64x32xf32> to vector<64x32xbf16>
    %61 = vector.extract_strided_slice %16 {offsets = [32, 0], sizes = [32, 128], strides = [1, 1]} : vector<128x128xbf16> to vector<32x128xbf16>
    %cst_21 = arith.constant dense<0.000000e+00> : vector<64x128xf32>
    %62 = tpu.matmul %60, %61, %cst_21 {dimension_numbers = #tpu.dot_dimension_numbers<[1], [0], [0], [1], [0, 0, 1, 1], [], []>} : vector<64x32xbf16>, vector<32x128xbf16>, vector<64x128xf32> -> vector<64x128xf32>
    %63 = arith.addf %40, %62 : vector<64x128xf32>
    %64 = vector.extract_strided_slice %12 {offsets = [0, 64], sizes = [64, 32], strides = [1, 1]} : vector<64x128xf32> to vector<64x32xf32>
    %65 = arith.truncf %64 : vector<64x32xf32> to vector<64x32xbf16>
    %66 = vector.extract_strided_slice %13 {offsets = [0, 64], sizes = [64, 32], strides = [1, 1]} : vector<64x128xf32> to vector<64x32xf32>
    %67 = arith.truncf %66 : vector<64x32xf32> to vector<64x32xbf16>
    %68 = vector.extract_strided_slice %14 {offsets = [0, 64], sizes = [64, 32], strides = [1, 1]} : vector<64x128xf32> to vector<64x32xf32>
    %69 = arith.truncf %68 : vector<64x32xf32> to vector<64x32xbf16>
    %cst_22 = arith.constant dense<0.000000e+00> : vector<64x64xf32>
    %70 = tpu.matmul %65, %67, %cst_22 {dimension_numbers = #tpu.dot_dimension_numbers<[1], [1], [0], [0], [0, 0, 1, 0], [], []>} : vector<64x32xbf16>, vector<64x32xbf16>, vector<64x64xf32> -> vector<64x64xf32>
    %cst_23 = arith.constant dense<0xFF800000> : vector<64xf32>
    %71 = vector.multi_reduction <maximumf>, %70, %cst_23 [1] : vector<64x64xf32> to vector<64xf32>
    %72 = vector.shape_cast %71 : vector<64xf32> to vector<64x1xf32>
    %73 = vector.broadcast %72 : vector<64x1xf32> to vector<64x64xf32>
    %74 = arith.subf %70, %73 : vector<64x64xf32>
    %75 = math.exp %74 : vector<64x64xf32>
    %cst_24 = arith.constant dense<0.000000e+00> : vector<64xf32>
    %76 = vector.multi_reduction <add>, %75, %cst_24 [1] : vector<64x64xf32> to vector<64xf32>
    %77 = vector.shape_cast %76 : vector<64xf32> to vector<64x1xf32>
    %78 = tpu.reciprocal %77 {approx = true} : vector<64x1xf32> -> vector<64x1xf32>
    %79 = vector.broadcast %78 : vector<64x1xf32> to vector<64x64xf32>
    %80 = arith.mulf %75, %79 : vector<64x64xf32>
    %81 = arith.truncf %80 : vector<64x64xf32> to vector<64x64xbf16>
    %cst_25 = arith.constant dense<0.000000e+00> : vector<64x32xf32>
    %82 = tpu.matmul %81, %69, %cst_25 {dimension_numbers = #tpu.dot_dimension_numbers<[1], [0], [0], [1], [0, 0, 1, 1], [], []>} : vector<64x64xbf16>, vector<64x32xbf16>, vector<64x32xf32> -> vector<64x32xf32>
    %83 = arith.truncf %82 : vector<64x32xf32> to vector<64x32xbf16>
    %84 = vector.extract_strided_slice %16 {offsets = [64, 0], sizes = [32, 128], strides = [1, 1]} : vector<128x128xbf16> to vector<32x128xbf16>
    %cst_26 = arith.constant dense<0.000000e+00> : vector<64x128xf32>
    %85 = tpu.matmul %83, %84, %cst_26 {dimension_numbers = #tpu.dot_dimension_numbers<[1], [0], [0], [1], [0, 0, 1, 1], [], []>} : vector<64x32xbf16>, vector<32x128xbf16>, vector<64x128xf32> -> vector<64x128xf32>
    %86 = arith.addf %63, %85 : vector<64x128xf32>
    %87 = vector.extract_strided_slice %12 {offsets = [0, 96], sizes = [64, 32], strides = [1, 1]} : vector<64x128xf32> to vector<64x32xf32>
    %88 = arith.truncf %87 : vector<64x32xf32> to vector<64x32xbf16>
    %89 = vector.extract_strided_slice %13 {offsets = [0, 96], sizes = [64, 32], strides = [1, 1]} : vector<64x128xf32> to vector<64x32xf32>
    %90 = arith.truncf %89 : vector<64x32xf32> to vector<64x32xbf16>
    %91 = vector.extract_strided_slice %14 {offsets = [0, 96], sizes = [64, 32], strides = [1, 1]} : vector<64x128xf32> to vector<64x32xf32>
    %92 = arith.truncf %91 : vector<64x32xf32> to vector<64x32xbf16>
    %cst_27 = arith.constant dense<0.000000e+00> : vector<64x64xf32>
    %93 = tpu.matmul %88, %90, %cst_27 {dimension_numbers = #tpu.dot_dimension_numbers<[1], [1], [0], [0], [0, 0, 1, 0], [], []>} : vector<64x32xbf16>, vector<64x32xbf16>, vector<64x64xf32> -> vector<64x64xf32>
    %cst_28 = arith.constant dense<0xFF800000> : vector<64xf32>
    %94 = vector.multi_reduction <maximumf>, %93, %cst_28 [1] : vector<64x64xf32> to vector<64xf32>
    %95 = vector.shape_cast %94 : vector<64xf32> to vector<64x1xf32>
    %96 = vector.broadcast %95 : vector<64x1xf32> to vector<64x64xf32>
    %97 = arith.subf %93, %96 : vector<64x64xf32>
    %98 = math.exp %97 : vector<64x64xf32>
    %cst_29 = arith.constant dense<0.000000e+00> : vector<64xf32>
    %99 = vector.multi_reduction <add>, %98, %cst_29 [1] : vector<64x64xf32> to vector<64xf32>
    %100 = vector.shape_cast %99 : vector<64xf32> to vector<64x1xf32>
    %101 = tpu.reciprocal %100 {approx = true} : vector<64x1xf32> -> vector<64x1xf32>
    %102 = vector.broadcast %101 : vector<64x1xf32> to vector<64x64xf32>
    %103 = arith.mulf %98, %102 : vector<64x64xf32>
    %104 = arith.truncf %103 : vector<64x64xf32> to vector<64x64xbf16>
    %cst_30 = arith.constant dense<0.000000e+00> : vector<64x32xf32>
    %105 = tpu.matmul %104, %92, %cst_30 {dimension_numbers = #tpu.dot_dimension_numbers<[1], [0], [0], [1], [0, 0, 1, 1], [], []>} : vector<64x64xbf16>, vector<64x32xbf16>, vector<64x32xf32> -> vector<64x32xf32>
    %106 = arith.truncf %105 : vector<64x32xf32> to vector<64x32xbf16>
    %107 = vector.extract_strided_slice %16 {offsets = [96, 0], sizes = [32, 128], strides = [1, 1]} : vector<128x128xbf16> to vector<32x128xbf16>
    %cst_31 = arith.constant dense<0.000000e+00> : vector<64x128xf32>
    %108 = tpu.matmul %106, %107, %cst_31 {dimension_numbers = #tpu.dot_dimension_numbers<[1], [0], [0], [1], [0, 0, 1, 1], [], []>} : vector<64x32xbf16>, vector<32x128xbf16>, vector<64x128xf32> -> vector<64x128xf32>
    %109 = arith.addf %86, %108 : vector<64x128xf32>
    %c0_32 = arith.constant 0 : index
    %c0_33 = arith.constant 0 : index
    %c0_34 = arith.constant 0 : index
    %110 = vector.load %arg5[%c0_32, %c0_33, %c0_34] : memref<1x1x128xf32, #tpu.memory_space<vmem>>, vector<1x1x128xf32>
    %111 = vector.shape_cast %110 : vector<1x1x128xf32> to vector<1x128xf32>
    %112 = vector.broadcast %111 : vector<1x128xf32> to vector<64x128xf32>
    %113 = arith.addf %109, %112 : vector<64x128xf32>
    %114 = arith.addf %3, %113 : vector<64x128xf32>
    %c0_35 = arith.constant 0 : index
    %c0_36 = arith.constant 0 : index
    %c0_37 = arith.constant 0 : index
    %115 = vector.load %arg6[%c0_35, %c0_36, %c0_37] : memref<1x1x128xf32, #tpu.memory_space<vmem>>, vector<1x1x128xf32>
    %116 = vector.shape_cast %115 : vector<1x1x128xf32> to vector<1x128xf32>
    %c0_38 = arith.constant 0 : index
    %c0_39 = arith.constant 0 : index
    %c0_40 = arith.constant 0 : index
    %117 = vector.load %arg7[%c0_38, %c0_39, %c0_40] : memref<1x1x128xf32, #tpu.memory_space<vmem>>, vector<1x1x128xf32>
    %118 = vector.shape_cast %117 : vector<1x1x128xf32> to vector<1x128xf32>
    %cst_41 = arith.constant dense<0.000000e+00> : vector<64xf32>
    %119 = vector.multi_reduction <add>, %114, %cst_41 [1] : vector<64x128xf32> to vector<64xf32>
    %120 = vector.shape_cast %119 : vector<64xf32> to vector<64x1xf32>
    %cst_42 = arith.constant 1.280000e+02 : f32
    %121 = vector.broadcast %cst_42 : f32 to vector<64x1xf32>
    %122 = arith.divf %120, %121 : vector<64x1xf32>
    %123 = vector.broadcast %122 : vector<64x1xf32> to vector<64x128xf32>
    %124 = arith.subf %114, %123 : vector<64x128xf32>
    %125 = arith.mulf %124, %124 : vector<64x128xf32>
    %cst_43 = arith.constant dense<0.000000e+00> : vector<64xf32>
    %126 = vector.multi_reduction <add>, %125, %cst_43 [1] : vector<64x128xf32> to vector<64xf32>
    %127 = vector.shape_cast %126 : vector<64xf32> to vector<64x1xf32>
    %cst_44 = arith.constant 1.280000e+02 : f32
    %128 = vector.broadcast %cst_44 : f32 to vector<64x1xf32>
    %129 = arith.divf %127, %128 : vector<64x1xf32>
    %130 = vector.broadcast %122 : vector<64x1xf32> to vector<64x128xf32>
    %131 = arith.subf %114, %130 : vector<64x128xf32>
    %cst_45 = arith.constant 9.99999974E-6 : f32
    %132 = vector.broadcast %cst_45 : f32 to vector<64x1xf32>
    %133 = arith.addf %129, %132 : vector<64x1xf32>
    %134 = math.rsqrt %133 : vector<64x1xf32>
    %135 = vector.broadcast %134 : vector<64x1xf32> to vector<64x128xf32>
    %136 = arith.mulf %131, %135 : vector<64x128xf32>
    %137 = vector.broadcast %116 : vector<1x128xf32> to vector<64x128xf32>
    %138 = arith.mulf %136, %137 : vector<64x128xf32>
    %139 = vector.broadcast %118 : vector<1x128xf32> to vector<64x128xf32>
    %140 = arith.addf %138, %139 : vector<64x128xf32>
    %141 = arith.truncf %140 : vector<64x128xf32> to vector<64x128xbf16>
    %c0_46 = arith.constant 0 : index
    %c0_47 = arith.constant 0 : index
    %c0_48 = arith.constant 0 : index
    %142 = vector.load %arg8[%c0_46, %c0_47, %c0_48] : memref<1x128x2048xbf16, #tpu.memory_space<vmem>>, vector<1x128x2048xbf16>
    %143 = vector.shape_cast %142 : vector<1x128x2048xbf16> to vector<128x2048xbf16>
    %cst_49 = arith.constant dense<0.000000e+00> : vector<64x2048xf32>
    %144 = tpu.matmul %141, %143, %cst_49 {dimension_numbers = #tpu.dot_dimension_numbers<[1], [0], [0], [1], [0, 0, 1, 1], [], []>} : vector<64x128xbf16>, vector<128x2048xbf16>, vector<64x2048xf32> -> vector<64x2048xf32>
    %c0_50 = arith.constant 0 : index
    %c0_51 = arith.constant 0 : index
    %c0_52 = arith.constant 0 : index
    %145 = vector.load %arg9[%c0_50, %c0_51, %c0_52] : memref<1x1x2048xf32, #tpu.memory_space<vmem>>, vector<1x1x2048xf32>
    %146 = vector.shape_cast %145 : vector<1x1x2048xf32> to vector<1x2048xf32>
    %147 = vector.broadcast %146 : vector<1x2048xf32> to vector<64x2048xf32>
    %148 = arith.addf %144, %147 : vector<64x2048xf32>
    %cst_53 = arith.constant 0.000000e+00 : f32
    %149 = vector.broadcast %cst_53 : f32 to vector<64x2048xf32>
    %150 = arith.maximumf %148, %149 : vector<64x2048xf32>
    %151 = arith.truncf %150 : vector<64x2048xf32> to vector<64x2048xbf16>
    %c0_54 = arith.constant 0 : index
    %c0_55 = arith.constant 0 : index
    %c0_56 = arith.constant 0 : index
    %152 = vector.load %arg10[%c0_54, %c0_55, %c0_56] : memref<1x2048x128xbf16, #tpu.memory_space<vmem>>, vector<1x2048x128xbf16>
    %153 = vector.shape_cast %152 : vector<1x2048x128xbf16> to vector<2048x128xbf16>
    %cst_57 = arith.constant dense<0.000000e+00> : vector<64x128xf32>
    %154 = tpu.matmul %151, %153, %cst_57 {dimension_numbers = #tpu.dot_dimension_numbers<[1], [0], [0], [1], [0, 0, 1, 1], [], []>} : vector<64x2048xbf16>, vector<2048x128xbf16>, vector<64x128xf32> -> vector<64x128xf32>
    %c0_58 = arith.constant 0 : index
    %c0_59 = arith.constant 0 : index
    %c0_60 = arith.constant 0 : index
    %155 = vector.load %arg11[%c0_58, %c0_59, %c0_60] : memref<1x1x128xf32, #tpu.memory_space<vmem>>, vector<1x1x128xf32>
    %156 = vector.shape_cast %155 : vector<1x1x128xf32> to vector<1x128xf32>
    %157 = vector.broadcast %156 : vector<1x128xf32> to vector<64x128xf32>
    %158 = arith.addf %154, %157 : vector<64x128xf32>
    %159 = arith.addf %140, %158 : vector<64x128xf32>
    %c0_61 = arith.constant 0 : index
    %c0_62 = arith.constant 0 : index
    %c0_63 = arith.constant 0 : index
    %160 = vector.load %arg12[%c0_61, %c0_62, %c0_63] : memref<1x1x128xf32, #tpu.memory_space<vmem>>, vector<1x1x128xf32>
    %161 = vector.shape_cast %160 : vector<1x1x128xf32> to vector<1x128xf32>
    %c0_64 = arith.constant 0 : index
    %c0_65 = arith.constant 0 : index
    %c0_66 = arith.constant 0 : index
    %162 = vector.load %arg13[%c0_64, %c0_65, %c0_66] : memref<1x1x128xf32, #tpu.memory_space<vmem>>, vector<1x1x128xf32>
    %163 = vector.shape_cast %162 : vector<1x1x128xf32> to vector<1x128xf32>
    %cst_67 = arith.constant dense<0.000000e+00> : vector<64xf32>
    %164 = vector.multi_reduction <add>, %159, %cst_67 [1] : vector<64x128xf32> to vector<64xf32>
    %165 = vector.shape_cast %164 : vector<64xf32> to vector<64x1xf32>
    %cst_68 = arith.constant 1.280000e+02 : f32
    %166 = vector.broadcast %cst_68 : f32 to vector<64x1xf32>
    %167 = arith.divf %165, %166 : vector<64x1xf32>
    %168 = vector.broadcast %167 : vector<64x1xf32> to vector<64x128xf32>
    %169 = arith.subf %159, %168 : vector<64x128xf32>
    %170 = arith.mulf %169, %169 : vector<64x128xf32>
    %cst_69 = arith.constant dense<0.000000e+00> : vector<64xf32>
    %171 = vector.multi_reduction <add>, %170, %cst_69 [1] : vector<64x128xf32> to vector<64xf32>
    %172 = vector.shape_cast %171 : vector<64xf32> to vector<64x1xf32>
    %cst_70 = arith.constant 1.280000e+02 : f32
    %173 = vector.broadcast %cst_70 : f32 to vector<64x1xf32>
    %174 = arith.divf %172, %173 : vector<64x1xf32>
    %175 = vector.broadcast %167 : vector<64x1xf32> to vector<64x128xf32>
    %176 = arith.subf %159, %175 : vector<64x128xf32>
    %cst_71 = arith.constant 9.99999974E-6 : f32
    %177 = vector.broadcast %cst_71 : f32 to vector<64x1xf32>
    %178 = arith.addf %174, %177 : vector<64x1xf32>
    %179 = math.rsqrt %178 : vector<64x1xf32>
    %180 = vector.broadcast %179 : vector<64x1xf32> to vector<64x128xf32>
    %181 = arith.mulf %176, %180 : vector<64x128xf32>
    %182 = vector.broadcast %161 : vector<1x128xf32> to vector<64x128xf32>
    %183 = arith.mulf %181, %182 : vector<64x128xf32>
    %184 = vector.broadcast %163 : vector<1x128xf32> to vector<64x128xf32>
    %185 = arith.addf %183, %184 : vector<64x128xf32>
    %c0_72 = arith.constant 0 : index
    %c0_73 = arith.constant 0 : index
    %186 = vector.load %arg18[%c0_72, %c0_73] : memref<64x128xf32, #tpu.memory_space<vmem>>, vector<64x128xf32>
    tpu.vector_store %arg18[%c0_72, %c0_73], %185 {strides = array<i32>} : memref<64x128xf32, #tpu.memory_space<vmem>>, vector<64x128xf32>,
    %c1_i32 = arith.constant 1 : i32
    %187 = arith.cmpi eq, %arg0, %c1_i32 : i32
    %188 = arith.extui %187 : i1 to i32
    %c0_i32_74 = arith.constant 0 : i32
    %189 = arith.cmpi ne, %188, %c0_i32_74 : i32
    scf.if %189 {
      %190 = arith.truncf %185 : vector<64x128xf32> to vector<64x128xbf16>
      %c0_75 = arith.constant 0 : index
      %c0_76 = arith.constant 0 : index
      %191 = vector.load %arg14[%c0_75, %c0_76] : memref<128x128xbf16, #tpu.memory_space<vmem>>, vector<128x128xbf16>
      %cst_77 = arith.constant dense<0.000000e+00> : vector<64x128xf32>
      %192 = tpu.matmul %190, %191, %cst_77 {dimension_numbers = #tpu.dot_dimension_numbers<[1], [0], [0], [1], [0, 0, 1, 1], [], []>} : vector<64x128xbf16>, vector<128x128xbf16>, vector<64x128xf32> -> vector<64x128xf32>
      %c0_78 = arith.constant 0 : index
      %c0_79 = arith.constant 0 : index
      %193 = vector.load %arg15[%c0_78, %c0_79] : memref<1x128xf32, #tpu.memory_space<vmem>>, vector<1x128xf32>
      %194 = vector.broadcast %193 : vector<1x128xf32> to vector<64x128xf32>
      %195 = arith.addf %192, %194 : vector<64x128xf32>
      %cst_80 = arith.constant dense<0.000000e+00> : vector<128xf32>
      %196 = vector.multi_reduction <add>, %195, %cst_80 [0] : vector<64x128xf32> to vector<128xf32>
      %197 = vector.shape_cast %196 : vector<128xf32> to vector<1x128xf32>
      %cst_81 = arith.constant 6.400000e+01 : f32
      %198 = vector.broadcast %cst_81 : f32 to vector<1x128xf32>
      %199 = arith.divf %197, %198 : vector<1x128xf32>
      %200 = vector.broadcast %199 : vector<1x128xf32> to vector<64x128xf32>
      %201 = arith.subf %195, %200 : vector<64x128xf32>
      %cst_82 = arith.constant dense<0.000000e+00> : vector<128x128xf32>
      %202 = tpu.matmul %201, %201, %cst_82 {dimension_numbers = #tpu.dot_dimension_numbers<[0], [0], [1], [1], [0, 1, 1, 1], [], []>} : vector<64x128xf32>, vector<64x128xf32>, vector<128x128xf32> -> vector<128x128xf32>
      %cst_83 = arith.constant 6.300000e+01 : f32
      %203 = vector.broadcast %cst_83 : f32 to vector<128x128xf32>
      %204 = arith.divf %202, %203 : vector<128x128xf32>
      %c0_84 = arith.constant 0 : index
      %c0_85 = arith.constant 0 : index
      %205 = vector.load %arg16[%c0_84, %c0_85] : memref<128x128xf32, #tpu.memory_space<vmem>>, vector<128x128xf32>
      tpu.vector_store %arg16[%c0_84, %c0_85], %204 {strides = array<i32>} : memref<128x128xf32, #tpu.memory_space<vmem>>, vector<128x128xf32>,
      %c0_86 = arith.constant 0 : index
      %c0_87 = arith.constant 0 : index
      %206 = vector.load %arg17[%c0_86, %c0_87] : memref<1x128xf32, #tpu.memory_space<vmem>>, vector<1x128xf32>
      tpu.vector_store %arg17[%c0_86, %c0_87], %199 {strides = array<i32>} : memref<1x128xf32, #tpu.memory_space<vmem>>, vector<1x128xf32>,
    } else {
    }
    return
  }
  func.func @transform_0(%arg0: i32) -> (i32, i32) {
    %c0_i32 = arith.constant 0 : i32
    %c0_i32_0 = arith.constant 0 : i32
    %c0_i32_1 = arith.constant 0 : i32
    return %c0_i32, %c0_i32_0 : i32, i32
  }
  func.func @transform_1(%arg0: i32) -> (i32, i32, i32) {
    %c0_i32 = arith.constant 0 : i32
    %c0_i32_0 = arith.constant 0 : i32
    %c0_i32_1 = arith.constant 0 : i32
    return %arg0, %c0_i32, %c0_i32_0 : i32, i32, i32
  }
  func.func @transform_2(%arg0: i32) -> (i32, i32, i32) {
    %c0_i32 = arith.constant 0 : i32
    %c0_i32_0 = arith.constant 0 : i32
    %c0_i32_1 = arith.constant 0 : i32
    return %arg0, %c0_i32, %c0_i32_0 : i32, i32, i32
  }
  func.func @transform_3(%arg0: i32) -> (i32, i32, i32) {
    %c0_i32 = arith.constant 0 : i32
    %c0_i32_0 = arith.constant 0 : i32
    %c0_i32_1 = arith.constant 0 : i32
    return %arg0, %c0_i32, %c0_i32_0 : i32, i32, i32
  }
  func.func @transform_4(%arg0: i32) -> (i32, i32, i32) {
    %c0_i32 = arith.constant 0 : i32
    %c0_i32_0 = arith.constant 0 : i32
    %c0_i32_1 = arith.constant 0 : i32
    return %arg0, %c0_i32, %c0_i32_0 : i32, i32, i32
  }
  func.func @transform_5(%arg0: i32) -> (i32, i32, i32) {
    %c0_i32 = arith.constant 0 : i32
    %c0_i32_0 = arith.constant 0 : i32
    %c0_i32_1 = arith.constant 0 : i32
    return %arg0, %c0_i32, %c0_i32_0 : i32, i32, i32
  }
  func.func @transform_6(%arg0: i32) -> (i32, i32, i32) {
    %c0_i32 = arith.constant 0 : i32
    %c0_i32_0 = arith.constant 0 : i32
    %c0_i32_1 = arith.constant 0 : i32
    return %arg0, %c0_i32, %c0_i32_0 : i32, i32, i32
  }
  func.func @transform_7(%arg0: i32) -> (i32, i32, i32) {
    %c0_i32 = arith.constant 0 : i32
    %c0_i32_0 = arith.constant 0 : i32
    %c0_i32_1 = arith.constant 0 : i32
    return %arg0, %c0_i32, %c0_i32_0 : i32, i32, i32
  }
  func.func @transform_8(%arg0: i32) -> (i32, i32, i32) {
    %c0_i32 = arith.constant 0 : i32
    %c0_i32_0 = arith.constant 0 : i32
    %c0_i32_1 = arith.constant 0 : i32
    return %arg0, %c0_i32, %c0_i32_0 : i32, i32, i32
  }
  func.func @transform_9(%arg0: i32) -> (i32, i32, i32) {
    %c0_i32 = arith.constant 0 : i32
    %c0_i32_0 = arith.constant 0 : i32
    %c0_i32_1 = arith.constant 0 : i32
    return %arg0, %c0_i32, %c0_i32_0 : i32, i32, i32
  }
  func.func @transform_10(%arg0: i32) -> (i32, i32, i32) {
    %c0_i32 = arith.constant 0 : i32
    %c0_i32_0 = arith.constant 0 : i32
    %c0_i32_1 = arith.constant 0 : i32
    return %arg0, %c0_i32, %c0_i32_0 : i32, i32, i32
  }
  func.func @transform_11(%arg0: i32) -> (i32, i32, i32) {
    %c0_i32 = arith.constant 0 : i32
    %c0_i32_0 = arith.constant 0 : i32
    %c0_i32_1 = arith.constant 0 : i32
    return %arg0, %c0_i32, %c0_i32_0 : i32, i32, i32
  }
  func.func @transform_12(%arg0: i32) -> (i32, i32, i32) {
    %c0_i32 = arith.constant 0 : i32
    %c0_i32_0 = arith.constant 0 : i32
    %c0_i32_1 = arith.constant 0 : i32
    return %arg0, %c0_i32, %c0_i32_0 : i32, i32, i32
  }
  func.func @transform_13(%arg0: i32) -> (i32, i32) {
    %c0_i32 = arith.constant 0 : i32
    %c0_i32_0 = arith.constant 0 : i32
    %c0_i32_1 = arith.constant 0 : i32
    return %c0_i32, %c0_i32_0 : i32, i32
  }
  func.func @transform_14(%arg0: i32) -> (i32, i32) {
    %c0_i32 = arith.constant 0 : i32
    %c0_i32_0 = arith.constant 0 : i32
    %c0_i32_1 = arith.constant 0 : i32
    return %c0_i32, %c0_i32_0 : i32, i32
  }
  func.func @transform_15(%arg0: i32) -> (i32, i32) {
    %c0_i32 = arith.constant 0 : i32
    %c0_i32_0 = arith.constant 0 : i32
    %c0_i32_1 = arith.constant 0 : i32
    return %c0_i32, %c0_i32_0 : i32, i32
  }
  func.func @transform_16(%arg0: i32) -> (i32, i32) {
    %c0_i32 = arith.constant 0 : i32
    %c0_i32_0 = arith.constant 0 : i32
    %c0_i32_1 = arith.constant 0 : i32
    return %c0_i32, %c0_i32_0 : i32, i32
  }
}

</mosaic_0001>

<llo_original>
// kernel: custom-call.11
$region0: #{custom-call.11}
  %s0 = inlined_call_operand.vmem [shape: f32[30,30], index: 0, kind: input, shape index: {}]
  %s1 = inlined_call_operand.vmem [shape: f32[30,30], index: 1, kind: output, shape index: {0}]
  %s2 = inlined_call_operand.hbm [shape: s32[30], index: 2, kind: output, shape index: {1}]
  %s3 = inlined_call_operand.vmem [shape: s32[30], index: 3, kind: output, shape index: {2}]
  %4 = xla_tuple %s1, %s2, %s3
  $region1: #{custom-call.11} parent=0
    #allocation0 [shape = 'u8[16384]{0}', space=vmem, size = 0x4000, scoped, tag = 'operand span for operand 0']
    #allocation1 [shape = 'u8[16384]{0}', space=vmem, size = 0x4000, scoped, tag = 'operand span for operand 1']
    #allocation2 [shape = 'u8[4096]{0}', space=vmem, size = 0x1000, scoped, tag = 'operand span for operand 2']
    #allocation3 [shape = 'u8[512]{0}', space=vmem, size = 0x400, scoped, tag = 'packed  for operand 2']
    #allocation4 [shape = 's32[1]{0}', space=sflag, size = 0x4, scoped, tag = 'scoped memory for custom-call.11']
    #allocation5 [shape = 'u8[4096]{0}', space=vmem, size = 0x1000, scoped, tag = 'operand span for operand 3']
    #allocation6 [shape = 'u8[512]{0}', space=vmem, size = 0x400, scoped, tag = 'packed  for operand 3']
    #allocation7 [shape = 's32[30,128]{1,0}', space=vmem, size = 0x4000, scoped, tag = 'scratch for permutations']
    %5 = vsyncpa [#allocation4], 0
    %p7 = scmp.gt.s32.totalorder 32, 0
    // Predicated region
    $region2: #{custom-call.11} parent=1 // pred_check
      %p8 = pneg %p7
    $region3: #{custom-call.11} parent=1 // pred_check_branch
      %10 = sbr.rel (%p8) target = $region5
    $region4: #{custom-call.11} parent=1 // pred_region
      %s11 = sshra.s32 32, 3
      %p12 = scmp.gt.s32.totalorder %s11, 0
      // Predicated region
      $region6: #{custom-call.11} parent=4 // pred_check
        %p13 = pneg %p12
      $region7: #{custom-call.11} parent=4 // pred_check_branch
        %15 = sbr.rel (%p13) target = $region9
      $region8: #{custom-call.11} parent=4 // pred_region
        %s16 = ssub.s32 %s11, 1
        %s17 = smul.u32 %s16, 128
        %s18 = sshra.s32 %s17, 4
        %s19 = scalar_lea.vmem %s0, %s18
        %v20 = vld [vmem:[%s0] sm:$0xff]
        // While loop
        $region10: #{custom-call.11} parent=8 // loop_pre_header
          _
        $region11: #{custom-call.11} parent=8 // loop_header
          %s21 = sphi %s0, %s43
          %s22 = sphi [#allocation0], %s44
          %v23 = vphi %v20, %v45
          %s24 = ssub.s32 %s19, 64
          %p25 = scmp.gt.s32.totalorder %s21, %s24
        $region12: #{custom-call.11} parent=8 // loop_header_branch
          %27 = sbr.rel (%p25) target = $region16
        $region13: #{custom-call.11} parent=8 // loop_body
          %28 = vst [vmem:[%s22] sm:$0xff] %v23
          %v29 = vld [vmem:[%s21 + $0x8] sm:$0xff]
          %30 = vst [vmem:[%s22 + $0x8] sm:$0xff] %v29
          %v31 = vld [vmem:[%s21 + $0x10] sm:$0xff]
          %32 = vst [vmem:[%s22 + $0x10] sm:$0xff] %v31
          %v33 = vld [vmem:[%s21 + $0x18] sm:$0xff]
          %34 = vst [vmem:[%s22 + $0x18] sm:$0xff] %v33
          %v35 = vld [vmem:[%s21 + $0x20] sm:$0xff]
          %36 = vst [vmem:[%s22 + $0x20] sm:$0xff] %v35
          %v37 = vld [vmem:[%s21 + $0x28] sm:$0xff]
          %38 = vst [vmem:[%s22 + $0x28] sm:$0xff] %v37
          %v39 = vld [vmem:[%s21 + $0x30] sm:$0xff]
          %40 = vst [vmem:[%s22 + $0x30] sm:$0xff] %v39
          %v41 = vld [vmem:[%s21 + $0x38] sm:$0xff]
          %42 = vst [vmem:[%s22 + $0x38] sm:$0xff] %v41
        $region14: #{custom-call.11} parent=8 // loop_footer
          %s43 = scalar_lea.vmem %s21, 64
          %s44 = scalar_lea.vmem %s22, 64
          %v45 = vld [vmem:[%s21 + $0x40] sm:$0xff]
        $region15: #{custom-call.11} parent=8 // loop_footer_branch
          %46 = sbr.rel target = $region11
        $region16: #{custom-call.11} parent=8 // loop_exit
          _
        // While loop
        $region17: #{custom-call.11} parent=8 // loop_pre_header
          _
        $region18: #{custom-call.11} parent=8 // loop_header
          %s47 = sphi %s21, %s55
          %s48 = sphi %s22, %s56
          %v49 = vphi %v23, %v49
          %p50 = scmp.gt.s32.totalorder %s47, %s19
        $region19: #{custom-call.11} parent=8 // loop_header_branch
          %52 = sbr.rel (%p50) target = $region23
        $region20: #{custom-call.11} parent=8 // loop_body
          %v53 = vld [vmem:[%s47] sm:$0xff]
          %54 = vst [vmem:[%s48] sm:$0xff] %v53
        $region21: #{custom-call.11} parent=8 // loop_footer
          %s55 = scalar_lea.vmem %s47, 8
          %s56 = scalar_lea.vmem %s48, 8
        $region22: #{custom-call.11} parent=8 // loop_footer_branch
          %57 = sbr.rel target = $region18
        $region23: #{custom-call.11} parent=8 // loop_exit
          _
      $region9: #{custom-call.11} parent=4 // pred_fallthru
        _
      %s58 = sand.u32 32, 7
      %s59 = sshllo.u32 0, %s58
      %s60 = smul.u32 %s11, 128
      %s61 = sshra.s32 %s60, 4
      %s62 = scalar_lea.vmem [#allocation0], %s61
      %s63 = smul.u32 %s11, 128
      %s64 = sshra.s32 %s63, 4
      %s65 = scalar_lea.vmem %s0, %s64
      %v66 = vld [vmem:[%s65] sm:%s59]
      %67 = vst [vmem:[%s62] sm:%s59] %v66
    $region5: #{custom-call.11} parent=1 // pred_fallthru
      _
    %v68 = vld [vmem:[#allocation0] sm:$0xff]
    %69 = vst [vmem:[#allocation1] sm:$0xff] %v68
    %s70 = scalar_lea.vmem [#allocation1], 8
    %s71 = scalar_lea.vmem [#allocation0], 8
    %v72 = vld [vmem:[%s71] sm:$0xff]
    %73 = vst [vmem:[%s70] sm:$0xff] %v72
    %s74 = scalar_lea.vmem [#allocation1], 16
    %s75 = scalar_lea.vmem [#allocation0], 16
    %v76 = vld [vmem:[%s75] sm:$0xff]
    %77 = vst [vmem:[%s74] sm:$0xff] %v76
    %s78 = scalar_lea.vmem [#allocation1], 24
    %s79 = scalar_lea.vmem [#allocation0], 24
    %v80 = vld [vmem:[%s79] sm:$0xff]
    %81 = vst [vmem:[%s78] sm:$0xff] %v80
    %82 = vst [vmem:[#allocation2] sm:$0x1] 0
    %v83 = vlaneseq
    %v84 = vshrl.u32 %v83, 7
    %v85 = vmov %v84
    loop: start=0, step=1, limit=4
    $region24: #{custom-call.11} parent=1 // loop_pre_header
      _
    $region25: #{custom-call.11} parent=1 // loop_header
      %s87 = sphi 0, %s91
      %p88 = scmp.ge.s32.totalorder %s87, 4
    $region26: #{custom-call.11} parent=1 // loop_header_branch
      %90 = sbr.rel (%p88) target = $region30
    $region27: #{custom-call.11} parent=1 // loop_body
      %s92 = smul.addr %s87, 8
      %s93 = scalar_lea.vmem [#allocation7], %s92
      %s94 = smul.u32 %s87, 8
      %v95 = vstv %s94
      %v96 = vadd.s32 %v85, %v95
      %97 = vst [vmem:[%s93] sm:$0xff] %v96
    $region28: #{custom-call.11} parent=1 // loop_footer
      %s91 = sadd.s32 1, %s87
    $region29: #{custom-call.11} parent=1 // loop_footer_branch
      %86 = sbr.rel target = $region25
    $region30: #{custom-call.11} parent=1 // loop_exit
      _
    loop: start=0, step=1, limit=30
    $region31: #{custom-call.11} parent=1 // loop_pre_header
      _
    $region32: #{custom-call.11} parent=1 // loop_header
      %s99 = sphi 0, %s103
      %p100 = scmp.ge.s32.totalorder %s99, 30
    $region33: #{custom-call.11} parent=1 // loop_header_branch
      %102 = sbr.rel (%p100) target = $region37
    $region34: #{custom-call.11} parent=1 // loop_body
      %v104 = vstv %s99
      %v105 = vlaneseq
      %v106 = vshrl.u32 %v105, 7
      %v107 = vmov %v106
      %v108 = vld [vmem:[#allocation1] sm:$0xff]
      %v109 = vand.u32 2147483647, %v108
      %v111 = vstv %s99
      %vm112 = vcmp.ge.s32.totalorder %v107, %v111
      %vm113 = vcmp.lt.s32.totalorder %v107, 30
      %vm114 = vmand %vm112, %vm113
      %vm115 = vcmp.lt.f32.partialorder -inf, %v109
      %vm116 = vmand %vm114, %vm115
      %v117 = vsel %vm116, %v107, %v104
      %v118 = vsel %vm116, %v109, -inf
      %s119 = scalar_lea.vmem [#allocation1], 8
      %v120 = vld [vmem:[%s119] sm:$0xff]
      %v121 = vand.u32 2147483647, %v120
      %v122 = vadd.s32 %v107, 8
      %v123 = vstv %s99
      %vm124 = vcmp.ge.s32.totalorder %v122, %v123
      %vm125 = vcmp.lt.s32.totalorder %v122, 30
      %vm126 = vmand %vm124, %vm125
      %vm127 = vcmp.lt.f32.partialorder %v118, %v121
      %vm128 = vmand %vm126, %vm127
      %v129 = vsel %vm128, %v122, %v117
      %v130 = vsel %vm128, %v121, %v118
      %s131 = scalar_lea.vmem [#allocation1], 16
      %v132 = vld [vmem:[%s131] sm:$0xff]
      %v133 = vand.u32 2147483647, %v132
      %v134 = vadd.s32 %v107, 16
      %v135 = vstv %s99
      %vm136 = vcmp.ge.s32.totalorder %v134, %v135
      %vm137 = vcmp.lt.s32.totalorder %v134, 30
      %vm138 = vmand %vm136, %vm137
      %vm139 = vcmp.lt.f32.partialorder %v130, %v133
      %vm140 = vmand %vm138, %vm139
      %v141 = vsel %vm140, %v134, %v129
      %v142 = vsel %vm140, %v133, %v130
      %s143 = scalar_lea.vmem [#allocation1], 24
      %v144 = vld [vmem:[%s143] sm:$0xff]
      %v145 = vand.u32 2147483647, %v144
      %v146 = vadd.s32 %v107, 24
      %v147 = vstv %s99
      %vm148 = vcmp.ge.s32.totalorder %v146, %v147
      %vm149 = vcmp.lt.s32.totalorder %v146, 30
      %vm150 = vmand %vm148, %vm149
      %vm151 = vcmp.lt.f32.partialorder %v142, %v145
      %vm152 = vmand %vm150, %vm151
      %v153 = vsel %vm152, %v146, %v141
      %v154 = vsel %vm152, %v145, %v142
      %v155 = vrot.slane %v154, 1
      %v156 = vrot.slane %v153, 1
      %vm157 = vcmp.ge.f32.partialorder %v155, %v154
      %v158 = vsel %vm157, %v155, %v154
      %v159 = vsel %vm157, %v156, %v153
      %v160 = vrot.slane %v155, 1
      %v161 = vrot.slane %v156, 1
      %vm162 = vcmp.ge.f32.partialorder %v160, %v158
      %v163 = vsel %vm162, %v160, %v158
      %v164 = vsel %vm162, %v161, %v159
      %v165 = vrot.slane %v160, 1
      %v166 = vrot.slane %v161, 1
      %vm167 = vcmp.ge.f32.partialorder %v165, %v163
      %v168 = vsel %vm167, %v165, %v163
      %v169 = vsel %vm167, %v166, %v164
      %v170 = vrot.slane %v165, 1
      %v171 = vrot.slane %v166, 1
      %vm172 = vcmp.ge.f32.partialorder %v170, %v168
      %v173 = vsel %vm172, %v170, %v168
      %v174 = vsel %vm172, %v171, %v169
      %v175 = vrot.slane %v170, 1
      %v176 = vrot.slane %v171, 1
      %vm177 = vcmp.ge.f32.partialorder %v175, %v173
      %v178 = vsel %vm177, %v175, %v173
      %v179 = vsel %vm177, %v176, %v174
      %v180 = vrot.slane %v175, 1
      %v181 = vrot.slane %v176, 1
      %vm182 = vcmp.ge.f32.partialorder %v180, %v178
      %v183 = vsel %vm182, %v180, %v178
      %v184 = vsel %vm182, %v181, %v179
      %v185 = vrot.slane %v180, 1
      %v186 = vrot.slane %v181, 1
      %vm187 = vcmp.ge.f32.partialorder %v185, %v183
      %v188 = vsel %vm187, %v185, %v183
      %v189 = vsel %vm187, %v186, %v184
      %s190 = ssub.s32 128, %s99
      %191 = vrot.lane.b32.xlu0 %v189, %s190
      %v192 = vpop.permute.xlu0 %191
      %s193 = vtos %v192
      %v194 = vstv %s99
      %v195 = vlaneseq
      %v196 = vand.u32 %v195, 127
      %vm197 = vcmp.eq.s32.totalorder %v196, %v194
      %v198 = vstv %s193
      %v199 = vld [vmem:[#allocation2] ss:$0 sm:$0xff]
      %v200 = vsel %vm197, %v198, %v199
      %201 = vst [vmem:[#allocation2] sm:$0x1] %v200
      %s202 = scalar_lea.vmem [#allocation1], %s99
      %s203 = scalar_lea.vmem [#allocation1], %s193
      %v204 = vld [vmem:[%s202] ss:$0 sm:$0xff]
      %v205 = vld [vmem:[%s203] ss:$0 sm:$0xff]
      %206 = vst [vmem:[%s203] sm:$0x1] %v204
      %207 = vst [vmem:[%s202] sm:$0x1] %v205
      %s208 = scalar_lea.vmem [#allocation7], %s99
      %s209 = scalar_lea.vmem [#allocation7], %s193
      %v210 = vld [vmem:[%s208] ss:$0 sm:$0xff]
      %v211 = vld [vmem:[%s209] ss:$0 sm:$0xff]
      %212 = vst [vmem:[%s209] sm:$0x1] %v210
      %213 = vst [vmem:[%s208] sm:$0x1] %v211
      %vm214 = vcmp.ne.f32.partialorder %v205, 0.0
      %vm215 = vmand %vm197, %vm214
      %v216 = vsel %vm215, %v205, 1.0
      %v217 = vlaneseq
      %v218 = vand.u32 %v217, 127
      %v219 = vstv %s99
      %vm220 = vcmp.gt.s32.totalorder %v218, %v219
      %v221 = vsel %vm220, %v205, 0.0
      %v222 = vlaneseq
      %v223 = vshrl.u32 %v222, 7
      %v224 = vmov %v223
      %v225 = vld [vmem:[#allocation1] sm:$0xff]
      %v227 = vstv %s99
      %vm228 = vcmp.gt.s32.totalorder %v224, %v227
      %v229 = vsel %vm228, %v216, 1.0
      %v230 = vrcp.pop %v229
      %v231 = vmul.f32 %v225, %v230
      %vm232 = vmand %vm228, %vm197
      %v233 = vsel %vm232, %v231, 0.0
      %234 = vadd.xlane.f32.xlu0 %v233
      %v235 = vpop.xlane.xlu0 %234
      %v236 = vmul.f32 %v235, %v221
      %v237 = vsub.f32 %v231, %v236
      %238 = vst [vmem:[#allocation1] sm:$0xff] %v237
      %s239 = scalar_lea.vmem [#allocation1], 8
      %v240 = vld [vmem:[%s239] sm:$0xff]
      %v241 = vadd.s32 %v224, 8
      %v242 = vstv %s99
      %vm243 = vcmp.gt.s32.totalorder %v241, %v242
      %v244 = vsel %vm243, %v216, 1.0
      %v245 = vrcp.pop %v244
      %v246 = vmul.f32 %v240, %v245
      %vm247 = vmand %vm243, %vm197
      %v248 = vsel %vm247, %v246, 0.0
      %249 = vadd.xlane.f32.xlu0 %v248
      %v250 = vpop.xlane.xlu0 %249
      %v251 = vmul.f32 %v250, %v221
      %v252 = vsub.f32 %v246, %v251
      %253 = vst [vmem:[%s239] sm:$0xff] %v252
      %s254 = scalar_lea.vmem [#allocation1], 16
      %v255 = vld [vmem:[%s254] sm:$0xff]
      %v256 = vadd.s32 %v224, 16
      %v257 = vstv %s99
      %vm258 = vcmp.gt.s32.totalorder %v256, %v257
      %v259 = vsel %vm258, %v216, 1.0
      %v260 = vrcp.pop %v259
      %v261 = vmul.f32 %v255, %v260
      %vm262 = vmand %vm258, %vm197
      %v263 = vsel %vm262, %v261, 0.0
      %264 = vadd.xlane.f32.xlu0 %v263
      %v265 = vpop.xlane.xlu0 %264
      %v266 = vmul.f32 %v265, %v221
      %v267 = vsub.f32 %v261, %v266
      %268 = vst [vmem:[%s254] sm:$0xff] %v267
      %s269 = scalar_lea.vmem [#allocation1], 24
      %v270 = vld [vmem:[%s269] sm:$0xff]
      %v271 = vadd.s32 %v224, 24
      %v272 = vstv %s99
      %vm273 = vcmp.gt.s32.totalorder %v271, %v272
      %v274 = vsel %vm273, %v216, 1.0
      %v275 = vrcp.pop %v274
      %v276 = vmul.f32 %v270, %v275
      %vm277 = vmand %vm273, %vm197
      %v278 = vsel %vm277, %v276, 0.0
      %279 = vadd.xlane.f32.xlu0 %v278
      %v280 = vpop.xlane.xlu0 %279
      %v281 = vmul.f32 %v280, %v221
      %v282 = vsub.f32 %v276, %v281
      %283 = vst [vmem:[%s269] sm:$0xff] %v282
    $region35: #{custom-call.11} parent=1 // loop_footer
      %s103 = sadd.s32 1, %s99
    $region36: #{custom-call.11} parent=1 // loop_footer_branch
      %98 = sbr.rel target = $region32
    $region37: #{custom-call.11} parent=1 // loop_exit
      _
    %v284 = vld [vmem:[#allocation7] sm:$0xff]
    %s285 = scalar_lea.vmem [#allocation7], 8
    %v286 = vld [vmem:[%s285] sm:$0xff]
    %s287 = scalar_lea.vmem [#allocation7], 16
    %v288 = vld [vmem:[%s287] sm:$0xff]
    %s289 = scalar_lea.vmem [#allocation7], 24
    %v290 = vld [vmem:[%s289] sm:$0xff]
    %s291 = scalar_lea.vmem [#allocation7], 32
    %s292 = scalar_lea.vmem [#allocation7], 40
    %s293 = scalar_lea.vmem [#allocation7], 48
    %s294 = scalar_lea.vmem [#allocation7], 56
    %s295 = scalar_lea.vmem [#allocation7], 64
    %s296 = scalar_lea.vmem [#allocation7], 72
    %s297 = scalar_lea.vmem [#allocation7], 80
    %s298 = scalar_lea.vmem [#allocation7], 88
    %s299 = scalar_lea.vmem [#allocation7], 96
    %s300 = scalar_lea.vmem [#allocation7], 104
    %s301 = scalar_lea.vmem [#allocation7], 112
    %s302 = scalar_lea.vmem [#allocation7], 120
    %303 = vxpose.xlu0.b32.start [1/16] %v284, 128
    %304 = vxpose.xlu0.b32.cont [2/16] %v286, 128
    %305 = vxpose.xlu0.b32.cont [3/16] %v288, 128
    %306 = vxpose.xlu0.b32.cont [4/16] %v290, 128
    %307 = vxpose.xlu0.b32.cont [5/16] 0, 128
    %308 = vxpose.xlu0.b32.cont [6/16] 0, 128
    %309 = vxpose.xlu0.b32.cont [7/16] 0, 128
    %310 = vxpose.xlu0.b32.cont [8/16] 0, 128
    %311 = vxpose.xlu0.b32.cont [9/16] 0, 128
    %312 = vxpose.xlu0.b32.cont [10/16] 0, 128
    %313 = vxpose.xlu0.b32.cont [11/16] 0, 128
    %314 = vxpose.xlu0.b32.cont [12/16] 0, 128
    %315 = vxpose.xlu0.b32.cont [13/16] 0, 128
    %316 = vxpose.xlu0.b32.cont [14/16] 0, 128
    %317 = vxpose.xlu0.b32.cont [15/16] 0, 128
    %318 = vxpose.xlu0.b32.end [16/16] 0, 128
    %v319 = vpop.trf.xlu0
    %v320 = vpop.trf.xlu0
    %v321 = vpop.trf.xlu0
    %v322 = vpop.trf.xlu0
    %v323 = vpop.trf.xlu0
    %v324 = vpop.trf.xlu0
    %v325 = vpop.trf.xlu0
    %v326 = vpop.trf.xlu0
    %v327 = vpop.trf.xlu0
    %v328 = vpop.trf.xlu0
    %v329 = vpop.trf.xlu0
    %v330 = vpop.trf.xlu0
    %v331 = vpop.trf.xlu0
    %v332 = vpop.trf.xlu0
    %v333 = vpop.trf.xlu0
    %v334 = vpop.trf.xlu0
    %335 = vst [vmem:[#allocation5] sm:$0x1] %v319
    %s337 = sshllo.u32 0, 1
    %v339 = vld [vmem:[#allocation2] sm:%s337]
    %s340 = sshllo.u32 0, 1
    %341 = vst [vmem:[#allocation3] sm:%s340] %v339
    %s343 = sshllo.u32 0, 1
    %v345 = vld [vmem:[#allocation5] sm:%s343]
    %s346 = sshllo.u32 0, 1
    %347 = vst [vmem:[#allocation6] sm:%s346] %v345
    %p349 = scmp.gt.s32.totalorder 32, 0
    // Predicated region
    $region38: #{custom-call.11} parent=1 // pred_check
      %p350 = pneg %p349
    $region39: #{custom-call.11} parent=1 // pred_check_branch
      %352 = sbr.rel (%p350) target = $region41
    $region40: #{custom-call.11} parent=1 // pred_region
      %s353 = sshra.s32 32, 3
      %p354 = scmp.gt.s32.totalorder %s353, 0
      // Predicated region
      $region42: #{custom-call.11} parent=40 // pred_check
        %p355 = pneg %p354
      $region43: #{custom-call.11} parent=40 // pred_check_branch
        %357 = sbr.rel (%p355) target = $region45
      $region44: #{custom-call.11} parent=40 // pred_region
        %s358 = ssub.s32 %s353, 1
        %s359 = smul.u32 %s358, 128
        %s360 = sshra.s32 %s359, 4
        %s361 = scalar_lea.vmem [#allocation1], %s360
        %v362 = vld [vmem:[#allocation1] sm:$0xff]
        // While loop
        $region46: #{custom-call.11} parent=44 // loop_pre_header
          _
        $region47: #{custom-call.11} parent=44 // loop_header
          %s363 = sphi [#allocation1], %s385
          %s364 = sphi %s1, %s386
          %v365 = vphi %v362, %v387
          %s366 = ssub.s32 %s361, 64
          %p367 = scmp.gt.s32.totalorder %s363, %s366
        $region48: #{custom-call.11} parent=44 // loop_header_branch
          %369 = sbr.rel (%p367) target = $region52
        $region49: #{custom-call.11} parent=44 // loop_body
          %370 = vst [vmem:[%s364] sm:$0xff] %v365
          %v371 = vld [vmem:[%s363 + $0x8] sm:$0xff]
          %372 = vst [vmem:[%s364 + $0x8] sm:$0xff] %v371
          %v373 = vld [vmem:[%s363 + $0x10] sm:$0xff]
          %374 = vst [vmem:[%s364 + $0x10] sm:$0xff] %v373
          %v375 = vld [vmem:[%s363 + $0x18] sm:$0xff]
          %376 = vst [vmem:[%s364 + $0x18] sm:$0xff] %v375
          %v377 = vld [vmem:[%s363 + $0x20] sm:$0xff]
          %378 = vst [vmem:[%s364 + $0x20] sm:$0xff] %v377
          %v379 = vld [vmem:[%s363 + $0x28] sm:$0xff]
          %380 = vst [vmem:[%s364 + $0x28] sm:$0xff] %v379
          %v381 = vld [vmem:[%s363 + $0x30] sm:$0xff]
          %382 = vst [vmem:[%s364 + $0x30] sm:$0xff] %v381
          %v383 = vld [vmem:[%s363 + $0x38] sm:$0xff]
          %384 = vst [vmem:[%s364 + $0x38] sm:$0xff] %v383
        $region50: #{custom-call.11} parent=44 // loop_footer
          %s385 = scalar_lea.vmem %s363, 64
          %s386 = scalar_lea.vmem %s364, 64
          %v387 = vld [vmem:[%s363 + $0x40] sm:$0xff]
        $region51: #{custom-call.11} parent=44 // loop_footer_branch
          %388 = sbr.rel target = $region47
        $region52: #{custom-call.11} parent=44 // loop_exit
          _
        // While loop
        $region53: #{custom-call.11} parent=44 // loop_pre_header
          _
        $region54: #{custom-call.11} parent=44 // loop_header
          %s389 = sphi %s363, %s397
          %s390 = sphi %s364, %s398
          %v391 = vphi %v365, %v391
          %p392 = scmp.gt.s32.totalorder %s389, %s361
        $region55: #{custom-call.11} parent=44 // loop_header_branch
          %394 = sbr.rel (%p392) target = $region59
        $region56: #{custom-call.11} parent=44 // loop_body
          %v395 = vld [vmem:[%s389] sm:$0xff]
          %396 = vst [vmem:[%s390] sm:$0xff] %v395
        $region57: #{custom-call.11} parent=44 // loop_footer
          %s397 = scalar_lea.vmem %s389, 8
          %s398 = scalar_lea.vmem %s390, 8
        $region58: #{custom-call.11} parent=44 // loop_footer_branch
          %399 = sbr.rel target = $region54
        $region59: #{custom-call.11} parent=44 // loop_exit
          _
      $region45: #{custom-call.11} parent=40 // pred_fallthru
        _
      %s400 = sand.u32 32, 7
      %s401 = sshllo.u32 0, %s400
      %s402 = smul.u32 %s353, 128
      %s403 = sshra.s32 %s402, 4
      %s404 = scalar_lea.vmem %s1, %s403
      %s405 = smul.u32 %s353, 128
      %s406 = sshra.s32 %s405, 4
      %s407 = scalar_lea.vmem [#allocation1], %s406
      %v408 = vld [vmem:[%s407] sm:%s401]
      %409 = vst [vmem:[%s404] sm:%s401] %v408
    $region41: #{custom-call.11} parent=1 // pred_fallthru
      _
    // Predicated region
    $region60: #{custom-call.11} parent=1 // pred_check
      _
    $region61: #{custom-call.11} parent=1 // pred_check_branch
      %411 = sbr.rel (0) target = $region63
    $region62: #{custom-call.11} parent=1 // pred_region
      %s413 = ssub.s32 16, 16
      %414 = vsyncadd [#allocation4], %s413
      %s415 = sshll.u32 [#allocation3], 4
      %s416 = int_to_ptr.vmem [resolvable:$true] %s415
      %418 = dma.vmem_to_hbm [thread:$0]  %s416, 16, %s2, [#allocation4]
    $region63: #{custom-call.11} parent=1 // pred_fallthru
      _
    // Predicated region
    $region64: #{custom-call.11} parent=1 // pred_check
      _
    $region65: #{custom-call.11} parent=1 // pred_check_branch
      %420 = sbr.rel (0) target = $region67
    $region66: #{custom-call.11} parent=1 // pred_region
      %p422 = scmp.gt.s32.totalorder 1, 0
      // Predicated region
      $region68: #{custom-call.11} parent=66 // pred_check
        %p423 = pneg %p422
      $region69: #{custom-call.11} parent=66 // pred_check_branch
        %425 = sbr.rel (%p423) target = $region71
      $region70: #{custom-call.11} parent=66 // pred_region
        %s426 = sshra.s32 1, 3
        %p427 = scmp.gt.s32.totalorder %s426, 0
        // Predicated region
        $region72: #{custom-call.11} parent=70 // pred_check
          %p428 = pneg %p427
        $region73: #{custom-call.11} parent=70 // pred_check_branch
          %430 = sbr.rel (%p428) target = $region75
        $region74: #{custom-call.11} parent=70 // pred_region
          %s431 = ssub.s32 %s426, 1
          %s432 = smul.u32 %s431, 128
          %s433 = sshra.s32 %s432, 4
          %s434 = scalar_lea.vmem [#allocation6], %s433
          %v435 = vld [vmem:[#allocation6] sm:$0xff]
          // While loop
          $region76: #{custom-call.11} parent=74 // loop_pre_header
            _
          $region77: #{custom-call.11} parent=74 // loop_header
            %s436 = sphi [#allocation6], %s458
            %s437 = sphi %s3, %s459
            %v438 = vphi %v435, %v460
            %s439 = ssub.s32 %s434, 64
            %p440 = scmp.gt.s32.totalorder %s436, %s439
          $region78: #{custom-call.11} parent=74 // loop_header_branch
            %442 = sbr.rel (%p440) target = $region82
          $region79: #{custom-call.11} parent=74 // loop_body
            %443 = vst [vmem:[%s437] sm:$0xff] %v438
            %v444 = vld [vmem:[%s436 + $0x8] sm:$0xff]
            %445 = vst [vmem:[%s437 + $0x8] sm:$0xff] %v444
            %v446 = vld [vmem:[%s436 + $0x10] sm:$0xff]
            %447 = vst [vmem:[%s437 + $0x10] sm:$0xff] %v446
            %v448 = vld [vmem:[%s436 + $0x18] sm:$0xff]
            %449 = vst [vmem:[%s437 + $0x18] sm:$0xff] %v448
            %v450 = vld [vmem:[%s436 + $0x20] sm:$0xff]
            %451 = vst [vmem:[%s437 + $0x20] sm:$0xff] %v450
            %v452 = vld [vmem:[%s436 + $0x28] sm:$0xff]
            %453 = vst [vmem:[%s437 + $0x28] sm:$0xff] %v452
            %v454 = vld [vmem:[%s436 + $0x30] sm:$0xff]
            %455 = vst [vmem:[%s437 + $0x30] sm:$0xff] %v454
            %v456 = vld [vmem:[%s436 + $0x38] sm:$0xff]
            %457 = vst [vmem:[%s437 + $0x38] sm:$0xff] %v456
          $region80: #{custom-call.11} parent=74 // loop_footer
            %s458 = scalar_lea.vmem %s436, 64
            %s459 = scalar_lea.vmem %s437, 64
            %v460 = vld [vmem:[%s436 + $0x40] sm:$0xff]
          $region81: #{custom-call.11} parent=74 // loop_footer_branch
            %461 = sbr.rel target = $region77
          $region82: #{custom-call.11} parent=74 // loop_exit
            _
          // While loop
          $region83: #{custom-call.11} parent=74 // loop_pre_header
            _
          $region84: #{custom-call.11} parent=74 // loop_header
            %s462 = sphi %s436, %s470
            %s463 = sphi %s437, %s471
            %v464 = vphi %v438, %v464
            %p465 = scmp.gt.s32.totalorder %s462, %s434
          $region85: #{custom-call.11} parent=74 // loop_header_branch
            %467 = sbr.rel (%p465) target = $region89
          $region86: #{custom-call.11} parent=74 // loop_body
            %v468 = vld [vmem:[%s462] sm:$0xff]
            %469 = vst [vmem:[%s463] sm:$0xff] %v468
          $region87: #{custom-call.11} parent=74 // loop_footer
            %s470 = scalar_lea.vmem %s462, 8
            %s471 = scalar_lea.vmem %s463, 8
          $region88: #{custom-call.11} parent=74 // loop_footer_branch
            %472 = sbr.rel target = $region84
          $region89: #{custom-call.11} parent=74 // loop_exit
            _
        $region75: #{custom-call.11} parent=70 // pred_fallthru
          _
        %s473 = sand.u32 1, 7
        %s474 = sshllo.u32 0, %s473
        %s475 = smul.u32 %s426, 128
        %s476 = sshra.s32 %s475, 4
        %s477 = scalar_lea.vmem %s3, %s476
        %s478 = smul.u32 %s426, 128
        %s479 = sshra.s32 %s478, 4
        %s480 = scalar_lea.vmem [#allocation6], %s479
        %v481 = vld [vmem:[%s480] sm:%s474]
        %482 = vst [vmem:[%s477] sm:%s474] %v481
      $region71: #{custom-call.11} parent=66 // pred_fallthru
        _
    $region67: #{custom-call.11} parent=1 // pred_fallthru
      _
    // Predicated region
    $region90: #{custom-call.11} parent=1 // pred_check
      _
    $region91: #{custom-call.11} parent=1 // pred_check_branch
      %484 = sbr.rel (0) target = $region93
    $region92: #{custom-call.11} parent=1 // pred_region
      %485 = dma.done [#allocation4], 16
    $region93: #{custom-call.11} parent=1 // pred_fallthru
      _
    // Predicated region
    $region94: #{custom-call.11} parent=1 // pred_check
      _
    $region95: #{custom-call.11} parent=1 // pred_check_branch
      %487 = sbr.rel (0) target = $region97
    $region96: #{custom-call.11} parent=1 // pred_region
      _
    $region97: #{custom-call.11} parent=1 // pred_fallthru
      _
    %488 = vsyncpa [#allocation4], 1

// kernel: custom-call.13
$region0: #{custom-call.13}
  %s0 = inlined_call_operand.vmem [shape: f32[1,30,30], index: 0, kind: input, shape index: {}]
  %s1 = inlined_call_operand.vmem [shape: f32[1,30,30], index: 1, kind: output, shape index: {}]
  $region1: #{custom-call.13} parent=0
    #allocation0 [shape = 'u8[16384]{0}', space=vmem, size = 0x4000, scoped, tag = 'operand span for operand 0']
    #allocation1 [shape = 'u8[16384]{0}', space=vmem, size = 0x4000, scoped, tag = 'operand span for operand 1']
    #allocation2 [shape = 'f32[30,30]{1,0}', space=vmem, size = 0x4000, scoped, tag = 'rescaled input a']
    // Predicated region
    $region2: #{custom-call.13} parent=1 // pred_check
      _
    $region3: #{custom-call.13} parent=1 // pred_check_branch
      %3 = sbr.rel (0) target = $region5
    $region4: #{custom-call.13} parent=1 // pred_region
      // Predicated region
      $region6: #{custom-call.13} parent=4 // pred_check
        _
      $region7: #{custom-call.13} parent=4 // pred_check_branch
        %5 = sbr.rel (0) target = $region9
      $region8: #{custom-call.13} parent=4 // pred_region
        // Predicated region
        $region21: #{custom-call.13} parent=8 // pred_check
          _
        $region22: #{custom-call.13} parent=8 // pred_check_branch
          %26 = sbr.rel (0) target = $region24
        $region23: #{custom-call.13} parent=8 // pred_region
          loop: start=0, step=1, limit=1
          $region25: #{custom-call.13} parent=23 // loop_pre_header
            _
          $region26: #{custom-call.13} parent=23 // loop_header
            %s28 = sphi 0, %s32
            %p29 = scmp.ge.s32.totalorder %s28, 1
            %s33 = sphi %s0, %s0
            %s34 = sphi [#allocation0], [#allocation0]
          $region27: #{custom-call.13} parent=23 // loop_header_branch
            %31 = sbr.rel (%p29) target = $region31
          $region28: #{custom-call.13} parent=23 // loop_body
            %v35 = vld [vmem:[%s33] sm:$0xff]
            %36 = vst [vmem:[%s34] sm:$0xff] %v35
            %v37 = vld [vmem:[%s33 + $0x8] sm:$0xff]
            %38 = vst [vmem:[%s34 + $0x8] sm:$0xff] %v37
            %v39 = vld [vmem:[%s33 + $0x10] sm:$0xff]
            %40 = vst [vmem:[%s34 + $0x10] sm:$0xff] %v39
            %v41 = vld [vmem:[%s33 + $0x18] sm:$0xff]
            %42 = vst [vmem:[%s34 + $0x18] sm:$0xff] %v41
          $region29: #{custom-call.13} parent=23 // loop_footer
            %s32 = sadd.s32 1, %s28
          $region30: #{custom-call.13} parent=23 // loop_footer_branch
            %27 = sbr.rel target = $region26
          $region31: #{custom-call.13} parent=23 // loop_exit
            _
        $region24: #{custom-call.13} parent=8 // pred_fallthru
          _
        // Predicated region
        $region32: #{custom-call.13} parent=8 // pred_check
          _
        $region33: #{custom-call.13} parent=8 // pred_check_branch
          %44 = sbr.rel target = $region35
        $region34: #{custom-call.13} parent=8 // pred_region
          _
        $region35: #{custom-call.13} parent=8 // pred_fallthru
          _
      $region9: #{custom-call.13} parent=4 // pred_fallthru
        _
      // Predicated region
      $region10: #{custom-call.13} parent=4 // pred_check
        _
      $region11: #{custom-call.13} parent=4 // pred_check_branch
        %7 = sbr.rel target = $region13
      $region12: #{custom-call.13} parent=4 // pred_region
        loop: start=0, step=1, limit=1
        $region14: #{custom-call.13} parent=12 // loop_pre_header
          _
        $region15: #{custom-call.13} parent=12 // loop_header
          %s10 = sphi 0, %s14
          %p11 = scmp.ge.s32.totalorder %s10, 1
          %s15 = sphi %s0, %s0
          %s16 = sphi [#allocation0], [#allocation0]
        $region16: #{custom-call.13} parent=12 // loop_header_branch
          %13 = sbr.rel (%p11) target = $region20
        $region17: #{custom-call.13} parent=12 // loop_body
          %v17 = vld [vmem:[%s15] sm:$0xff]
          %18 = vst [vmem:[%s16] sm:$0xff] %v17
          %v19 = vld [vmem:[%s15 + $0x8] sm:$0xff]
          %20 = vst [vmem:[%s16 + $0x8] sm:$0xff] %v19
          %v21 = vld [vmem:[%s15 + $0x10] sm:$0xff]
          %22 = vst [vmem:[%s16 + $0x10] sm:$0xff] %v21
          %v23 = vld [vmem:[%s15 + $0x18] sm:$0xff]
          %24 = vst [vmem:[%s16 + $0x18] sm:$0xff] %v23
        $region18: #{custom-call.13} parent=12 // loop_footer
          %s14 = sadd.s32 1, %s10
        $region19: #{custom-call.13} parent=12 // loop_footer_branch
          %9 = sbr.rel target = $region15
        $region20: #{custom-call.13} parent=12 // loop_exit
          _
      $region13: #{custom-call.13} parent=4 // pred_fallthru
        _
    $region5: #{custom-call.13} parent=1 // pred_fallthru
      _
    %45 = vnop
    %v46 = vlaneseq
    %v47 = vand.u32 %v46, 127
    %vm48 = vcmp.lt.s32.totalorder %v47, 30
    %v49 = vlaneseq
    %v50 = vshrl.u32 %v49, 7
    %vm52 = vcmp.eq.s32.totalorder %v50, %v47
    %v53 = vld [vmem:[#allocation0] sm:$0xff]
    %v54 = vsel %vm52, %v53, 0.0
    %55 = vadd.xlane.f32.xlu0 %v54
    %v56 = vpop.xlane.xlu0 %55
    %vm57 = vcmp.ge.s32.totalorder %v50, %v47
    %vm58 = vmand %vm57, %vm48
    %v59 = vsel %vm58, %v53, 0.0
    %v60 = vrcp.pop %v56
    %v61 = vmul.f32 %v59, %v60
    %62 = vst [vmem:[#allocation2] sm:$0xff] %v61
    %s63 = scalar_lea.vmem [#allocation0], 8
    %s64 = scalar_lea.vmem [#allocation2], 8
    %v65 = vlaneseq
    %v66 = vshrl.u32 %v65, 7
    %v67 = vadd.s32 %v66, 8
    %vm68 = vcmp.eq.s32.totalorder %v67, %v47
    %v69 = vld [vmem:[%s63] sm:$0xff]
    %v70 = vsel %vm68, %v69, 0.0
    %71 = vadd.xlane.f32.xlu0 %v70
    %v72 = vpop.xlane.xlu0 %71
    %vm73 = vcmp.ge.s32.totalorder %v67, %v47
    %vm74 = vmand %vm73, %vm48
    %v75 = vsel %vm74, %v69, 0.0
    %v76 = vrcp.pop %v72
    %v77 = vmul.f32 %v75, %v76
    %78 = vst [vmem:[%s64] sm:$0xff] %v77
    %s79 = scalar_lea.vmem [#allocation0], 16
    %s80 = scalar_lea.vmem [#allocation2], 16
    %v81 = vlaneseq
    %v82 = vshrl.u32 %v81, 7
    %v83 = vadd.s32 %v82, 16
    %vm84 = vcmp.eq.s32.totalorder %v83, %v47
    %v85 = vld [vmem:[%s79] sm:$0xff]
    %v86 = vsel %vm84, %v85, 0.0
    %87 = vadd.xlane.f32.xlu0 %v86
    %v88 = vpop.xlane.xlu0 %87
    %vm89 = vcmp.ge.s32.totalorder %v83, %v47
    %vm90 = vmand %vm89, %vm48
    %v91 = vsel %vm90, %v85, 0.0
    %v92 = vrcp.pop %v88
    %v93 = vmul.f32 %v91, %v92
    %94 = vst [vmem:[%s80] sm:$0xff] %v93
    %s95 = scalar_lea.vmem [#allocation0], 24
    %s96 = scalar_lea.vmem [#allocation2], 24
    %v97 = vlaneseq
    %v98 = vshrl.u32 %v97, 7
    %v99 = vadd.s32 %v98, 24
    %vm100 = vcmp.eq.s32.totalorder %v99, %v47
    %v101 = vld [vmem:[%s95] sm:$0xff]
    %v102 = vsel %vm100, %v101, 0.0
    %103 = vadd.xlane.f32.xlu0 %v102
    %v104 = vpop.xlane.xlu0 %103
    %vm105 = vcmp.ge.s32.totalorder %v99, %v47
    %vm106 = vmand %vm105, %vm48
    %v107 = vsel %vm106, %v101, 0.0
    %v108 = vrcp.pop %v104
    %v109 = vmul.f32 %v107, %v108
    %110 = vst [vmem:[%s96] sm:$0xff] %v109
    %v111 = vlaneseq
    %v112 = vand.u32 %v111, 127
    %v113 = vlaneseq
    %v114 = vshrl.u32 %v113, 7
    %vm116 = vcmp.eq.s32.totalorder %v112, %v114
    %v117 = vlaneseq
    %v118 = vand.u32 %v117, 127
    %vm119 = vcmp.eq.s32.totalorder %v118, 0
    %v120 = vsel %vm119, 1.0, -1.0
    %v121 = vsel %vm116, %v120, 0.0
    %v122 = vlaneseq
    %v123 = vand.u32 %v122, 127
    %v124 = vlaneseq
    %v125 = vshrl.u32 %v124, 7
    %v126 = vadd.s32 %v125, 8
    %vm127 = vcmp.eq.s32.totalorder %v123, %v126
    %v128 = vsel %vm127, -1.0, 0.0
    %v129 = vlaneseq
    %v130 = vand.u32 %v129, 127
    %v131 = vlaneseq
    %v132 = vshrl.u32 %v131, 7
    %v133 = vadd.s32 %v132, 16
    %vm134 = vcmp.eq.s32.totalorder %v130, %v133
    %v135 = vsel %vm134, -1.0, 0.0
    %v136 = vlaneseq
    %v137 = vand.u32 %v136, 127
    %v138 = vlaneseq
    %v139 = vshrl.u32 %v138, 7
    %v140 = vadd.s32 %v139, 24
    %vm141 = vcmp.eq.s32.totalorder %v137, %v140
    %v142 = vsel %vm141, -1.0, 0.0
    %s143 = scalar_lea.vmem [#allocation2], 1
    %v144 = vld [vmem:[%s143] ss:$0 sm:$0xff]
    %v145 = vxor.u32 %v144, 2147483648
    %v146 = vlaneseq
    %v147 = vand.u32 %v146, 127
    %vm148 = vcmp.eq.s32.totalorder %v147, 1
    %v149 = vmul.f32 %v145, %v121
    %150 = vadd.xlane.f32.xlu0 %v149
    %v151 = vpop.xlane.xlu0 %150
    %v152 = vsel %vm148, %v151, %v121
    %s153 = scalar_lea.vmem [#allocation2], 2
    %v154 = vld [vmem:[%s153] ss:$0 sm:$0xff]
    %v155 = vxor.u32 %v154, 2147483648
    %v156 = vlaneseq
    %v157 = vand.u32 %v156, 127
    %vm158 = vcmp.eq.s32.totalorder %v157, 2
    %v159 = vmul.f32 %v155, %v152
    %160 = vadd.xlane.f32.xlu0 %v159
    %v161 = vpop.xlane.xlu0 %160
    %v162 = vsel %vm158, %v161, %v152
    %s163 = scalar_lea.vmem [#allocation2], 3
    %v164 = vld [vmem:[%s163] ss:$0 sm:$0xff]
    %v165 = vxor.u32 %v164, 2147483648
    %v166 = vlaneseq
    %v167 = vand.u32 %v166, 127
    %vm168 = vcmp.eq.s32.totalorder %v167, 3
    %v169 = vmul.f32 %v165, %v162
    %170 = vadd.xlane.f32.xlu0 %v169
    %v171 = vpop.xlane.xlu0 %170
    %v172 = vsel %vm168, %v171, %v162
    %s173 = scalar_lea.vmem [#allocation2], 4
    %v174 = vld [vmem:[%s173] ss:$0 sm:$0xff]
    %v175 = vxor.u32 %v174, 2147483648
    %v176 = vlaneseq
    %v177 = vand.u32 %v176, 127
    %vm178 = vcmp.eq.s32.totalorder %v177, 4
    %v179 = vmul.f32 %v175, %v172
    %180 = vadd.xlane.f32.xlu0 %v179
    %v181 = vpop.xlane.xlu0 %180
    %v182 = vsel %vm178, %v181, %v172
    %s183 = scalar_lea.vmem [#allocation2], 5
    %v184 = vld [vmem:[%s183] ss:$0 sm:$0xff]
    %v185 = vxor.u32 %v184, 2147483648
    %v186 = vlaneseq
    %v187 = vand.u32 %v186, 127
    %vm188 = vcmp.eq.s32.totalorder %v187, 5
    %v189 = vmul.f32 %v185, %v182
    %190 = vadd.xlane.f32.xlu0 %v189
    %v191 = vpop.xlane.xlu0 %190
    %v192 = vsel %vm188, %v191, %v182
    %s193 = scalar_lea.vmem [#allocation2], 6
    %v194 = vld [vmem:[%s193] ss:$0 sm:$0xff]
    %v195 = vxor.u32 %v194, 2147483648
    %v196 = vlaneseq
    %v197 = vand.u32 %v196, 127
    %vm198 = vcmp.eq.s32.totalorder %v197, 6
    %v199 = vmul.f32 %v195, %v192
    %200 = vadd.xlane.f32.xlu0 %v199
    %v201 = vpop.xlane.xlu0 %200
    %v202 = vsel %vm198, %v201, %v192
    %s203 = scalar_lea.vmem [#allocation2], 7
    %v204 = vld [vmem:[%s203] ss:$0 sm:$0xff]
    %v205 = vxor.u32 %v204, 2147483648
    %v206 = vlaneseq
    %v207 = vand.u32 %v206, 127
    %vm208 = vcmp.eq.s32.totalorder %v207, 7
    %v209 = vmul.f32 %v205, %v202
    %210 = vadd.xlane.f32.xlu0 %v209
    %v211 = vpop.xlane.xlu0 %210
    %v212 = vsel %vm208, %v211, %v202
    %s213 = scalar_lea.vmem [#allocation2], 8
    %v214 = vld [vmem:[%s213] ss:$0 sm:$0xff]
    %v215 = vxor.u32 %v214, 2147483648
    %v216 = vlaneseq
    %v217 = vand.u32 %v216, 127
    %vm218 = vcmp.eq.s32.totalorder %v217, 8
    %v219 = vmul.f32 %v215, %v212
    %220 = vadd.xlane.f32.xlu0 %v219
    %v221 = vpop.xlane.xlu0 %220
    %v222 = vsel %vm218, %v221, %v212
    %v223 = vmul.f32 %v215, %v128
    %224 = vadd.xlane.f32.xlu0 %v223
    %v225 = vpop.xlane.xlu0 %224
    %v226 = vsel %vm218, %v225, %v128
    %s227 = scalar_lea.vmem [#allocation2], 9
    %v228 = vld [vmem:[%s227] ss:$0 sm:$0xff]
    %v229 = vxor.u32 %v228, 2147483648
    %v230 = vlaneseq
    %v231 = vand.u32 %v230, 127
    %vm232 = vcmp.eq.s32.totalorder %v231, 9
    %v233 = vmul.f32 %v229, %v222
    %234 = vadd.xlane.f32.xlu0 %v233
    %v235 = vpop.xlane.xlu0 %234
    %v236 = vsel %vm232, %v235, %v222
    %v237 = vmul.f32 %v229, %v226
    %238 = vadd.xlane.f32.xlu0 %v237
    %v239 = vpop.xlane.xlu0 %238
    %v240 = vsel %vm232, %v239, %v226
    %s241 = scalar_lea.vmem [#allocation2], 10
    %v242 = vld [vmem:[%s241] ss:$0 sm:$0xff]
    %v243 = vxor.u32 %v242, 2147483648
    %v244 = vlaneseq
    %v245 = vand.u32 %v244, 127
    %vm246 = vcmp.eq.s32.totalorder %v245, 10
    %v247 = vmul.f32 %v243, %v236
    %248 = vadd.xlane.f32.xlu0 %v247
    %v249 = vpop.xlane.xlu0 %248
    %v250 = vsel %vm246, %v249, %v236
    %v251 = vmul.f32 %v243, %v240
    %252 = vadd.xlane.f32.xlu0 %v251
    %v253 = vpop.xlane.xlu0 %252
    %v254 = vsel %vm246, %v253, %v240
    %s255 = scalar_lea.vmem [#allocation2], 11
    %v256 = vld [vmem:[%s255] ss:$0 sm:$0xff]
    %v257 = vxor.u32 %v256, 2147483648
    %v258 = vlaneseq
    %v259 = vand.u32 %v258, 127
    %vm260 = vcmp.eq.s32.totalorder %v259, 11
    %v261 = vmul.f32 %v257, %v250
    %262 = vadd.xlane.f32.xlu0 %v261
    %v263 = vpop.xlane.xlu0 %262
    %v264 = vsel %vm260, %v263, %v250
    %v265 = vmul.f32 %v257, %v254
    %266 = vadd.xlane.f32.xlu0 %v265
    %v267 = vpop.xlane.xlu0 %266
    %v268 = vsel %vm260, %v267, %v254
    %s269 = scalar_lea.vmem [#allocation2], 12
    %v270 = vld [vmem:[%s269] ss:$0 sm:$0xff]
    %v271 = vxor.u32 %v270, 2147483648
    %v272 = vlaneseq
    %v273 = vand.u32 %v272, 127
    %vm274 = vcmp.eq.s32.totalorder %v273, 12
    %v275 = vmul.f32 %v271, %v264
    %276 = vadd.xlane.f32.xlu0 %v275
    %v277 = vpop.xlane.xlu0 %276
    %v278 = vsel %vm274, %v277, %v264
    %v279 = vmul.f32 %v271, %v268
    %280 = vadd.xlane.f32.xlu0 %v279
    %v281 = vpop.xlane.xlu0 %280
    %v282 = vsel %vm274, %v281, %v268
    %s283 = scalar_lea.vmem [#allocation2], 13
    %v284 = vld [vmem:[%s283] ss:$0 sm:$0xff]
    %v285 = vxor.u32 %v284, 2147483648
    %v286 = vlaneseq
    %v287 = vand.u32 %v286, 127
    %vm288 = vcmp.eq.s32.totalorder %v287, 13
    %v289 = vmul.f32 %v285, %v278
    %290 = vadd.xlane.f32.xlu0 %v289
    %v291 = vpop.xlane.xlu0 %290
    %v292 = vsel %vm288, %v291, %v278
    %v293 = vmul.f32 %v285, %v282
    %294 = vadd.xlane.f32.xlu0 %v293
    %v295 = vpop.xlane.xlu0 %294
    %v296 = vsel %vm288, %v295, %v282
    %s297 = scalar_lea.vmem [#allocation2], 14
    %v298 = vld [vmem:[%s297] ss:$0 sm:$0xff]
    %v299 = vxor.u32 %v298, 2147483648
    %v300 = vlaneseq
    %v301 = vand.u32 %v300, 127
    %vm302 = vcmp.eq.s32.totalorder %v301, 14
    %v303 = vmul.f32 %v299, %v292
    %304 = vadd.xlane.f32.xlu0 %v303
    %v305 = vpop.xlane.xlu0 %304
    %v306 = vsel %vm302, %v305, %v292
    %v307 = vmul.f32 %v299, %v296
    %308 = vadd.xlane.f32.xlu0 %v307
    %v309 = vpop.xlane.xlu0 %308
    %v310 = vsel %vm302, %v309, %v296
    %s311 = scalar_lea.vmem [#allocation2], 15
    %v312 = vld [vmem:[%s311] ss:$0 sm:$0xff]
    %v313 = vxor.u32 %v312, 2147483648
    %v314 = vlaneseq
    %v315 = vand.u32 %v314, 127
    %vm316 = vcmp.eq.s32.totalorder %v315, 15
    %v317 = vmul.f32 %v313, %v306
    %318 = vadd.xlane.f32.xlu0 %v317
    %v319 = vpop.xlane.xlu0 %318
    %v320 = vsel %vm316, %v319, %v306
    %v321 = vmul.f32 %v313, %v310
    %322 = vadd.xlane.f32.xlu0 %v321
    %v323 = vpop.xlane.xlu0 %322
    %v324 = vsel %vm316, %v323, %v310
    %s325 = scalar_lea.vmem [#allocation2], 16
    %v326 = vld [vmem:[%s325] ss:$0 sm:$0xff]
    %v327 = vxor.u32 %v326, 2147483648
    %v328 = vlaneseq
    %v329 = vand.u32 %v328, 127
    %vm330 = vcmp.eq.s32.totalorder %v329, 16
    %v331 = vmul.f32 %v327, %v320
    %332 = vadd.xlane.f32.xlu0 %v331
    %v333 = vpop.xlane.xlu0 %332
    %v334 = vsel %vm330, %v333, %v320
    %v335 = vmul.f32 %v327, %v324
    %336 = vadd.xlane.f32.xlu0 %v335
    %v337 = vpop.xlane.xlu0 %336
    %v338 = vsel %vm330, %v337, %v324
    %v339 = vmul.f32 %v327, %v135
    %340 = vadd.xlane.f32.xlu0 %v339
    %v341 = vpop.xlane.xlu0 %340
    %v342 = vsel %vm330, %v341, %v135
    %s343 = scalar_lea.vmem [#allocation2], 17
    %v344 = vld [vmem:[%s343] ss:$0 sm:$0xff]
    %v345 = vxor.u32 %v344, 2147483648
    %v346 = vlaneseq
    %v347 = vand.u32 %v346, 127
    %vm348 = vcmp.eq.s32.totalorder %v347, 17
    %v349 = vmul.f32 %v345, %v334
    %350 = vadd.xlane.f32.xlu0 %v349
    %v351 = vpop.xlane.xlu0 %350
    %v352 = vsel %vm348, %v351, %v334
    %v353 = vmul.f32 %v345, %v338
    %354 = vadd.xlane.f32.xlu0 %v353
    %v355 = vpop.xlane.xlu0 %354
    %v356 = vsel %vm348, %v355, %v338
    %v357 = vmul.f32 %v345, %v342
    %358 = vadd.xlane.f32.xlu0 %v357
    %v359 = vpop.xlane.xlu0 %358
    %v360 = vsel %vm348, %v359, %v342
    %s361 = scalar_lea.vmem [#allocation2], 18
    %v362 = vld [vmem:[%s361] ss:$0 sm:$0xff]
    %v363 = vxor.u32 %v362, 2147483648
    %v364 = vlaneseq
    %v365 = vand.u32 %v364, 127
    %vm366 = vcmp.eq.s32.totalorder %v365, 18
    %v367 = vmul.f32 %v363, %v352
    %368 = vadd.xlane.f32.xlu0 %v367
    %v369 = vpop.xlane.xlu0 %368
    %v370 = vsel %vm366, %v369, %v352
    %v371 = vmul.f32 %v363, %v356
    %372 = vadd.xlane.f32.xlu0 %v371
    %v373 = vpop.xlane.xlu0 %372
    %v374 = vsel %vm366, %v373, %v356
    %v375 = vmul.f32 %v363, %v360
    %376 = vadd.xlane.f32.xlu0 %v375
    %v377 = vpop.xlane.xlu0 %376
    %v378 = vsel %vm366, %v377, %v360
    %s379 = scalar_lea.vmem [#allocation2], 19
    %v380 = vld [vmem:[%s379] ss:$0 sm:$0xff]
    %v381 = vxor.u32 %v380, 2147483648
    %v382 = vlaneseq
    %v383 = vand.u32 %v382, 127
    %vm384 = vcmp.eq.s32.totalorder %v383, 19
    %v385 = vmul.f32 %v381, %v370
    %386 = vadd.xlane.f32.xlu0 %v385
    %v387 = vpop.xlane.xlu0 %386
    %v388 = vsel %vm384, %v387, %v370
    %v389 = vmul.f32 %v381, %v374
    %390 = vadd.xlane.f32.xlu0 %v389
    %v391 = vpop.xlane.xlu0 %390
    %v392 = vsel %vm384, %v391, %v374
    %v393 = vmul.f32 %v381, %v378
    %394 = vadd.xlane.f32.xlu0 %v393
    %v395 = vpop.xlane.xlu0 %394
    %v396 = vsel %vm384, %v395, %v378
    %s397 = scalar_lea.vmem [#allocation2], 20
    %v398 = vld [vmem:[%s397] ss:$0 sm:$0xff]
    %v399 = vxor.u32 %v398, 2147483648
    %v400 = vlaneseq
    %v401 = vand.u32 %v400, 127
    %vm402 = vcmp.eq.s32.totalorder %v401, 20
    %v403 = vmul.f32 %v399, %v388
    %404 = vadd.xlane.f32.xlu0 %v403
    %v405 = vpop.xlane.xlu0 %404
    %v406 = vsel %vm402, %v405, %v388
    %v407 = vmul.f32 %v399, %v392
    %408 = vadd.xlane.f32.xlu0 %v407
    %v409 = vpop.xlane.xlu0 %408
    %v410 = vsel %vm402, %v409, %v392
    %v411 = vmul.f32 %v399, %v396
    %412 = vadd.xlane.f32.xlu0 %v411
    %v413 = vpop.xlane.xlu0 %412
    %v414 = vsel %vm402, %v413, %v396
    %s415 = scalar_lea.vmem [#allocation2], 21
    %v416 = vld [vmem:[%s415] ss:$0 sm:$0xff]
    %v417 = vxor.u32 %v416, 2147483648
    %v418 = vlaneseq
    %v419 = vand.u32 %v418, 127
    %vm420 = vcmp.eq.s32.totalorder %v419, 21
    %v421 = vmul.f32 %v417, %v406
    %422 = vadd.xlane.f32.xlu0 %v421
    %v423 = vpop.xlane.xlu0 %422
    %v424 = vsel %vm420, %v423, %v406
    %v425 = vmul.f32 %v417, %v410
    %426 = vadd.xlane.f32.xlu0 %v425
    %v427 = vpop.xlane.xlu0 %426
    %v428 = vsel %vm420, %v427, %v410
    %v429 = vmul.f32 %v417, %v414
    %430 = vadd.xlane.f32.xlu0 %v429
    %v431 = vpop.xlane.xlu0 %430
    %v432 = vsel %vm420, %v431, %v414
    %s433 = scalar_lea.vmem [#allocation2], 22
    %v434 = vld [vmem:[%s433] ss:$0 sm:$0xff]
    %v435 = vxor.u32 %v434, 2147483648
    %v436 = vlaneseq
    %v437 = vand.u32 %v436, 127
    %vm438 = vcmp.eq.s32.totalorder %v437, 22
    %v439 = vmul.f32 %v435, %v424
    %440 = vadd.xlane.f32.xlu0 %v439
    %v441 = vpop.xlane.xlu0 %440
    %v442 = vsel %vm438, %v441, %v424
    %v443 = vmul.f32 %v435, %v428
    %444 = vadd.xlane.f32.xlu0 %v443
    %v445 = vpop.xlane.xlu0 %444
    %v446 = vsel %vm438, %v445, %v428
    %v447 = vmul.f32 %v435, %v432
    %448 = vadd.xlane.f32.xlu0 %v447
    %v449 = vpop.xlane.xlu0 %448
    %v450 = vsel %vm438, %v449, %v432
    %s451 = scalar_lea.vmem [#allocation2], 23
    %v452 = vld [vmem:[%s451] ss:$0 sm:$0xff]
    %v453 = vxor.u32 %v452, 2147483648
    %v454 = vlaneseq
    %v455 = vand.u32 %v454, 127
    %vm456 = vcmp.eq.s32.totalorder %v455, 23
    %v457 = vmul.f32 %v453, %v442
    %458 = vadd.xlane.f32.xlu0 %v457
    %v459 = vpop.xlane.xlu0 %458
    %v460 = vsel %vm456, %v459, %v442
    %v461 = vmul.f32 %v453, %v446
    %462 = vadd.xlane.f32.xlu0 %v461
    %v463 = vpop.xlane.xlu0 %462
    %v464 = vsel %vm456, %v463, %v446
    %v465 = vmul.f32 %v453, %v450
    %466 = vadd.xlane.f32.xlu0 %v465
    %v467 = vpop.xlane.xlu0 %466
    %v468 = vsel %vm456, %v467, %v450
    %s469 = scalar_lea.vmem [#allocation2], 24
    %v470 = vld [vmem:[%s469] ss:$0 sm:$0xff]
    %v471 = vxor.u32 %v470, 2147483648
    %v472 = vlaneseq
    %v473 = vand.u32 %v472, 127
    %vm474 = vcmp.eq.s32.totalorder %v473, 24
    %v475 = vmul.f32 %v471, %v460
    %476 = vadd.xlane.f32.xlu0 %v475
    %v477 = vpop.xlane.xlu0 %476
    %v478 = vsel %vm474, %v477, %v460
    %v479 = vmul.f32 %v471, %v464
    %480 = vadd.xlane.f32.xlu0 %v479
    %v481 = vpop.xlane.xlu0 %480
    %v482 = vsel %vm474, %v481, %v464
    %v483 = vmul.f32 %v471, %v468
    %484 = vadd.xlane.f32.xlu0 %v483
    %v485 = vpop.xlane.xlu0 %484
    %v486 = vsel %vm474, %v485, %v468
    %v487 = vmul.f32 %v471, %v142
    %488 = vadd.xlane.f32.xlu0 %v487
    %v489 = vpop.xlane.xlu0 %488
    %v490 = vsel %vm474, %v489, %v142
    %s491 = scalar_lea.vmem [#allocation2], 25
    %v492 = vld [vmem:[%s491] ss:$0 sm:$0xff]
    %v493 = vxor.u32 %v492, 2147483648
    %v494 = vlaneseq
    %v495 = vand.u32 %v494, 127
    %vm496 = vcmp.eq.s32.totalorder %v495, 25
    %v497 = vmul.f32 %v493, %v478
    %498 = vadd.xlane.f32.xlu0 %v497
    %v499 = vpop.xlane.xlu0 %498
    %v500 = vsel %vm496, %v499, %v478
    %v501 = vmul.f32 %v493, %v482
    %502 = vadd.xlane.f32.xlu0 %v501
    %v503 = vpop.xlane.xlu0 %502
    %v504 = vsel %vm496, %v503, %v482
    %v505 = vmul.f32 %v493, %v486
    %506 = vadd.xlane.f32.xlu0 %v505
    %v507 = vpop.xlane.xlu0 %506
    %v508 = vsel %vm496, %v507, %v486
    %v509 = vmul.f32 %v493, %v490
    %510 = vadd.xlane.f32.xlu0 %v509
    %v511 = vpop.xlane.xlu0 %510
    %v512 = vsel %vm496, %v511, %v490
    %s513 = scalar_lea.vmem [#allocation2], 26
    %v514 = vld [vmem:[%s513] ss:$0 sm:$0xff]
    %v515 = vxor.u32 %v514, 2147483648
    %v516 = vlaneseq
    %v517 = vand.u32 %v516, 127
    %vm518 = vcmp.eq.s32.totalorder %v517, 26
    %v519 = vmul.f32 %v515, %v500
    %520 = vadd.xlane.f32.xlu0 %v519
    %v521 = vpop.xlane.xlu0 %520
    %v522 = vsel %vm518, %v521, %v500
    %v523 = vmul.f32 %v515, %v504
    %524 = vadd.xlane.f32.xlu0 %v523
    %v525 = vpop.xlane.xlu0 %524
    %v526 = vsel %vm518, %v525, %v504
    %v527 = vmul.f32 %v515, %v508
    %528 = vadd.xlane.f32.xlu0 %v527
    %v529 = vpop.xlane.xlu0 %528
    %v530 = vsel %vm518, %v529, %v508
    %v531 = vmul.f32 %v515, %v512
    %532 = vadd.xlane.f32.xlu0 %v531
    %v533 = vpop.xlane.xlu0 %532
    %v534 = vsel %vm518, %v533, %v512
    %s535 = scalar_lea.vmem [#allocation2], 27
    %v536 = vld [vmem:[%s535] ss:$0 sm:$0xff]
    %v537 = vxor.u32 %v536, 2147483648
    %v538 = vlaneseq
    %v539 = vand.u32 %v538, 127
    %vm540 = vcmp.eq.s32.totalorder %v539, 27
    %v541 = vmul.f32 %v537, %v522
    %542 = vadd.xlane.f32.xlu0 %v541
    %v543 = vpop.xlane.xlu0 %542
    %v544 = vsel %vm540, %v543, %v522
    %v545 = vmul.f32 %v537, %v526
    %546 = vadd.xlane.f32.xlu0 %v545
    %v547 = vpop.xlane.xlu0 %546
    %v548 = vsel %vm540, %v547, %v526
    %v549 = vmul.f32 %v537, %v530
    %550 = vadd.xlane.f32.xlu0 %v549
    %v551 = vpop.xlane.xlu0 %550
    %v552 = vsel %vm540, %v551, %v530
    %v553 = vmul.f32 %v537, %v534
    %554 = vadd.xlane.f32.xlu0 %v553
    %v555 = vpop.xlane.xlu0 %554
    %v556 = vsel %vm540, %v555, %v534
    %s557 = scalar_lea.vmem [#allocation2], 28
    %v558 = vld [vmem:[%s557] ss:$0 sm:$0xff]
    %v559 = vxor.u32 %v558, 2147483648
    %v560 = vlaneseq
    %v561 = vand.u32 %v560, 127
    %vm562 = vcmp.eq.s32.totalorder %v561, 28
    %v563 = vmul.f32 %v559, %v544
    %564 = vadd.xlane.f32.xlu0 %v563
    %v565 = vpop.xlane.xlu0 %564
    %v566 = vsel %vm562, %v565, %v544
    %v567 = vmul.f32 %v559, %v548
    %568 = vadd.xlane.f32.xlu0 %v567
    %v569 = vpop.xlane.xlu0 %568
    %v570 = vsel %vm562, %v569, %v548
    %v571 = vmul.f32 %v559, %v552
    %572 = vadd.xlane.f32.xlu0 %v571
    %v573 = vpop.xlane.xlu0 %572
    %v574 = vsel %vm562, %v573, %v552
    %v575 = vmul.f32 %v559, %v556
    %576 = vadd.xlane.f32.xlu0 %v575
    %v577 = vpop.xlane.xlu0 %576
    %v578 = vsel %vm562, %v577, %v556
    %s579 = scalar_lea.vmem [#allocation2], 29
    %v580 = vld [vmem:[%s579] ss:$0 sm:$0xff]
    %v581 = vxor.u32 %v580, 2147483648
    %v582 = vlaneseq
    %v583 = vand.u32 %v582, 127
    %vm584 = vcmp.eq.s32.totalorder %v583, 29
    %v585 = vmul.f32 %v581, %v566
    %586 = vadd.xlane.f32.xlu0 %v585
    %v587 = vpop.xlane.xlu0 %586
    %v588 = vsel %vm584, %v587, %v566
    %v589 = vmul.f32 %v581, %v570
    %590 = vadd.xlane.f32.xlu0 %v589
    %v591 = vpop.xlane.xlu0 %590
    %v592 = vsel %vm584, %v591, %v570
    %v593 = vmul.f32 %v581, %v574
    %594 = vadd.xlane.f32.xlu0 %v593
    %v595 = vpop.xlane.xlu0 %594
    %v596 = vsel %vm584, %v595, %v574
    %v597 = vmul.f32 %v581, %v578
    %598 = vadd.xlane.f32.xlu0 %v597
    %v599 = vpop.xlane.xlu0 %598
    %v600 = vsel %vm584, %v599, %v578
    %v601 = vrcp.pop %v56
    %v602 = vmul.f32 %v588, %v601
    %vm603 = vweird.f32 %v56
    %v604 = vsel %vm603, %v588, %v602
    %605 = vst [vmem:[#allocation1] sm:$0xff] %v604
    %v606 = vrcp.pop %v72
    %v607 = vmul.f32 %v592, %v606
    %vm608 = vweird.f32 %v72
    %v609 = vsel %vm608, %v592, %v607
    %s610 = scalar_lea.vmem [#allocation1], 8
    %611 = vst [vmem:[%s610] sm:$0xff] %v609
    %v612 = vrcp.pop %v88
    %v613 = vmul.f32 %v596, %v612
    %vm614 = vweird.f32 %v88
    %v615 = vsel %vm614, %v596, %v613
    %s616 = scalar_lea.vmem [#allocation1], 16
    %617 = vst [vmem:[%s616] sm:$0xff] %v615
    %v618 = vrcp.pop %v104
    %v619 = vmul.f32 %v600, %v618
    %vm620 = vweird.f32 %v104
    %v621 = vsel %vm620, %v600, %v619
    %s622 = scalar_lea.vmem [#allocation1], 24
    %623 = vst [vmem:[%s622] sm:$0xff] %v621
    // Predicated region
    $region36: #{custom-call.13} parent=1 // pred_check
      _
    $region37: #{custom-call.13} parent=1 // pred_check_branch
      %625 = sbr.rel (0) target = $region39
    $region38: #{custom-call.13} parent=1 // pred_region
      // Predicated region
      $region40: #{custom-call.13} parent=38 // pred_check
        _
      $region41: #{custom-call.13} parent=38 // pred_check_branch
        %627 = sbr.rel (0) target = $region43
      $region42: #{custom-call.13} parent=38 // pred_region
        // Predicated region
        $region55: #{custom-call.13} parent=42 // pred_check
          _
        $region56: #{custom-call.13} parent=42 // pred_check_branch
          %648 = sbr.rel (0) target = $region58
        $region57: #{custom-call.13} parent=42 // pred_region
          loop: start=0, step=1, limit=1
          $region59: #{custom-call.13} parent=57 // loop_pre_header
            _
          $region60: #{custom-call.13} parent=57 // loop_header
            %s650 = sphi 0, %s654
            %p651 = scmp.ge.s32.totalorder %s650, 1
            %s655 = sphi [#allocation1], [#allocation1]
            %s656 = sphi %s1, %s1
          $region61: #{custom-call.13} parent=57 // loop_header_branch
            %653 = sbr.rel (%p651) target = $region65
          $region62: #{custom-call.13} parent=57 // loop_body
            %v657 = vld [vmem:[%s655] sm:$0xff]
            %658 = vst [vmem:[%s656] sm:$0xff] %v657
            %v659 = vld [vmem:[%s655 + $0x8] sm:$0xff]
            %660 = vst [vmem:[%s656 + $0x8] sm:$0xff] %v659
            %v661 = vld [vmem:[%s655 + $0x10] sm:$0xff]
            %662 = vst [vmem:[%s656 + $0x10] sm:$0xff] %v661
            %v663 = vld [vmem:[%s655 + $0x18] sm:$0xff]
            %664 = vst [vmem:[%s656 + $0x18] sm:$0xff] %v663
          $region63: #{custom-call.13} parent=57 // loop_footer
            %s654 = sadd.s32 1, %s650
          $region64: #{custom-call.13} parent=57 // loop_footer_branch
            %649 = sbr.rel target = $region60
          $region65: #{custom-call.13} parent=57 // loop_exit
            _
        $region58: #{custom-call.13} parent=42 // pred_fallthru
          _
        // Predicated region
        $region66: #{custom-call.13} parent=42 // pred_check
          _
        $region67: #{custom-call.13} parent=42 // pred_check_branch
          %666 = sbr.rel target = $region69
        $region68: #{custom-call.13} parent=42 // pred_region
          _
        $region69: #{custom-call.13} parent=42 // pred_fallthru
          _
      $region43: #{custom-call.13} parent=38 // pred_fallthru
        _
      // Predicated region
      $region44: #{custom-call.13} parent=38 // pred_check
        _
      $region45: #{custom-call.13} parent=38 // pred_check_branch
        %629 = sbr.rel target = $region47
      $region46: #{custom-call.13} parent=38 // pred_region
        loop: start=0, step=1, limit=1
        $region48: #{custom-call.13} parent=46 // loop_pre_header
          _
        $region49: #{custom-call.13} parent=46 // loop_header
          %s632 = sphi 0, %s636
          %p633 = scmp.ge.s32.totalorder %s632, 1
          %s637 = sphi [#allocation1], [#allocation1]
          %s638 = sphi %s1, %s1
        $region50: #{custom-call.13} parent=46 // loop_header_branch
          %635 = sbr.rel (%p633) target = $region54
        $region51: #{custom-call.13} parent=46 // loop_body
          %v639 = vld [vmem:[%s637] sm:$0xff]
          %640 = vst [vmem:[%s638] sm:$0xff] %v639
          %v641 = vld [vmem:[%s637 + $0x8] sm:$0xff]
          %642 = vst [vmem:[%s638 + $0x8] sm:$0xff] %v641
          %v643 = vld [vmem:[%s637 + $0x10] sm:$0xff]
          %644 = vst [vmem:[%s638 + $0x10] sm:$0xff] %v643
          %v645 = vld [vmem:[%s637 + $0x18] sm:$0xff]
          %646 = vst [vmem:[%s638 + $0x18] sm:$0xff] %v645
        $region52: #{custom-call.13} parent=46 // loop_footer
          %s636 = sadd.s32 1, %s632
        $region53: #{custom-call.13} parent=46 // loop_footer_branch
          %631 = sbr.rel target = $region49
        $region54: #{custom-call.13} parent=46 // loop_exit
          _
      $region47: #{custom-call.13} parent=38 // pred_fallthru
        _
    $region39: #{custom-call.13} parent=1 // pred_fallthru
      _
    %667 = vnop

// kernel: custom-call.12
$region0: #{custom-call.12}
  %s0 = inlined_call_operand.vmem [shape: f32[1,30,30], index: 0, kind: input, shape index: {}]
  %s1 = inlined_call_operand.vmem [shape: f32[1,30,30], index: 1, kind: output, shape index: {}]
  $region1: #{custom-call.12} parent=0
    #allocation0 [shape = 'u8[16384]{0}', space=vmem, size = 0x4000, scoped, tag = 'operand span for operand 0']
    #allocation1 [shape = 'u8[16384]{0}', space=vmem, size = 0x4000, scoped, tag = 'operand span for operand 1']
    #allocation2 [shape = 'f32[30,30]{1,0}', space=vmem, size = 0x4000, scoped, tag = 'rescaled input a']
    // Predicated region
    $region2: #{custom-call.12} parent=1 // pred_check
      _
    $region3: #{custom-call.12} parent=1 // pred_check_branch
      %3 = sbr.rel (0) target = $region5
    $region4: #{custom-call.12} parent=1 // pred_region
      // Predicated region
      $region6: #{custom-call.12} parent=4 // pred_check
        _
      $region7: #{custom-call.12} parent=4 // pred_check_branch
        %5 = sbr.rel (0) target = $region9
      $region8: #{custom-call.12} parent=4 // pred_region
        // Predicated region
        $region21: #{custom-call.12} parent=8 // pred_check
          _
        $region22: #{custom-call.12} parent=8 // pred_check_branch
          %26 = sbr.rel (0) target = $region24
        $region23: #{custom-call.12} parent=8 // pred_region
          loop: start=0, step=1, limit=1
          $region25: #{custom-call.12} parent=23 // loop_pre_header
            _
          $region26: #{custom-call.12} parent=23 // loop_header
            %s28 = sphi 0, %s32
            %p29 = scmp.ge.s32.totalorder %s28, 1
            %s33 = sphi %s0, %s0
            %s34 = sphi [#allocation0], [#allocation0]
          $region27: #{custom-call.12} parent=23 // loop_header_branch
            %31 = sbr.rel (%p29) target = $region31
          $region28: #{custom-call.12} parent=23 // loop_body
            %v35 = vld [vmem:[%s33] sm:$0xff]
            %36 = vst [vmem:[%s34] sm:$0xff] %v35
            %v37 = vld [vmem:[%s33 + $0x8] sm:$0xff]
            %38 = vst [vmem:[%s34 + $0x8] sm:$0xff] %v37
            %v39 = vld [vmem:[%s33 + $0x10] sm:$0xff]
            %40 = vst [vmem:[%s34 + $0x10] sm:$0xff] %v39
            %v41 = vld [vmem:[%s33 + $0x18] sm:$0xff]
            %42 = vst [vmem:[%s34 + $0x18] sm:$0xff] %v41
          $region29: #{custom-call.12} parent=23 // loop_footer
            %s32 = sadd.s32 1, %s28
          $region30: #{custom-call.12} parent=23 // loop_footer_branch
            %27 = sbr.rel target = $region26
          $region31: #{custom-call.12} parent=23 // loop_exit
            _
        $region24: #{custom-call.12} parent=8 // pred_fallthru
          _
        // Predicated region
        $region32: #{custom-call.12} parent=8 // pred_check
          _
        $region33: #{custom-call.12} parent=8 // pred_check_branch
          %44 = sbr.rel target = $region35
        $region34: #{custom-call.12} parent=8 // pred_region
          _
        $region35: #{custom-call.12} parent=8 // pred_fallthru
          _
      $region9: #{custom-call.12} parent=4 // pred_fallthru
        _
      // Predicated region
      $region10: #{custom-call.12} parent=4 // pred_check
        _
      $region11: #{custom-call.12} parent=4 // pred_check_branch
        %7 = sbr.rel target = $region13
      $region12: #{custom-call.12} parent=4 // pred_region
        loop: start=0, step=1, limit=1
        $region14: #{custom-call.12} parent=12 // loop_pre_header
          _
        $region15: #{custom-call.12} parent=12 // loop_header
          %s10 = sphi 0, %s14
          %p11 = scmp.ge.s32.totalorder %s10, 1
          %s15 = sphi %s0, %s0
          %s16 = sphi [#allocation0], [#allocation0]
        $region16: #{custom-call.12} parent=12 // loop_header_branch
          %13 = sbr.rel (%p11) target = $region20
        $region17: #{custom-call.12} parent=12 // loop_body
          %v17 = vld [vmem:[%s15] sm:$0xff]
          %18 = vst [vmem:[%s16] sm:$0xff] %v17
          %v19 = vld [vmem:[%s15 + $0x8] sm:$0xff]
          %20 = vst [vmem:[%s16 + $0x8] sm:$0xff] %v19
          %v21 = vld [vmem:[%s15 + $0x10] sm:$0xff]
          %22 = vst [vmem:[%s16 + $0x10] sm:$0xff] %v21
          %v23 = vld [vmem:[%s15 + $0x18] sm:$0xff]
          %24 = vst [vmem:[%s16 + $0x18] sm:$0xff] %v23
        $region18: #{custom-call.12} parent=12 // loop_footer
          %s14 = sadd.s32 1, %s10
        $region19: #{custom-call.12} parent=12 // loop_footer_branch
          %9 = sbr.rel target = $region15
        $region20: #{custom-call.12} parent=12 // loop_exit
          _
      $region13: #{custom-call.12} parent=4 // pred_fallthru
        _
    $region5: #{custom-call.12} parent=1 // pred_fallthru
      _
    %45 = vnop
    %v46 = vlaneseq
    %v47 = vand.u32 %v46, 127
    %vm48 = vcmp.lt.s32.totalorder %v47, 30
    %v49 = vlaneseq
    %v50 = vshrl.u32 %v49, 7
    %vm52 = vcmp.eq.s32.totalorder %v50, %v47
    %v53 = vld [vmem:[#allocation0] sm:$0xff]
    %v54 = vsel %vm52, %v53, 0.0
    %55 = vadd.xlane.f32.xlu0 %v54
    %v56 = vpop.xlane.xlu0 %55
    %vm57 = vcmp.le.s32.totalorder %v50, %v47
    %vm58 = vmand %vm57, %vm48
    %v59 = vsel %vm58, %v53, 0.0
    %v60 = vrcp.pop %v56
    %v61 = vmul.f32 %v59, %v60
    %62 = vst [vmem:[#allocation2] sm:$0xff] %v61
    %s63 = scalar_lea.vmem [#allocation0], 8
    %s64 = scalar_lea.vmem [#allocation2], 8
    %v65 = vlaneseq
    %v66 = vshrl.u32 %v65, 7
    %v67 = vadd.s32 %v66, 8
    %vm68 = vcmp.eq.s32.totalorder %v67, %v47
    %v69 = vld [vmem:[%s63] sm:$0xff]
    %v70 = vsel %vm68, %v69, 0.0
    %71 = vadd.xlane.f32.xlu0 %v70
    %v72 = vpop.xlane.xlu0 %71
    %vm73 = vcmp.le.s32.totalorder %v67, %v47
    %vm74 = vmand %vm73, %vm48
    %v75 = vsel %vm74, %v69, 0.0
    %v76 = vrcp.pop %v72
    %v77 = vmul.f32 %v75, %v76
    %78 = vst [vmem:[%s64] sm:$0xff] %v77
    %s79 = scalar_lea.vmem [#allocation0], 16
    %s80 = scalar_lea.vmem [#allocation2], 16
    %v81 = vlaneseq
    %v82 = vshrl.u32 %v81, 7
    %v83 = vadd.s32 %v82, 16
    %vm84 = vcmp.eq.s32.totalorder %v83, %v47
    %v85 = vld [vmem:[%s79] sm:$0xff]
    %v86 = vsel %vm84, %v85, 0.0
    %87 = vadd.xlane.f32.xlu0 %v86
    %v88 = vpop.xlane.xlu0 %87
    %vm89 = vcmp.le.s32.totalorder %v83, %v47
    %vm90 = vmand %vm89, %vm48
    %v91 = vsel %vm90, %v85, 0.0
    %v92 = vrcp.pop %v88
    %v93 = vmul.f32 %v91, %v92
    %94 = vst [vmem:[%s80] sm:$0xff] %v93
    %s95 = scalar_lea.vmem [#allocation0], 24
    %s96 = scalar_lea.vmem [#allocation2], 24
    %v97 = vlaneseq
    %v98 = vshrl.u32 %v97, 7
    %v99 = vadd.s32 %v98, 24
    %vm100 = vcmp.eq.s32.totalorder %v99, %v47
    %v101 = vld [vmem:[%s95] sm:$0xff]
    %v102 = vsel %vm100, %v101, 0.0
    %103 = vadd.xlane.f32.xlu0 %v102
    %v104 = vpop.xlane.xlu0 %103
    %vm105 = vcmp.le.s32.totalorder %v99, %v47
    %vm106 = vmand %vm105, %vm48
    %v107 = vsel %vm106, %v101, 0.0
    %v108 = vrcp.pop %v104
    %v109 = vmul.f32 %v107, %v108
    %110 = vst [vmem:[%s96] sm:$0xff] %v109
    %v111 = vlaneseq
    %v112 = vand.u32 %v111, 127
    %v113 = vlaneseq
    %v114 = vshrl.u32 %v113, 7
    %vm116 = vcmp.eq.s32.totalorder %v112, %v114
    %v117 = vsel %vm116, -1.0, 0.0
    %v118 = vlaneseq
    %v119 = vand.u32 %v118, 127
    %v120 = vlaneseq
    %v121 = vshrl.u32 %v120, 7
    %v122 = vadd.s32 %v121, 8
    %vm123 = vcmp.eq.s32.totalorder %v119, %v122
    %v124 = vsel %vm123, -1.0, 0.0
    %v125 = vlaneseq
    %v126 = vand.u32 %v125, 127
    %v127 = vlaneseq
    %v128 = vshrl.u32 %v127, 7
    %v129 = vadd.s32 %v128, 16
    %vm130 = vcmp.eq.s32.totalorder %v126, %v129
    %v131 = vsel %vm130, -1.0, 0.0
    %v132 = vlaneseq
    %v133 = vand.u32 %v132, 127
    %v134 = vlaneseq
    %v135 = vshrl.u32 %v134, 7
    %v136 = vadd.s32 %v135, 24
    %vm137 = vcmp.eq.s32.totalorder %v133, %v136
    %v138 = vlaneseq
    %v139 = vand.u32 %v138, 127
    %vm140 = vcmp.eq.s32.totalorder %v139, 29
    %v141 = vsel %vm140, 1.0, -1.0
    %v142 = vsel %vm137, %v141, 0.0
    %s143 = scalar_lea.vmem [#allocation2], 28
    %v144 = vld [vmem:[%s143] ss:$0 sm:$0xff]
    %v145 = vxor.u32 %v144, 2147483648
    %v146 = vlaneseq
    %v147 = vand.u32 %v146, 127
    %vm148 = vcmp.eq.s32.totalorder %v147, 28
    %v149 = vmul.f32 %v145, %v142
    %150 = vadd.xlane.f32.xlu0 %v149
    %v151 = vpop.xlane.xlu0 %150
    %v152 = vsel %vm148, %v151, %v142
    %s153 = scalar_lea.vmem [#allocation2], 27
    %v154 = vld [vmem:[%s153] ss:$0 sm:$0xff]
    %v155 = vxor.u32 %v154, 2147483648
    %v156 = vlaneseq
    %v157 = vand.u32 %v156, 127
    %vm158 = vcmp.eq.s32.totalorder %v157, 27
    %v159 = vmul.f32 %v155, %v152
    %160 = vadd.xlane.f32.xlu0 %v159
    %v161 = vpop.xlane.xlu0 %160
    %v162 = vsel %vm158, %v161, %v152
    %s163 = scalar_lea.vmem [#allocation2], 26
    %v164 = vld [vmem:[%s163] ss:$0 sm:$0xff]
    %v165 = vxor.u32 %v164, 2147483648
    %v166 = vlaneseq
    %v167 = vand.u32 %v166, 127
    %vm168 = vcmp.eq.s32.totalorder %v167, 26
    %v169 = vmul.f32 %v165, %v162
    %170 = vadd.xlane.f32.xlu0 %v169
    %v171 = vpop.xlane.xlu0 %170
    %v172 = vsel %vm168, %v171, %v162
    %s173 = scalar_lea.vmem [#allocation2], 25
    %v174 = vld [vmem:[%s173] ss:$0 sm:$0xff]
    %v175 = vxor.u32 %v174, 2147483648
    %v176 = vlaneseq
    %v177 = vand.u32 %v176, 127
    %vm178 = vcmp.eq.s32.totalorder %v177, 25
    %v179 = vmul.f32 %v175, %v172
    %180 = vadd.xlane.f32.xlu0 %v179
    %v181 = vpop.xlane.xlu0 %180
    %v182 = vsel %vm178, %v181, %v172
    %s183 = scalar_lea.vmem [#allocation2], 24
    %v184 = vld [vmem:[%s183] ss:$0 sm:$0xff]
    %v185 = vxor.u32 %v184, 2147483648
    %v186 = vlaneseq
    %v187 = vand.u32 %v186, 127
    %vm188 = vcmp.eq.s32.totalorder %v187, 24
    %v189 = vmul.f32 %v185, %v182
    %190 = vadd.xlane.f32.xlu0 %v189
    %v191 = vpop.xlane.xlu0 %190
    %v192 = vsel %vm188, %v191, %v182
    %s193 = scalar_lea.vmem [#allocation2], 23
    %v194 = vld [vmem:[%s193] ss:$0 sm:$0xff]
    %v195 = vxor.u32 %v194, 2147483648
    %v196 = vlaneseq
    %v197 = vand.u32 %v196, 127
    %vm198 = vcmp.eq.s32.totalorder %v197, 23
    %v199 = vmul.f32 %v195, %v131
    %200 = vadd.xlane.f32.xlu0 %v199
    %v201 = vpop.xlane.xlu0 %200
    %v202 = vsel %vm198, %v201, %v131
    %v203 = vmul.f32 %v195, %v192
    %204 = vadd.xlane.f32.xlu0 %v203
    %v205 = vpop.xlane.xlu0 %204
    %v206 = vsel %vm198, %v205, %v192
    %s207 = scalar_lea.vmem [#allocation2], 22
    %v208 = vld [vmem:[%s207] ss:$0 sm:$0xff]
    %v209 = vxor.u32 %v208, 2147483648
    %v210 = vlaneseq
    %v211 = vand.u32 %v210, 127
    %vm212 = vcmp.eq.s32.totalorder %v211, 22
    %v213 = vmul.f32 %v209, %v202
    %214 = vadd.xlane.f32.xlu0 %v213
    %v215 = vpop.xlane.xlu0 %214
    %v216 = vsel %vm212, %v215, %v202
    %v217 = vmul.f32 %v209, %v206
    %218 = vadd.xlane.f32.xlu0 %v217
    %v219 = vpop.xlane.xlu0 %218
    %v220 = vsel %vm212, %v219, %v206
    %s221 = scalar_lea.vmem [#allocation2], 21
    %v222 = vld [vmem:[%s221] ss:$0 sm:$0xff]
    %v223 = vxor.u32 %v222, 2147483648
    %v224 = vlaneseq
    %v225 = vand.u32 %v224, 127
    %vm226 = vcmp.eq.s32.totalorder %v225, 21
    %v227 = vmul.f32 %v223, %v216
    %228 = vadd.xlane.f32.xlu0 %v227
    %v229 = vpop.xlane.xlu0 %228
    %v230 = vsel %vm226, %v229, %v216
    %v231 = vmul.f32 %v223, %v220
    %232 = vadd.xlane.f32.xlu0 %v231
    %v233 = vpop.xlane.xlu0 %232
    %v234 = vsel %vm226, %v233, %v220
    %s235 = scalar_lea.vmem [#allocation2], 20
    %v236 = vld [vmem:[%s235] ss:$0 sm:$0xff]
    %v237 = vxor.u32 %v236, 2147483648
    %v238 = vlaneseq
    %v239 = vand.u32 %v238, 127
    %vm240 = vcmp.eq.s32.totalorder %v239, 20
    %v241 = vmul.f32 %v237, %v230
    %242 = vadd.xlane.f32.xlu0 %v241
    %v243 = vpop.xlane.xlu0 %242
    %v244 = vsel %vm240, %v243, %v230
    %v245 = vmul.f32 %v237, %v234
    %246 = vadd.xlane.f32.xlu0 %v245
    %v247 = vpop.xlane.xlu0 %246
    %v248 = vsel %vm240, %v247, %v234
    %s249 = scalar_lea.vmem [#allocation2], 19
    %v250 = vld [vmem:[%s249] ss:$0 sm:$0xff]
    %v251 = vxor.u32 %v250, 2147483648
    %v252 = vlaneseq
    %v253 = vand.u32 %v252, 127
    %vm254 = vcmp.eq.s32.totalorder %v253, 19
    %v255 = vmul.f32 %v251, %v244
    %256 = vadd.xlane.f32.xlu0 %v255
    %v257 = vpop.xlane.xlu0 %256
    %v258 = vsel %vm254, %v257, %v244
    %v259 = vmul.f32 %v251, %v248
    %260 = vadd.xlane.f32.xlu0 %v259
    %v261 = vpop.xlane.xlu0 %260
    %v262 = vsel %vm254, %v261, %v248
    %s263 = scalar_lea.vmem [#allocation2], 18
    %v264 = vld [vmem:[%s263] ss:$0 sm:$0xff]
    %v265 = vxor.u32 %v264, 2147483648
    %v266 = vlaneseq
    %v267 = vand.u32 %v266, 127
    %vm268 = vcmp.eq.s32.totalorder %v267, 18
    %v269 = vmul.f32 %v265, %v258
    %270 = vadd.xlane.f32.xlu0 %v269
    %v271 = vpop.xlane.xlu0 %270
    %v272 = vsel %vm268, %v271, %v258
    %v273 = vmul.f32 %v265, %v262
    %274 = vadd.xlane.f32.xlu0 %v273
    %v275 = vpop.xlane.xlu0 %274
    %v276 = vsel %vm268, %v275, %v262
    %s277 = scalar_lea.vmem [#allocation2], 17
    %v278 = vld [vmem:[%s277] ss:$0 sm:$0xff]
    %v279 = vxor.u32 %v278, 2147483648
    %v280 = vlaneseq
    %v281 = vand.u32 %v280, 127
    %vm282 = vcmp.eq.s32.totalorder %v281, 17
    %v283 = vmul.f32 %v279, %v272
    %284 = vadd.xlane.f32.xlu0 %v283
    %v285 = vpop.xlane.xlu0 %284
    %v286 = vsel %vm282, %v285, %v272
    %v287 = vmul.f32 %v279, %v276
    %288 = vadd.xlane.f32.xlu0 %v287
    %v289 = vpop.xlane.xlu0 %288
    %v290 = vsel %vm282, %v289, %v276
    %s291 = scalar_lea.vmem [#allocation2], 16
    %v292 = vld [vmem:[%s291] ss:$0 sm:$0xff]
    %v293 = vxor.u32 %v292, 2147483648
    %v294 = vlaneseq
    %v295 = vand.u32 %v294, 127
    %vm296 = vcmp.eq.s32.totalorder %v295, 16
    %v297 = vmul.f32 %v293, %v286
    %298 = vadd.xlane.f32.xlu0 %v297
    %v299 = vpop.xlane.xlu0 %298
    %v300 = vsel %vm296, %v299, %v286
    %v301 = vmul.f32 %v293, %v290
    %302 = vadd.xlane.f32.xlu0 %v301
    %v303 = vpop.xlane.xlu0 %302
    %v304 = vsel %vm296, %v303, %v290
    %s305 = scalar_lea.vmem [#allocation2], 15
    %v306 = vld [vmem:[%s305] ss:$0 sm:$0xff]
    %v307 = vxor.u32 %v306, 2147483648
    %v308 = vlaneseq
    %v309 = vand.u32 %v308, 127
    %vm310 = vcmp.eq.s32.totalorder %v309, 15
    %v311 = vmul.f32 %v307, %v124
    %312 = vadd.xlane.f32.xlu0 %v311
    %v313 = vpop.xlane.xlu0 %312
    %v314 = vsel %vm310, %v313, %v124
    %v315 = vmul.f32 %v307, %v300
    %316 = vadd.xlane.f32.xlu0 %v315
    %v317 = vpop.xlane.xlu0 %316
    %v318 = vsel %vm310, %v317, %v300
    %v319 = vmul.f32 %v307, %v304
    %320 = vadd.xlane.f32.xlu0 %v319
    %v321 = vpop.xlane.xlu0 %320
    %v322 = vsel %vm310, %v321, %v304
    %s323 = scalar_lea.vmem [#allocation2], 14
    %v324 = vld [vmem:[%s323] ss:$0 sm:$0xff]
    %v325 = vxor.u32 %v324, 2147483648
    %v326 = vlaneseq
    %v327 = vand.u32 %v326, 127
    %vm328 = vcmp.eq.s32.totalorder %v327, 14
    %v329 = vmul.f32 %v325, %v314
    %330 = vadd.xlane.f32.xlu0 %v329
    %v331 = vpop.xlane.xlu0 %330
    %v332 = vsel %vm328, %v331, %v314
    %v333 = vmul.f32 %v325, %v318
    %334 = vadd.xlane.f32.xlu0 %v333
    %v335 = vpop.xlane.xlu0 %334
    %v336 = vsel %vm328, %v335, %v318
    %v337 = vmul.f32 %v325, %v322
    %338 = vadd.xlane.f32.xlu0 %v337
    %v339 = vpop.xlane.xlu0 %338
    %v340 = vsel %vm328, %v339, %v322
    %s341 = scalar_lea.vmem [#allocation2], 13
    %v342 = vld [vmem:[%s341] ss:$0 sm:$0xff]
    %v343 = vxor.u32 %v342, 2147483648
    %v344 = vlaneseq
    %v345 = vand.u32 %v344, 127
    %vm346 = vcmp.eq.s32.totalorder %v345, 13
    %v347 = vmul.f32 %v343, %v332
    %348 = vadd.xlane.f32.xlu0 %v347
    %v349 = vpop.xlane.xlu0 %348
    %v350 = vsel %vm346, %v349, %v332
    %v351 = vmul.f32 %v343, %v336
    %352 = vadd.xlane.f32.xlu0 %v351
    %v353 = vpop.xlane.xlu0 %352
    %v354 = vsel %vm346, %v353, %v336
    %v355 = vmul.f32 %v343, %v340
    %356 = vadd.xlane.f32.xlu0 %v355
    %v357 = vpop.xlane.xlu0 %356
    %v358 = vsel %vm346, %v357, %v340
    %s359 = scalar_lea.vmem [#allocation2], 12
    %v360 = vld [vmem:[%s359] ss:$0 sm:$0xff]
    %v361 = vxor.u32 %v360, 2147483648
    %v362 = vlaneseq
    %v363 = vand.u32 %v362, 127
    %vm364 = vcmp.eq.s32.totalorder %v363, 12
    %v365 = vmul.f32 %v361, %v350
    %366 = vadd.xlane.f32.xlu0 %v365
    %v367 = vpop.xlane.xlu0 %366
    %v368 = vsel %vm364, %v367, %v350
    %v369 = vmul.f32 %v361, %v354
    %370 = vadd.xlane.f32.xlu0 %v369
    %v371 = vpop.xlane.xlu0 %370
    %v372 = vsel %vm364, %v371, %v354
    %v373 = vmul.f32 %v361, %v358
    %374 = vadd.xlane.f32.xlu0 %v373
    %v375 = vpop.xlane.xlu0 %374
    %v376 = vsel %vm364, %v375, %v358
    %s377 = scalar_lea.vmem [#allocation2], 11
    %v378 = vld [vmem:[%s377] ss:$0 sm:$0xff]
    %v379 = vxor.u32 %v378, 2147483648
    %v380 = vlaneseq
    %v381 = vand.u32 %v380, 127
    %vm382 = vcmp.eq.s32.totalorder %v381, 11
    %v383 = vmul.f32 %v379, %v368
    %384 = vadd.xlane.f32.xlu0 %v383
    %v385 = vpop.xlane.xlu0 %384
    %v386 = vsel %vm382, %v385, %v368
    %v387 = vmul.f32 %v379, %v372
    %388 = vadd.xlane.f32.xlu0 %v387
    %v389 = vpop.xlane.xlu0 %388
    %v390 = vsel %vm382, %v389, %v372
    %v391 = vmul.f32 %v379, %v376
    %392 = vadd.xlane.f32.xlu0 %v391
    %v393 = vpop.xlane.xlu0 %392
    %v394 = vsel %vm382, %v393, %v376
    %s395 = scalar_lea.vmem [#allocation2], 10
    %v396 = vld [vmem:[%s395] ss:$0 sm:$0xff]
    %v397 = vxor.u32 %v396, 2147483648
    %v398 = vlaneseq
    %v399 = vand.u32 %v398, 127
    %vm400 = vcmp.eq.s32.totalorder %v399, 10
    %v401 = vmul.f32 %v397, %v386
    %402 = vadd.xlane.f32.xlu0 %v401
    %v403 = vpop.xlane.xlu0 %402
    %v404 = vsel %vm400, %v403, %v386
    %v405 = vmul.f32 %v397, %v390
    %406 = vadd.xlane.f32.xlu0 %v405
    %v407 = vpop.xlane.xlu0 %406
    %v408 = vsel %vm400, %v407, %v390
    %v409 = vmul.f32 %v397, %v394
    %410 = vadd.xlane.f32.xlu0 %v409
    %v411 = vpop.xlane.xlu0 %410
    %v412 = vsel %vm400, %v411, %v394
    %s413 = scalar_lea.vmem [#allocation2], 9
    %v414 = vld [vmem:[%s413] ss:$0 sm:$0xff]
    %v415 = vxor.u32 %v414, 2147483648
    %v416 = vlaneseq
    %v417 = vand.u32 %v416, 127
    %vm418 = vcmp.eq.s32.totalorder %v417, 9
    %v419 = vmul.f32 %v415, %v404
    %420 = vadd.xlane.f32.xlu0 %v419
    %v421 = vpop.xlane.xlu0 %420
    %v422 = vsel %vm418, %v421, %v404
    %v423 = vmul.f32 %v415, %v408
    %424 = vadd.xlane.f32.xlu0 %v423
    %v425 = vpop.xlane.xlu0 %424
    %v426 = vsel %vm418, %v425, %v408
    %v427 = vmul.f32 %v415, %v412
    %428 = vadd.xlane.f32.xlu0 %v427
    %v429 = vpop.xlane.xlu0 %428
    %v430 = vsel %vm418, %v429, %v412
    %s431 = scalar_lea.vmem [#allocation2], 8
    %v432 = vld [vmem:[%s431] ss:$0 sm:$0xff]
    %v433 = vxor.u32 %v432, 2147483648
    %v434 = vlaneseq
    %v435 = vand.u32 %v434, 127
    %vm436 = vcmp.eq.s32.totalorder %v435, 8
    %v437 = vmul.f32 %v433, %v422
    %438 = vadd.xlane.f32.xlu0 %v437
    %v439 = vpop.xlane.xlu0 %438
    %v440 = vsel %vm436, %v439, %v422
    %v441 = vmul.f32 %v433, %v426
    %442 = vadd.xlane.f32.xlu0 %v441
    %v443 = vpop.xlane.xlu0 %442
    %v444 = vsel %vm436, %v443, %v426
    %v445 = vmul.f32 %v433, %v430
    %446 = vadd.xlane.f32.xlu0 %v445
    %v447 = vpop.xlane.xlu0 %446
    %v448 = vsel %vm436, %v447, %v430
    %s449 = scalar_lea.vmem [#allocation2], 7
    %v450 = vld [vmem:[%s449] ss:$0 sm:$0xff]
    %v451 = vxor.u32 %v450, 2147483648
    %v452 = vlaneseq
    %v453 = vand.u32 %v452, 127
    %vm454 = vcmp.eq.s32.totalorder %v453, 7
    %v455 = vmul.f32 %v451, %v117
    %456 = vadd.xlane.f32.xlu0 %v455
    %v457 = vpop.xlane.xlu0 %456
    %v458 = vsel %vm454, %v457, %v117
    %v459 = vmul.f32 %v451, %v440
    %460 = vadd.xlane.f32.xlu0 %v459
    %v461 = vpop.xlane.xlu0 %460
    %v462 = vsel %vm454, %v461, %v440
    %v463 = vmul.f32 %v451, %v444
    %464 = vadd.xlane.f32.xlu0 %v463
    %v465 = vpop.xlane.xlu0 %464
    %v466 = vsel %vm454, %v465, %v444
    %v467 = vmul.f32 %v451, %v448
    %468 = vadd.xlane.f32.xlu0 %v467
    %v469 = vpop.xlane.xlu0 %468
    %v470 = vsel %vm454, %v469, %v448
    %s471 = scalar_lea.vmem [#allocation2], 6
    %v472 = vld [vmem:[%s471] ss:$0 sm:$0xff]
    %v473 = vxor.u32 %v472, 2147483648
    %v474 = vlaneseq
    %v475 = vand.u32 %v474, 127
    %vm476 = vcmp.eq.s32.totalorder %v475, 6
    %v477 = vmul.f32 %v473, %v458
    %478 = vadd.xlane.f32.xlu0 %v477
    %v479 = vpop.xlane.xlu0 %478
    %v480 = vsel %vm476, %v479, %v458
    %v481 = vmul.f32 %v473, %v462
    %482 = vadd.xlane.f32.xlu0 %v481
    %v483 = vpop.xlane.xlu0 %482
    %v484 = vsel %vm476, %v483, %v462
    %v485 = vmul.f32 %v473, %v466
    %486 = vadd.xlane.f32.xlu0 %v485
    %v487 = vpop.xlane.xlu0 %486
    %v488 = vsel %vm476, %v487, %v466
    %v489 = vmul.f32 %v473, %v470
    %490 = vadd.xlane.f32.xlu0 %v489
    %v491 = vpop.xlane.xlu0 %490
    %v492 = vsel %vm476, %v491, %v470
    %s493 = scalar_lea.vmem [#allocation2], 5
    %v494 = vld [vmem:[%s493] ss:$0 sm:$0xff]
    %v495 = vxor.u32 %v494, 2147483648
    %v496 = vlaneseq
    %v497 = vand.u32 %v496, 127
    %vm498 = vcmp.eq.s32.totalorder %v497, 5
    %v499 = vmul.f32 %v495, %v480
    %500 = vadd.xlane.f32.xlu0 %v499
    %v501 = vpop.xlane.xlu0 %500
    %v502 = vsel %vm498, %v501, %v480
    %v503 = vmul.f32 %v495, %v484
    %504 = vadd.xlane.f32.xlu0 %v503
    %v505 = vpop.xlane.xlu0 %504
    %v506 = vsel %vm498, %v505, %v484
    %v507 = vmul.f32 %v495, %v488
    %508 = vadd.xlane.f32.xlu0 %v507
    %v509 = vpop.xlane.xlu0 %508
    %v510 = vsel %vm498, %v509, %v488
    %v511 = vmul.f32 %v495, %v492
    %512 = vadd.xlane.f32.xlu0 %v511
    %v513 = vpop.xlane.xlu0 %512
    %v514 = vsel %vm498, %v513, %v492
    %s515 = scalar_lea.vmem [#allocation2], 4
    %v516 = vld [vmem:[%s515] ss:$0 sm:$0xff]
    %v517 = vxor.u32 %v516, 2147483648
    %v518 = vlaneseq
    %v519 = vand.u32 %v518, 127
    %vm520 = vcmp.eq.s32.totalorder %v519, 4
    %v521 = vmul.f32 %v517, %v502
    %522 = vadd.xlane.f32.xlu0 %v521
    %v523 = vpop.xlane.xlu0 %522
    %v524 = vsel %vm520, %v523, %v502
    %v525 = vmul.f32 %v517, %v506
    %526 = vadd.xlane.f32.xlu0 %v525
    %v527 = vpop.xlane.xlu0 %526
    %v528 = vsel %vm520, %v527, %v506
    %v529 = vmul.f32 %v517, %v510
    %530 = vadd.xlane.f32.xlu0 %v529
    %v531 = vpop.xlane.xlu0 %530
    %v532 = vsel %vm520, %v531, %v510
    %v533 = vmul.f32 %v517, %v514
    %534 = vadd.xlane.f32.xlu0 %v533
    %v535 = vpop.xlane.xlu0 %534
    %v536 = vsel %vm520, %v535, %v514
    %s537 = scalar_lea.vmem [#allocation2], 3
    %v538 = vld [vmem:[%s537] ss:$0 sm:$0xff]
    %v539 = vxor.u32 %v538, 2147483648
    %v540 = vlaneseq
    %v541 = vand.u32 %v540, 127
    %vm542 = vcmp.eq.s32.totalorder %v541, 3
    %v543 = vmul.f32 %v539, %v524
    %544 = vadd.xlane.f32.xlu0 %v543
    %v545 = vpop.xlane.xlu0 %544
    %v546 = vsel %vm542, %v545, %v524
    %v547 = vmul.f32 %v539, %v528
    %548 = vadd.xlane.f32.xlu0 %v547
    %v549 = vpop.xlane.xlu0 %548
    %v550 = vsel %vm542, %v549, %v528
    %v551 = vmul.f32 %v539, %v532
    %552 = vadd.xlane.f32.xlu0 %v551
    %v553 = vpop.xlane.xlu0 %552
    %v554 = vsel %vm542, %v553, %v532
    %v555 = vmul.f32 %v539, %v536
    %556 = vadd.xlane.f32.xlu0 %v555
    %v557 = vpop.xlane.xlu0 %556
    %v558 = vsel %vm542, %v557, %v536
    %s559 = scalar_lea.vmem [#allocation2], 2
    %v560 = vld [vmem:[%s559] ss:$0 sm:$0xff]
    %v561 = vxor.u32 %v560, 2147483648
    %v562 = vlaneseq
    %v563 = vand.u32 %v562, 127
    %vm564 = vcmp.eq.s32.totalorder %v563, 2
    %v565 = vmul.f32 %v561, %v546
    %566 = vadd.xlane.f32.xlu0 %v565
    %v567 = vpop.xlane.xlu0 %566
    %v568 = vsel %vm564, %v567, %v546
    %v569 = vmul.f32 %v561, %v550
    %570 = vadd.xlane.f32.xlu0 %v569
    %v571 = vpop.xlane.xlu0 %570
    %v572 = vsel %vm564, %v571, %v550
    %v573 = vmul.f32 %v561, %v554
    %574 = vadd.xlane.f32.xlu0 %v573
    %v575 = vpop.xlane.xlu0 %574
    %v576 = vsel %vm564, %v575, %v554
    %v577 = vmul.f32 %v561, %v558
    %578 = vadd.xlane.f32.xlu0 %v577
    %v579 = vpop.xlane.xlu0 %578
    %v580 = vsel %vm564, %v579, %v558
    %s581 = scalar_lea.vmem [#allocation2], 1
    %v582 = vld [vmem:[%s581] ss:$0 sm:$0xff]
    %v583 = vxor.u32 %v582, 2147483648
    %v584 = vlaneseq
    %v585 = vand.u32 %v584, 127
    %vm586 = vcmp.eq.s32.totalorder %v585, 1
    %v587 = vmul.f32 %v583, %v568
    %588 = vadd.xlane.f32.xlu0 %v587
    %v589 = vpop.xlane.xlu0 %588
    %v590 = vsel %vm586, %v589, %v568
    %v591 = vmul.f32 %v583, %v572
    %592 = vadd.xlane.f32.xlu0 %v591
    %v593 = vpop.xlane.xlu0 %592
    %v594 = vsel %vm586, %v593, %v572
    %v595 = vmul.f32 %v583, %v576
    %596 = vadd.xlane.f32.xlu0 %v595
    %v597 = vpop.xlane.xlu0 %596
    %v598 = vsel %vm586, %v597, %v576
    %v599 = vmul.f32 %v583, %v580
    %600 = vadd.xlane.f32.xlu0 %v599
    %v601 = vpop.xlane.xlu0 %600
    %v602 = vsel %vm586, %v601, %v580
    %v603 = vld [vmem:[#allocation2] ss:$0 sm:$0xff]
    %v604 = vxor.u32 %v603, 2147483648
    %v605 = vlaneseq
    %v606 = vand.u32 %v605, 127
    %vm607 = vcmp.eq.s32.totalorder %v606, 0
    %v608 = vmul.f32 %v604, %v590
    %609 = vadd.xlane.f32.xlu0 %v608
    %v610 = vpop.xlane.xlu0 %609
    %v611 = vsel %vm607, %v610, %v590
    %v612 = vmul.f32 %v604, %v594
    %613 = vadd.xlane.f32.xlu0 %v612
    %v614 = vpop.xlane.xlu0 %613
    %v615 = vsel %vm607, %v614, %v594
    %v616 = vmul.f32 %v604, %v598
    %617 = vadd.xlane.f32.xlu0 %v616
    %v618 = vpop.xlane.xlu0 %617
    %v619 = vsel %vm607, %v618, %v598
    %v620 = vmul.f32 %v604, %v602
    %621 = vadd.xlane.f32.xlu0 %v620
    %v622 = vpop.xlane.xlu0 %621
    %v623 = vsel %vm607, %v622, %v602
    %v624 = vrcp.pop %v56
    %v625 = vmul.f32 %v611, %v624
    %vm626 = vweird.f32 %v56
    %v627 = vsel %vm626, %v611, %v625
    %628 = vst [vmem:[#allocation1] sm:$0xff] %v627
    %v629 = vrcp.pop %v72
    %v630 = vmul.f32 %v615, %v629
    %vm631 = vweird.f32 %v72
    %v632 = vsel %vm631, %v615, %v630
    %s633 = scalar_lea.vmem [#allocation1], 8
    %634 = vst [vmem:[%s633] sm:$0xff] %v632
    %v635 = vrcp.pop %v88
    %v636 = vmul.f32 %v619, %v635
    %vm637 = vweird.f32 %v88
    %v638 = vsel %vm637, %v619, %v636
    %s639 = scalar_lea.vmem [#allocation1], 16
    %640 = vst [vmem:[%s639] sm:$0xff] %v638
    %v641 = vrcp.pop %v104
    %v642 = vmul.f32 %v623, %v641
    %vm643 = vweird.f32 %v104
    %v644 = vsel %vm643, %v623, %v642
    %s645 = scalar_lea.vmem [#allocation1], 24
    %646 = vst [vmem:[%s645] sm:$0xff] %v644
    // Predicated region
    $region36: #{custom-call.12} parent=1 // pred_check
      _
    $region37: #{custom-call.12} parent=1 // pred_check_branch
      %648 = sbr.rel (0) target = $region39
    $region38: #{custom-call.12} parent=1 // pred_region
      // Predicated region
      $region40: #{custom-call.12} parent=38 // pred_check
        _
      $region41: #{custom-call.12} parent=38 // pred_check_branch
        %650 = sbr.rel (0) target = $region43
      $region42: #{custom-call.12} parent=38 // pred_region
        // Predicated region
        $region55: #{custom-call.12} parent=42 // pred_check
          _
        $region56: #{custom-call.12} parent=42 // pred_check_branch
          %671 = sbr.rel (0) target = $region58
        $region57: #{custom-call.12} parent=42 // pred_region
          loop: start=0, step=1, limit=1
          $region59: #{custom-call.12} parent=57 // loop_pre_header
            _
          $region60: #{custom-call.12} parent=57 // loop_header
            %s673 = sphi 0, %s677
            %p674 = scmp.ge.s32.totalorder %s673, 1
            %s678 = sphi [#allocation1], [#allocation1]
            %s679 = sphi %s1, %s1
          $region61: #{custom-call.12} parent=57 // loop_header_branch
            %676 = sbr.rel (%p674) target = $region65
          $region62: #{custom-call.12} parent=57 // loop_body
            %v680 = vld [vmem:[%s678] sm:$0xff]
            %681 = vst [vmem:[%s679] sm:$0xff] %v680
            %v682 = vld [vmem:[%s678 + $0x8] sm:$0xff]
            %683 = vst [vmem:[%s679 + $0x8] sm:$0xff] %v682
            %v684 = vld [vmem:[%s678 + $0x10] sm:$0xff]
            %685 = vst [vmem:[%s679 + $0x10] sm:$0xff] %v684
            %v686 = vld [vmem:[%s678 + $0x18] sm:$0xff]
            %687 = vst [vmem:[%s679 + $0x18] sm:$0xff] %v686
          $region63: #{custom-call.12} parent=57 // loop_footer
            %s677 = sadd.s32 1, %s673
          $region64: #{custom-call.12} parent=57 // loop_footer_branch
            %672 = sbr.rel target = $region60
          $region65: #{custom-call.12} parent=57 // loop_exit
            _
        $region58: #{custom-call.12} parent=42 // pred_fallthru
          _
        // Predicated region
        $region66: #{custom-call.12} parent=42 // pred_check
          _
        $region67: #{custom-call.12} parent=42 // pred_check_branch
          %689 = sbr.rel target = $region69
        $region68: #{custom-call.12} parent=42 // pred_region
          _
        $region69: #{custom-call.12} parent=42 // pred_fallthru
          _
      $region43: #{custom-call.12} parent=38 // pred_fallthru
        _
      // Predicated region
      $region44: #{custom-call.12} parent=38 // pred_check
        _
      $region45: #{custom-call.12} parent=38 // pred_check_branch
        %652 = sbr.rel target = $region47
      $region46: #{custom-call.12} parent=38 // pred_region
        loop: start=0, step=1, limit=1
        $region48: #{custom-call.12} parent=46 // loop_pre_header
          _
        $region49: #{custom-call.12} parent=46 // loop_header
          %s655 = sphi 0, %s659
          %p656 = scmp.ge.s32.totalorder %s655, 1
          %s660 = sphi [#allocation1], [#allocation1]
          %s661 = sphi %s1, %s1
        $region50: #{custom-call.12} parent=46 // loop_header_branch
          %658 = sbr.rel (%p656) target = $region54
        $region51: #{custom-call.12} parent=46 // loop_body
          %v662 = vld [vmem:[%s660] sm:$0xff]
          %663 = vst [vmem:[%s661] sm:$0xff] %v662
          %v664 = vld [vmem:[%s660 + $0x8] sm:$0xff]
          %665 = vst [vmem:[%s661 + $0x8] sm:$0xff] %v664
          %v666 = vld [vmem:[%s660 + $0x10] sm:$0xff]
          %667 = vst [vmem:[%s661 + $0x10] sm:$0xff] %v666
          %v668 = vld [vmem:[%s660 + $0x18] sm:$0xff]
          %669 = vst [vmem:[%s661 + $0x18] sm:$0xff] %v668
        $region52: #{custom-call.12} parent=46 // loop_footer
          %s659 = sadd.s32 1, %s655
        $region53: #{custom-call.12} parent=46 // loop_footer_branch
          %654 = sbr.rel target = $region49
        $region54: #{custom-call.12} parent=46 // loop_exit
          _
      $region47: #{custom-call.12} parent=38 // pred_fallthru
        _
    $region39: #{custom-call.12} parent=1 // pred_fallthru
      _
    %690 = vnop

// kernel: dinn_forward.1
$region0: #{dinn_forward.1}
  #allocation0 [shape = 'u32[]', space=smem, size = 0x4, offset = 0x4, fixed_abs, tag = 'smem constant byte address 0x4 - core index']
  #allocation1 [shape = 'u32[144,128]{1,0:T(1,128)}', space=vmem, size = 0x12000, scoped, tag = 'internal scratch']
  #allocation2 [shape = 'f32[64,128]{1,0:T(8,128)}', space=vmem, size = 0x8000, scoped, tag = 'scratch operand']
  %s0 = inlined_call_operand.hbm [shape: f32[64,128], index: 0, kind: input, shape index: {}]
  %s1 = inlined_call_operand.hbm [shape: bf16[2,128,384], index: 1, kind: input, shape index: {}]
  %s2 = inlined_call_operand.vmem [shape: f32[2,1,384], index: 2, kind: input, shape index: {}]
  %s3 = inlined_call_operand.hbm [shape: bf16[2,128,128], index: 3, kind: input, shape index: {}]
  %s4 = inlined_call_operand.vmem [shape: f32[2,1,128], index: 4, kind: input, shape index: {}]
  %s5 = inlined_call_operand.vmem [shape: f32[2,1,128], index: 5, kind: input, shape index: {}]
  %s6 = inlined_call_operand.vmem [shape: f32[2,1,128], index: 6, kind: input, shape index: {}]
  %s7 = inlined_call_operand.hbm [shape: bf16[2,128,2048], index: 7, kind: input, shape index: {}]
  %s8 = inlined_call_operand.vmem [shape: f32[2,1,2048], index: 8, kind: input, shape index: {}]
  %s9 = inlined_call_operand.hbm [shape: bf16[2,2048,128], index: 9, kind: input, shape index: {}]
  %s10 = inlined_call_operand.vmem [shape: f32[2,1,128], index: 10, kind: input, shape index: {}]
  %s11 = inlined_call_operand.vmem [shape: f32[2,1,128], index: 11, kind: input, shape index: {}]
  %s12 = inlined_call_operand.vmem [shape: f32[2,1,128], index: 12, kind: input, shape index: {}]
  %s13 = inlined_call_operand.hbm [shape: bf16[128,128], index: 13, kind: input, shape index: {}]
  %s14 = inlined_call_operand.vmem [shape: f32[1,128], index: 14, kind: input, shape index: {}]
  %s15 = inlined_call_operand.vmem [shape: f32[128,128], index: 15, kind: output, shape index: {0}]
  %s16 = inlined_call_operand.vmem [shape: f32[1,128], index: 16, kind: output, shape index: {1}]
  %17 = xla_tuple %s15, %s16
  %s18 = sld [smem:[#allocation0]]
  $region133: #{dinn_forward.1} parent=0
    _
  %s20 = ssub.s32 1, %s18
  %s21 = scalar_select 0, %s20, %s18
  $region1: #{dinn_forward.1} parent=0
    #allocation3 [shape = 'u8[32768]{0}', space=vmem, size = 0x8000, scoped, tag = 'input window, operand 0, single buffered']
    #allocation4 [shape = 's32[2]{0}', space=sflag, size = 0x8, scoped, tag = 'scoped memory for dinn_forward.1']
    #allocation5 [shape = 'u8[196608]{0}', space=vmem, size = 0x30000, scoped, tag = 'input window, operand 1']
    #allocation6 [shape = 's32[2]{0}', space=sflag, size = 0x8, scoped, tag = 'scoped memory for dinn_forward.1']
    #allocation7 [shape = 'u8[65536]{0}', space=vmem, size = 0x10000, scoped, tag = 'input window, operand 3']
    #allocation8 [shape = 'u8[1048576]{0}', space=vmem, size = 0x100000, scoped, tag = 'input window, operand 7']
    #allocation9 [shape = 's32[2]{0}', space=sflag, size = 0x8, scoped, tag = 'scoped memory for dinn_forward.1']
    #allocation10 [shape = 'u8[1048576]{0}', space=vmem, size = 0x100000, scoped, tag = 'input window, operand 9']
    #allocation11 [shape = 'u8[32768]{0}', space=vmem, size = 0x8000, scoped, tag = 'input window, operand 13, single buffered']
    #allocation12 [shape = 's32[1]{0}', space=sflag, size = 0x4, scoped, tag = 'scoped memory for dinn_forward.1']
    %22 = vsyncpa [#allocation4], 0
    %23 = vsyncpa [#allocation6], 0
    %s24 = scalar_lea.sflag [#allocation6], 1
    %25 = vsyncpa %s24, 0
    %26 = vsyncpa [#allocation9], 0
    %s27 = scalar_lea.sflag [#allocation9], 1
    %28 = vsyncpa %s27, 0
    %29 = vsyncpa [#allocation12], 0
    loop: start=0, step=1, limit=4
    $region2: #{dinn_forward.1} parent=1 // loop_pre_header
      _
    $region3: #{dinn_forward.1} parent=1 // loop_header
      %s31 = sphi 0, %s35
      %p32 = scmp.ge.s32.totalorder %s31, 4
      %s39 = sphi 0, %s39
      %s41 = sphi 0, %s39
      %s42 = sphi 0, %s41
      %s56 = sphi 0, %s42
      %s62 = sphi 0, %s64
      %s65 = sphi 0, %s62
      %s66 = sphi 0, %s65
      %s82 = sphi 0, %s66
      %s88 = sphi 0, %s90
      %s91 = sphi 0, %s88
      %s92 = sphi 0, %s91
      %s108 = sphi 0, %s92
      %s114 = sphi 0, %s116
      %s117 = sphi 0, %s114
      %s118 = sphi 0, %s117
      %s134 = sphi 0, %s118
      %s140 = sphi 0, %s142
      %s143 = sphi 0, %s140
      %s144 = sphi 0, %s143
      %s160 = sphi 0, %s144
      %s166 = sphi 0, %s168
      %s169 = sphi 0, %s166
      %s170 = sphi 0, %s169
      %s186 = sphi 0, %s170
      %s192 = sphi 0, %s194
      %s195 = sphi 0, %s192
      %s196 = sphi 0, %s195
      %s212 = sphi 0, %s196
      %s218 = sphi 0, %s220
      %s221 = sphi 0, %s218
      %s222 = sphi 0, %s221
      %s238 = sphi 0, %s222
      %s244 = sphi 0, %s246
      %s247 = sphi 0, %s244
      %s248 = sphi 0, %s247
      %s264 = sphi 0, %s248
      %s270 = sphi 0, %s272
      %s273 = sphi 0, %s270
      %s274 = sphi 0, %s273
      %s290 = sphi 0, %s274
      %s296 = sphi 0, %s298
      %s299 = sphi 0, %s296
      %s300 = sphi 0, %s299
      %s316 = sphi 0, %s300
      %s322 = sphi 0, %s324
      %s325 = sphi 0, %s322
      %s326 = sphi 0, %s325
      %s342 = sphi 0, %s326
      %s348 = sphi 0, %s350
      %s351 = sphi 0, %s348
      %s352 = sphi 0, %s351
      %s368 = sphi 0, %s352
      %s372 = sphi 0, %s372
      %s374 = sphi 0, %s372
      %s375 = sphi 0, %s374
      %s389 = sphi 0, %s375
      %s393 = sphi 0, %s393
      %s395 = sphi 0, %s393
      %s396 = sphi 0, %s395
      %s410 = sphi 0, %s396
      %s414 = sphi 0, %s414
      %s416 = sphi 0, %s414
      %s417 = sphi 0, %s416
      %s431 = sphi 0, %s417
      %s435 = sphi 0, %s435
      %s437 = sphi 0, %s435
      %s438 = sphi 0, %s437
      %s452 = sphi 0, %s438
    $region4: #{dinn_forward.1} parent=1 // loop_header_branch
      %34 = sbr.rel (%p32) target = $region8
    $region5: #{dinn_forward.1} parent=1 // loop_body
      %s36 = ssub.s32 %s31, 1
      %s37 = ssub.s32 %s31, 2
      %s38 = sadd.s32 %s31, 1
      %s40 = sadd.s32 %s39, 1
      %p43 = scmp.eq.s32.totalorder %s31, 1
      %p44 = scmp.ne.s32.totalorder %s39, %s41
      %p45 = scmp.eq.s32.totalorder %s31, 0
      %p46 = por %p44, %p45
      %p47 = scmp.ne.s32.totalorder %s39, %s41
      %p48 = scmp.eq.s32.totalorder %s36, 1
      %p49 = por %p47, %p48
      %p50 = scmp.ne.s32.totalorder %s41, %s42
      %p51 = scmp.eq.s32.totalorder %s36, 0
      %p52 = por %p50, %p51
      %p53 = scmp.ne.s32.totalorder %s41, %s42
      %p54 = scmp.eq.s32.totalorder %s37, 1
      %p55 = por %p53, %p54
      %p57 = scmp.ne.s32.totalorder %s42, %s56
      %p58 = scmp.eq.s32.totalorder %s37, 0
      %p59 = por %p57, %p58
      %s60 = ssub.s32 %s31, %s38
      %p61 = scmp.eq.s32.totalorder %s60, 0
      %s63 = sadd.s32 %s62, 1
      %s64 = scalar_select %p61, %s62, %s63
      %p67 = pneg %p61
      %p68 = scmp.eq.s32.totalorder %s31, 1
      %p69 = por %p67, %p68
      %p70 = scmp.ne.s32.totalorder %s62, %s65
      %p71 = scmp.eq.s32.totalorder %s31, 0
      %p72 = por %p70, %p71
      %p73 = scmp.ne.s32.totalorder %s62, %s65
      %p74 = scmp.eq.s32.totalorder %s36, 1
      %p75 = por %p73, %p74
      %p76 = scmp.ne.s32.totalorder %s65, %s66
      %p77 = scmp.eq.s32.totalorder %s36, 0
      %p78 = por %p76, %p77
      %p79 = scmp.ne.s32.totalorder %s65, %s66
      %p80 = scmp.eq.s32.totalorder %s37, 1
      %p81 = por %p79, %p80
      %p83 = scmp.ne.s32.totalorder %s66, %s82
      %p84 = scmp.eq.s32.totalorder %s37, 0
      %p85 = por %p83, %p84
      %s86 = ssub.s32 %s31, %s38
      %p87 = scmp.eq.s32.totalorder %s86, 0
      %s89 = sadd.s32 %s88, 1
      %s90 = scalar_select %p87, %s88, %s89
      %p93 = pneg %p87
      %p94 = scmp.eq.s32.totalorder %s31, 1
      %p95 = por %p93, %p94
      %p96 = scmp.ne.s32.totalorder %s88, %s91
      %p97 = scmp.eq.s32.totalorder %s31, 0
      %p98 = por %p96, %p97
      %p99 = scmp.ne.s32.totalorder %s88, %s91
      %p100 = scmp.eq.s32.totalorder %s36, 1
      %p101 = por %p99, %p100
      %p102 = scmp.ne.s32.totalorder %s91, %s92
      %p103 = scmp.eq.s32.totalorder %s36, 0
      %p104 = por %p102, %p103
      %p105 = scmp.ne.s32.totalorder %s91, %s92
      %p106 = scmp.eq.s32.totalorder %s37, 1
      %p107 = por %p105, %p106
      %p109 = scmp.ne.s32.totalorder %s92, %s108
      %p110 = scmp.eq.s32.totalorder %s37, 0
      %p111 = por %p109, %p110
      %s112 = ssub.s32 %s31, %s38
      %p113 = scmp.eq.s32.totalorder %s112, 0
      %s115 = sadd.s32 %s114, 1
      %s116 = scalar_select %p113, %s114, %s115
      %p119 = pneg %p113
      %p120 = scmp.eq.s32.totalorder %s31, 1
      %p121 = por %p119, %p120
      %p122 = scmp.ne.s32.totalorder %s114, %s117
      %p123 = scmp.eq.s32.totalorder %s31, 0
      %p124 = por %p122, %p123
      %p125 = scmp.ne.s32.totalorder %s114, %s117
      %p126 = scmp.eq.s32.totalorder %s36, 1
      %p127 = por %p125, %p126
      %p128 = scmp.ne.s32.totalorder %s117, %s118
      %p129 = scmp.eq.s32.totalorder %s36, 0
      %p130 = por %p128, %p129
      %p131 = scmp.ne.s32.totalorder %s117, %s118
      %p132 = scmp.eq.s32.totalorder %s37, 1
      %p133 = por %p131, %p132
      %p135 = scmp.ne.s32.totalorder %s118, %s134
      %p136 = scmp.eq.s32.totalorder %s37, 0
      %p137 = por %p135, %p136
      %s138 = ssub.s32 %s31, %s38
      %p139 = scmp.eq.s32.totalorder %s138, 0
      %s141 = sadd.s32 %s140, 1
      %s142 = scalar_select %p139, %s140, %s141
      %p145 = pneg %p139
      %p146 = scmp.eq.s32.totalorder %s31, 1
      %p147 = por %p145, %p146
      %p148 = scmp.ne.s32.totalorder %s140, %s143
      %p149 = scmp.eq.s32.totalorder %s31, 0
      %p150 = por %p148, %p149
      %p151 = scmp.ne.s32.totalorder %s140, %s143
      %p152 = scmp.eq.s32.totalorder %s36, 1
      %p153 = por %p151, %p152
      %p154 = scmp.ne.s32.totalorder %s143, %s144
      %p155 = scmp.eq.s32.totalorder %s36, 0
      %p156 = por %p154, %p155
      %p157 = scmp.ne.s32.totalorder %s143, %s144
      %p158 = scmp.eq.s32.totalorder %s37, 1
      %p159 = por %p157, %p158
      %p161 = scmp.ne.s32.totalorder %s144, %s160
      %p162 = scmp.eq.s32.totalorder %s37, 0
      %p163 = por %p161, %p162
      %s164 = ssub.s32 %s31, %s38
      %p165 = scmp.eq.s32.totalorder %s164, 0
      %s167 = sadd.s32 %s166, 1
      %s168 = scalar_select %p165, %s166, %s167
      %p171 = pneg %p165
      %p172 = scmp.eq.s32.totalorder %s31, 1
      %p173 = por %p171, %p172
      %p174 = scmp.ne.s32.totalorder %s166, %s169
      %p175 = scmp.eq.s32.totalorder %s31, 0
      %p176 = por %p174, %p175
      %p177 = scmp.ne.s32.totalorder %s166, %s169
      %p178 = scmp.eq.s32.totalorder %s36, 1
      %p179 = por %p177, %p178
      %p180 = scmp.ne.s32.totalorder %s169, %s170
      %p181 = scmp.eq.s32.totalorder %s36, 0
      %p182 = por %p180, %p181
      %p183 = scmp.ne.s32.totalorder %s169, %s170
      %p184 = scmp.eq.s32.totalorder %s37, 1
      %p185 = por %p183, %p184
      %p187 = scmp.ne.s32.totalorder %s170, %s186
      %p188 = scmp.eq.s32.totalorder %s37, 0
      %p189 = por %p187, %p188
      %s190 = ssub.s32 %s31, %s38
      %p191 = scmp.eq.s32.totalorder %s190, 0
      %s193 = sadd.s32 %s192, 1
      %s194 = scalar_select %p191, %s192, %s193
      %p197 = pneg %p191
      %p198 = scmp.eq.s32.totalorder %s31, 1
      %p199 = por %p197, %p198
      %p200 = scmp.ne.s32.totalorder %s192, %s195
      %p201 = scmp.eq.s32.totalorder %s31, 0
      %p202 = por %p200, %p201
      %p203 = scmp.ne.s32.totalorder %s192, %s195
      %p204 = scmp.eq.s32.totalorder %s36, 1
      %p205 = por %p203, %p204
      %p206 = scmp.ne.s32.totalorder %s195, %s196
      %p207 = scmp.eq.s32.totalorder %s36, 0
      %p208 = por %p206, %p207
      %p209 = scmp.ne.s32.totalorder %s195, %s196
      %p210 = scmp.eq.s32.totalorder %s37, 1
      %p211 = por %p209, %p210
      %p213 = scmp.ne.s32.totalorder %s196, %s212
      %p214 = scmp.eq.s32.totalorder %s37, 0
      %p215 = por %p213, %p214
      %s216 = ssub.s32 %s31, %s38
      %p217 = scmp.eq.s32.totalorder %s216, 0
      %s219 = sadd.s32 %s218, 1
      %s220 = scalar_select %p217, %s218, %s219
      %p223 = pneg %p217
      %p224 = scmp.eq.s32.totalorder %s31, 1
      %p225 = por %p223, %p224
      %p226 = scmp.ne.s32.totalorder %s218, %s221
      %p227 = scmp.eq.s32.totalorder %s31, 0
      %p228 = por %p226, %p227
      %p229 = scmp.ne.s32.totalorder %s218, %s221
      %p230 = scmp.eq.s32.totalorder %s36, 1
      %p231 = por %p229, %p230
      %p232 = scmp.ne.s32.totalorder %s221, %s222
      %p233 = scmp.eq.s32.totalorder %s36, 0
      %p234 = por %p232, %p233
      %p235 = scmp.ne.s32.totalorder %s221, %s222
      %p236 = scmp.eq.s32.totalorder %s37, 1
      %p237 = por %p235, %p236
      %p239 = scmp.ne.s32.totalorder %s222, %s238
      %p240 = scmp.eq.s32.totalorder %s37, 0
      %p241 = por %p239, %p240
      %s242 = ssub.s32 %s31, %s38
      %p243 = scmp.eq.s32.totalorder %s242, 0
      %s245 = sadd.s32 %s244, 1
      %s246 = scalar_select %p243, %s244, %s245
      %p249 = pneg %p243
      %p250 = scmp.eq.s32.totalorder %s31, 1
      %p251 = por %p249, %p250
      %p252 = scmp.ne.s32.totalorder %s244, %s247
      %p253 = scmp.eq.s32.totalorder %s31, 0
      %p254 = por %p252, %p253
      %p255 = scmp.ne.s32.totalorder %s244, %s247
      %p256 = scmp.eq.s32.totalorder %s36, 1
      %p257 = por %p255, %p256
      %p258 = scmp.ne.s32.totalorder %s247, %s248
      %p259 = scmp.eq.s32.totalorder %s36, 0
      %p260 = por %p258, %p259
      %p261 = scmp.ne.s32.totalorder %s247, %s248
      %p262 = scmp.eq.s32.totalorder %s37, 1
      %p263 = por %p261, %p262
      %p265 = scmp.ne.s32.totalorder %s248, %s264
      %p266 = scmp.eq.s32.totalorder %s37, 0
      %p267 = por %p265, %p266
      %s268 = ssub.s32 %s31, %s38
      %p269 = scmp.eq.s32.totalorder %s268, 0
      %s271 = sadd.s32 %s270, 1
      %s272 = scalar_select %p269, %s270, %s271
      %p275 = pneg %p269
      %p276 = scmp.eq.s32.totalorder %s31, 1
      %p277 = por %p275, %p276
      %p278 = scmp.ne.s32.totalorder %s270, %s273
      %p279 = scmp.eq.s32.totalorder %s31, 0
      %p280 = por %p278, %p279
      %p281 = scmp.ne.s32.totalorder %s270, %s273
      %p282 = scmp.eq.s32.totalorder %s36, 1
      %p283 = por %p281, %p282
      %p284 = scmp.ne.s32.totalorder %s273, %s274
      %p285 = scmp.eq.s32.totalorder %s36, 0
      %p286 = por %p284, %p285
      %p287 = scmp.ne.s32.totalorder %s273, %s274
      %p288 = scmp.eq.s32.totalorder %s37, 1
      %p289 = por %p287, %p288
      %p291 = scmp.ne.s32.totalorder %s274, %s290
      %p292 = scmp.eq.s32.totalorder %s37, 0
      %p293 = por %p291, %p292
      %s294 = ssub.s32 %s31, %s38
      %p295 = scmp.eq.s32.totalorder %s294, 0
      %s297 = sadd.s32 %s296, 1
      %s298 = scalar_select %p295, %s296, %s297
      %p301 = pneg %p295
      %p302 = scmp.eq.s32.totalorder %s31, 1
      %p303 = por %p301, %p302
      %p304 = scmp.ne.s32.totalorder %s296, %s299
      %p305 = scmp.eq.s32.totalorder %s31, 0
      %p306 = por %p304, %p305
      %p307 = scmp.ne.s32.totalorder %s296, %s299
      %p308 = scmp.eq.s32.totalorder %s36, 1
      %p309 = por %p307, %p308
      %p310 = scmp.ne.s32.totalorder %s299, %s300
      %p311 = scmp.eq.s32.totalorder %s36, 0
      %p312 = por %p310, %p311
      %p313 = scmp.ne.s32.totalorder %s299, %s300
      %p314 = scmp.eq.s32.totalorder %s37, 1
      %p315 = por %p313, %p314
      %p317 = scmp.ne.s32.totalorder %s300, %s316
      %p318 = scmp.eq.s32.totalorder %s37, 0
      %p319 = por %p317, %p318
      %s320 = ssub.s32 %s31, %s38
      %p321 = scmp.eq.s32.totalorder %s320, 0
      %s323 = sadd.s32 %s322, 1
      %s324 = scalar_select %p321, %s322, %s323
      %p327 = pneg %p321
      %p328 = scmp.eq.s32.totalorder %s31, 1
      %p329 = por %p327, %p328
      %p330 = scmp.ne.s32.totalorder %s322, %s325
      %p331 = scmp.eq.s32.totalorder %s31, 0
      %p332 = por %p330, %p331
      %p333 = scmp.ne.s32.totalorder %s322, %s325
      %p334 = scmp.eq.s32.totalorder %s36, 1
      %p335 = por %p333, %p334
      %p336 = scmp.ne.s32.totalorder %s325, %s326
      %p337 = scmp.eq.s32.totalorder %s36, 0
      %p338 = por %p336, %p337
      %p339 = scmp.ne.s32.totalorder %s325, %s326
      %p340 = scmp.eq.s32.totalorder %s37, 1
      %p341 = por %p339, %p340
      %p343 = scmp.ne.s32.totalorder %s326, %s342
      %p344 = scmp.eq.s32.totalorder %s37, 0
      %p345 = por %p343, %p344
      %s346 = ssub.s32 %s31, %s38
      %p347 = scmp.eq.s32.totalorder %s346, 0
      %s349 = sadd.s32 %s348, 1
      %s350 = scalar_select %p347, %s348, %s349
      %p353 = pneg %p347
      %p354 = scmp.eq.s32.totalorder %s31, 1
      %p355 = por %p353, %p354
      %p356 = scmp.ne.s32.totalorder %s348, %s351
      %p357 = scmp.eq.s32.totalorder %s31, 0
      %p358 = por %p356, %p357
      %p359 = scmp.ne.s32.totalorder %s348, %s351
      %p360 = scmp.eq.s32.totalorder %s36, 1
      %p361 = por %p359, %p360
      %p362 = scmp.ne.s32.totalorder %s351, %s352
      %p363 = scmp.eq.s32.totalorder %s36, 0
      %p364 = por %p362, %p363
      %p365 = scmp.ne.s32.totalorder %s351, %s352
      %p366 = scmp.eq.s32.totalorder %s37, 1
      %p367 = por %p365, %p366
      %p369 = scmp.ne.s32.totalorder %s352, %s368
      %p370 = scmp.eq.s32.totalorder %s37, 0
      %p371 = por %p369, %p370
      %s373 = sadd.s32 %s372, 1
      %p376 = scmp.eq.s32.totalorder %s31, 1
      %p377 = scmp.ne.s32.totalorder %s372, %s374
      %p378 = scmp.eq.s32.totalorder %s31, 0
      %p379 = por %p377, %p378
      %p380 = scmp.ne.s32.totalorder %s372, %s374
      %p381 = scmp.eq.s32.totalorder %s36, 1
      %p382 = por %p380, %p381
      %p383 = scmp.ne.s32.totalorder %s374, %s375
      %p384 = scmp.eq.s32.totalorder %s36, 0
      %p385 = por %p383, %p384
      %p386 = scmp.ne.s32.totalorder %s374, %s375
      %p387 = scmp.eq.s32.totalorder %s37, 1
      %p388 = por %p386, %p387
      %p390 = scmp.ne.s32.totalorder %s375, %s389
      %p391 = scmp.eq.s32.totalorder %s37, 0
      %p392 = por %p390, %p391
      %s394 = sadd.s32 %s393, 1
      %p397 = scmp.eq.s32.totalorder %s31, 1
      %p398 = scmp.ne.s32.totalorder %s393, %s395
      %p399 = scmp.eq.s32.totalorder %s31, 0
      %p400 = por %p398, %p399
      %p401 = scmp.ne.s32.totalorder %s393, %s395
      %p402 = scmp.eq.s32.totalorder %s36, 1
      %p403 = por %p401, %p402
      %p404 = scmp.ne.s32.totalorder %s395, %s396
      %p405 = scmp.eq.s32.totalorder %s36, 0
      %p406 = por %p404, %p405
      %p407 = scmp.ne.s32.totalorder %s395, %s396
      %p408 = scmp.eq.s32.totalorder %s37, 1
      %p409 = por %p407, %p408
      %p411 = scmp.ne.s32.totalorder %s396, %s410
      %p412 = scmp.eq.s32.totalorder %s37, 0
      %p413 = por %p411, %p412
      %s415 = sadd.s32 %s414, 1
      %p418 = scmp.eq.s32.totalorder %s31, 1
      %p419 = scmp.ne.s32.totalorder %s414, %s416
      %p420 = scmp.eq.s32.totalorder %s31, 0
      %p421 = por %p419, %p420
      %p422 = scmp.ne.s32.totalorder %s414, %s416
      %p423 = scmp.eq.s32.totalorder %s36, 1
      %p424 = por %p422, %p423
      %p425 = scmp.ne.s32.totalorder %s416, %s417
      %p426 = scmp.eq.s32.totalorder %s36, 0
      %p427 = por %p425, %p426
      %p428 = scmp.ne.s32.totalorder %s416, %s417
      %p429 = scmp.eq.s32.totalorder %s37, 1
      %p430 = por %p428, %p429
      %p432 = scmp.ne.s32.totalorder %s417, %s431
      %p433 = scmp.eq.s32.totalorder %s37, 0
      %p434 = por %p432, %p433
      %s436 = sadd.s32 %s435, 1
      %p439 = scmp.eq.s32.totalorder %s31, 1
      %p440 = scmp.ne.s32.totalorder %s435, %s437
      %p441 = scmp.eq.s32.totalorder %s31, 0
      %p442 = por %p440, %p441
      %p443 = scmp.ne.s32.totalorder %s435, %s437
      %p444 = scmp.eq.s32.totalorder %s36, 1
      %p445 = por %p443, %p444
      %p446 = scmp.ne.s32.totalorder %s437, %s438
      %p447 = scmp.eq.s32.totalorder %s36, 0
      %p448 = por %p446, %p447
      %p449 = scmp.ne.s32.totalorder %s437, %s438
      %p450 = scmp.eq.s32.totalorder %s37, 1
      %p451 = por %p449, %p450
      %p453 = scmp.ne.s32.totalorder %s438, %s452
      %p454 = scmp.eq.s32.totalorder %s37, 0
      %p455 = por %p453, %p454
      %p456 = scmp.le.s32.totalorder 1, %s31
      %p457 = scmp.lt.s32.totalorder %s31, 3
      %p458 = pnand %p456, %p457
      %p459 = pneg %p458
      // Predicated region
      $region9: #{dinn_forward.1} parent=5 // pred_check
        _
      $region10: #{dinn_forward.1} parent=5 // pred_check_branch
        %461 = sbr.rel (%p458) target = $region12
      $region11: #{dinn_forward.1} parent=5 // pred_region
        %s462 = ssub.s32 %s31, 1
        // Predicated region
        $region13: #{dinn_forward.1} parent=11 // pred_check
          %p463 = pneg %p52
        $region14: #{dinn_forward.1} parent=11 // pred_check_branch
          %465 = sbr.rel (%p463) target = $region16
        $region15: #{dinn_forward.1} parent=11 // pred_region
          %s467 = ssub.s32 1024, 1024
          %468 = vsyncadd [#allocation4], %s467
          %s469 = sshll.u32 [#allocation3], 4
          %s470 = int_to_ptr.vmem [resolvable:$true] %s469
          %475 = dma.hbm_to_vmem [thread:$0]  %s0, 1024, %s470, [#allocation4], 128, 128, 8
        $region16: #{dinn_forward.1} parent=11 // pred_fallthru
          _
        // Predicated region
        $region17: #{dinn_forward.1} parent=11 // pred_check
          %p476 = pneg %p385
        $region18: #{dinn_forward.1} parent=11 // pred_check_branch
          %478 = sbr.rel (%p476) target = $region20
        $region19: #{dinn_forward.1} parent=11 // pred_region
          %s480 = ssub.s32 1024, 1024
          %481 = vsyncadd [#allocation12], %s480
          %s482 = sshll.u32 [#allocation11], 4
          %s483 = int_to_ptr.vmem [resolvable:$true] %s482
          %488 = dma.hbm_to_vmem [thread:$0]  %s13, 1024, %s483, [#allocation12], 64, 64, 4
        $region20: #{dinn_forward.1} parent=11 // pred_fallthru
          _
        // Predicated region
        $region21: #{dinn_forward.1} parent=11 // pred_check
          %p489 = pneg %p406
        $region22: #{dinn_forward.1} parent=11 // pred_check_branch
          %491 = sbr.rel (%p489) target = $region24
        $region23: #{dinn_forward.1} parent=11 // pred_region
          _
        $region24: #{dinn_forward.1} parent=11 // pred_fallthru
          _
      $region12: #{dinn_forward.1} parent=5 // pred_fallthru
        _
      %p492 = scmp.lt.s32.totalorder %s31, 2
      // Predicated region
      $region25: #{dinn_forward.1} parent=5 // pred_check
        %p493 = pneg %p492
      $region26: #{dinn_forward.1} parent=5 // pred_check_branch
        %495 = sbr.rel (%p493) target = $region28
      $region27: #{dinn_forward.1} parent=5 // pred_region
        // Predicated region
        $region29: #{dinn_forward.1} parent=27 // pred_check
          %p496 = pneg %p72
        $region30: #{dinn_forward.1} parent=27 // pred_check_branch
          %498 = sbr.rel (%p496) target = $region32
        $region31: #{dinn_forward.1} parent=27 // pred_region
          %s499 = sand.u32 %s31, 1
          %s500 = scalar_lea.sflag [#allocation6], %s499
          %s501 = sand.u32 %s62, 1
          %s502 = smul.addr %s501, 192
          %s503 = scalar_lea.vmem [#allocation5], %s502
          %s505 = ssub.s32 3072, 3072
          %506 = vsyncadd %s500, %s505
          %s507 = smul.addr %s31, 48
          %s508 = smul.addr %s507, 64
          %s509 = scalar_lea.hbm %s1, %s508
          %s510 = sshll.u32 %s503, 4
          %s511 = int_to_ptr.vmem [resolvable:$true] %s510
          %516 = dma.hbm_to_vmem [thread:$0]  %s509, 3072, %s511, %s500, 192, 192, 12
        $region32: #{dinn_forward.1} parent=27 // pred_fallthru
          _
        // Predicated region
        $region33: #{dinn_forward.1} parent=27 // pred_check
          %p517 = pneg %p98
        $region34: #{dinn_forward.1} parent=27 // pred_check_branch
          %519 = sbr.rel (%p517) target = $region36
        $region35: #{dinn_forward.1} parent=27 // pred_region
          %p520 = scmp.lt.s32.totalorder %s31, 1
          %s521 = scalar_select %p520, %s31, 1
          %s522 = smul.addr %s521, 3
          %s523 = scalar_lea.vmem %s2, %s522
        $region36: #{dinn_forward.1} parent=27 // pred_fallthru
          _
        // Predicated region
        $region37: #{dinn_forward.1} parent=27 // pred_check
          %p524 = pneg %p124
        $region38: #{dinn_forward.1} parent=27 // pred_check_branch
          %526 = sbr.rel (%p524) target = $region40
        $region39: #{dinn_forward.1} parent=27 // pred_region
          %s527 = sand.u32 %s31, 1
          %s528 = scalar_lea.sflag [#allocation6], %s527
          %s529 = sand.u32 %s114, 1
          %s530 = smul.addr %s529, 64
          %s531 = scalar_lea.vmem [#allocation7], %s530
          %s533 = ssub.s32 1024, 1024
          %534 = vsyncadd %s528, %s533
          %s535 = smul.addr %s31, 16
          %s536 = smul.addr %s535, 64
          %s537 = scalar_lea.hbm %s3, %s536
          %s538 = sshll.u32 %s531, 4
          %s539 = int_to_ptr.vmem [resolvable:$true] %s538
          %544 = dma.hbm_to_vmem [thread:$0]  %s537, 1024, %s539, %s528, 64, 64, 4
        $region40: #{dinn_forward.1} parent=27 // pred_fallthru
          _
        // Predicated region
        $region41: #{dinn_forward.1} parent=27 // pred_check
          %p545 = pneg %p150
        $region42: #{dinn_forward.1} parent=27 // pred_check_branch
          %547 = sbr.rel (%p545) target = $region44
        $region43: #{dinn_forward.1} parent=27 // pred_region
          %p548 = scmp.lt.s32.totalorder %s31, 1
          %s549 = scalar_select %p548, %s31, 1
          %s550 = scalar_lea.vmem %s4, %s549
        $region44: #{dinn_forward.1} parent=27 // pred_fallthru
          _
        // Predicated region
        $region45: #{dinn_forward.1} parent=27 // pred_check
          %p551 = pneg %p176
        $region46: #{dinn_forward.1} parent=27 // pred_check_branch
          %553 = sbr.rel (%p551) target = $region48
        $region47: #{dinn_forward.1} parent=27 // pred_region
          %p554 = scmp.lt.s32.totalorder %s31, 1
          %s555 = scalar_select %p554, %s31, 1
          %s556 = scalar_lea.vmem %s5, %s555
        $region48: #{dinn_forward.1} parent=27 // pred_fallthru
          _
        // Predicated region
        $region49: #{dinn_forward.1} parent=27 // pred_check
          %p557 = pneg %p202
        $region50: #{dinn_forward.1} parent=27 // pred_check_branch
          %559 = sbr.rel (%p557) target = $region52
        $region51: #{dinn_forward.1} parent=27 // pred_region
          %p560 = scmp.lt.s32.totalorder %s31, 1
          %s561 = scalar_select %p560, %s31, 1
          %s562 = scalar_lea.vmem %s6, %s561
        $region52: #{dinn_forward.1} parent=27 // pred_fallthru
          _
        // Predicated region
        $region53: #{dinn_forward.1} parent=27 // pred_check
          %p563 = pneg %p228
        $region54: #{dinn_forward.1} parent=27 // pred_check_branch
          %565 = sbr.rel (%p563) target = $region56
        $region55: #{dinn_forward.1} parent=27 // pred_region
          %s566 = sand.u32 %s31, 1
          %s567 = scalar_lea.sflag [#allocation9], %s566
          %s568 = sand.u32 %s218, 1
          %s569 = smul.addr %s568, 1024
          %s570 = scalar_lea.vmem [#allocation8], %s569
          %s572 = ssub.s32 16384, 16384
          %573 = vsyncadd %s567, %s572
          %s574 = smul.addr %s31, 256
          %s575 = smul.addr %s574, 64
          %s576 = scalar_lea.hbm %s7, %s575
          %s577 = sshll.u32 %s570, 4
          %s578 = int_to_ptr.vmem [resolvable:$true] %s577
          %583 = dma.hbm_to_vmem [thread:$0]  %s576, 16384, %s578, %s567, 1024, 1024, 64
        $region56: #{dinn_forward.1} parent=27 // pred_fallthru
          _
        // Predicated region
        $region57: #{dinn_forward.1} parent=27 // pred_check
          %p584 = pneg %p254
        $region58: #{dinn_forward.1} parent=27 // pred_check_branch
          %586 = sbr.rel (%p584) target = $region60
        $region59: #{dinn_forward.1} parent=27 // pred_region
          %p587 = scmp.lt.s32.totalorder %s31, 1
          %s588 = scalar_select %p587, %s31, 1
          %s589 = smul.addr %s588, 16
          %s590 = scalar_lea.vmem %s8, %s589
        $region60: #{dinn_forward.1} parent=27 // pred_fallthru
          _
        // Predicated region
        $region61: #{dinn_forward.1} parent=27 // pred_check
          %p591 = pneg %p280
        $region62: #{dinn_forward.1} parent=27 // pred_check_branch
          %593 = sbr.rel (%p591) target = $region64
        $region63: #{dinn_forward.1} parent=27 // pred_region
          %s594 = sand.u32 %s31, 1
          %s595 = scalar_lea.sflag [#allocation9], %s594
          %s596 = sand.u32 %s270, 1
          %s597 = smul.addr %s596, 1024
          %s598 = scalar_lea.vmem [#allocation10], %s597
          %s600 = ssub.s32 16384, 16384
          %601 = vsyncadd %s595, %s600
          %s602 = smul.addr %s31, 256
          %s603 = smul.addr %s602, 64
          %s604 = scalar_lea.hbm %s9, %s603
          %s605 = sshll.u32 %s598, 4
          %s606 = int_to_ptr.vmem [resolvable:$true] %s605
          %611 = dma.hbm_to_vmem [thread:$0]  %s604, 16384, %s606, %s595, 64, 64, 4
        $region64: #{dinn_forward.1} parent=27 // pred_fallthru
          _
        // Predicated region
        $region65: #{dinn_forward.1} parent=27 // pred_check
          %p612 = pneg %p306
        $region66: #{dinn_forward.1} parent=27 // pred_check_branch
          %614 = sbr.rel (%p612) target = $region68
        $region67: #{dinn_forward.1} parent=27 // pred_region
          %p615 = scmp.lt.s32.totalorder %s31, 1
          %s616 = scalar_select %p615, %s31, 1
          %s617 = scalar_lea.vmem %s10, %s616
        $region68: #{dinn_forward.1} parent=27 // pred_fallthru
          _
        // Predicated region
        $region69: #{dinn_forward.1} parent=27 // pred_check
          %p618 = pneg %p332
        $region70: #{dinn_forward.1} parent=27 // pred_check_branch
          %620 = sbr.rel (%p618) target = $region72
        $region71: #{dinn_forward.1} parent=27 // pred_region
          %p621 = scmp.lt.s32.totalorder %s31, 1
          %s622 = scalar_select %p621, %s31, 1
          %s623 = scalar_lea.vmem %s11, %s622
        $region72: #{dinn_forward.1} parent=27 // pred_fallthru
          _
        // Predicated region
        $region73: #{dinn_forward.1} parent=27 // pred_check
          %p624 = pneg %p358
        $region74: #{dinn_forward.1} parent=27 // pred_check_branch
          %626 = sbr.rel (%p624) target = $region76
        $region75: #{dinn_forward.1} parent=27 // pred_region
          %p627 = scmp.lt.s32.totalorder %s31, 1
          %s628 = scalar_select %p627, %s31, 1
          %s629 = scalar_lea.vmem %s12, %s628
        $region76: #{dinn_forward.1} parent=27 // pred_fallthru
          _
      $region28: #{dinn_forward.1} parent=5 // pred_fallthru
        _
      %p630 = scmp.le.s32.totalorder 1, %s31
      %p631 = scmp.lt.s32.totalorder %s31, 3
      %p632 = pnand %p630, %p631
      %p633 = pneg %p632
      // Predicated region
      $region77: #{dinn_forward.1} parent=5 // pred_check
        _
      $region78: #{dinn_forward.1} parent=5 // pred_check_branch
        %635 = sbr.rel (%p632) target = $region80
      $region79: #{dinn_forward.1} parent=5 // pred_region
        %s636 = ssub.s32 %s31, 1
        // Predicated region
        $region81: #{dinn_forward.1} parent=79 // pred_check
          %p637 = pneg %p52
        $region82: #{dinn_forward.1} parent=79 // pred_check_branch
          %639 = sbr.rel (%p637) target = $region84
        $region83: #{dinn_forward.1} parent=79 // pred_region
          %640 = dma.done [#allocation4], 1024
        $region84: #{dinn_forward.1} parent=79 // pred_fallthru
          _
        %s641 = sand.u32 %s36, 1
        %s642 = scalar_lea.sflag [#allocation6], %s641
        %s643 = sand.u32 %s65, 1
        %s644 = smul.addr %s643, 192
        %s645 = scalar_lea.vmem [#allocation5], %s644
        // Predicated region
        $region85: #{dinn_forward.1} parent=79 // pred_check
          %p646 = pneg %p78
        $region86: #{dinn_forward.1} parent=79 // pred_check_branch
          %648 = sbr.rel (%p646) target = $region88
        $region87: #{dinn_forward.1} parent=79 // pred_region
          %649 = dma.done %s642, 3072
        $region88: #{dinn_forward.1} parent=79 // pred_fallthru
          _
        %s650 = sand.u32 %s36, 1
        %s651 = scalar_lea.sflag [#allocation6], %s650
        %s652 = sand.u32 %s117, 1
        %s653 = smul.addr %s652, 64
        %s654 = scalar_lea.vmem [#allocation7], %s653
        // Predicated region
        $region89: #{dinn_forward.1} parent=79 // pred_check
          %p655 = pneg %p130
        $region90: #{dinn_forward.1} parent=79 // pred_check_branch
          %657 = sbr.rel (%p655) target = $region92
        $region91: #{dinn_forward.1} parent=79 // pred_region
          %658 = dma.done %s651, 1024
        $region92: #{dinn_forward.1} parent=79 // pred_fallthru
          _
        %s659 = sand.u32 %s36, 1
        %s660 = scalar_lea.sflag [#allocation9], %s659
        %s661 = sand.u32 %s221, 1
        %s662 = smul.addr %s661, 1024
        %s663 = scalar_lea.vmem [#allocation8], %s662
        // Predicated region
        $region93: #{dinn_forward.1} parent=79 // pred_check
          %p664 = pneg %p234
        $region94: #{dinn_forward.1} parent=79 // pred_check_branch
          %666 = sbr.rel (%p664) target = $region96
        $region95: #{dinn_forward.1} parent=79 // pred_region
          %667 = dma.done %s660, 16384
        $region96: #{dinn_forward.1} parent=79 // pred_fallthru
          _
        %s668 = sand.u32 %s36, 1
        %s669 = scalar_lea.sflag [#allocation9], %s668
        %s670 = sand.u32 %s273, 1
        %s671 = smul.addr %s670, 1024
        %s672 = scalar_lea.vmem [#allocation10], %s671
        // Predicated region
        $region97: #{dinn_forward.1} parent=79 // pred_check
          %p673 = pneg %p286
        $region98: #{dinn_forward.1} parent=79 // pred_check_branch
          %675 = sbr.rel (%p673) target = $region100
        $region99: #{dinn_forward.1} parent=79 // pred_region
          %676 = dma.done %s669, 16384
        $region100: #{dinn_forward.1} parent=79 // pred_fallthru
          _
        // Predicated region
        $region101: #{dinn_forward.1} parent=79 // pred_check
          %p677 = pneg %p385
        $region102: #{dinn_forward.1} parent=79 // pred_check_branch
          %679 = sbr.rel (%p677) target = $region104
        $region103: #{dinn_forward.1} parent=79 // pred_region
          %680 = dma.done [#allocation12], 1024
        $region104: #{dinn_forward.1} parent=79 // pred_fallthru
          _
        %p681 = pneg %p52
        %p682 = pneg %p49
        %s683 = sand.u32 %s36, 1
        %s684 = scalar_lea.sflag [#allocation6], %s683
        %s685 = sand.u32 %s65, 1
        %s686 = smul.addr %s685, 192
        %s687 = scalar_lea.vmem [#allocation5], %s686
        %p688 = pneg %p78
        %p689 = pneg %p75
        %p690 = scmp.lt.s32.totalorder %s36, 1
        %s691 = scalar_select %p690, %s36, 1
        %s692 = smul.addr %s691, 3
        %s693 = scalar_lea.vmem %s2, %s692
        %p694 = pneg %p104
        %p695 = pneg %p101
        %s696 = sand.u32 %s36, 1
        %s697 = scalar_lea.sflag [#allocation6], %s696
        %s698 = sand.u32 %s117, 1
        %s699 = smul.addr %s698, 64
        %s700 = scalar_lea.vmem [#allocation7], %s699
        %p701 = pneg %p130
        %p702 = pneg %p127
        %p703 = scmp.lt.s32.totalorder %s36, 1
        %s704 = scalar_select %p703, %s36, 1
        %s705 = scalar_lea.vmem %s4, %s704
        %p706 = pneg %p156
        %p707 = pneg %p153
        %p708 = scmp.lt.s32.totalorder %s36, 1
        %s709 = scalar_select %p708, %s36, 1
        %s710 = scalar_lea.vmem %s5, %s709
        %p711 = pneg %p182
        %p712 = pneg %p179
        %p713 = scmp.lt.s32.totalorder %s36, 1
        %s714 = scalar_select %p713, %s36, 1
        %s715 = scalar_lea.vmem %s6, %s714
        %p716 = pneg %p208
        %p717 = pneg %p205
        %s718 = sand.u32 %s36, 1
        %s719 = scalar_lea.sflag [#allocation9], %s718
        %s720 = sand.u32 %s221, 1
        %s721 = smul.addr %s720, 1024
        %s722 = scalar_lea.vmem [#allocation8], %s721
        %p723 = pneg %p234
        %p724 = pneg %p231
        %p725 = scmp.lt.s32.totalorder %s36, 1
        %s726 = scalar_select %p725, %s36, 1
        %s727 = smul.addr %s726, 16
        %s728 = scalar_lea.vmem %s8, %s727
        %p729 = pneg %p260
        %p730 = pneg %p257
        %s731 = sand.u32 %s36, 1
        %s732 = scalar_lea.sflag [#allocation9], %s731
        %s733 = sand.u32 %s273, 1
        %s734 = smul.addr %s733, 1024
        %s735 = scalar_lea.vmem [#allocation10], %s734
        %p736 = pneg %p286
        %p737 = pneg %p283
        %p738 = scmp.lt.s32.totalorder %s36, 1
        %s739 = scalar_select %p738, %s36, 1
        %s740 = scalar_lea.vmem %s10, %s739
        %p741 = pneg %p312
        %p742 = pneg %p309
        %p743 = scmp.lt.s32.totalorder %s36, 1
        %s744 = scalar_select %p743, %s36, 1
        %s745 = scalar_lea.vmem %s11, %s744
        %p746 = pneg %p338
        %p747 = pneg %p335
        %p748 = scmp.lt.s32.totalorder %s36, 1
        %s749 = scalar_select %p748, %s36, 1
        %s750 = scalar_lea.vmem %s12, %s749
        %p751 = pneg %p364
        %p752 = pneg %p361
        %p753 = pneg %p385
        %p754 = pneg %p382
        %p755 = pneg %p406
        %p756 = pneg %p403
        %p757 = pneg %p427
        %p758 = pneg %p424
        %p759 = pneg %p448
        %p760 = pneg %p445
        %p761 = scmp.lt.s32.totalorder %s36, 1
        %s762 = scalar_select %p761, %s36, 1
        %s763 = smul.addr %s762, 3
        %s764 = scalar_lea.vmem %s2, %s763
        %p765 = scmp.lt.s32.totalorder %s36, 1
        %s766 = scalar_select %p765, %s36, 1
        %s767 = scalar_lea.vmem %s4, %s766
        %p768 = scmp.lt.s32.totalorder %s36, 1
        %s769 = scalar_select %p768, %s36, 1
        %s770 = scalar_lea.vmem %s5, %s769
        %p771 = scmp.lt.s32.totalorder %s36, 1
        %s772 = scalar_select %p771, %s36, 1
        %s773 = scalar_lea.vmem %s6, %s772
        %p774 = scmp.lt.s32.totalorder %s36, 1
        %s775 = scalar_select %p774, %s36, 1
        %s776 = smul.addr %s775, 16
        %s777 = scalar_lea.vmem %s8, %s776
        %p778 = scmp.lt.s32.totalorder %s36, 1
        %s779 = scalar_select %p778, %s36, 1
        %s780 = scalar_lea.vmem %s10, %s779
        %p781 = scmp.lt.s32.totalorder %s36, 1
        %s782 = scalar_select %p781, %s36, 1
        %s783 = scalar_lea.vmem %s11, %s782
        %p784 = scmp.lt.s32.totalorder %s36, 1
        %s785 = scalar_select %p784, %s36, 1
        %s786 = scalar_lea.vmem %s12, %s785
        %p788 = scmp.eq.s32.totalorder %s36, 0
        // Predicated region
        $region105: #{dinn_forward.1} parent=79 // pred_check
          %p789 = pneg %p788
        $region106: #{dinn_forward.1} parent=79 // pred_check_branch
          %791 = sbr.rel (%p789) target = $region108
        $region107: #{dinn_forward.1} parent=79 // pred_region
          %v792 = vld [vmem:[#allocation3] sm:$0xff]
          %v793 = vld [vmem:[#allocation3 + $0x8] sm:$0xff]
          %v794 = vld [vmem:[#allocation3 + $0x10] sm:$0xff]
          %v795 = vld [vmem:[#allocation3 + $0x18] sm:$0xff]
          %v796 = vld [vmem:[#allocation3 + $0x20] sm:$0xff]
          %v797 = vld [vmem:[#allocation3 + $0x28] sm:$0xff]
          %v798 = vld [vmem:[#allocation3 + $0x30] sm:$0xff]
          %v799 = vld [vmem:[#allocation3 + $0x38] sm:$0xff]
          %800 = vst [vmem:[#allocation2] sm:$0xff] %v792
          %801 = vst [vmem:[#allocation2 + $0x8] sm:$0xff] %v793
          %802 = vst [vmem:[#allocation2 + $0x10] sm:$0xff] %v794
          %803 = vst [vmem:[#allocation2 + $0x18] sm:$0xff] %v795
          %804 = vst [vmem:[#allocation2 + $0x20] sm:$0xff] %v796
          %805 = vst [vmem:[#allocation2 + $0x28] sm:$0xff] %v797
          %806 = vst [vmem:[#allocation2 + $0x30] sm:$0xff] %v798
          %807 = vst [vmem:[#allocation2 + $0x38] sm:$0xff] %v799
        $region108: #{dinn_forward.1} parent=79 // pred_fallthru
          _
        %v808 = vld [vmem:[#allocation2] sm:$0xff]
        %v809 = vld [vmem:[#allocation2 + $0x8] sm:$0xff]
        %v810 = vld [vmem:[#allocation2 + $0x10] sm:$0xff]
        %v811 = vld [vmem:[#allocation2 + $0x18] sm:$0xff]
        %v812 = vld [vmem:[#allocation2 + $0x20] sm:$0xff]
        %v813 = vld [vmem:[#allocation2 + $0x28] sm:$0xff]
        %v814 = vld [vmem:[#allocation2 + $0x30] sm:$0xff]
        %v815 = vld [vmem:[#allocation2 + $0x38] sm:$0xff]
        %v816 = vpack.c.bf16 %v809, %v808
        %v817 = vpack.c.bf16 %v811, %v810
        %v818 = vpack.c.bf16 %v813, %v812
        %v819 = vpack.c.bf16 %v815, %v814
        %v820 = vld [vmem:[%s645] sm:$0xff]
        %v821 = vld [vmem:[%s645 + $0x8] sm:$0xf]
        %v822 = vld [vmem:[%s645 + $0xc] sm:$0xff]
        %v823 = vld [vmem:[%s645 + $0x14] sm:$0xf]
        %v824 = vld [vmem:[%s645 + $0x18] sm:$0xff]
        %v825 = vld [vmem:[%s645 + $0x20] sm:$0xf]
        %v826 = vld [vmem:[%s645 + $0x24] sm:$0xff]
        %v827 = vld [vmem:[%s645 + $0x2c] sm:$0xf]
        %v828 = vld [vmem:[%s645 + $0x30] sm:$0xff]
        %v829 = vld [vmem:[%s645 + $0x38] sm:$0xf]
        %v830 = vld [vmem:[%s645 + $0x3c] sm:$0xff]
        %v831 = vld [vmem:[%s645 + $0x44] sm:$0xf]
        %v832 = vld [vmem:[%s645 + $0x48] sm:$0xff]
        %v833 = vld [vmem:[%s645 + $0x50] sm:$0xf]
        %v834 = vld [vmem:[%s645 + $0x54] sm:$0xff]
        %v835 = vld [vmem:[%s645 + $0x5c] sm:$0xf]
        %v836 = vld [vmem:[%s645 + $0x60] sm:$0xff]
        %v837 = vld [vmem:[%s645 + $0x68] sm:$0xf]
        %v838 = vld [vmem:[%s645 + $0x6c] sm:$0xff]
        %v839 = vld [vmem:[%s645 + $0x74] sm:$0xf]
        %v840 = vld [vmem:[%s645 + $0x78] sm:$0xff]
        %v841 = vld [vmem:[%s645 + $0x80] sm:$0xf]
        %v842 = vld [vmem:[%s645 + $0x84] sm:$0xff]
        %v843 = vld [vmem:[%s645 + $0x8c] sm:$0xf]
        %v844 = vld [vmem:[%s645 + $0x90] sm:$0xff]
        %v845 = vld [vmem:[%s645 + $0x98] sm:$0xf]
        %v846 = vld [vmem:[%s645 + $0x9c] sm:$0xff]
        %v847 = vld [vmem:[%s645 + $0xa4] sm:$0xf]
        %v848 = vld [vmem:[%s645 + $0xa8] sm:$0xff]
        %v849 = vld [vmem:[%s645 + $0xb0] sm:$0xf]
        %v850 = vld [vmem:[%s645 + $0xb4] sm:$0xff]
        %v851 = vld [vmem:[%s645 + $0xbc] sm:$0xf]
        %v852 = vld [vmem:[%s764] sm:$0x7]
        %v854 = vlaneseq
        %v855 = vshrl.u32 %v854, 7
        %v856 = vsub.s32 0, %v855
        %v857 = vrot.slane %v852, %v856
        %v858 = vlaneseq
        %v859 = vshrl.u32 %v858, 7
        %v860 = vsub.s32 1, %v859
        %v861 = vrot.slane %v852, %v860
        %v862 = vlaneseq
        %v863 = vshrl.u32 %v862, 7
        %v864 = vsub.s32 2, %v863
        %v865 = vrot.slane %v852, %v864
        %v901 = vunpack.c.l.b16 %v820
        %v902 = vunpack.c.h.b16 %v820
        %v903 = vunpack.c.l.b16 %v821
        %v904 = vunpack.c.l.b16 %v822
        %v905 = vunpack.c.h.b16 %v822
        %v906 = vunpack.c.l.b16 %v823
        %v907 = vunpack.c.l.b16 %v824
        %v908 = vunpack.c.h.b16 %v824
        %v909 = vunpack.c.l.b16 %v825
        %v910 = vunpack.c.l.b16 %v826
        %v911 = vunpack.c.h.b16 %v826
        %v912 = vunpack.c.l.b16 %v827
        %v913 = vunpack.c.l.b16 %v828
        %v914 = vunpack.c.h.b16 %v828
        %v915 = vunpack.c.l.b16 %v829
        %v916 = vunpack.c.l.b16 %v830
        %v917 = vunpack.c.h.b16 %v830
        %v918 = vunpack.c.l.b16 %v831
        %v919 = vunpack.c.l.b16 %v832
        %v920 = vunpack.c.h.b16 %v832
        %v921 = vunpack.c.l.b16 %v833
        %v922 = vunpack.c.l.b16 %v834
        %v923 = vunpack.c.h.b16 %v834
        %v924 = vunpack.c.l.b16 %v835
        %v925 = vunpack.c.l.b16 %v836
        %v926 = vunpack.c.h.b16 %v836
        %v927 = vunpack.c.l.b16 %v837
        %v928 = vunpack.c.l.b16 %v838
        %v929 = vunpack.c.h.b16 %v838
        %v930 = vunpack.c.l.b16 %v839
        %v931 = vunpack.c.l.b16 %v840
        %v932 = vunpack.c.h.b16 %v840
        %v933 = vunpack.c.l.b16 %v841
        %v934 = vunpack.c.l.b16 %v842
        %v935 = vunpack.c.h.b16 %v842
        %v936 = vunpack.c.l.b16 %v843
        %v937 = vunpack.c.l.b16 %v844
        %v938 = vunpack.c.h.b16 %v844
        %v939 = vunpack.c.l.b16 %v845
        %v940 = vunpack.c.l.b16 %v846
        %v941 = vunpack.c.h.b16 %v846
        %v942 = vunpack.c.l.b16 %v847
        %v943 = vunpack.c.l.b16 %v848
        %v944 = vunpack.c.h.b16 %v848
        %v945 = vunpack.c.l.b16 %v849
        %v946 = vunpack.c.l.b16 %v850
        %v947 = vunpack.c.h.b16 %v850
        %v948 = vunpack.c.l.b16 %v851
        %v949 = vpack.c.b16 %v904, %v901
        %v950 = vpack.c.b16 %v905, %v902
        %v951 = vpack.c.b16 %v906, %v903
        %v952 = vpack.c.b16 %v910, %v907
        %v953 = vpack.c.b16 %v911, %v908
        %v954 = vpack.c.b16 %v912, %v909
        %v955 = vpack.c.b16 %v916, %v913
        %v956 = vpack.c.b16 %v917, %v914
        %v957 = vpack.c.b16 %v918, %v915
        %v958 = vpack.c.b16 %v922, %v919
        %v959 = vpack.c.b16 %v923, %v920
        %v960 = vpack.c.b16 %v924, %v921
        %v961 = vpack.c.b16 %v928, %v925
        %v962 = vpack.c.b16 %v929, %v926
        %v963 = vpack.c.b16 %v930, %v927
        %v964 = vpack.c.b16 %v934, %v931
        %v965 = vpack.c.b16 %v935, %v932
        %v966 = vpack.c.b16 %v936, %v933
        %v967 = vpack.c.b16 %v940, %v937
        %v968 = vpack.c.b16 %v941, %v938
        %v969 = vpack.c.b16 %v942, %v939
        %v970 = vpack.c.b16 %v946, %v943
        %v971 = vpack.c.b16 %v947, %v944
        %v972 = vpack.c.b16 %v948, %v945
        %997 = vmatprep.subr.bf16.mxu0 %v950
        %998 = vmatpush1.bf16.msra.mxu0 %v949
        %999 = vmatprep.subr.bf16.mxu0 %v953
        %1000 = vmatpush1.bf16.msra.mxu0 %v952
        %1001 = vmatprep.subr.bf16.mxu0 %v956
        %1002 = vmatpush1.bf16.msra.mxu0 %v955
        %1003 = vmatprep.subr.bf16.mxu0 %v959
        %1004 = vmatpush1.bf16.msra.mxu0 %v958
        %1005 = vmatprep.subr.bf16.mxu0 %v962
        %1006 = vmatpush1.bf16.msra.mxu0 %v961
        %1007 = vmatprep.subr.bf16.mxu0 %v965
        %1008 = vmatpush1.bf16.msra.mxu0 %v964
        %1009 = vmatprep.subr.bf16.mxu0 %v968
        %1010 = vmatpush1.bf16.msra.mxu0 %v967
        %1011 = vmatprep.subr.bf16.mxu0 %v971
        %1012 = vmatpush1.bf16.msra.mxu0 %v970
        %1013 = vmatprep.subr.bf16.mxu0 0
        %1014 = vmatpush1.bf16.msra.mxu0 0
        %1015 = vmatprep.subr.bf16.mxu0 0
        %1016 = vmatpush1.bf16.msra.mxu0 0
        %1017 = vmatprep.subr.bf16.mxu0 0
        %1018 = vmatpush1.bf16.msra.mxu0 0
        %1019 = vmatprep.subr.bf16.mxu0 0
        %1020 = vmatpush1.bf16.msra.mxu0 0
        %1021 = vmatprep.subr.bf16.mxu0 0
        %1022 = vmatpush1.bf16.msra.mxu0 0
        %1023 = vmatprep.subr.bf16.mxu0 0
        %1024 = vmatpush1.bf16.msra.mxu0 0
        %1025 = vmatprep.subr.bf16.mxu0 0
        %1026 = vmatpush1.bf16.msra.mxu0 0
        %1027 = vmatprep.subr.bf16.mxu0 0
        %1028 = vmatpush1.bf16.msra.mxu0 0
        %1029 = vmatprep.mubr.bf16.mxu0 0
        %1030 = vmatmul.mubr.bf16.gmra.mrb[0].mxu0 %v816
        %v1031 = vpop.f32.mrb[0].mxu0
        %v1032 = vadd.f32 %v857, %v1031
        %v1033 = vpop.f32.mrb[0].mxu0
        %v1034 = vadd.f32 %v861, %v1033
        %v1035 = vpop.f32.mrb[0].mxu0
        %v1036 = vadd.f32 %v857, %v1035
        %v1037 = vpop.f32.mrb[0].mxu0
        %v1038 = vadd.f32 %v861, %v1037
        %1039 = vmatprep.mubr.bf16.mxu0 0
        %1040 = vmatmul.mubr.bf16.gmra.mrb[0].mxu0 %v817
        %v1041 = vpop.f32.mrb[0].mxu0
        %v1042 = vadd.f32 %v857, %v1041
        %v1043 = vpop.f32.mrb[0].mxu0
        %v1044 = vadd.f32 %v861, %v1043
        %v1045 = vpop.f32.mrb[0].mxu0
        %v1046 = vadd.f32 %v857, %v1045
        %v1047 = vpop.f32.mrb[0].mxu0
        %v1048 = vadd.f32 %v861, %v1047
        %1049 = vmatprep.mubr.bf16.mxu0 0
        %1050 = vmatmul.mubr.bf16.gmra.mrb[0].mxu0 %v818
        %v1051 = vpop.f32.mrb[0].mxu0
        %v1052 = vadd.f32 %v857, %v1051
        %v1053 = vpop.f32.mrb[0].mxu0
        %v1054 = vadd.f32 %v861, %v1053
        %v1055 = vpop.f32.mrb[0].mxu0
        %v1056 = vadd.f32 %v857, %v1055
        %v1057 = vpop.f32.mrb[0].mxu0
        %v1058 = vadd.f32 %v861, %v1057
        %1059 = vmatprep.mubr.bf16.mxu0 0
        %1060 = vmatmul.mubr.bf16.gmra.mrb[0].mxu0 %v819
        %v1061 = vpop.f32.mrb[0].mxu0
        %v1062 = vadd.f32 %v857, %v1061
        %v1063 = vpop.f32.mrb[0].mxu0
        %v1064 = vadd.f32 %v861, %v1063
        %v1065 = vpop.f32.mrb[0].mxu0
        %v1066 = vadd.f32 %v857, %v1065
        %v1067 = vpop.f32.mrb[0].mxu0
        %v1068 = vadd.f32 %v861, %v1067
        %1069 = vdwg.mxu0
        %1070 = vmatprep.subr.bf16.mxu0 0
        %1071 = vmatpush1.bf16.msra.mxu0 %v951
        %1072 = vmatprep.subr.bf16.mxu0 0
        %1073 = vmatpush1.bf16.msra.mxu0 %v954
        %1074 = vmatprep.subr.bf16.mxu0 0
        %1075 = vmatpush1.bf16.msra.mxu0 %v957
        %1076 = vmatprep.subr.bf16.mxu0 0
        %1077 = vmatpush1.bf16.msra.mxu0 %v960
        %1078 = vmatprep.subr.bf16.mxu0 0
        %1079 = vmatpush1.bf16.msra.mxu0 %v963
        %1080 = vmatprep.subr.bf16.mxu0 0
        %1081 = vmatpush1.bf16.msra.mxu0 %v966
        %1082 = vmatprep.subr.bf16.mxu0 0
        %1083 = vmatpush1.bf16.msra.mxu0 %v969
        %1084 = vmatprep.subr.bf16.mxu0 0
        %1085 = vmatpush1.bf16.msra.mxu0 %v972
        %1086 = vmatprep.subr.bf16.mxu0 0
        %1087 = vmatpush1.bf16.msra.mxu0 0
        %1088 = vmatprep.subr.bf16.mxu0 0
        %1089 = vmatpush1.bf16.msra.mxu0 0
        %1090 = vmatprep.subr.bf16.mxu0 0
        %1091 = vmatpush1.bf16.msra.mxu0 0
        %1092 = vmatprep.subr.bf16.mxu0 0
        %1093 = vmatpush1.bf16.msra.mxu0 0
        %1094 = vmatprep.subr.bf16.mxu0 0
        %1095 = vmatpush1.bf16.msra.mxu0 0
        %1096 = vmatprep.subr.bf16.mxu0 0
        %1097 = vmatpush1.bf16.msra.mxu0 0
        %1098 = vmatprep.subr.bf16.mxu0 0
        %1099 = vmatpush1.bf16.msra.mxu0 0
        %1100 = vmatprep.subr.bf16.mxu0 0
        %1101 = vmatpush1.bf16.msra.mxu0 0
        %1102 = vmatprep.mubr.bf16.mxu0 0
        %1103 = vmatmul.mubr.bf16.gmra.mrb[0].mxu0 %v816
        %v1104 = vpop.f32.mrb[0].mxu0
        %v1105 = vadd.f32 %v865, %v1104
        %v1106 = vpop.f32.mrb[0].mxu0
        %v1107 = vpop.f32.mrb[0].mxu0
        %v1108 = vadd.f32 %v865, %v1107
        %v1109 = vpop.f32.mrb[0].mxu0
        %1110 = vmatprep.mubr.bf16.mxu0 0
        %1111 = vmatmul.mubr.bf16.gmra.mrb[0].mxu0 %v817
        %v1112 = vpop.f32.mrb[0].mxu0
        %v1113 = vadd.f32 %v865, %v1112
        %v1114 = vpop.f32.mrb[0].mxu0
        %v1115 = vpop.f32.mrb[0].mxu0
        %v1116 = vadd.f32 %v865, %v1115
        %v1117 = vpop.f32.mrb[0].mxu0
        %1118 = vmatprep.mubr.bf16.mxu0 0
        %1119 = vmatmul.mubr.bf16.gmra.mrb[0].mxu0 %v818
        %v1120 = vpop.f32.mrb[0].mxu0
        %v1121 = vadd.f32 %v865, %v1120
        %v1122 = vpop.f32.mrb[0].mxu0
        %v1123 = vpop.f32.mrb[0].mxu0
        %v1124 = vadd.f32 %v865, %v1123
        %v1125 = vpop.f32.mrb[0].mxu0
        %1126 = vmatprep.mubr.bf16.mxu0 0
        %1127 = vmatmul.mubr.bf16.gmra.mrb[0].mxu0 %v819
        %v1128 = vpop.f32.mrb[0].mxu0
        %v1129 = vadd.f32 %v865, %v1128
        %v1130 = vpop.f32.mrb[0].mxu0
        %v1131 = vpop.f32.mrb[0].mxu0
        %v1132 = vadd.f32 %v865, %v1131
        %v1133 = vpop.f32.mrb[0].mxu0
        %1134 = vdwg.mxu0
        %v1135 = vld [vmem:[%s654] sm:$0xf]
        %v1136 = vld [vmem:[%s654 + $0x4] sm:$0xf]
        %v1137 = vld [vmem:[%s654 + $0x8] sm:$0xf]
        %v1138 = vld [vmem:[%s654 + $0xc] sm:$0xf]
        %v1139 = vld [vmem:[%s654 + $0x10] sm:$0xf]
        %v1140 = vld [vmem:[%s654 + $0x14] sm:$0xf]
        %v1141 = vld [vmem:[%s654 + $0x18] sm:$0xf]
        %v1142 = vld [vmem:[%s654 + $0x1c] sm:$0xf]
        %v1143 = vld [vmem:[%s654 + $0x20] sm:$0xf]
        %v1144 = vld [vmem:[%s654 + $0x24] sm:$0xf]
        %v1145 = vld [vmem:[%s654 + $0x28] sm:$0xf]
        %v1146 = vld [vmem:[%s654 + $0x2c] sm:$0xf]
        %v1147 = vld [vmem:[%s654 + $0x30] sm:$0xf]
        %v1148 = vld [vmem:[%s654 + $0x34] sm:$0xf]
        %v1149 = vld [vmem:[%s654 + $0x38] sm:$0xf]
        %v1150 = vld [vmem:[%s654 + $0x3c] sm:$0xf]
        %v1151 = vpack.c.bf16 %v1036, %v1032
        %v1152 = vpack.c.bf16 %v1046, %v1042
        %v1153 = vpack.c.bf16 %v1056, %v1052
        %v1154 = vpack.c.bf16 %v1066, %v1062
        %v1155 = vpack.c.bf16 %v1038, %v1034
        %v1156 = vpack.c.bf16 %v1048, %v1044
        %v1157 = vpack.c.bf16 %v1058, %v1054
        %v1158 = vpack.c.bf16 %v1068, %v1064
        %v1159 = vpack.c.bf16 %v1108, %v1105
        %v1160 = vpack.c.bf16 %v1116, %v1113
        %v1161 = vpack.c.bf16 %v1124, %v1121
        %v1162 = vpack.c.bf16 %v1132, %v1129
        %vm1163 = vcmask 261120
        %v1165 = vsel %vm1163, %v1151, 0
        %v1168 = vsel %vm1163, %v1152, 0
        %v1171 = vsel %vm1163, %v1153, 0
        %v1174 = vsel %vm1163, %v1154, 0
        %v1177 = vsel %vm1163, %v1155, 0
        %v1180 = vsel %vm1163, %v1156, 0
        %v1183 = vsel %vm1163, %v1157, 0
        %v1186 = vsel %vm1163, %v1158, 0
        %1188 = vmatprep.subr.bf16.mxu0 0
        %1189 = vmatpush1.bf16.xpose.msra.mxu0 %v1177
        %1190 = vmatprep.subr.bf16.mxu0 0
        %1191 = vmatpush1.bf16.xpose.msra.mxu0 %v1180
        %1192 = vmatprep.subr.bf16.mxu0 0
        %1193 = vmatpush1.bf16.xpose.msra.mxu0 %v1183
        %1194 = vmatprep.subr.bf16.mxu0 0
        %1195 = vmatpush1.bf16.xpose.msra.mxu0 %v1186
        %1196 = vmatprep.subr.bf16.mxu0 0
        %1197 = vmatpush1.bf16.xpose.msra.mxu0 0
        %1198 = vmatprep.subr.bf16.mxu0 0
        %1199 = vmatpush1.bf16.xpose.msra.mxu0 0
        %1200 = vmatprep.subr.bf16.mxu0 0
        %1201 = vmatpush1.bf16.xpose.msra.mxu0 0
        %1202 = vmatprep.subr.bf16.mxu0 0
        %1203 = vmatpush1.bf16.xpose.msra.mxu0 0
        %1204 = vmatprep.subr.bf16.mxu0 0
        %1205 = vmatpush1.bf16.xpose.msra.mxu0 0
        %1206 = vmatprep.subr.bf16.mxu0 0
        %1207 = vmatpush1.bf16.xpose.msra.mxu0 0
        %1208 = vmatprep.subr.bf16.mxu0 0
        %1209 = vmatpush1.bf16.xpose.msra.mxu0 0
        %1210 = vmatprep.subr.bf16.mxu0 0
        %1211 = vmatpush1.bf16.xpose.msra.mxu0 0
        %1212 = vmatprep.subr.bf16.mxu0 0
        %1213 = vmatpush1.bf16.xpose.msra.mxu0 0
        %1214 = vmatprep.subr.bf16.mxu0 0
        %1215 = vmatpush1.bf16.xpose.msra.mxu0 0
        %1216 = vmatprep.subr.bf16.mxu0 0
        %1217 = vmatpush1.bf16.xpose.msra.mxu0 0
        %1218 = vmatprep.subr.bf16.mxu0 0
        %1219 = vmatpush1.bf16.xpose.msra.mxu0 0
        %1220 = vmatprep.mubr.bf16.mxu0 0
        %1221 = vmatmul.mubr.bf16.gmra.mrb[0].mxu0 %v1165
        %v1222 = vpop.f32.mrb[0].mxu0
        %v1223 = vadd.f32 0.0, %v1222
        %v1224 = vpop.f32.mrb[0].mxu0
        %v1225 = vpop.f32.mrb[0].mxu0
        %v1226 = vadd.f32 0.0, %v1225
        %v1227 = vpop.f32.mrb[0].mxu0
        %1228 = vmatprep.mubr.bf16.mxu0 0
        %1229 = vmatmul.mubr.bf16.gmra.mrb[0].mxu0 %v1168
        %v1230 = vpop.f32.mrb[0].mxu0
        %v1231 = vadd.f32 0.0, %v1230
        %v1232 = vpop.f32.mrb[0].mxu0
        %v1233 = vpop.f32.mrb[0].mxu0
        %v1234 = vadd.f32 0.0, %v1233
        %v1235 = vpop.f32.mrb[0].mxu0
        %1236 = vmatprep.mubr.bf16.mxu0 0
        %1237 = vmatmul.mubr.bf16.gmra.mrb[0].mxu0 %v1171
        %v1238 = vpop.f32.mrb[0].mxu0
        %v1239 = vadd.f32 0.0, %v1238
        %v1240 = vpop.f32.mrb[0].mxu0
        %v1241 = vpop.f32.mrb[0].mxu0
        %v1242 = vadd.f32 0.0, %v1241
        %v1243 = vpop.f32.mrb[0].mxu0
        %1244 = vmatprep.mubr.bf16.mxu0 0
        %1245 = vmatmul.mubr.bf16.gmra.mrb[0].mxu0 %v1174
        %v1246 = vpop.f32.mrb[0].mxu0
        %v1247 = vadd.f32 0.0, %v1246
        %v1248 = vpop.f32.mrb[0].mxu0
        %v1249 = vpop.f32.mrb[0].mxu0
        %v1250 = vadd.f32 0.0, %v1249
        %v1251 = vpop.f32.mrb[0].mxu0
        %1252 = vdwg.mxu0
        %vm1253 = vcmask 523264
        %v1254 = vsel %vm1253, %v1223, -inf
        %1255 = vmax.xlane.f32.xlu0 %v1254
        %v1256 = vpop.xlane.xlu0 %1255
        %v1257 = vsel %vm1253, %v1226, -inf
        %1258 = vmax.xlane.f32.xlu0 %v1257
        %v1259 = vpop.xlane.xlu0 %1258
        %v1260 = vsel %vm1253, %v1231, -inf
        %1261 = vmax.xlane.f32.xlu0 %v1260
        %v1262 = vpop.xlane.xlu0 %1261
        %v1263 = vsel %vm1253, %v1234, -inf
        %1264 = vmax.xlane.f32.xlu0 %v1263
        %v1265 = vpop.xlane.xlu0 %1264
        %v1266 = vsel %vm1253, %v1239, -inf
        %1267 = vmax.xlane.f32.xlu0 %v1266
        %v1268 = vpop.xlane.xlu0 %1267
        %v1269 = vsel %vm1253, %v1242, -inf
        %1270 = vmax.xlane.f32.xlu0 %v1269
        %v1271 = vpop.xlane.xlu0 %1270
        %v1272 = vsel %vm1253, %v1247, -inf
        %1273 = vmax.xlane.f32.xlu0 %v1272
        %v1274 = vpop.xlane.xlu0 %1273
        %v1275 = vsel %vm1253, %v1250, -inf
        %1276 = vmax.xlane.f32.xlu0 %v1275
        %v1277 = vpop.xlane.xlu0 %1276
        %v1278 = vsub.f32 %v1223, %v1256
        %v1279 = vsub.f32 %v1226, %v1259
        %v1280 = vsub.f32 %v1231, %v1262
        %v1281 = vsub.f32 %v1234, %v1265
        %v1282 = vsub.f32 %v1239, %v1268
        %v1283 = vsub.f32 %v1242, %v1271
        %v1284 = vsub.f32 %v1247, %v1274
        %v1285 = vsub.f32 %v1250, %v1277
        %v1286 = vmul.f32 %v1278, 1.442695
        %v1287 = vpow.pop %v1286
        %v1288 = vmul.f32 %v1279, 1.442695
        %v1289 = vpow.pop %v1288
        %v1290 = vmul.f32 %v1280, 1.442695
        %v1291 = vpow.pop %v1290
        %v1292 = vmul.f32 %v1281, 1.442695
        %v1293 = vpow.pop %v1292
        %v1294 = vmul.f32 %v1282, 1.442695
        %v1295 = vpow.pop %v1294
        %v1296 = vmul.f32 %v1283, 1.442695
        %v1297 = vpow.pop %v1296
        %v1298 = vmul.f32 %v1284, 1.442695
        %v1299 = vpow.pop %v1298
        %v1300 = vmul.f32 %v1285, 1.442695
        %v1301 = vpow.pop %v1300
        %v1302 = vsel %vm1253, %v1287, 0.0
        %1303 = vadd.xlane.f32.xlu0 %v1302
        %v1304 = vpop.xlane.xlu0 %1303
        %v1305 = vsel %vm1253, %v1289, 0.0
        %1306 = vadd.xlane.f32.xlu0 %v1305
        %v1307 = vpop.xlane.xlu0 %1306
        %v1308 = vsel %vm1253, %v1291, 0.0
        %1309 = vadd.xlane.f32.xlu0 %v1308
        %v1310 = vpop.xlane.xlu0 %1309
        %v1311 = vsel %vm1253, %v1293, 0.0
        %1312 = vadd.xlane.f32.xlu0 %v1311
        %v1313 = vpop.xlane.xlu0 %1312
        %v1314 = vsel %vm1253, %v1295, 0.0
        %1315 = vadd.xlane.f32.xlu0 %v1314
        %v1316 = vpop.xlane.xlu0 %1315
        %v1317 = vsel %vm1253, %v1297, 0.0
        %1318 = vadd.xlane.f32.xlu0 %v1317
        %v1319 = vpop.xlane.xlu0 %1318
        %v1320 = vsel %vm1253, %v1299, 0.0
        %1321 = vadd.xlane.f32.xlu0 %v1320
        %v1322 = vpop.xlane.xlu0 %1321
        %v1323 = vsel %vm1253, %v1301, 0.0
        %1324 = vadd.xlane.f32.xlu0 %v1323
        %v1325 = vpop.xlane.xlu0 %1324
        %v1326 = vrcp.pop %v1304
        %v1327 = vrcp.pop %v1307
        %v1328 = vrcp.pop %v1310
        %v1329 = vrcp.pop %v1313
        %v1330 = vrcp.pop %v1316
        %v1331 = vrcp.pop %v1319
        %v1332 = vrcp.pop %v1322
        %v1333 = vrcp.pop %v1325
        %v1334 = vmul.f32 %v1287, %v1326
        %v1335 = vmul.f32 %v1289, %v1327
        %v1336 = vmul.f32 %v1291, %v1328
        %v1337 = vmul.f32 %v1293, %v1329
        %v1338 = vmul.f32 %v1295, %v1330
        %v1339 = vmul.f32 %v1297, %v1331
        %v1340 = vmul.f32 %v1299, %v1332
        %v1341 = vmul.f32 %v1301, %v1333
        %v1342 = vpack.c.bf16 %v1335, %v1334
        %v1343 = vpack.c.bf16 %v1337, %v1336
        %v1344 = vpack.c.bf16 %v1339, %v1338
        %v1345 = vpack.c.bf16 %v1341, %v1340
        %v1347 = vsel %vm1253, %v1342, 0
        %v1350 = vsel %vm1253, %v1343, 0
        %v1353 = vsel %vm1253, %v1344, 0
        %v1356 = vsel %vm1253, %v1345, 0
        %1358 = vmatprep.subr.bf16.mxu0 0
        %1359 = vmatpush1.bf16.msra.mxu0 %v1159
        %1360 = vmatprep.subr.bf16.mxu0 0
        %1361 = vmatpush1.bf16.msra.mxu0 %v1160
        %1362 = vmatprep.subr.bf16.mxu0 0
        %1363 = vmatpush1.bf16.msra.mxu0 %v1161
        %1364 = vmatprep.subr.bf16.mxu0 0
        %1365 = vmatpush1.bf16.msra.mxu0 %v1162
        %1366 = vmatprep.subr.bf16.mxu0 0
        %1367 = vmatpush1.bf16.msra.mxu0 0
        %1368 = vmatprep.subr.bf16.mxu0 0
        %1369 = vmatpush1.bf16.msra.mxu0 0
        %1370 = vmatprep.subr.bf16.mxu0 0
        %1371 = vmatpush1.bf16.msra.mxu0 0
        %1372 = vmatprep.subr.bf16.mxu0 0
        %1373 = vmatpush1.bf16.msra.mxu0 0
        %1374 = vmatprep.subr.bf16.mxu0 0
        %1375 = vmatpush1.bf16.msra.mxu0 0
        %1376 = vmatprep.subr.bf16.mxu0 0
        %1377 = vmatpush1.bf16.msra.mxu0 0
        %1378 = vmatprep.subr.bf16.mxu0 0
        %1379 = vmatpush1.bf16.msra.mxu0 0
        %1380 = vmatprep.subr.bf16.mxu0 0
        %1381 = vmatpush1.bf16.msra.mxu0 0
        %1382 = vmatprep.subr.bf16.mxu0 0
        %1383 = vmatpush1.bf16.msra.mxu0 0
        %1384 = vmatprep.subr.bf16.mxu0 0
        %1385 = vmatpush1.bf16.msra.mxu0 0
        %1386 = vmatprep.subr.bf16.mxu0 0
        %1387 = vmatpush1.bf16.msra.mxu0 0
        %1388 = vmatprep.subr.bf16.mxu0 0
        %1389 = vmatpush1.bf16.msra.mxu0 0
        %1390 = vmatprep.mubr.bf16.mxu0 0
        %1391 = vmatmul.mubr.bf16.gmra.mrb[0].mxu0 %v1347
        %v1392 = vpop.f32.mrb[0].mxu0
        %v1393 = vadd.f32 0.0, %v1392
        %v1394 = vpop.f32.mrb[0].mxu0
        %v1395 = vpop.f32.mrb[0].mxu0
        %v1396 = vadd.f32 0.0, %v1395
        %v1397 = vpop.f32.mrb[0].mxu0
        %1398 = vmatprep.mubr.bf16.mxu0 0
        %1399 = vmatmul.mubr.bf16.gmra.mrb[0].mxu0 %v1350
        %v1400 = vpop.f32.mrb[0].mxu0
        %v1401 = vadd.f32 0.0, %v1400
        %v1402 = vpop.f32.mrb[0].mxu0
        %v1403 = vpop.f32.mrb[0].mxu0
        %v1404 = vadd.f32 0.0, %v1403
        %v1405 = vpop.f32.mrb[0].mxu0
        %1406 = vmatprep.mubr.bf16.mxu0 0
        %1407 = vmatmul.mubr.bf16.gmra.mrb[0].mxu0 %v1353
        %v1408 = vpop.f32.mrb[0].mxu0
        %v1409 = vadd.f32 0.0, %v1408
        %v1410 = vpop.f32.mrb[0].mxu0
        %v1411 = vpop.f32.mrb[0].mxu0
        %v1412 = vadd.f32 0.0, %v1411
        %v1413 = vpop.f32.mrb[0].mxu0
        %1414 = vmatprep.mubr.bf16.mxu0 0
        %1415 = vmatmul.mubr.bf16.gmra.mrb[0].mxu0 %v1356
        %v1416 = vpop.f32.mrb[0].mxu0
        %v1417 = vadd.f32 0.0, %v1416
        %v1418 = vpop.f32.mrb[0].mxu0
        %v1419 = vpop.f32.mrb[0].mxu0
        %v1420 = vadd.f32 0.0, %v1419
        %v1421 = vpop.f32.mrb[0].mxu0
        %1422 = vdwg.mxu0
        %v1423 = vpack.c.bf16 %v1396, %v1393
        %v1424 = vpack.c.bf16 %v1404, %v1401
        %v1425 = vpack.c.bf16 %v1412, %v1409
        %v1426 = vpack.c.bf16 %v1420, %v1417
        %1431 = vrot.lane.b32.xlu0 %v1151, 96
        %v1432 = vpop.permute.xlu0 %1431
        %1433 = vrot.lane.b32.xlu0 %v1152, 96
        %v1434 = vpop.permute.xlu0 %1433
        %1435 = vrot.lane.b32.xlu0 %v1153, 96
        %v1436 = vpop.permute.xlu0 %1435
        %1437 = vrot.lane.b32.xlu0 %v1154, 96
        %v1438 = vpop.permute.xlu0 %1437
        %1443 = vrot.lane.b32.xlu0 %v1155, 96
        %v1444 = vpop.permute.xlu0 %1443
        %1445 = vrot.lane.b32.xlu0 %v1156, 96
        %v1446 = vpop.permute.xlu0 %1445
        %1447 = vrot.lane.b32.xlu0 %v1157, 96
        %v1448 = vpop.permute.xlu0 %1447
        %1449 = vrot.lane.b32.xlu0 %v1158, 96
        %v1450 = vpop.permute.xlu0 %1449
        %v1452 = vsel %vm1163, %v1432, 0
        %v1455 = vsel %vm1163, %v1434, 0
        %v1458 = vsel %vm1163, %v1436, 0
        %v1461 = vsel %vm1163, %v1438, 0
        %v1464 = vsel %vm1163, %v1444, 0
        %v1467 = vsel %vm1163, %v1446, 0
        %v1470 = vsel %vm1163, %v1448, 0
        %v1473 = vsel %vm1163, %v1450, 0
        %1475 = vmatprep.subr.bf16.mxu0 0
        %1476 = vmatpush1.bf16.xpose.msra.mxu0 %v1464
        %1477 = vmatprep.subr.bf16.mxu0 0
        %1478 = vmatpush1.bf16.xpose.msra.mxu0 %v1467
        %1479 = vmatprep.subr.bf16.mxu0 0
        %1480 = vmatpush1.bf16.xpose.msra.mxu0 %v1470
        %1481 = vmatprep.subr.bf16.mxu0 0
        %1482 = vmatpush1.bf16.xpose.msra.mxu0 %v1473
        %1483 = vmatprep.subr.bf16.mxu0 0
        %1484 = vmatpush1.bf16.xpose.msra.mxu0 0
        %1485 = vmatprep.subr.bf16.mxu0 0
        %1486 = vmatpush1.bf16.xpose.msra.mxu0 0
        %1487 = vmatprep.subr.bf16.mxu0 0
        %1488 = vmatpush1.bf16.xpose.msra.mxu0 0
        %1489 = vmatprep.subr.bf16.mxu0 0
        %1490 = vmatpush1.bf16.xpose.msra.mxu0 0
        %1491 = vmatprep.subr.bf16.mxu0 0
        %1492 = vmatpush1.bf16.xpose.msra.mxu0 0
        %1493 = vmatprep.subr.bf16.mxu0 0
        %1494 = vmatpush1.bf16.xpose.msra.mxu0 0
        %1495 = vmatprep.subr.bf16.mxu0 0
        %1496 = vmatpush1.bf16.xpose.msra.mxu0 0
        %1497 = vmatprep.subr.bf16.mxu0 0
        %1498 = vmatpush1.bf16.xpose.msra.mxu0 0
        %1499 = vmatprep.subr.bf16.mxu0 0
        %1500 = vmatpush1.bf16.xpose.msra.mxu0 0
        %1501 = vmatprep.subr.bf16.mxu0 0
        %1502 = vmatpush1.bf16.xpose.msra.mxu0 0
        %1503 = vmatprep.subr.bf16.mxu0 0
        %1504 = vmatpush1.bf16.xpose.msra.mxu0 0
        %1505 = vmatprep.subr.bf16.mxu0 0
        %1506 = vmatpush1.bf16.xpose.msra.mxu0 0
        %1507 = vmatprep.mubr.bf16.mxu0 0
        %1508 = vmatmul.mubr.bf16.gmra.mrb[0].mxu0 %v1452
        %v1509 = vpop.f32.mrb[0].mxu0
        %v1510 = vadd.f32 0.0, %v1509
        %v1511 = vpop.f32.mrb[0].mxu0
        %v1512 = vpop.f32.mrb[0].mxu0
        %v1513 = vadd.f32 0.0, %v1512
        %v1514 = vpop.f32.mrb[0].mxu0
        %1515 = vmatprep.mubr.bf16.mxu0 0
        %1516 = vmatmul.mubr.bf16.gmra.mrb[0].mxu0 %v1455
        %v1517 = vpop.f32.mrb[0].mxu0
        %v1518 = vadd.f32 0.0, %v1517
        %v1519 = vpop.f32.mrb[0].mxu0
        %v1520 = vpop.f32.mrb[0].mxu0
        %v1521 = vadd.f32 0.0, %v1520
        %v1522 = vpop.f32.mrb[0].mxu0
        %1523 = vmatprep.mubr.bf16.mxu0 0
        %1524 = vmatmul.mubr.bf16.gmra.mrb[0].mxu0 %v1458
        %v1525 = vpop.f32.mrb[0].mxu0
        %v1526 = vadd.f32 0.0, %v1525
        %v1527 = vpop.f32.mrb[0].mxu0
        %v1528 = vpop.f32.mrb[0].mxu0
        %v1529 = vadd.f32 0.0, %v1528
        %v1530 = vpop.f32.mrb[0].mxu0
        %1531 = vmatprep.mubr.bf16.mxu0 0
        %1532 = vmatmul.mubr.bf16.gmra.mrb[0].mxu0 %v1461
        %v1533 = vpop.f32.mrb[0].mxu0
        %v1534 = vadd.f32 0.0, %v1533
        %v1535 = vpop.f32.mrb[0].mxu0
        %v1536 = vpop.f32.mrb[0].mxu0
        %v1537 = vadd.f32 0.0, %v1536
        %v1538 = vpop.f32.mrb[0].mxu0
        %1539 = vdwg.mxu0
        %v1540 = vsel %vm1253, %v1510, -inf
        %1541 = vmax.xlane.f32.xlu0 %v1540
        %v1542 = vpop.xlane.xlu0 %1541
        %v1543 = vsel %vm1253, %v1513, -inf
        %1544 = vmax.xlane.f32.xlu0 %v1543
        %v1545 = vpop.xlane.xlu0 %1544
        %v1546 = vsel %vm1253, %v1518, -inf
        %1547 = vmax.xlane.f32.xlu0 %v1546
        %v1548 = vpop.xlane.xlu0 %1547
        %v1549 = vsel %vm1253, %v1521, -inf
        %1550 = vmax.xlane.f32.xlu0 %v1549
        %v1551 = vpop.xlane.xlu0 %1550
        %v1552 = vsel %vm1253, %v1526, -inf
        %1553 = vmax.xlane.f32.xlu0 %v1552
        %v1554 = vpop.xlane.xlu0 %1553
        %v1555 = vsel %vm1253, %v1529, -inf
        %1556 = vmax.xlane.f32.xlu0 %v1555
        %v1557 = vpop.xlane.xlu0 %1556
        %v1558 = vsel %vm1253, %v1534, -inf
        %1559 = vmax.xlane.f32.xlu0 %v1558
        %v1560 = vpop.xlane.xlu0 %1559
        %v1561 = vsel %vm1253, %v1537, -inf
        %1562 = vmax.xlane.f32.xlu0 %v1561
        %v1563 = vpop.xlane.xlu0 %1562
        %v1564 = vsub.f32 %v1510, %v1542
        %v1565 = vsub.f32 %v1513, %v1545
        %v1566 = vsub.f32 %v1518, %v1548
        %v1567 = vsub.f32 %v1521, %v1551
        %v1568 = vsub.f32 %v1526, %v1554
        %v1569 = vsub.f32 %v1529, %v1557
        %v1570 = vsub.f32 %v1534, %v1560
        %v1571 = vsub.f32 %v1537, %v1563
        %v1572 = vmul.f32 %v1564, 1.442695
        %v1573 = vpow.pop %v1572
        %v1574 = vmul.f32 %v1565, 1.442695
        %v1575 = vpow.pop %v1574
        %v1576 = vmul.f32 %v1566, 1.442695
        %v1577 = vpow.pop %v1576
        %v1578 = vmul.f32 %v1567, 1.442695
        %v1579 = vpow.pop %v1578
        %v1580 = vmul.f32 %v1568, 1.442695
        %v1581 = vpow.pop %v1580
        %v1582 = vmul.f32 %v1569, 1.442695
        %v1583 = vpow.pop %v1582
        %v1584 = vmul.f32 %v1570, 1.442695
        %v1585 = vpow.pop %v1584
        %v1586 = vmul.f32 %v1571, 1.442695
        %v1587 = vpow.pop %v1586
        %v1588 = vsel %vm1253, %v1573, 0.0
        %1589 = vadd.xlane.f32.xlu0 %v1588
        %v1590 = vpop.xlane.xlu0 %1589
        %v1591 = vsel %vm1253, %v1575, 0.0
        %1592 = vadd.xlane.f32.xlu0 %v1591
        %v1593 = vpop.xlane.xlu0 %1592
        %v1594 = vsel %vm1253, %v1577, 0.0
        %1595 = vadd.xlane.f32.xlu0 %v1594
        %v1596 = vpop.xlane.xlu0 %1595
        %v1597 = vsel %vm1253, %v1579, 0.0
        %1598 = vadd.xlane.f32.xlu0 %v1597
        %v1599 = vpop.xlane.xlu0 %1598
        %v1600 = vsel %vm1253, %v1581, 0.0
        %1601 = vadd.xlane.f32.xlu0 %v1600
        %v1602 = vpop.xlane.xlu0 %1601
        %v1603 = vsel %vm1253, %v1583, 0.0
        %1604 = vadd.xlane.f32.xlu0 %v1603
        %v1605 = vpop.xlane.xlu0 %1604
        %v1606 = vsel %vm1253, %v1585, 0.0
        %1607 = vadd.xlane.f32.xlu0 %v1606
        %v1608 = vpop.xlane.xlu0 %1607
        %v1609 = vsel %vm1253, %v1587, 0.0
        %1610 = vadd.xlane.f32.xlu0 %v1609
        %v1611 = vpop.xlane.xlu0 %1610
        %v1612 = vrcp.pop %v1590
        %v1613 = vrcp.pop %v1593
        %v1614 = vrcp.pop %v1596
        %v1615 = vrcp.pop %v1599
        %v1616 = vrcp.pop %v1602
        %v1617 = vrcp.pop %v1605
        %v1618 = vrcp.pop %v1608
        %v1619 = vrcp.pop %v1611
        %v1620 = vmul.f32 %v1573, %v1612
        %v1621 = vmul.f32 %v1575, %v1613
        %v1622 = vmul.f32 %v1577, %v1614
        %v1623 = vmul.f32 %v1579, %v1615
        %v1624 = vmul.f32 %v1581, %v1616
        %v1625 = vmul.f32 %v1583, %v1617
        %v1626 = vmul.f32 %v1585, %v1618
        %v1627 = vmul.f32 %v1587, %v1619
        %v1628 = vpack.c.bf16 %v1621, %v1620
        %v1629 = vpack.c.bf16 %v1623, %v1622
        %v1630 = vpack.c.bf16 %v1625, %v1624
        %v1631 = vpack.c.bf16 %v1627, %v1626
        %1636 = vrot.lane.b32.xlu0 %v1159, 96
        %v1637 = vpop.permute.xlu0 %1636
        %1638 = vrot.lane.b32.xlu0 %v1160, 96
        %v1639 = vpop.permute.xlu0 %1638
        %1640 = vrot.lane.b32.xlu0 %v1161, 96
        %v1641 = vpop.permute.xlu0 %1640
        %1642 = vrot.lane.b32.xlu0 %v1162, 96
        %v1643 = vpop.permute.xlu0 %1642
        %v1649 = vsel %vm1253, %v1628, 0
        %v1652 = vsel %vm1253, %v1629, 0
        %v1655 = vsel %vm1253, %v1630, 0
        %v1658 = vsel %vm1253, %v1631, 0
        %1660 = vmatprep.subr.bf16.mxu0 0
        %1661 = vmatpush1.bf16.msra.mxu0 %v1637
        %1662 = vmatprep.subr.bf16.mxu0 0
        %1663 = vmatpush1.bf16.msra.mxu0 %v1639
        %1664 = vmatprep.subr.bf16.mxu0 0
        %1665 = vmatpush1.bf16.msra.mxu0 %v1641
        %1666 = vmatprep.subr.bf16.mxu0 0
        %1667 = vmatpush1.bf16.msra.mxu0 %v1643
        %1668 = vmatprep.subr.bf16.mxu0 0
        %1669 = vmatpush1.bf16.msra.mxu0 0
        %1670 = vmatprep.subr.bf16.mxu0 0
        %1671 = vmatpush1.bf16.msra.mxu0 0
        %1672 = vmatprep.subr.bf16.mxu0 0
        %1673 = vmatpush1.bf16.msra.mxu0 0
        %1674 = vmatprep.subr.bf16.mxu0 0
        %1675 = vmatpush1.bf16.msra.mxu0 0
        %1676 = vmatprep.subr.bf16.mxu0 0
        %1677 = vmatpush1.bf16.msra.mxu0 0
        %1678 = vmatprep.subr.bf16.mxu0 0
        %1679 = vmatpush1.bf16.msra.mxu0 0
        %1680 = vmatprep.subr.bf16.mxu0 0
        %1681 = vmatpush1.bf16.msra.mxu0 0
        %1682 = vmatprep.subr.bf16.mxu0 0
        %1683 = vmatpush1.bf16.msra.mxu0 0
        %1684 = vmatprep.subr.bf16.mxu0 0
        %1685 = vmatpush1.bf16.msra.mxu0 0
        %1686 = vmatprep.subr.bf16.mxu0 0
        %1687 = vmatpush1.bf16.msra.mxu0 0
        %1688 = vmatprep.subr.bf16.mxu0 0
        %1689 = vmatpush1.bf16.msra.mxu0 0
        %1690 = vmatprep.subr.bf16.mxu0 0
        %1691 = vmatpush1.bf16.msra.mxu0 0
        %1692 = vmatprep.mubr.bf16.mxu0 0
        %1693 = vmatmul.mubr.bf16.gmra.mrb[0].mxu0 %v1649
        %v1694 = vpop.f32.mrb[0].mxu0
        %v1695 = vadd.f32 0.0, %v1694
        %v1696 = vpop.f32.mrb[0].mxu0
        %v1697 = vpop.f32.mrb[0].mxu0
        %v1698 = vadd.f32 0.0, %v1697
        %v1699 = vpop.f32.mrb[0].mxu0
        %1700 = vmatprep.mubr.bf16.mxu0 0
        %1701 = vmatmul.mubr.bf16.gmra.mrb[0].mxu0 %v1652
        %v1702 = vpop.f32.mrb[0].mxu0
        %v1703 = vadd.f32 0.0, %v1702
        %v1704 = vpop.f32.mrb[0].mxu0
        %v1705 = vpop.f32.mrb[0].mxu0
        %v1706 = vadd.f32 0.0, %v1705
        %v1707 = vpop.f32.mrb[0].mxu0
        %1708 = vmatprep.mubr.bf16.mxu0 0
        %1709 = vmatmul.mubr.bf16.gmra.mrb[0].mxu0 %v1655
        %v1710 = vpop.f32.mrb[0].mxu0
        %v1711 = vadd.f32 0.0, %v1710
        %v1712 = vpop.f32.mrb[0].mxu0
        %v1713 = vpop.f32.mrb[0].mxu0
        %v1714 = vadd.f32 0.0, %v1713
        %v1715 = vpop.f32.mrb[0].mxu0
        %1716 = vmatprep.mubr.bf16.mxu0 0
        %1717 = vmatmul.mubr.bf16.gmra.mrb[0].mxu0 %v1658
        %v1718 = vpop.f32.mrb[0].mxu0
        %v1719 = vadd.f32 0.0, %v1718
        %v1720 = vpop.f32.mrb[0].mxu0
        %v1721 = vpop.f32.mrb[0].mxu0
        %v1722 = vadd.f32 0.0, %v1721
        %v1723 = vpop.f32.mrb[0].mxu0
        %1724 = vdwg.mxu0
        %v1725 = vpack.c.bf16 %v1698, %v1695
        %v1726 = vpack.c.bf16 %v1706, %v1703
        %v1727 = vpack.c.bf16 %v1714, %v1711
        %v1728 = vpack.c.bf16 %v1722, %v1719
        %v1733 = vunpack.c.l.b16 %v1139
        %v1734 = vunpack.c.l.b16 %v1140
        %v1735 = vunpack.c.l.b16 %v1141
        %v1736 = vunpack.c.l.b16 %v1142
        %v1737 = vpack.c.b16 %v1734, %v1733
        %v1738 = vpack.c.b16 %v1736, %v1735
        %v1742 = vsel %vm1163, %v1725, 0
        %v1745 = vsel %vm1163, %v1726, 0
        %v1748 = vsel %vm1163, %v1727, 0
        %v1751 = vsel %vm1163, %v1728, 0
        %1753 = vmatprep.subr.bf16.mxu0 0
        %1754 = vmatpush1.bf16.msra.mxu0 %v1737
        %1755 = vmatprep.subr.bf16.mxu0 0
        %1756 = vmatpush1.bf16.msra.mxu0 %v1738
        %1757 = vmatprep.subr.bf16.mxu0 0
        %1758 = vmatpush1.bf16.msra.mxu0 0
        %1759 = vmatprep.subr.bf16.mxu0 0
        %1760 = vmatpush1.bf16.msra.mxu0 0
        %1761 = vmatprep.subr.bf16.mxu0 0
        %1762 = vmatpush1.bf16.msra.mxu0 0
        %1763 = vmatprep.subr.bf16.mxu0 0
        %1764 = vmatpush1.bf16.msra.mxu0 0
        %1765 = vmatprep.subr.bf16.mxu0 0
        %1766 = vmatpush1.bf16.msra.mxu0 0
        %1767 = vmatprep.subr.bf16.mxu0 0
        %1768 = vmatpush1.bf16.msra.mxu0 0
        %1769 = vmatprep.subr.bf16.mxu0 0
        %1770 = vmatpush1.bf16.msra.mxu0 0
        %1771 = vmatprep.subr.bf16.mxu0 0
        %1772 = vmatpush1.bf16.msra.mxu0 0
        %1773 = vmatprep.subr.bf16.mxu0 0
        %1774 = vmatpush1.bf16.msra.mxu0 0
        %1775 = vmatprep.subr.bf16.mxu0 0
        %1776 = vmatpush1.bf16.msra.mxu0 0
        %1777 = vmatprep.subr.bf16.mxu0 0
        %1778 = vmatpush1.bf16.msra.mxu0 0
        %1779 = vmatprep.subr.bf16.mxu0 0
        %1780 = vmatpush1.bf16.msra.mxu0 0
        %1781 = vmatprep.subr.bf16.mxu0 0
        %1782 = vmatpush1.bf16.msra.mxu0 0
        %1783 = vmatprep.subr.bf16.mxu0 0
        %1784 = vmatpush1.bf16.msra.mxu0 0
        %1785 = vmatprep.mubr.bf16.mxu0 0
        %1786 = vmatmul.mubr.bf16.gmra.mrb[0].mxu0 %v1742
        %v1787 = vpop.f32.mrb[0].mxu0
        %v1788 = vadd.f32 0.0, %v1787
        %v1789 = vpop.f32.mrb[0].mxu0
        %v1790 = vpop.f32.mrb[0].mxu0
        %v1791 = vadd.f32 0.0, %v1790
        %v1792 = vpop.f32.mrb[0].mxu0
        %1793 = vmatprep.mubr.bf16.mxu0 0
        %1794 = vmatmul.mubr.bf16.gmra.mrb[0].mxu0 %v1745
        %v1795 = vpop.f32.mrb[0].mxu0
        %v1796 = vadd.f32 0.0, %v1795
        %v1797 = vpop.f32.mrb[0].mxu0
        %v1798 = vpop.f32.mrb[0].mxu0
        %v1799 = vadd.f32 0.0, %v1798
        %v1800 = vpop.f32.mrb[0].mxu0
        %1801 = vmatprep.mubr.bf16.mxu0 0
        %1802 = vmatmul.mubr.bf16.gmra.mrb[0].mxu0 %v1748
        %v1803 = vpop.f32.mrb[0].mxu0
        %v1804 = vadd.f32 0.0, %v1803
        %v1805 = vpop.f32.mrb[0].mxu0
        %v1806 = vpop.f32.mrb[0].mxu0
        %v1807 = vadd.f32 0.0, %v1806
        %v1808 = vpop.f32.mrb[0].mxu0
        %1809 = vmatprep.mubr.bf16.mxu0 0
        %1810 = vmatmul.mubr.bf16.gmra.mrb[0].mxu0 %v1751
        %v1811 = vpop.f32.mrb[0].mxu0
        %v1812 = vadd.f32 0.0, %v1811
        %v1813 = vpop.f32.mrb[0].mxu0
        %v1814 = vpop.f32.mrb[0].mxu0
        %v1815 = vadd.f32 0.0, %v1814
        %v1816 = vpop.f32.mrb[0].mxu0
        %1817 = vdwg.mxu0
        %v1822 = vunpack.c.l.b16 %v1135
        %v1823 = vunpack.c.l.b16 %v1136
        %v1824 = vunpack.c.l.b16 %v1137
        %v1825 = vunpack.c.l.b16 %v1138
        %v1826 = vpack.c.b16 %v1823, %v1822
        %v1827 = vpack.c.b16 %v1825, %v1824
        %v1831 = vsel %vm1163, %v1423, 0
        %v1834 = vsel %vm1163, %v1424, 0
        %v1837 = vsel %vm1163, %v1425, 0
        %v1840 = vsel %vm1163, %v1426, 0
        %1842 = vmatprep.subr.bf16.mxu0 0
        %1843 = vmatpush1.bf16.msra.mxu0 %v1826
        %1844 = vmatprep.subr.bf16.mxu0 0
        %1845 = vmatpush1.bf16.msra.mxu0 %v1827
        %1846 = vmatprep.subr.bf16.mxu0 0
        %1847 = vmatpush1.bf16.msra.mxu0 0
        %1848 = vmatprep.subr.bf16.mxu0 0
        %1849 = vmatpush1.bf16.msra.mxu0 0
        %1850 = vmatprep.subr.bf16.mxu0 0
        %1851 = vmatpush1.bf16.msra.mxu0 0
        %1852 = vmatprep.subr.bf16.mxu0 0
        %1853 = vmatpush1.bf16.msra.mxu0 0
        %1854 = vmatprep.subr.bf16.mxu0 0
        %1855 = vmatpush1.bf16.msra.mxu0 0
        %1856 = vmatprep.subr.bf16.mxu0 0
        %1857 = vmatpush1.bf16.msra.mxu0 0
        %1858 = vmatprep.subr.bf16.mxu0 0
        %1859 = vmatpush1.bf16.msra.mxu0 0
        %1860 = vmatprep.subr.bf16.mxu0 0
        %1861 = vmatpush1.bf16.msra.mxu0 0
        %1862 = vmatprep.subr.bf16.mxu0 0
        %1863 = vmatpush1.bf16.msra.mxu0 0
        %1864 = vmatprep.subr.bf16.mxu0 0
        %1865 = vmatpush1.bf16.msra.mxu0 0
        %1866 = vmatprep.subr.bf16.mxu0 0
        %1867 = vmatpush1.bf16.msra.mxu0 0
        %1868 = vmatprep.subr.bf16.mxu0 0
        %1869 = vmatpush1.bf16.msra.mxu0 0
        %1870 = vmatprep.subr.bf16.mxu0 0
        %1871 = vmatpush1.bf16.msra.mxu0 0
        %1872 = vmatprep.subr.bf16.mxu0 0
        %1873 = vmatpush1.bf16.msra.mxu0 0
        %1874 = vmatprep.mubr.bf16.mxu0 0
        %1875 = vmatmul.mubr.bf16.gmra.mrb[0].mxu0 %v1831
        %v1876 = vpop.f32.mrb[0].mxu0
        %v1877 = vadd.f32 %v1788, %v1876
        %v1878 = vpop.f32.mrb[0].mxu0
        %v1879 = vpop.f32.mrb[0].mxu0
        %v1880 = vadd.f32 %v1791, %v1879
        %v1881 = vpop.f32.mrb[0].mxu0
        %1882 = vmatprep.mubr.bf16.mxu0 0
        %1883 = vmatmul.mubr.bf16.gmra.mrb[0].mxu0 %v1834
        %v1884 = vpop.f32.mrb[0].mxu0
        %v1885 = vadd.f32 %v1796, %v1884
        %v1886 = vpop.f32.mrb[0].mxu0
        %v1887 = vpop.f32.mrb[0].mxu0
        %v1888 = vadd.f32 %v1799, %v1887
        %v1889 = vpop.f32.mrb[0].mxu0
        %1890 = vmatprep.mubr.bf16.mxu0 0
        %1891 = vmatmul.mubr.bf16.gmra.mrb[0].mxu0 %v1837
        %v1892 = vpop.f32.mrb[0].mxu0
        %v1893 = vadd.f32 %v1804, %v1892
        %v1894 = vpop.f32.mrb[0].mxu0
        %v1895 = vpop.f32.mrb[0].mxu0
        %v1896 = vadd.f32 %v1807, %v1895
        %v1897 = vpop.f32.mrb[0].mxu0
        %1898 = vmatprep.mubr.bf16.mxu0 0
        %1899 = vmatmul.mubr.bf16.gmra.mrb[0].mxu0 %v1840
        %v1900 = vpop.f32.mrb[0].mxu0
        %v1901 = vadd.f32 %v1812, %v1900
        %v1902 = vpop.f32.mrb[0].mxu0
        %v1903 = vpop.f32.mrb[0].mxu0
        %v1904 = vadd.f32 %v1815, %v1903
        %v1905 = vpop.f32.mrb[0].mxu0
        %1906 = vdwg.mxu0
        %1907 = vrot.lane.b32.xlu0 %v1151, 64
        %v1908 = vpop.permute.xlu0 %1907
        %1909 = vrot.lane.b32.xlu0 %v1152, 64
        %v1910 = vpop.permute.xlu0 %1909
        %1911 = vrot.lane.b32.xlu0 %v1153, 64
        %v1912 = vpop.permute.xlu0 %1911
        %1913 = vrot.lane.b32.xlu0 %v1154, 64
        %v1914 = vpop.permute.xlu0 %1913
        %1915 = vrot.lane.b32.xlu0 %v1155, 64
        %v1916 = vpop.permute.xlu0 %1915
        %1917 = vrot.lane.b32.xlu0 %v1156, 64
        %v1918 = vpop.permute.xlu0 %1917
        %1919 = vrot.lane.b32.xlu0 %v1157, 64
        %v1920 = vpop.permute.xlu0 %1919
        %1921 = vrot.lane.b32.xlu0 %v1158, 64
        %v1922 = vpop.permute.xlu0 %1921
        %v1924 = vsel %vm1163, %v1908, 0
        %v1927 = vsel %vm1163, %v1910, 0
        %v1930 = vsel %vm1163, %v1912, 0
        %v1933 = vsel %vm1163, %v1914, 0
        %v1936 = vsel %vm1163, %v1916, 0
        %v1939 = vsel %vm1163, %v1918, 0
        %v1942 = vsel %vm1163, %v1920, 0
        %v1945 = vsel %vm1163, %v1922, 0
        %1947 = vmatprep.subr.bf16.mxu0 0
        %1948 = vmatpush1.bf16.xpose.msra.mxu0 %v1936
        %1949 = vmatprep.subr.bf16.mxu0 0
        %1950 = vmatpush1.bf16.xpose.msra.mxu0 %v1939
        %1951 = vmatprep.subr.bf16.mxu0 0
        %1952 = vmatpush1.bf16.xpose.msra.mxu0 %v1942
        %1953 = vmatprep.subr.bf16.mxu0 0
        %1954 = vmatpush1.bf16.xpose.msra.mxu0 %v1945
        %1955 = vmatprep.subr.bf16.mxu0 0
        %1956 = vmatpush1.bf16.xpose.msra.mxu0 0
        %1957 = vmatprep.subr.bf16.mxu0 0
        %1958 = vmatpush1.bf16.xpose.msra.mxu0 0
        %1959 = vmatprep.subr.bf16.mxu0 0
        %1960 = vmatpush1.bf16.xpose.msra.mxu0 0
        %1961 = vmatprep.subr.bf16.mxu0 0
        %1962 = vmatpush1.bf16.xpose.msra.mxu0 0
        %1963 = vmatprep.subr.bf16.mxu0 0
        %1964 = vmatpush1.bf16.xpose.msra.mxu0 0
        %1965 = vmatprep.subr.bf16.mxu0 0
        %1966 = vmatpush1.bf16.xpose.msra.mxu0 0
        %1967 = vmatprep.subr.bf16.mxu0 0
        %1968 = vmatpush1.bf16.xpose.msra.mxu0 0
        %1969 = vmatprep.subr.bf16.mxu0 0
        %1970 = vmatpush1.bf16.xpose.msra.mxu0 0
        %1971 = vmatprep.subr.bf16.mxu0 0
        %1972 = vmatpush1.bf16.xpose.msra.mxu0 0
        %1973 = vmatprep.subr.bf16.mxu0 0
        %1974 = vmatpush1.bf16.xpose.msra.mxu0 0
        %1975 = vmatprep.subr.bf16.mxu0 0
        %1976 = vmatpush1.bf16.xpose.msra.mxu0 0
        %1977 = vmatprep.subr.bf16.mxu0 0
        %1978 = vmatpush1.bf16.xpose.msra.mxu0 0
        %1979 = vmatprep.mubr.bf16.mxu0 0
        %1980 = vmatmul.mubr.bf16.gmra.mrb[0].mxu0 %v1924
        %v1981 = vpop.f32.mrb[0].mxu0
        %v1982 = vadd.f32 0.0, %v1981
        %v1983 = vpop.f32.mrb[0].mxu0
        %v1984 = vpop.f32.mrb[0].mxu0
        %v1985 = vadd.f32 0.0, %v1984
        %v1986 = vpop.f32.mrb[0].mxu0
        %1987 = vmatprep.mubr.bf16.mxu0 0
        %1988 = vmatmul.mubr.bf16.gmra.mrb[0].mxu0 %v1927
        %v1989 = vpop.f32.mrb[0].mxu0
        %v1990 = vadd.f32 0.0, %v1989
        %v1991 = vpop.f32.mrb[0].mxu0
        %v1992 = vpop.f32.mrb[0].mxu0
        %v1993 = vadd.f32 0.0, %v1992
        %v1994 = vpop.f32.mrb[0].mxu0
        %1995 = vmatprep.mubr.bf16.mxu0 0
        %1996 = vmatmul.mubr.bf16.gmra.mrb[0].mxu0 %v1930
        %v1997 = vpop.f32.mrb[0].mxu0
        %v1998 = vadd.f32 0.0, %v1997
        %v1999 = vpop.f32.mrb[0].mxu0
        %v2000 = vpop.f32.mrb[0].mxu0
        %v2001 = vadd.f32 0.0, %v2000
        %v2002 = vpop.f32.mrb[0].mxu0
        %2003 = vmatprep.mubr.bf16.mxu0 0
        %2004 = vmatmul.mubr.bf16.gmra.mrb[0].mxu0 %v1933
        %v2005 = vpop.f32.mrb[0].mxu0
        %v2006 = vadd.f32 0.0, %v2005
        %v2007 = vpop.f32.mrb[0].mxu0
        %v2008 = vpop.f32.mrb[0].mxu0
        %v2009 = vadd.f32 0.0, %v2008
        %v2010 = vpop.f32.mrb[0].mxu0
        %2011 = vdwg.mxu0
        %v2012 = vsel %vm1253, %v1982, -inf
        %2013 = vmax.xlane.f32.xlu0 %v2012
        %v2014 = vpop.xlane.xlu0 %2013
        %v2015 = vsel %vm1253, %v1985, -inf
        %2016 = vmax.xlane.f32.xlu0 %v2015
        %v2017 = vpop.xlane.xlu0 %2016
        %v2018 = vsel %vm1253, %v1990, -inf
        %2019 = vmax.xlane.f32.xlu0 %v2018
        %v2020 = vpop.xlane.xlu0 %2019
        %v2021 = vsel %vm1253, %v1993, -inf
        %2022 = vmax.xlane.f32.xlu0 %v2021
        %v2023 = vpop.xlane.xlu0 %2022
        %v2024 = vsel %vm1253, %v1998, -inf
        %2025 = vmax.xlane.f32.xlu0 %v2024
        %v2026 = vpop.xlane.xlu0 %2025
        %v2027 = vsel %vm1253, %v2001, -inf
        %2028 = vmax.xlane.f32.xlu0 %v2027
        %v2029 = vpop.xlane.xlu0 %2028
        %v2030 = vsel %vm1253, %v2006, -inf
        %2031 = vmax.xlane.f32.xlu0 %v2030
        %v2032 = vpop.xlane.xlu0 %2031
        %v2033 = vsel %vm1253, %v2009, -inf
        %2034 = vmax.xlane.f32.xlu0 %v2033
        %v2035 = vpop.xlane.xlu0 %2034
        %v2036 = vsub.f32 %v1982, %v2014
        %v2037 = vsub.f32 %v1985, %v2017
        %v2038 = vsub.f32 %v1990, %v2020
        %v2039 = vsub.f32 %v1993, %v2023
        %v2040 = vsub.f32 %v1998, %v2026
        %v2041 = vsub.f32 %v2001, %v2029
        %v2042 = vsub.f32 %v2006, %v2032
        %v2043 = vsub.f32 %v2009, %v2035
        %v2044 = vmul.f32 %v2036, 1.442695
        %v2045 = vpow.pop %v2044
        %v2046 = vmul.f32 %v2037, 1.442695
        %v2047 = vpow.pop %v2046
        %v2048 = vmul.f32 %v2038, 1.442695
        %v2049 = vpow.pop %v2048
        %v2050 = vmul.f32 %v2039, 1.442695
        %v2051 = vpow.pop %v2050
        %v2052 = vmul.f32 %v2040, 1.442695
        %v2053 = vpow.pop %v2052
        %v2054 = vmul.f32 %v2041, 1.442695
        %v2055 = vpow.pop %v2054
        %v2056 = vmul.f32 %v2042, 1.442695
        %v2057 = vpow.pop %v2056
        %v2058 = vmul.f32 %v2043, 1.442695
        %v2059 = vpow.pop %v2058
        %v2060 = vsel %vm1253, %v2045, 0.0
        %2061 = vadd.xlane.f32.xlu0 %v2060
        %v2062 = vpop.xlane.xlu0 %2061
        %v2063 = vsel %vm1253, %v2047, 0.0
        %2064 = vadd.xlane.f32.xlu0 %v2063
        %v2065 = vpop.xlane.xlu0 %2064
        %v2066 = vsel %vm1253, %v2049, 0.0
        %2067 = vadd.xlane.f32.xlu0 %v2066
        %v2068 = vpop.xlane.xlu0 %2067
        %v2069 = vsel %vm1253, %v2051, 0.0
        %2070 = vadd.xlane.f32.xlu0 %v2069
        %v2071 = vpop.xlane.xlu0 %2070
        %v2072 = vsel %vm1253, %v2053, 0.0
        %2073 = vadd.xlane.f32.xlu0 %v2072
        %v2074 = vpop.xlane.xlu0 %2073
        %v2075 = vsel %vm1253, %v2055, 0.0
        %2076 = vadd.xlane.f32.xlu0 %v2075
        %v2077 = vpop.xlane.xlu0 %2076
        %v2078 = vsel %vm1253, %v2057, 0.0
        %2079 = vadd.xlane.f32.xlu0 %v2078
        %v2080 = vpop.xlane.xlu0 %2079
        %v2081 = vsel %vm1253, %v2059, 0.0
        %2082 = vadd.xlane.f32.xlu0 %v2081
        %v2083 = vpop.xlane.xlu0 %2082
        %v2084 = vrcp.pop %v2062
        %v2085 = vrcp.pop %v2065
        %v2086 = vrcp.pop %v2068
        %v2087 = vrcp.pop %v2071
        %v2088 = vrcp.pop %v2074
        %v2089 = vrcp.pop %v2077
        %v2090 = vrcp.pop %v2080
        %v2091 = vrcp.pop %v2083
        %v2092 = vmul.f32 %v2045, %v2084
        %v2093 = vmul.f32 %v2047, %v2085
        %v2094 = vmul.f32 %v2049, %v2086
        %v2095 = vmul.f32 %v2051, %v2087
        %v2096 = vmul.f32 %v2053, %v2088
        %v2097 = vmul.f32 %v2055, %v2089
        %v2098 = vmul.f32 %v2057, %v2090
        %v2099 = vmul.f32 %v2059, %v2091
        %v2100 = vpack.c.bf16 %v2093, %v2092
        %v2101 = vpack.c.bf16 %v2095, %v2094
        %v2102 = vpack.c.bf16 %v2097, %v2096
        %v2103 = vpack.c.bf16 %v2099, %v2098
        %2104 = vrot.lane.b32.xlu0 %v1159, 64
        %v2105 = vpop.permute.xlu0 %2104
        %2106 = vrot.lane.b32.xlu0 %v1160, 64
        %v2107 = vpop.permute.xlu0 %2106
        %2108 = vrot.lane.b32.xlu0 %v1161, 64
        %v2109 = vpop.permute.xlu0 %2108
        %2110 = vrot.lane.b32.xlu0 %v1162, 64
        %v2111 = vpop.permute.xlu0 %2110
        %v2117 = vsel %vm1253, %v2100, 0
        %v2120 = vsel %vm1253, %v2101, 0
        %v2123 = vsel %vm1253, %v2102, 0
        %v2126 = vsel %vm1253, %v2103, 0
        %2128 = vmatprep.subr.bf16.mxu0 0
        %2129 = vmatpush1.bf16.msra.mxu0 %v2105
        %2130 = vmatprep.subr.bf16.mxu0 0
        %2131 = vmatpush1.bf16.msra.mxu0 %v2107
        %2132 = vmatprep.subr.bf16.mxu0 0
        %2133 = vmatpush1.bf16.msra.mxu0 %v2109
        %2134 = vmatprep.subr.bf16.mxu0 0
        %2135 = vmatpush1.bf16.msra.mxu0 %v2111
        %2136 = vmatprep.subr.bf16.mxu0 0
        %2137 = vmatpush1.bf16.msra.mxu0 0
        %2138 = vmatprep.subr.bf16.mxu0 0
        %2139 = vmatpush1.bf16.msra.mxu0 0
        %2140 = vmatprep.subr.bf16.mxu0 0
        %2141 = vmatpush1.bf16.msra.mxu0 0
        %2142 = vmatprep.subr.bf16.mxu0 0
        %2143 = vmatpush1.bf16.msra.mxu0 0
        %2144 = vmatprep.subr.bf16.mxu0 0
        %2145 = vmatpush1.bf16.msra.mxu0 0
        %2146 = vmatprep.subr.bf16.mxu0 0
        %2147 = vmatpush1.bf16.msra.mxu0 0
        %2148 = vmatprep.subr.bf16.mxu0 0
        %2149 = vmatpush1.bf16.msra.mxu0 0
        %2150 = vmatprep.subr.bf16.mxu0 0
        %2151 = vmatpush1.bf16.msra.mxu0 0
        %2152 = vmatprep.subr.bf16.mxu0 0
        %2153 = vmatpush1.bf16.msra.mxu0 0
        %2154 = vmatprep.subr.bf16.mxu0 0
        %2155 = vmatpush1.bf16.msra.mxu0 0
        %2156 = vmatprep.subr.bf16.mxu0 0
        %2157 = vmatpush1.bf16.msra.mxu0 0
        %2158 = vmatprep.subr.bf16.mxu0 0
        %2159 = vmatpush1.bf16.msra.mxu0 0
        %2160 = vmatprep.mubr.bf16.mxu0 0
        %2161 = vmatmul.mubr.bf16.gmra.mrb[0].mxu0 %v2117
        %v2162 = vpop.f32.mrb[0].mxu0
        %v2163 = vadd.f32 0.0, %v2162
        %v2164 = vpop.f32.mrb[0].mxu0
        %v2165 = vpop.f32.mrb[0].mxu0
        %v2166 = vadd.f32 0.0, %v2165
        %v2167 = vpop.f32.mrb[0].mxu0
        %2168 = vmatprep.mubr.bf16.mxu0 0
        %2169 = vmatmul.mubr.bf16.gmra.mrb[0].mxu0 %v2120
        %v2170 = vpop.f32.mrb[0].mxu0
        %v2171 = vadd.f32 0.0, %v2170
        %v2172 = vpop.f32.mrb[0].mxu0
        %v2173 = vpop.f32.mrb[0].mxu0
        %v2174 = vadd.f32 0.0, %v2173
        %v2175 = vpop.f32.mrb[0].mxu0
        %2176 = vmatprep.mubr.bf16.mxu0 0
        %2177 = vmatmul.mubr.bf16.gmra.mrb[0].mxu0 %v2123
        %v2178 = vpop.f32.mrb[0].mxu0
        %v2179 = vadd.f32 0.0, %v2178
        %v2180 = vpop.f32.mrb[0].mxu0
        %v2181 = vpop.f32.mrb[0].mxu0
        %v2182 = vadd.f32 0.0, %v2181
        %v2183 = vpop.f32.mrb[0].mxu0
        %2184 = vmatprep.mubr.bf16.mxu0 0
        %2185 = vmatmul.mubr.bf16.gmra.mrb[0].mxu0 %v2126
        %v2186 = vpop.f32.mrb[0].mxu0
        %v2187 = vadd.f32 0.0, %v2186
        %v2188 = vpop.f32.mrb[0].mxu0
        %v2189 = vpop.f32.mrb[0].mxu0
        %v2190 = vadd.f32 0.0, %v2189
        %v2191 = vpop.f32.mrb[0].mxu0
        %2192 = vdwg.mxu0
        %v2193 = vpack.c.bf16 %v2166, %v2163
        %v2194 = vpack.c.bf16 %v2174, %v2171
        %v2195 = vpack.c.bf16 %v2182, %v2179
        %v2196 = vpack.c.bf16 %v2190, %v2187
        %v2201 = vunpack.c.l.b16 %v1143
        %v2202 = vunpack.c.l.b16 %v1144
        %v2203 = vunpack.c.l.b16 %v1145
        %v2204 = vunpack.c.l.b16 %v1146
        %v2205 = vpack.c.b16 %v2202, %v2201
        %v2206 = vpack.c.b16 %v2204, %v2203
        %v2210 = vsel %vm1163, %v2193, 0
        %v2213 = vsel %vm1163, %v2194, 0
        %v2216 = vsel %vm1163, %v2195, 0
        %v2219 = vsel %vm1163, %v2196, 0
        %2221 = vmatprep.subr.bf16.mxu0 0
        %2222 = vmatpush1.bf16.msra.mxu0 %v2205
        %2223 = vmatprep.subr.bf16.mxu0 0
        %2224 = vmatpush1.bf16.msra.mxu0 %v2206
        %2225 = vmatprep.subr.bf16.mxu0 0
        %2226 = vmatpush1.bf16.msra.mxu0 0
        %2227 = vmatprep.subr.bf16.mxu0 0
        %2228 = vmatpush1.bf16.msra.mxu0 0
        %2229 = vmatprep.subr.bf16.mxu0 0
        %2230 = vmatpush1.bf16.msra.mxu0 0
        %2231 = vmatprep.subr.bf16.mxu0 0
        %2232 = vmatpush1.bf16.msra.mxu0 0
        %2233 = vmatprep.subr.bf16.mxu0 0
        %2234 = vmatpush1.bf16.msra.mxu0 0
        %2235 = vmatprep.subr.bf16.mxu0 0
        %2236 = vmatpush1.bf16.msra.mxu0 0
        %2237 = vmatprep.subr.bf16.mxu0 0
        %2238 = vmatpush1.bf16.msra.mxu0 0
        %2239 = vmatprep.subr.bf16.mxu0 0
        %2240 = vmatpush1.bf16.msra.mxu0 0
        %2241 = vmatprep.subr.bf16.mxu0 0
        %2242 = vmatpush1.bf16.msra.mxu0 0
        %2243 = vmatprep.subr.bf16.mxu0 0
        %2244 = vmatpush1.bf16.msra.mxu0 0
        %2245 = vmatprep.subr.bf16.mxu0 0
        %2246 = vmatpush1.bf16.msra.mxu0 0
        %2247 = vmatprep.subr.bf16.mxu0 0
        %2248 = vmatpush1.bf16.msra.mxu0 0
        %2249 = vmatprep.subr.bf16.mxu0 0
        %2250 = vmatpush1.bf16.msra.mxu0 0
        %2251 = vmatprep.subr.bf16.mxu0 0
        %2252 = vmatpush1.bf16.msra.mxu0 0
        %2253 = vmatprep.mubr.bf16.mxu0 0
        %2254 = vmatmul.mubr.bf16.gmra.mrb[0].mxu0 %v2210
        %v2255 = vpop.f32.mrb[0].mxu0
        %v2256 = vadd.f32 0.0, %v2255
        %v2257 = vpop.f32.mrb[0].mxu0
        %v2258 = vpop.f32.mrb[0].mxu0
        %v2259 = vadd.f32 0.0, %v2258
        %v2260 = vpop.f32.mrb[0].mxu0
        %2261 = vmatprep.mubr.bf16.mxu0 0
        %2262 = vmatmul.mubr.bf16.gmra.mrb[0].mxu0 %v2213
        %v2263 = vpop.f32.mrb[0].mxu0
        %v2264 = vadd.f32 0.0, %v2263
        %v2265 = vpop.f32.mrb[0].mxu0
        %v2266 = vpop.f32.mrb[0].mxu0
        %v2267 = vadd.f32 0.0, %v2266
        %v2268 = vpop.f32.mrb[0].mxu0
        %2269 = vmatprep.mubr.bf16.mxu0 0
        %2270 = vmatmul.mubr.bf16.gmra.mrb[0].mxu0 %v2216
        %v2271 = vpop.f32.mrb[0].mxu0
        %v2272 = vadd.f32 0.0, %v2271
        %v2273 = vpop.f32.mrb[0].mxu0
        %v2274 = vpop.f32.mrb[0].mxu0
        %v2275 = vadd.f32 0.0, %v2274
        %v2276 = vpop.f32.mrb[0].mxu0
        %2277 = vmatprep.mubr.bf16.mxu0 0
        %2278 = vmatmul.mubr.bf16.gmra.mrb[0].mxu0 %v2219
        %v2279 = vpop.f32.mrb[0].mxu0
        %v2280 = vadd.f32 0.0, %v2279
        %v2281 = vpop.f32.mrb[0].mxu0
        %v2282 = vpop.f32.mrb[0].mxu0
        %v2283 = vadd.f32 0.0, %v2282
        %v2284 = vpop.f32.mrb[0].mxu0
        %2285 = vdwg.mxu0
        %v2286 = vadd.f32 %v1877, %v2256
        %v2287 = vadd.f32 %v1880, %v2259
        %v2288 = vadd.f32 %v1885, %v2264
        %v2289 = vadd.f32 %v1888, %v2267
        %v2290 = vadd.f32 %v1893, %v2272
        %v2291 = vadd.f32 %v1896, %v2275
        %v2292 = vadd.f32 %v1901, %v2280
        %v2293 = vadd.f32 %v1904, %v2283
        %2294 = vrot.lane.b32.xlu0 %v1151, 32
        %v2295 = vpop.permute.xlu0 %2294
        %2296 = vrot.lane.b32.xlu0 %v1152, 32
        %v2297 = vpop.permute.xlu0 %2296
        %2298 = vrot.lane.b32.xlu0 %v1153, 32
        %v2299 = vpop.permute.xlu0 %2298
        %2300 = vrot.lane.b32.xlu0 %v1154, 32
        %v2301 = vpop.permute.xlu0 %2300
        %2302 = vrot.lane.b32.xlu0 %v1155, 32
        %v2303 = vpop.permute.xlu0 %2302
        %2304 = vrot.lane.b32.xlu0 %v1156, 32
        %v2305 = vpop.permute.xlu0 %2304
        %2306 = vrot.lane.b32.xlu0 %v1157, 32
        %v2307 = vpop.permute.xlu0 %2306
        %2308 = vrot.lane.b32.xlu0 %v1158, 32
        %v2309 = vpop.permute.xlu0 %2308
        %v2311 = vsel %vm1163, %v2295, 0
        %v2314 = vsel %vm1163, %v2297, 0
        %v2317 = vsel %vm1163, %v2299, 0
        %v2320 = vsel %vm1163, %v2301, 0
        %v2323 = vsel %vm1163, %v2303, 0
        %v2326 = vsel %vm1163, %v2305, 0
        %v2329 = vsel %vm1163, %v2307, 0
        %v2332 = vsel %vm1163, %v2309, 0
        %2334 = vmatprep.subr.bf16.mxu0 0
        %2335 = vmatpush1.bf16.xpose.msra.mxu0 %v2323
        %2336 = vmatprep.subr.bf16.mxu0 0
        %2337 = vmatpush1.bf16.xpose.msra.mxu0 %v2326
        %2338 = vmatprep.subr.bf16.mxu0 0
        %2339 = vmatpush1.bf16.xpose.msra.mxu0 %v2329
        %2340 = vmatprep.subr.bf16.mxu0 0
        %2341 = vmatpush1.bf16.xpose.msra.mxu0 %v2332
        %2342 = vmatprep.subr.bf16.mxu0 0
        %2343 = vmatpush1.bf16.xpose.msra.mxu0 0
        %2344 = vmatprep.subr.bf16.mxu0 0
        %2345 = vmatpush1.bf16.xpose.msra.mxu0 0
        %2346 = vmatprep.subr.bf16.mxu0 0
        %2347 = vmatpush1.bf16.xpose.msra.mxu0 0
        %2348 = vmatprep.subr.bf16.mxu0 0
        %2349 = vmatpush1.bf16.xpose.msra.mxu0 0
        %2350 = vmatprep.subr.bf16.mxu0 0
        %2351 = vmatpush1.bf16.xpose.msra.mxu0 0
        %2352 = vmatprep.subr.bf16.mxu0 0
        %2353 = vmatpush1.bf16.xpose.msra.mxu0 0
        %2354 = vmatprep.subr.bf16.mxu0 0
        %2355 = vmatpush1.bf16.xpose.msra.mxu0 0
        %2356 = vmatprep.subr.bf16.mxu0 0
        %2357 = vmatpush1.bf16.xpose.msra.mxu0 0
        %2358 = vmatprep.subr.bf16.mxu0 0
        %2359 = vmatpush1.bf16.xpose.msra.mxu0 0
        %2360 = vmatprep.subr.bf16.mxu0 0
        %2361 = vmatpush1.bf16.xpose.msra.mxu0 0
        %2362 = vmatprep.subr.bf16.mxu0 0
        %2363 = vmatpush1.bf16.xpose.msra.mxu0 0
        %2364 = vmatprep.subr.bf16.mxu0 0
        %2365 = vmatpush1.bf16.xpose.msra.mxu0 0
        %2366 = vmatprep.mubr.bf16.mxu0 0
        %2367 = vmatmul.mubr.bf16.gmra.mrb[0].mxu0 %v2311
        %v2368 = vpop.f32.mrb[0].mxu0
        %v2369 = vadd.f32 0.0, %v2368
        %v2370 = vpop.f32.mrb[0].mxu0
        %v2371 = vpop.f32.mrb[0].mxu0
        %v2372 = vadd.f32 0.0, %v2371
        %v2373 = vpop.f32.mrb[0].mxu0
        %2374 = vmatprep.mubr.bf16.mxu0 0
        %2375 = vmatmul.mubr.bf16.gmra.mrb[0].mxu0 %v2314
        %v2376 = vpop.f32.mrb[0].mxu0
        %v2377 = vadd.f32 0.0, %v2376
        %v2378 = vpop.f32.mrb[0].mxu0
        %v2379 = vpop.f32.mrb[0].mxu0
        %v2380 = vadd.f32 0.0, %v2379
        %v2381 = vpop.f32.mrb[0].mxu0
        %2382 = vmatprep.mubr.bf16.mxu0 0
        %2383 = vmatmul.mubr.bf16.gmra.mrb[0].mxu0 %v2317
        %v2384 = vpop.f32.mrb[0].mxu0
        %v2385 = vadd.f32 0.0, %v2384
        %v2386 = vpop.f32.mrb[0].mxu0
        %v2387 = vpop.f32.mrb[0].mxu0
        %v2388 = vadd.f32 0.0, %v2387
        %v2389 = vpop.f32.mrb[0].mxu0
        %2390 = vmatprep.mubr.bf16.mxu0 0
        %2391 = vmatmul.mubr.bf16.gmra.mrb[0].mxu0 %v2320
        %v2392 = vpop.f32.mrb[0].mxu0
        %v2393 = vadd.f32 0.0, %v2392
        %v2394 = vpop.f32.mrb[0].mxu0
        %v2395 = vpop.f32.mrb[0].mxu0
        %v2396 = vadd.f32 0.0, %v2395
        %v2397 = vpop.f32.mrb[0].mxu0
        %2398 = vdwg.mxu0
        %v2399 = vsel %vm1253, %v2369, -inf
        %2400 = vmax.xlane.f32.xlu0 %v2399
        %v2401 = vpop.xlane.xlu0 %2400
        %v2402 = vsel %vm1253, %v2372, -inf
        %2403 = vmax.xlane.f32.xlu0 %v2402
        %v2404 = vpop.xlane.xlu0 %2403
        %v2405 = vsel %vm1253, %v2377, -inf
        %2406 = vmax.xlane.f32.xlu0 %v2405
        %v2407 = vpop.xlane.xlu0 %2406
        %v2408 = vsel %vm1253, %v2380, -inf
        %2409 = vmax.xlane.f32.xlu0 %v2408
        %v2410 = vpop.xlane.xlu0 %2409
        %v2411 = vsel %vm1253, %v2385, -inf
        %2412 = vmax.xlane.f32.xlu0 %v2411
        %v2413 = vpop.xlane.xlu0 %2412
        %v2414 = vsel %vm1253, %v2388, -inf
        %2415 = vmax.xlane.f32.xlu0 %v2414
        %v2416 = vpop.xlane.xlu0 %2415
        %v2417 = vsel %vm1253, %v2393, -inf
        %2418 = vmax.xlane.f32.xlu0 %v2417
        %v2419 = vpop.xlane.xlu0 %2418
        %v2420 = vsel %vm1253, %v2396, -inf
        %2421 = vmax.xlane.f32.xlu0 %v2420
        %v2422 = vpop.xlane.xlu0 %2421
        %v2423 = vsub.f32 %v2369, %v2401
        %v2424 = vsub.f32 %v2372, %v2404
        %v2425 = vsub.f32 %v2377, %v2407
        %v2426 = vsub.f32 %v2380, %v2410
        %v2427 = vsub.f32 %v2385, %v2413
        %v2428 = vsub.f32 %v2388, %v2416
        %v2429 = vsub.f32 %v2393, %v2419
        %v2430 = vsub.f32 %v2396, %v2422
        %v2431 = vmul.f32 %v2423, 1.442695
        %v2432 = vpow.pop %v2431
        %v2433 = vmul.f32 %v2424, 1.442695
        %v2434 = vpow.pop %v2433
        %v2435 = vmul.f32 %v2425, 1.442695
        %v2436 = vpow.pop %v2435
        %v2437 = vmul.f32 %v2426, 1.442695
        %v2438 = vpow.pop %v2437
        %v2439 = vmul.f32 %v2427, 1.442695
        %v2440 = vpow.pop %v2439
        %v2441 = vmul.f32 %v2428, 1.442695
        %v2442 = vpow.pop %v2441
        %v2443 = vmul.f32 %v2429, 1.442695
        %v2444 = vpow.pop %v2443
        %v2445 = vmul.f32 %v2430, 1.442695
        %v2446 = vpow.pop %v2445
        %v2447 = vsel %vm1253, %v2432, 0.0
        %2448 = vadd.xlane.f32.xlu0 %v2447
        %v2449 = vpop.xlane.xlu0 %2448
        %v2450 = vsel %vm1253, %v2434, 0.0
        %2451 = vadd.xlane.f32.xlu0 %v2450
        %v2452 = vpop.xlane.xlu0 %2451
        %v2453 = vsel %vm1253, %v2436, 0.0
        %2454 = vadd.xlane.f32.xlu0 %v2453
        %v2455 = vpop.xlane.xlu0 %2454
        %v2456 = vsel %vm1253, %v2438, 0.0
        %2457 = vadd.xlane.f32.xlu0 %v2456
        %v2458 = vpop.xlane.xlu0 %2457
        %v2459 = vsel %vm1253, %v2440, 0.0
        %2460 = vadd.xlane.f32.xlu0 %v2459
        %v2461 = vpop.xlane.xlu0 %2460
        %v2462 = vsel %vm1253, %v2442, 0.0
        %2463 = vadd.xlane.f32.xlu0 %v2462
        %v2464 = vpop.xlane.xlu0 %2463
        %v2465 = vsel %vm1253, %v2444, 0.0
        %2466 = vadd.xlane.f32.xlu0 %v2465
        %v2467 = vpop.xlane.xlu0 %2466
        %v2468 = vsel %vm1253, %v2446, 0.0
        %2469 = vadd.xlane.f32.xlu0 %v2468
        %v2470 = vpop.xlane.xlu0 %2469
        %v2471 = vrcp.pop %v2449
        %v2472 = vrcp.pop %v2452
        %v2473 = vrcp.pop %v2455
        %v2474 = vrcp.pop %v2458
        %v2475 = vrcp.pop %v2461
        %v2476 = vrcp.pop %v2464
        %v2477 = vrcp.pop %v2467
        %v2478 = vrcp.pop %v2470
        %v2479 = vmul.f32 %v2432, %v2471
        %v2480 = vmul.f32 %v2434, %v2472
        %v2481 = vmul.f32 %v2436, %v2473
        %v2482 = vmul.f32 %v2438, %v2474
        %v2483 = vmul.f32 %v2440, %v2475
        %v2484 = vmul.f32 %v2442, %v2476
        %v2485 = vmul.f32 %v2444, %v2477
        %v2486 = vmul.f32 %v2446, %v2478
        %v2487 = vpack.c.bf16 %v2480, %v2479
        %v2488 = vpack.c.bf16 %v2482, %v2481
        %v2489 = vpack.c.bf16 %v2484, %v2483
        %v2490 = vpack.c.bf16 %v2486, %v2485
        %2491 = vrot.lane.b32.xlu0 %v1159, 32
        %v2492 = vpop.permute.xlu0 %2491
        %2493 = vrot.lane.b32.xlu0 %v1160, 32
        %v2494 = vpop.permute.xlu0 %2493
        %2495 = vrot.lane.b32.xlu0 %v1161, 32
        %v2496 = vpop.permute.xlu0 %2495
        %2497 = vrot.lane.b32.xlu0 %v1162, 32
        %v2498 = vpop.permute.xlu0 %2497
        %v2504 = vsel %vm1253, %v2487, 0
        %v2507 = vsel %vm1253, %v2488, 0
        %v2510 = vsel %vm1253, %v2489, 0
        %v2513 = vsel %vm1253, %v2490, 0
        %2515 = vmatprep.subr.bf16.mxu0 0
        %2516 = vmatpush1.bf16.msra.mxu0 %v2492
        %2517 = vmatprep.subr.bf16.mxu0 0
        %2518 = vmatpush1.bf16.msra.mxu0 %v2494
        %2519 = vmatprep.subr.bf16.mxu0 0
        %2520 = vmatpush1.bf16.msra.mxu0 %v2496
        %2521 = vmatprep.subr.bf16.mxu0 0
        %2522 = vmatpush1.bf16.msra.mxu0 %v2498
        %2523 = vmatprep.subr.bf16.mxu0 0
        %2524 = vmatpush1.bf16.msra.mxu0 0
        %2525 = vmatprep.subr.bf16.mxu0 0
        %2526 = vmatpush1.bf16.msra.mxu0 0
        %2527 = vmatprep.subr.bf16.mxu0 0
        %2528 = vmatpush1.bf16.msra.mxu0 0
        %2529 = vmatprep.subr.bf16.mxu0 0
        %2530 = vmatpush1.bf16.msra.mxu0 0
        %2531 = vmatprep.subr.bf16.mxu0 0
        %2532 = vmatpush1.bf16.msra.mxu0 0
        %2533 = vmatprep.subr.bf16.mxu0 0
        %2534 = vmatpush1.bf16.msra.mxu0 0
        %2535 = vmatprep.subr.bf16.mxu0 0
        %2536 = vmatpush1.bf16.msra.mxu0 0
        %2537 = vmatprep.subr.bf16.mxu0 0
        %2538 = vmatpush1.bf16.msra.mxu0 0
        %2539 = vmatprep.subr.bf16.mxu0 0
        %2540 = vmatpush1.bf16.msra.mxu0 0
        %2541 = vmatprep.subr.bf16.mxu0 0
        %2542 = vmatpush1.bf16.msra.mxu0 0
        %2543 = vmatprep.subr.bf16.mxu0 0
        %2544 = vmatpush1.bf16.msra.mxu0 0
        %2545 = vmatprep.subr.bf16.mxu0 0
        %2546 = vmatpush1.bf16.msra.mxu0 0
        %2547 = vmatprep.mubr.bf16.mxu0 0
        %2548 = vmatmul.mubr.bf16.gmra.mrb[0].mxu0 %v2504
        %v2549 = vpop.f32.mrb[0].mxu0
        %v2550 = vadd.f32 0.0, %v2549
        %v2551 = vpop.f32.mrb[0].mxu0
        %v2552 = vpop.f32.mrb[0].mxu0
        %v2553 = vadd.f32 0.0, %v2552
        %v2554 = vpop.f32.mrb[0].mxu0
        %2555 = vmatprep.mubr.bf16.mxu0 0
        %2556 = vmatmul.mubr.bf16.gmra.mrb[0].mxu0 %v2507
        %v2557 = vpop.f32.mrb[0].mxu0
        %v2558 = vadd.f32 0.0, %v2557
        %v2559 = vpop.f32.mrb[0].mxu0
        %v2560 = vpop.f32.mrb[0].mxu0
        %v2561 = vadd.f32 0.0, %v2560
        %v2562 = vpop.f32.mrb[0].mxu0
        %2563 = vmatprep.mubr.bf16.mxu0 0
        %2564 = vmatmul.mubr.bf16.gmra.mrb[0].mxu0 %v2510
        %v2565 = vpop.f32.mrb[0].mxu0
        %v2566 = vadd.f32 0.0, %v2565
        %v2567 = vpop.f32.mrb[0].mxu0
        %v2568 = vpop.f32.mrb[0].mxu0
        %v2569 = vadd.f32 0.0, %v2568
        %v2570 = vpop.f32.mrb[0].mxu0
        %2571 = vmatprep.mubr.bf16.mxu0 0
        %2572 = vmatmul.mubr.bf16.gmra.mrb[0].mxu0 %v2513
        %v2573 = vpop.f32.mrb[0].mxu0
        %v2574 = vadd.f32 0.0, %v2573
        %v2575 = vpop.f32.mrb[0].mxu0
        %v2576 = vpop.f32.mrb[0].mxu0
        %v2577 = vadd.f32 0.0, %v2576
        %v2578 = vpop.f32.mrb[0].mxu0
        %2579 = vdwg.mxu0
        %v2580 = vpack.c.bf16 %v2553, %v2550
        %v2581 = vpack.c.bf16 %v2561, %v2558
        %v2582 = vpack.c.bf16 %v2569, %v2566
        %v2583 = vpack.c.bf16 %v2577, %v2574
        %v2588 = vunpack.c.l.b16 %v1147
        %v2589 = vunpack.c.l.b16 %v1148
        %v2590 = vunpack.c.l.b16 %v1149
        %v2591 = vunpack.c.l.b16 %v1150
        %v2592 = vpack.c.b16 %v2589, %v2588
        %v2593 = vpack.c.b16 %v2591, %v2590
        %v2597 = vsel %vm1163, %v2580, 0
        %v2600 = vsel %vm1163, %v2581, 0
        %v2603 = vsel %vm1163, %v2582, 0
        %v2606 = vsel %vm1163, %v2583, 0
        %2608 = vmatprep.subr.bf16.mxu0 0
        %2609 = vmatpush1.bf16.msra.mxu0 %v2592
        %2610 = vmatprep.subr.bf16.mxu0 0
        %2611 = vmatpush1.bf16.msra.mxu0 %v2593
        %2612 = vmatprep.subr.bf16.mxu0 0
        %2613 = vmatpush1.bf16.msra.mxu0 0
        %2614 = vmatprep.subr.bf16.mxu0 0
        %2615 = vmatpush1.bf16.msra.mxu0 0
        %2616 = vmatprep.subr.bf16.mxu0 0
        %2617 = vmatpush1.bf16.msra.mxu0 0
        %2618 = vmatprep.subr.bf16.mxu0 0
        %2619 = vmatpush1.bf16.msra.mxu0 0
        %2620 = vmatprep.subr.bf16.mxu0 0
        %2621 = vmatpush1.bf16.msra.mxu0 0
        %2622 = vmatprep.subr.bf16.mxu0 0
        %2623 = vmatpush1.bf16.msra.mxu0 0
        %2624 = vmatprep.subr.bf16.mxu0 0
        %2625 = vmatpush1.bf16.msra.mxu0 0
        %2626 = vmatprep.subr.bf16.mxu0 0
        %2627 = vmatpush1.bf16.msra.mxu0 0
        %2628 = vmatprep.subr.bf16.mxu0 0
        %2629 = vmatpush1.bf16.msra.mxu0 0
        %2630 = vmatprep.subr.bf16.mxu0 0
        %2631 = vmatpush1.bf16.msra.mxu0 0
        %2632 = vmatprep.subr.bf16.mxu0 0
        %2633 = vmatpush1.bf16.msra.mxu0 0
        %2634 = vmatprep.subr.bf16.mxu0 0
        %2635 = vmatpush1.bf16.msra.mxu0 0
        %2636 = vmatprep.subr.bf16.mxu0 0
        %2637 = vmatpush1.bf16.msra.mxu0 0
        %2638 = vmatprep.subr.bf16.mxu0 0
        %2639 = vmatpush1.bf16.msra.mxu0 0
        %2640 = vmatprep.mubr.bf16.mxu0 0
        %2641 = vmatmul.mubr.bf16.gmra.mrb[0].mxu0 %v2597
        %v2642 = vpop.f32.mrb[0].mxu0
        %v2643 = vadd.f32 0.0, %v2642
        %v2644 = vpop.f32.mrb[0].mxu0
        %v2645 = vpop.f32.mrb[0].mxu0
        %v2646 = vadd.f32 0.0, %v2645
        %v2647 = vpop.f32.mrb[0].mxu0
        %2648 = vmatprep.mubr.bf16.mxu0 0
        %2649 = vmatmul.mubr.bf16.gmra.mrb[0].mxu0 %v2600
        %v2650 = vpop.f32.mrb[0].mxu0
        %v2651 = vadd.f32 0.0, %v2650
        %v2652 = vpop.f32.mrb[0].mxu0
        %v2653 = vpop.f32.mrb[0].mxu0
        %v2654 = vadd.f32 0.0, %v2653
        %v2655 = vpop.f32.mrb[0].mxu0
        %2656 = vmatprep.mubr.bf16.mxu0 0
        %2657 = vmatmul.mubr.bf16.gmra.mrb[0].mxu0 %v2603
        %v2658 = vpop.f32.mrb[0].mxu0
        %v2659 = vadd.f32 0.0, %v2658
        %v2660 = vpop.f32.mrb[0].mxu0
        %v2661 = vpop.f32.mrb[0].mxu0
        %v2662 = vadd.f32 0.0, %v2661
        %v2663 = vpop.f32.mrb[0].mxu0
        %2664 = vmatprep.mubr.bf16.mxu0 0
        %2665 = vmatmul.mubr.bf16.gmra.mrb[0].mxu0 %v2606
        %v2666 = vpop.f32.mrb[0].mxu0
        %v2667 = vadd.f32 0.0, %v2666
        %v2668 = vpop.f32.mrb[0].mxu0
        %v2669 = vpop.f32.mrb[0].mxu0
        %v2670 = vadd.f32 0.0, %v2669
        %v2671 = vpop.f32.mrb[0].mxu0
        %2672 = vdwg.mxu0
        %v2673 = vadd.f32 %v2286, %v2643
        %v2674 = vadd.f32 %v2287, %v2646
        %v2675 = vadd.f32 %v2288, %v2651
        %v2676 = vadd.f32 %v2289, %v2654
        %v2677 = vadd.f32 %v2290, %v2659
        %v2678 = vadd.f32 %v2291, %v2662
        %v2679 = vadd.f32 %v2292, %v2667
        %v2680 = vadd.f32 %v2293, %v2670
        %v2681 = vld [vmem:[%s767] sm:$0x1]
        %v2683 = vlaneseq
        %v2684 = vshrl.u32 %v2683, 7
        %v2685 = vsub.s32 0, %v2684
        %v2686 = vrot.slane %v2681, %v2685
        %v2688 = vadd.f32 %v2673, %v2686
        %v2689 = vadd.f32 %v2674, %v2686
        %v2690 = vadd.f32 %v2675, %v2686
        %v2691 = vadd.f32 %v2676, %v2686
        %v2692 = vadd.f32 %v2677, %v2686
        %v2693 = vadd.f32 %v2678, %v2686
        %v2694 = vadd.f32 %v2679, %v2686
        %v2695 = vadd.f32 %v2680, %v2686
        %v2696 = vadd.f32 %v808, %v2688
        %v2697 = vadd.f32 %v809, %v2689
        %v2698 = vadd.f32 %v810, %v2690
        %v2699 = vadd.f32 %v811, %v2691
        %v2700 = vadd.f32 %v812, %v2692
        %v2701 = vadd.f32 %v813, %v2693
        %v2702 = vadd.f32 %v814, %v2694
        %v2703 = vadd.f32 %v815, %v2695
        %v2704 = vld [vmem:[%s770] sm:$0x1]
        %v2705 = vld [vmem:[%s773] sm:$0x1]
        %2706 = vadd.xlane.f32.xlu0 %v2696
        %v2707 = vpop.xlane.xlu0 %2706
        %2708 = vadd.xlane.f32.xlu0 %v2697
        %v2709 = vpop.xlane.xlu0 %2708
        %2710 = vadd.xlane.f32.xlu0 %v2698
        %v2711 = vpop.xlane.xlu0 %2710
        %2712 = vadd.xlane.f32.xlu0 %v2699
        %v2713 = vpop.xlane.xlu0 %2712
        %2714 = vadd.xlane.f32.xlu0 %v2700
        %v2715 = vpop.xlane.xlu0 %2714
        %2716 = vadd.xlane.f32.xlu0 %v2701
        %v2717 = vpop.xlane.xlu0 %2716
        %2718 = vadd.xlane.f32.xlu0 %v2702
        %v2719 = vpop.xlane.xlu0 %2718
        %2720 = vadd.xlane.f32.xlu0 %v2703
        %v2721 = vpop.xlane.xlu0 %2720
        %v2722 = vrcp.pop 128.0
        %v2723 = vmul.f32 %v2707, %v2722
        %v2724 = vmul.f32 %v2709, %v2722
        %v2725 = vmul.f32 %v2711, %v2722
        %v2726 = vmul.f32 %v2713, %v2722
        %v2727 = vmul.f32 %v2715, %v2722
        %v2728 = vmul.f32 %v2717, %v2722
        %v2729 = vmul.f32 %v2719, %v2722
        %v2730 = vmul.f32 %v2721, %v2722
        %v2731 = vsub.f32 %v2696, %v2723
        %v2732 = vsub.f32 %v2697, %v2724
        %v2733 = vsub.f32 %v2698, %v2725
        %v2734 = vsub.f32 %v2699, %v2726
        %v2735 = vsub.f32 %v2700, %v2727
        %v2736 = vsub.f32 %v2701, %v2728
        %v2737 = vsub.f32 %v2702, %v2729
        %v2738 = vsub.f32 %v2703, %v2730
        %v2739 = vmul.f32 %v2731, %v2731
        %v2740 = vmul.f32 %v2732, %v2732
        %v2741 = vmul.f32 %v2733, %v2733
        %v2742 = vmul.f32 %v2734, %v2734
        %v2743 = vmul.f32 %v2735, %v2735
        %v2744 = vmul.f32 %v2736, %v2736
        %v2745 = vmul.f32 %v2737, %v2737
        %v2746 = vmul.f32 %v2738, %v2738
        %2747 = vadd.xlane.f32.xlu0 %v2739
        %v2748 = vpop.xlane.xlu0 %2747
        %2749 = vadd.xlane.f32.xlu0 %v2740
        %v2750 = vpop.xlane.xlu0 %2749
        %2751 = vadd.xlane.f32.xlu0 %v2741
        %v2752 = vpop.xlane.xlu0 %2751
        %2753 = vadd.xlane.f32.xlu0 %v2742
        %v2754 = vpop.xlane.xlu0 %2753
        %2755 = vadd.xlane.f32.xlu0 %v2743
        %v2756 = vpop.xlane.xlu0 %2755
        %2757 = vadd.xlane.f32.xlu0 %v2744
        %v2758 = vpop.xlane.xlu0 %2757
        %2759 = vadd.xlane.f32.xlu0 %v2745
        %v2760 = vpop.xlane.xlu0 %2759
        %2761 = vadd.xlane.f32.xlu0 %v2746
        %v2762 = vpop.xlane.xlu0 %2761
        %v2763 = vmul.f32 %v2748, %v2722
        %v2764 = vmul.f32 %v2750, %v2722
        %v2765 = vmul.f32 %v2752, %v2722
        %v2766 = vmul.f32 %v2754, %v2722
        %v2767 = vmul.f32 %v2756, %v2722
        %v2768 = vmul.f32 %v2758, %v2722
        %v2769 = vmul.f32 %v2760, %v2722
        %v2770 = vmul.f32 %v2762, %v2722
        %v2771 = vadd.f32 %v2763, 1e-05
        %v2772 = vadd.f32 %v2764, 1e-05
        %v2773 = vadd.f32 %v2765, 1e-05
        %v2774 = vadd.f32 %v2766, 1e-05
        %v2775 = vadd.f32 %v2767, 1e-05
        %v2776 = vadd.f32 %v2768, 1e-05
        %v2777 = vadd.f32 %v2769, 1e-05
        %v2778 = vadd.f32 %v2770, 1e-05
        %v2779 = vrsqrt.pop %v2771
        %v2780 = vrsqrt.pop %v2772
        %v2781 = vrsqrt.pop %v2773
        %v2782 = vrsqrt.pop %v2774
        %v2783 = vrsqrt.pop %v2775
        %v2784 = vrsqrt.pop %v2776
        %v2785 = vrsqrt.pop %v2777
        %v2786 = vrsqrt.pop %v2778
        %v2787 = vmul.f32 %v2731, %v2779
        %v2788 = vmul.f32 %v2732, %v2780
        %v2789 = vmul.f32 %v2733, %v2781
        %v2790 = vmul.f32 %v2734, %v2782
        %v2791 = vmul.f32 %v2735, %v2783
        %v2792 = vmul.f32 %v2736, %v2784
        %v2793 = vmul.f32 %v2737, %v2785
        %v2794 = vmul.f32 %v2738, %v2786
        %v2796 = vlaneseq
        %v2797 = vshrl.u32 %v2796, 7
        %v2798 = vsub.s32 0, %v2797
        %v2799 = vrot.slane %v2704, %v2798
        %v2801 = vmul.f32 %v2787, %v2799
        %v2802 = vmul.f32 %v2788, %v2799
        %v2803 = vmul.f32 %v2789, %v2799
        %v2804 = vmul.f32 %v2790, %v2799
        %v2805 = vmul.f32 %v2791, %v2799
        %v2806 = vmul.f32 %v2792, %v2799
        %v2807 = vmul.f32 %v2793, %v2799
        %v2808 = vmul.f32 %v2794, %v2799
        %v2810 = vlaneseq
        %v2811 = vshrl.u32 %v2810, 7
        %v2812 = vsub.s32 0, %v2811
        %v2813 = vrot.slane %v2705, %v2812
        %v2815 = vadd.f32 %v2801, %v2813
        %v2816 = vadd.f32 %v2802, %v2813
        %v2817 = vadd.f32 %v2803, %v2813
        %v2818 = vadd.f32 %v2804, %v2813
        %v2819 = vadd.f32 %v2805, %v2813
        %v2820 = vadd.f32 %v2806, %v2813
        %v2821 = vadd.f32 %v2807, %v2813
        %v2822 = vadd.f32 %v2808, %v2813
        %v2823 = vpack.c.bf16 %v2816, %v2815
        %v2824 = vpack.c.bf16 %v2818, %v2817
        %v2825 = vpack.c.bf16 %v2820, %v2819
        %v2826 = vpack.c.bf16 %v2822, %v2821
        %v2827 = vld [vmem:[%s663] sm:$0xff]
        %v2828 = vld [vmem:[%s663 + $0x8] sm:$0xff]
        %v2829 = vld [vmem:[%s663 + $0x10] sm:$0xff]
        %v2830 = vld [vmem:[%s663 + $0x18] sm:$0xff]
        %v2831 = vld [vmem:[%s663 + $0x20] sm:$0xff]
        %v2832 = vld [vmem:[%s663 + $0x28] sm:$0xff]
        %v2833 = vld [vmem:[%s663 + $0x30] sm:$0xff]
        %v2834 = vld [vmem:[%s663 + $0x38] sm:$0xff]
        %v2835 = vld [vmem:[%s663 + $0x40] sm:$0xff]
        %v2836 = vld [vmem:[%s663 + $0x48] sm:$0xff]
        %v2837 = vld [vmem:[%s663 + $0x50] sm:$0xff]
        %v2838 = vld [vmem:[%s663 + $0x58] sm:$0xff]
        %v2839 = vld [vmem:[%s663 + $0x60] sm:$0xff]
        %v2840 = vld [vmem:[%s663 + $0x68] sm:$0xff]
        %v2841 = vld [vmem:[%s663 + $0x70] sm:$0xff]
        %v2842 = vld [vmem:[%s663 + $0x78] sm:$0xff]
        %v2843 = vld [vmem:[%s663 + $0x80] sm:$0xff]
        %v2844 = vld [vmem:[%s663 + $0x88] sm:$0xff]
        %v2845 = vld [vmem:[%s663 + $0x90] sm:$0xff]
        %v2846 = vld [vmem:[%s663 + $0x98] sm:$0xff]
        %v2847 = vld [vmem:[%s663 + $0xa0] sm:$0xff]
        %v2848 = vld [vmem:[%s663 + $0xa8] sm:$0xff]
        %v2849 = vld [vmem:[%s663 + $0xb0] sm:$0xff]
        %v2850 = vld [vmem:[%s663 + $0xb8] sm:$0xff]
        %v2851 = vld [vmem:[%s663 + $0xc0] sm:$0xff]
        %v2852 = vld [vmem:[%s663 + $0xc8] sm:$0xff]
        %v2853 = vld [vmem:[%s663 + $0xd0] sm:$0xff]
        %v2854 = vld [vmem:[%s663 + $0xd8] sm:$0xff]
        %v2855 = vld [vmem:[%s663 + $0xe0] sm:$0xff]
        %v2856 = vld [vmem:[%s663 + $0xe8] sm:$0xff]
        %v2857 = vld [vmem:[%s663 + $0xf0] sm:$0xff]
        %v2858 = vld [vmem:[%s663 + $0xf8] sm:$0xff]
        %v2859 = vld [vmem:[%s663 + $0x100] sm:$0xff]
        %v2860 = vld [vmem:[%s663 + $0x108] sm:$0xff]
        %v2861 = vld [vmem:[%s663 + $0x110] sm:$0xff]
        %v2862 = vld [vmem:[%s663 + $0x118] sm:$0xff]
        %v2863 = vld [vmem:[%s663 + $0x120] sm:$0xff]
        %v2864 = vld [vmem:[%s663 + $0x128] sm:$0xff]
        %v2865 = vld [vmem:[%s663 + $0x130] sm:$0xff]
        %v2866 = vld [vmem:[%s663 + $0x138] sm:$0xff]
        %v2867 = vld [vmem:[%s663 + $0x140] sm:$0xff]
        %v2868 = vld [vmem:[%s663 + $0x148] sm:$0xff]
        %v2869 = vld [vmem:[%s663 + $0x150] sm:$0xff]
        %v2870 = vld [vmem:[%s663 + $0x158] sm:$0xff]
        %v2871 = vld [vmem:[%s663 + $0x160] sm:$0xff]
        %v2872 = vld [vmem:[%s663 + $0x168] sm:$0xff]
        %v2873 = vld [vmem:[%s663 + $0x170] sm:$0xff]
        %v2874 = vld [vmem:[%s663 + $0x178] sm:$0xff]
        %v2875 = vld [vmem:[%s663 + $0x180] sm:$0xff]
        %v2876 = vld [vmem:[%s663 + $0x188] sm:$0xff]
        %v2877 = vld [vmem:[%s663 + $0x190] sm:$0xff]
        %v2878 = vld [vmem:[%s663 + $0x198] sm:$0xff]
        %v2879 = vld [vmem:[%s663 + $0x1a0] sm:$0xff]
        %v2880 = vld [vmem:[%s663 + $0x1a8] sm:$0xff]
        %v2881 = vld [vmem:[%s663 + $0x1b0] sm:$0xff]
        %v2882 = vld [vmem:[%s663 + $0x1b8] sm:$0xff]
        %v2883 = vld [vmem:[%s663 + $0x1c0] sm:$0xff]
        %v2884 = vld [vmem:[%s663 + $0x1c8] sm:$0xff]
        %v2885 = vld [vmem:[%s663 + $0x1d0] sm:$0xff]
        %v2886 = vld [vmem:[%s663 + $0x1d8] sm:$0xff]
        %v2887 = vld [vmem:[%s663 + $0x1e0] sm:$0xff]
        %v2888 = vld [vmem:[%s663 + $0x1e8] sm:$0xff]
        %v2889 = vld [vmem:[%s663 + $0x1f0] sm:$0xff]
        %v2890 = vld [vmem:[%s663 + $0x1f8] sm:$0xff]
        %v2891 = vld [vmem:[%s663 + $0x200] sm:$0xff]
        %v2892 = vld [vmem:[%s663 + $0x208] sm:$0xff]
        %v2893 = vld [vmem:[%s663 + $0x210] sm:$0xff]
        %v2894 = vld [vmem:[%s663 + $0x218] sm:$0xff]
        %v2895 = vld [vmem:[%s663 + $0x220] sm:$0xff]
        %v2896 = vld [vmem:[%s663 + $0x228] sm:$0xff]
        %v2897 = vld [vmem:[%s663 + $0x230] sm:$0xff]
        %v2898 = vld [vmem:[%s663 + $0x238] sm:$0xff]
        %v2899 = vld [vmem:[%s663 + $0x240] sm:$0xff]
        %v2900 = vld [vmem:[%s663 + $0x248] sm:$0xff]
        %v2901 = vld [vmem:[%s663 + $0x250] sm:$0xff]
        %v2902 = vld [vmem:[%s663 + $0x258] sm:$0xff]
        %v2903 = vld [vmem:[%s663 + $0x260] sm:$0xff]
        %v2904 = vld [vmem:[%s663 + $0x268] sm:$0xff]
        %v2905 = vld [vmem:[%s663 + $0x270] sm:$0xff]
        %v2906 = vld [vmem:[%s663 + $0x278] sm:$0xff]
        %v2907 = vld [vmem:[%s663 + $0x280] sm:$0xff]
        %v2908 = vld [vmem:[%s663 + $0x288] sm:$0xff]
        %v2909 = vld [vmem:[%s663 + $0x290] sm:$0xff]
        %v2910 = vld [vmem:[%s663 + $0x298] sm:$0xff]
        %v2911 = vld [vmem:[%s663 + $0x2a0] sm:$0xff]
        %v2912 = vld [vmem:[%s663 + $0x2a8] sm:$0xff]
        %v2913 = vld [vmem:[%s663 + $0x2b0] sm:$0xff]
        %v2914 = vld [vmem:[%s663 + $0x2b8] sm:$0xff]
        %v2915 = vld [vmem:[%s663 + $0x2c0] sm:$0xff]
        %v2916 = vld [vmem:[%s663 + $0x2c8] sm:$0xff]
        %v2917 = vld [vmem:[%s663 + $0x2d0] sm:$0xff]
        %v2918 = vld [vmem:[%s663 + $0x2d8] sm:$0xff]
        %v2919 = vld [vmem:[%s663 + $0x2e0] sm:$0xff]
        %v2920 = vld [vmem:[%s663 + $0x2e8] sm:$0xff]
        %v2921 = vld [vmem:[%s663 + $0x2f0] sm:$0xff]
        %v2922 = vld [vmem:[%s663 + $0x2f8] sm:$0xff]
        %v2923 = vld [vmem:[%s663 + $0x300] sm:$0xff]
        %v2924 = vld [vmem:[%s663 + $0x308] sm:$0xff]
        %v2925 = vld [vmem:[%s663 + $0x310] sm:$0xff]
        %v2926 = vld [vmem:[%s663 + $0x318] sm:$0xff]
        %v2927 = vld [vmem:[%s663 + $0x320] sm:$0xff]
        %v2928 = vld [vmem:[%s663 + $0x328] sm:$0xff]
        %v2929 = vld [vmem:[%s663 + $0x330] sm:$0xff]
        %v2930 = vld [vmem:[%s663 + $0x338] sm:$0xff]
        %v2931 = vld [vmem:[%s663 + $0x340] sm:$0xff]
        %v2932 = vld [vmem:[%s663 + $0x348] sm:$0xff]
        %v2933 = vld [vmem:[%s663 + $0x350] sm:$0xff]
        %v2934 = vld [vmem:[%s663 + $0x358] sm:$0xff]
        %v2935 = vld [vmem:[%s663 + $0x360] sm:$0xff]
        %v2936 = vld [vmem:[%s663 + $0x368] sm:$0xff]
        %v2937 = vld [vmem:[%s663 + $0x370] sm:$0xff]
        %v2938 = vld [vmem:[%s663 + $0x378] sm:$0xff]
        %v2939 = vld [vmem:[%s663 + $0x380] sm:$0xff]
        %v2940 = vld [vmem:[%s663 + $0x388] sm:$0xff]
        %v2941 = vld [vmem:[%s663 + $0x390] sm:$0xff]
        %v2942 = vld [vmem:[%s663 + $0x398] sm:$0xff]
        %v2943 = vld [vmem:[%s663 + $0x3a0] sm:$0xff]
        %v2944 = vld [vmem:[%s663 + $0x3a8] sm:$0xff]
        %v2945 = vld [vmem:[%s663 + $0x3b0] sm:$0xff]
        %v2946 = vld [vmem:[%s663 + $0x3b8] sm:$0xff]
        %v2947 = vld [vmem:[%s663 + $0x3c0] sm:$0xff]
        %v2948 = vld [vmem:[%s663 + $0x3c8] sm:$0xff]
        %v2949 = vld [vmem:[%s663 + $0x3d0] sm:$0xff]
        %v2950 = vld [vmem:[%s663 + $0x3d8] sm:$0xff]
        %v2951 = vld [vmem:[%s663 + $0x3e0] sm:$0xff]
        %v2952 = vld [vmem:[%s663 + $0x3e8] sm:$0xff]
        %v2953 = vld [vmem:[%s663 + $0x3f0] sm:$0xff]
        %v2954 = vld [vmem:[%s663 + $0x3f8] sm:$0xff]
        %v2955 = vld [vmem:[%s777] sm:$0xff]
        %v2956 = vld [vmem:[%s777 + $0x8] sm:$0xff]
        %v2959 = vlaneseq
        %v2960 = vshrl.u32 %v2959, 7
        %v2961 = vsub.s32 0, %v2960
        %v2962 = vrot.slane %v2955, %v2961
        %v2963 = vlaneseq
        %v2964 = vshrl.u32 %v2963, 7
        %v2965 = vsub.s32 1, %v2964
        %v2966 = vrot.slane %v2955, %v2965
        %v2967 = vlaneseq
        %v2968 = vshrl.u32 %v2967, 7
        %v2969 = vsub.s32 2, %v2968
        %v2970 = vrot.slane %v2955, %v2969
        %v2971 = vlaneseq
        %v2972 = vshrl.u32 %v2971, 7
        %v2973 = vsub.s32 3, %v2972
        %v2974 = vrot.slane %v2955, %v2973
        %v2975 = vlaneseq
        %v2976 = vshrl.u32 %v2975, 7
        %v2977 = vsub.s32 4, %v2976
        %v2978 = vrot.slane %v2955, %v2977
        %v2979 = vlaneseq
        %v2980 = vshrl.u32 %v2979, 7
        %v2981 = vsub.s32 5, %v2980
        %v2982 = vrot.slane %v2955, %v2981
        %v2983 = vlaneseq
        %v2984 = vshrl.u32 %v2983, 7
        %v2985 = vsub.s32 6, %v2984
        %v2986 = vrot.slane %v2955, %v2985
        %v2987 = vlaneseq
        %v2988 = vshrl.u32 %v2987, 7
        %v2989 = vsub.s32 7, %v2988
        %v2990 = vrot.slane %v2955, %v2989
        %v2991 = vlaneseq
        %v2992 = vshrl.u32 %v2991, 7
        %v2993 = vsub.s32 0, %v2992
        %v2994 = vrot.slane %v2956, %v2993
        %v2995 = vlaneseq
        %v2996 = vshrl.u32 %v2995, 7
        %v2997 = vsub.s32 1, %v2996
        %v2998 = vrot.slane %v2956, %v2997
        %v2999 = vlaneseq
        %v3000 = vshrl.u32 %v2999, 7
        %v3001 = vsub.s32 2, %v3000
        %v3002 = vrot.slane %v2956, %v3001
        %v3003 = vlaneseq
        %v3004 = vshrl.u32 %v3003, 7
        %v3005 = vsub.s32 3, %v3004
        %v3006 = vrot.slane %v2956, %v3005
        %v3007 = vlaneseq
        %v3008 = vshrl.u32 %v3007, 7
        %v3009 = vsub.s32 4, %v3008
        %v3010 = vrot.slane %v2956, %v3009
        %v3011 = vlaneseq
        %v3012 = vshrl.u32 %v3011, 7
        %v3013 = vsub.s32 5, %v3012
        %v3014 = vrot.slane %v2956, %v3013
        %v3015 = vlaneseq
        %v3016 = vshrl.u32 %v3015, 7
        %v3017 = vsub.s32 6, %v3016
        %v3018 = vrot.slane %v2956, %v3017
        %v3019 = vlaneseq
        %v3020 = vshrl.u32 %v3019, 7
        %v3021 = vsub.s32 7, %v3020
        %v3022 = vrot.slane %v2956, %v3021
        %v3167 = vunpack.c.l.b16 %v2827
        %v3168 = vunpack.c.h.b16 %v2827
        %v3169 = vunpack.c.l.b16 %v2828
        %v3170 = vunpack.c.h.b16 %v2828
        %v3171 = vunpack.c.l.b16 %v2829
        %v3172 = vunpack.c.h.b16 %v2829
        %v3173 = vunpack.c.l.b16 %v2830
        %v3174 = vunpack.c.h.b16 %v2830
        %v3175 = vunpack.c.l.b16 %v2831
        %v3176 = vunpack.c.h.b16 %v2831
        %v3177 = vunpack.c.l.b16 %v2832
        %v3178 = vunpack.c.h.b16 %v2832
        %v3179 = vunpack.c.l.b16 %v2833
        %v3180 = vunpack.c.h.b16 %v2833
        %v3181 = vunpack.c.l.b16 %v2834
        %v3182 = vunpack.c.h.b16 %v2834
        %v3183 = vunpack.c.l.b16 %v2835
        %v3184 = vunpack.c.h.b16 %v2835
        %v3185 = vunpack.c.l.b16 %v2836
        %v3186 = vunpack.c.h.b16 %v2836
        %v3187 = vunpack.c.l.b16 %v2837
        %v3188 = vunpack.c.h.b16 %v2837
        %v3189 = vunpack.c.l.b16 %v2838
        %v3190 = vunpack.c.h.b16 %v2838
        %v3191 = vunpack.c.l.b16 %v2839
        %v3192 = vunpack.c.h.b16 %v2839
        %v3193 = vunpack.c.l.b16 %v2840
        %v3194 = vunpack.c.h.b16 %v2840
        %v3195 = vunpack.c.l.b16 %v2841
        %v3196 = vunpack.c.h.b16 %v2841
        %v3197 = vunpack.c.l.b16 %v2842
        %v3198 = vunpack.c.h.b16 %v2842
        %v3199 = vunpack.c.l.b16 %v2843
        %v3200 = vunpack.c.h.b16 %v2843
        %v3201 = vunpack.c.l.b16 %v2844
        %v3202 = vunpack.c.h.b16 %v2844
        %v3203 = vunpack.c.l.b16 %v2845
        %v3204 = vunpack.c.h.b16 %v2845
        %v3205 = vunpack.c.l.b16 %v2846
        %v3206 = vunpack.c.h.b16 %v2846
        %v3207 = vunpack.c.l.b16 %v2847
        %v3208 = vunpack.c.h.b16 %v2847
        %v3209 = vunpack.c.l.b16 %v2848
        %v3210 = vunpack.c.h.b16 %v2848
        %v3211 = vunpack.c.l.b16 %v2849
        %v3212 = vunpack.c.h.b16 %v2849
        %v3213 = vunpack.c.l.b16 %v2850
        %v3214 = vunpack.c.h.b16 %v2850
        %v3215 = vunpack.c.l.b16 %v2851
        %v3216 = vunpack.c.h.b16 %v2851
        %v3217 = vunpack.c.l.b16 %v2852
        %v3218 = vunpack.c.h.b16 %v2852
        %v3219 = vunpack.c.l.b16 %v2853
        %v3220 = vunpack.c.h.b16 %v2853
        %v3221 = vunpack.c.l.b16 %v2854
        %v3222 = vunpack.c.h.b16 %v2854
        %v3223 = vunpack.c.l.b16 %v2855
        %v3224 = vunpack.c.h.b16 %v2855
        %v3225 = vunpack.c.l.b16 %v2856
        %v3226 = vunpack.c.h.b16 %v2856
        %v3227 = vunpack.c.l.b16 %v2857
        %v3228 = vunpack.c.h.b16 %v2857
        %v3229 = vunpack.c.l.b16 %v2858
        %v3230 = vunpack.c.h.b16 %v2858
        %v3231 = vunpack.c.l.b16 %v2859
        %v3232 = vunpack.c.h.b16 %v2859
        %v3233 = vunpack.c.l.b16 %v2860
        %v3234 = vunpack.c.h.b16 %v2860
        %v3235 = vunpack.c.l.b16 %v2861
        %v3236 = vunpack.c.h.b16 %v2861
        %v3237 = vunpack.c.l.b16 %v2862
        %v3238 = vunpack.c.h.b16 %v2862
        %v3239 = vunpack.c.l.b16 %v2863
        %v3240 = vunpack.c.h.b16 %v2863
        %v3241 = vunpack.c.l.b16 %v2864
        %v3242 = vunpack.c.h.b16 %v2864
        %v3243 = vunpack.c.l.b16 %v2865
        %v3244 = vunpack.c.h.b16 %v2865
        %v3245 = vunpack.c.l.b16 %v2866
        %v3246 = vunpack.c.h.b16 %v2866
        %v3247 = vunpack.c.l.b16 %v2867
        %v3248 = vunpack.c.h.b16 %v2867
        %v3249 = vunpack.c.l.b16 %v2868
        %v3250 = vunpack.c.h.b16 %v2868
        %v3251 = vunpack.c.l.b16 %v2869
        %v3252 = vunpack.c.h.b16 %v2869
        %v3253 = vunpack.c.l.b16 %v2870
        %v3254 = vunpack.c.h.b16 %v2870
        %v3255 = vunpack.c.l.b16 %v2871
        %v3256 = vunpack.c.h.b16 %v2871
        %v3257 = vunpack.c.l.b16 %v2872
        %v3258 = vunpack.c.h.b16 %v2872
        %v3259 = vunpack.c.l.b16 %v2873
        %v3260 = vunpack.c.h.b16 %v2873
        %v3261 = vunpack.c.l.b16 %v2874
        %v3262 = vunpack.c.h.b16 %v2874
        %v3263 = vunpack.c.l.b16 %v2875
        %v3264 = vunpack.c.h.b16 %v2875
        %v3265 = vunpack.c.l.b16 %v2876
        %v3266 = vunpack.c.h.b16 %v2876
        %v3267 = vunpack.c.l.b16 %v2877
        %v3268 = vunpack.c.h.b16 %v2877
        %v3269 = vunpack.c.l.b16 %v2878
        %v3270 = vunpack.c.h.b16 %v2878
        %v3271 = vunpack.c.l.b16 %v2879
        %v3272 = vunpack.c.h.b16 %v2879
        %v3273 = vunpack.c.l.b16 %v2880
        %v3274 = vunpack.c.h.b16 %v2880
        %v3275 = vunpack.c.l.b16 %v2881
        %v3276 = vunpack.c.h.b16 %v2881
        %v3277 = vunpack.c.l.b16 %v2882
        %v3278 = vunpack.c.h.b16 %v2882
        %v3279 = vunpack.c.l.b16 %v2883
        %v3280 = vunpack.c.h.b16 %v2883
        %v3281 = vunpack.c.l.b16 %v2884
        %v3282 = vunpack.c.h.b16 %v2884
        %v3283 = vunpack.c.l.b16 %v2885
        %v3284 = vunpack.c.h.b16 %v2885
        %v3285 = vunpack.c.l.b16 %v2886
        %v3286 = vunpack.c.h.b16 %v2886
        %v3287 = vunpack.c.l.b16 %v2887
        %v3288 = vunpack.c.h.b16 %v2887
        %v3289 = vunpack.c.l.b16 %v2888
        %v3290 = vunpack.c.h.b16 %v2888
        %v3291 = vunpack.c.l.b16 %v2889
        %v3292 = vunpack.c.h.b16 %v2889
        %v3293 = vunpack.c.l.b16 %v2890
        %v3294 = vunpack.c.h.b16 %v2890
        %v3295 = vunpack.c.l.b16 %v2891
        %v3296 = vunpack.c.h.b16 %v2891
        %v3297 = vunpack.c.l.b16 %v2892
        %v3298 = vunpack.c.h.b16 %v2892
        %v3299 = vunpack.c.l.b16 %v2893
        %v3300 = vunpack.c.h.b16 %v2893
        %v3301 = vunpack.c.l.b16 %v2894
        %v3302 = vunpack.c.h.b16 %v2894
        %v3303 = vunpack.c.l.b16 %v2895
        %v3304 = vunpack.c.h.b16 %v2895
        %v3305 = vunpack.c.l.b16 %v2896
        %v3306 = vunpack.c.h.b16 %v2896
        %v3307 = vunpack.c.l.b16 %v2897
        %v3308 = vunpack.c.h.b16 %v2897
        %v3309 = vunpack.c.l.b16 %v2898
        %v3310 = vunpack.c.h.b16 %v2898
        %v3311 = vunpack.c.l.b16 %v2899
        %v3312 = vunpack.c.h.b16 %v2899
        %v3313 = vunpack.c.l.b16 %v2900
        %v3314 = vunpack.c.h.b16 %v2900
        %v3315 = vunpack.c.l.b16 %v2901
        %v3316 = vunpack.c.h.b16 %v2901
        %v3317 = vunpack.c.l.b16 %v2902
        %v3318 = vunpack.c.h.b16 %v2902
        %v3319 = vunpack.c.l.b16 %v2903
        %v3320 = vunpack.c.h.b16 %v2903
        %v3321 = vunpack.c.l.b16 %v2904
        %v3322 = vunpack.c.h.b16 %v2904
        %v3323 = vunpack.c.l.b16 %v2905
        %v3324 = vunpack.c.h.b16 %v2905
        %v3325 = vunpack.c.l.b16 %v2906
        %v3326 = vunpack.c.h.b16 %v2906
        %v3327 = vunpack.c.l.b16 %v2907
        %v3328 = vunpack.c.h.b16 %v2907
        %v3329 = vunpack.c.l.b16 %v2908
        %v3330 = vunpack.c.h.b16 %v2908
        %v3331 = vunpack.c.l.b16 %v2909
        %v3332 = vunpack.c.h.b16 %v2909
        %v3333 = vunpack.c.l.b16 %v2910
        %v3334 = vunpack.c.h.b16 %v2910
        %v3335 = vunpack.c.l.b16 %v2911
        %v3336 = vunpack.c.h.b16 %v2911
        %v3337 = vunpack.c.l.b16 %v2912
        %v3338 = vunpack.c.h.b16 %v2912
        %v3339 = vunpack.c.l.b16 %v2913
        %v3340 = vunpack.c.h.b16 %v2913
        %v3341 = vunpack.c.l.b16 %v2914
        %v3342 = vunpack.c.h.b16 %v2914
        %v3343 = vunpack.c.l.b16 %v2915
        %v3344 = vunpack.c.h.b16 %v2915
        %v3345 = vunpack.c.l.b16 %v2916
        %v3346 = vunpack.c.h.b16 %v2916
        %v3347 = vunpack.c.l.b16 %v2917
        %v3348 = vunpack.c.h.b16 %v2917
        %v3349 = vunpack.c.l.b16 %v2918
        %v3350 = vunpack.c.h.b16 %v2918
        %v3351 = vunpack.c.l.b16 %v2919
        %v3352 = vunpack.c.h.b16 %v2919
        %v3353 = vunpack.c.l.b16 %v2920
        %v3354 = vunpack.c.h.b16 %v2920
        %v3355 = vunpack.c.l.b16 %v2921
        %v3356 = vunpack.c.h.b16 %v2921
        %v3357 = vunpack.c.l.b16 %v2922
        %v3358 = vunpack.c.h.b16 %v2922
        %v3359 = vunpack.c.l.b16 %v2923
        %v3360 = vunpack.c.h.b16 %v2923
        %v3361 = vunpack.c.l.b16 %v2924
        %v3362 = vunpack.c.h.b16 %v2924
        %v3363 = vunpack.c.l.b16 %v2925
        %v3364 = vunpack.c.h.b16 %v2925
        %v3365 = vunpack.c.l.b16 %v2926
        %v3366 = vunpack.c.h.b16 %v2926
        %v3367 = vunpack.c.l.b16 %v2927
        %v3368 = vunpack.c.h.b16 %v2927
        %v3369 = vunpack.c.l.b16 %v2928
        %v3370 = vunpack.c.h.b16 %v2928
        %v3371 = vunpack.c.l.b16 %v2929
        %v3372 = vunpack.c.h.b16 %v2929
        %v3373 = vunpack.c.l.b16 %v2930
        %v3374 = vunpack.c.h.b16 %v2930
        %v3375 = vunpack.c.l.b16 %v2931
        %v3376 = vunpack.c.h.b16 %v2931
        %v3377 = vunpack.c.l.b16 %v2932
        %v3378 = vunpack.c.h.b16 %v2932
        %v3379 = vunpack.c.l.b16 %v2933
        %v3380 = vunpack.c.h.b16 %v2933
        %v3381 = vunpack.c.l.b16 %v2934
        %v3382 = vunpack.c.h.b16 %v2934
        %v3383 = vunpack.c.l.b16 %v2935
        %v3384 = vunpack.c.h.b16 %v2935
        %v3385 = vunpack.c.l.b16 %v2936
        %v3386 = vunpack.c.h.b16 %v2936
        %v3387 = vunpack.c.l.b16 %v2937
        %v3388 = vunpack.c.h.b16 %v2937
        %v3389 = vunpack.c.l.b16 %v2938
        %v3390 = vunpack.c.h.b16 %v2938
        %v3391 = vunpack.c.l.b16 %v2939
        %v3392 = vunpack.c.h.b16 %v2939
        %v3393 = vunpack.c.l.b16 %v2940
        %v3394 = vunpack.c.h.b16 %v2940
        %v3395 = vunpack.c.l.b16 %v2941
        %v3396 = vunpack.c.h.b16 %v2941
        %v3397 = vunpack.c.l.b16 %v2942
        %v3398 = vunpack.c.h.b16 %v2942
        %v3399 = vunpack.c.l.b16 %v2943
        %v3400 = vunpack.c.h.b16 %v2943
        %v3401 = vunpack.c.l.b16 %v2944
        %v3402 = vunpack.c.h.b16 %v2944
        %v3403 = vunpack.c.l.b16 %v2945
        %v3404 = vunpack.c.h.b16 %v2945
        %v3405 = vunpack.c.l.b16 %v2946
        %v3406 = vunpack.c.h.b16 %v2946
        %v3407 = vunpack.c.l.b16 %v2947
        %v3408 = vunpack.c.h.b16 %v2947
        %v3409 = vunpack.c.l.b16 %v2948
        %v3410 = vunpack.c.h.b16 %v2948
        %v3411 = vunpack.c.l.b16 %v2949
        %v3412 = vunpack.c.h.b16 %v2949
        %v3413 = vunpack.c.l.b16 %v2950
        %v3414 = vunpack.c.h.b16 %v2950
        %v3415 = vunpack.c.l.b16 %v2951
        %v3416 = vunpack.c.h.b16 %v2951
        %v3417 = vunpack.c.l.b16 %v2952
        %v3418 = vunpack.c.h.b16 %v2952
        %v3419 = vunpack.c.l.b16 %v2953
        %v3420 = vunpack.c.h.b16 %v2953
        %v3421 = vunpack.c.l.b16 %v2954
        %v3422 = vunpack.c.h.b16 %v2954
        %v3423 = vpack.c.b16 %v3183, %v3167
        %v3424 = vpack.c.b16 %v3184, %v3168
        %v3425 = vpack.c.b16 %v3185, %v3169
        %v3426 = vpack.c.b16 %v3186, %v3170
        %v3427 = vpack.c.b16 %v3187, %v3171
        %v3428 = vpack.c.b16 %v3188, %v3172
        %v3429 = vpack.c.b16 %v3189, %v3173
        %v3430 = vpack.c.b16 %v3190, %v3174
        %v3431 = vpack.c.b16 %v3191, %v3175
        %v3432 = vpack.c.b16 %v3192, %v3176
        %v3433 = vpack.c.b16 %v3193, %v3177
        %v3434 = vpack.c.b16 %v3194, %v3178
        %v3435 = vpack.c.b16 %v3195, %v3179
        %v3436 = vpack.c.b16 %v3196, %v3180
        %v3437 = vpack.c.b16 %v3197, %v3181
        %v3438 = vpack.c.b16 %v3198, %v3182
        %v3439 = vpack.c.b16 %v3215, %v3199
        %v3440 = vpack.c.b16 %v3216, %v3200
        %v3441 = vpack.c.b16 %v3217, %v3201
        %v3442 = vpack.c.b16 %v3218, %v3202
        %v3443 = vpack.c.b16 %v3219, %v3203
        %v3444 = vpack.c.b16 %v3220, %v3204
        %v3445 = vpack.c.b16 %v3221, %v3205
        %v3446 = vpack.c.b16 %v3222, %v3206
        %v3447 = vpack.c.b16 %v3223, %v3207
        %v3448 = vpack.c.b16 %v3224, %v3208
        %v3449 = vpack.c.b16 %v3225, %v3209
        %v3450 = vpack.c.b16 %v3226, %v3210
        %v3451 = vpack.c.b16 %v3227, %v3211
        %v3452 = vpack.c.b16 %v3228, %v3212
        %v3453 = vpack.c.b16 %v3229, %v3213
        %v3454 = vpack.c.b16 %v3230, %v3214
        %v3455 = vpack.c.b16 %v3247, %v3231
        %v3456 = vpack.c.b16 %v3248, %v3232
        %v3457 = vpack.c.b16 %v3249, %v3233
        %v3458 = vpack.c.b16 %v3250, %v3234
        %v3459 = vpack.c.b16 %v3251, %v3235
        %v3460 = vpack.c.b16 %v3252, %v3236
        %v3461 = vpack.c.b16 %v3253, %v3237
        %v3462 = vpack.c.b16 %v3254, %v3238
        %v3463 = vpack.c.b16 %v3255, %v3239
        %v3464 = vpack.c.b16 %v3256, %v3240
        %v3465 = vpack.c.b16 %v3257, %v3241
        %v3466 = vpack.c.b16 %v3258, %v3242
        %v3467 = vpack.c.b16 %v3259, %v3243
        %v3468 = vpack.c.b16 %v3260, %v3244
        %v3469 = vpack.c.b16 %v3261, %v3245
        %v3470 = vpack.c.b16 %v3262, %v3246
        %v3471 = vpack.c.b16 %v3279, %v3263
        %v3472 = vpack.c.b16 %v3280, %v3264
        %v3473 = vpack.c.b16 %v3281, %v3265
        %v3474 = vpack.c.b16 %v3282, %v3266
        %v3475 = vpack.c.b16 %v3283, %v3267
        %v3476 = vpack.c.b16 %v3284, %v3268
        %v3477 = vpack.c.b16 %v3285, %v3269
        %v3478 = vpack.c.b16 %v3286, %v3270
        %v3479 = vpack.c.b16 %v3287, %v3271
        %v3480 = vpack.c.b16 %v3288, %v3272
        %v3481 = vpack.c.b16 %v3289, %v3273
        %v3482 = vpack.c.b16 %v3290, %v3274
        %v3483 = vpack.c.b16 %v3291, %v3275
        %v3484 = vpack.c.b16 %v3292, %v3276
        %v3485 = vpack.c.b16 %v3293, %v3277
        %v3486 = vpack.c.b16 %v3294, %v3278
        %v3487 = vpack.c.b16 %v3311, %v3295
        %v3488 = vpack.c.b16 %v3312, %v3296
        %v3489 = vpack.c.b16 %v3313, %v3297
        %v3490 = vpack.c.b16 %v3314, %v3298
        %v3491 = vpack.c.b16 %v3315, %v3299
        %v3492 = vpack.c.b16 %v3316, %v3300
        %v3493 = vpack.c.b16 %v3317, %v3301
        %v3494 = vpack.c.b16 %v3318, %v3302
        %v3495 = vpack.c.b16 %v3319, %v3303
        %v3496 = vpack.c.b16 %v3320, %v3304
        %v3497 = vpack.c.b16 %v3321, %v3305
        %v3498 = vpack.c.b16 %v3322, %v3306
        %v3499 = vpack.c.b16 %v3323, %v3307
        %v3500 = vpack.c.b16 %v3324, %v3308
        %v3501 = vpack.c.b16 %v3325, %v3309
        %v3502 = vpack.c.b16 %v3326, %v3310
        %v3503 = vpack.c.b16 %v3343, %v3327
        %v3504 = vpack.c.b16 %v3344, %v3328
        %v3505 = vpack.c.b16 %v3345, %v3329
        %v3506 = vpack.c.b16 %v3346, %v3330
        %v3507 = vpack.c.b16 %v3347, %v3331
        %v3508 = vpack.c.b16 %v3348, %v3332
        %v3509 = vpack.c.b16 %v3349, %v3333
        %v3510 = vpack.c.b16 %v3350, %v3334
        %v3511 = vpack.c.b16 %v3351, %v3335
        %v3512 = vpack.c.b16 %v3352, %v3336
        %v3513 = vpack.c.b16 %v3353, %v3337
        %v3514 = vpack.c.b16 %v3354, %v3338
        %v3515 = vpack.c.b16 %v3355, %v3339
        %v3516 = vpack.c.b16 %v3356, %v3340
        %v3517 = vpack.c.b16 %v3357, %v3341
        %v3518 = vpack.c.b16 %v3358, %v3342
        %v3519 = vpack.c.b16 %v3375, %v3359
        %v3520 = vpack.c.b16 %v3376, %v3360
        %v3521 = vpack.c.b16 %v3377, %v3361
        %v3522 = vpack.c.b16 %v3378, %v3362
        %v3523 = vpack.c.b16 %v3379, %v3363
        %v3524 = vpack.c.b16 %v3380, %v3364
        %v3525 = vpack.c.b16 %v3381, %v3365
        %v3526 = vpack.c.b16 %v3382, %v3366
        %v3527 = vpack.c.b16 %v3383, %v3367
        %v3528 = vpack.c.b16 %v3384, %v3368
        %v3529 = vpack.c.b16 %v3385, %v3369
        %v3530 = vpack.c.b16 %v3386, %v3370
        %v3531 = vpack.c.b16 %v3387, %v3371
        %v3532 = vpack.c.b16 %v3388, %v3372
        %v3533 = vpack.c.b16 %v3389, %v3373
        %v3534 = vpack.c.b16 %v3390, %v3374
        %v3535 = vpack.c.b16 %v3407, %v3391
        %v3536 = vpack.c.b16 %v3408, %v3392
        %v3537 = vpack.c.b16 %v3409, %v3393
        %v3538 = vpack.c.b16 %v3410, %v3394
        %v3539 = vpack.c.b16 %v3411, %v3395
        %v3540 = vpack.c.b16 %v3412, %v3396
        %v3541 = vpack.c.b16 %v3413, %v3397
        %v3542 = vpack.c.b16 %v3414, %v3398
        %v3543 = vpack.c.b16 %v3415, %v3399
        %v3544 = vpack.c.b16 %v3416, %v3400
        %v3545 = vpack.c.b16 %v3417, %v3401
        %v3546 = vpack.c.b16 %v3418, %v3402
        %v3547 = vpack.c.b16 %v3419, %v3403
        %v3548 = vpack.c.b16 %v3420, %v3404
        %v3549 = vpack.c.b16 %v3421, %v3405
        %v3550 = vpack.c.b16 %v3422, %v3406
        %3679 = vmatprep.subr.bf16.mxu0 %v3424
        %3680 = vmatpush1.bf16.msra.mxu0 %v3423
        %3681 = vmatprep.subr.bf16.mxu0 %v3440
        %3682 = vmatpush1.bf16.msra.mxu0 %v3439
        %3683 = vmatprep.subr.bf16.mxu0 %v3456
        %3684 = vmatpush1.bf16.msra.mxu0 %v3455
        %3685 = vmatprep.subr.bf16.mxu0 %v3472
        %3686 = vmatpush1.bf16.msra.mxu0 %v3471
        %3687 = vmatprep.subr.bf16.mxu0 %v3488
        %3688 = vmatpush1.bf16.msra.mxu0 %v3487
        %3689 = vmatprep.subr.bf16.mxu0 %v3504
        %3690 = vmatpush1.bf16.msra.mxu0 %v3503
        %3691 = vmatprep.subr.bf16.mxu0 %v3520
        %3692 = vmatpush1.bf16.msra.mxu0 %v3519
        %3693 = vmatprep.subr.bf16.mxu0 %v3536
        %3694 = vmatpush1.bf16.msra.mxu0 %v3535
        %3695 = vmatprep.subr.bf16.mxu0 0
        %3696 = vmatpush1.bf16.msra.mxu0 0
        %3697 = vmatprep.subr.bf16.mxu0 0
        %3698 = vmatpush1.bf16.msra.mxu0 0
        %3699 = vmatprep.subr.bf16.mxu0 0
        %3700 = vmatpush1.bf16.msra.mxu0 0
        %3701 = vmatprep.subr.bf16.mxu0 0
        %3702 = vmatpush1.bf16.msra.mxu0 0
        %3703 = vmatprep.subr.bf16.mxu0 0
        %3704 = vmatpush1.bf16.msra.mxu0 0
        %3705 = vmatprep.subr.bf16.mxu0 0
        %3706 = vmatpush1.bf16.msra.mxu0 0
        %3707 = vmatprep.subr.bf16.mxu0 0
        %3708 = vmatpush1.bf16.msra.mxu0 0
        %3709 = vmatprep.subr.bf16.mxu0 0
        %3710 = vmatpush1.bf16.msra.mxu0 0
        %3711 = vmatprep.mubr.bf16.mxu0 0
        %3712 = vmatmul.mubr.bf16.gmra.mrb[0].mxu0 %v2823
        %v3713 = vpop.f32.mrb[0].mxu0
        %v3714 = vadd.f32 %v2962, %v3713
        %v3715 = vpop.f32.mrb[0].mxu0
        %v3716 = vadd.f32 %v2966, %v3715
        %v3717 = vpop.f32.mrb[0].mxu0
        %v3718 = vadd.f32 %v2962, %v3717
        %v3719 = vpop.f32.mrb[0].mxu0
        %v3720 = vadd.f32 %v2966, %v3719
        %3721 = vmatprep.mubr.bf16.mxu0 0
        %3722 = vmatmul.mubr.bf16.gmra.mrb[0].mxu0 %v2824
        %v3723 = vpop.f32.mrb[0].mxu0
        %v3724 = vadd.f32 %v2962, %v3723
        %v3725 = vpop.f32.mrb[0].mxu0
        %v3726 = vadd.f32 %v2966, %v3725
        %v3727 = vpop.f32.mrb[0].mxu0
        %v3728 = vadd.f32 %v2962, %v3727
        %v3729 = vpop.f32.mrb[0].mxu0
        %v3730 = vadd.f32 %v2966, %v3729
        %3731 = vmatprep.mubr.bf16.mxu0 0
        %3732 = vmatmul.mubr.bf16.gmra.mrb[0].mxu0 %v2825
        %v3733 = vpop.f32.mrb[0].mxu0
        %v3734 = vadd.f32 %v2962, %v3733
        %v3735 = vpop.f32.mrb[0].mxu0
        %v3736 = vadd.f32 %v2966, %v3735
        %v3737 = vpop.f32.mrb[0].mxu0
        %v3738 = vadd.f32 %v2962, %v3737
        %v3739 = vpop.f32.mrb[0].mxu0
        %v3740 = vadd.f32 %v2966, %v3739
        %3741 = vmatprep.mubr.bf16.mxu0 0
        %3742 = vmatmul.mubr.bf16.gmra.mrb[0].mxu0 %v2826
        %v3743 = vpop.f32.mrb[0].mxu0
        %v3744 = vadd.f32 %v2962, %v3743
        %v3745 = vpop.f32.mrb[0].mxu0
        %v3746 = vadd.f32 %v2966, %v3745
        %v3747 = vpop.f32.mrb[0].mxu0
        %v3748 = vadd.f32 %v2962, %v3747
        %v3749 = vpop.f32.mrb[0].mxu0
        %v3750 = vadd.f32 %v2966, %v3749
        %3751 = vdwg.mxu0
        %3752 = vmatprep.subr.bf16.mxu0 %v3426
        %3753 = vmatpush1.bf16.msra.mxu0 %v3425
        %3754 = vmatprep.subr.bf16.mxu0 %v3442
        %3755 = vmatpush1.bf16.msra.mxu0 %v3441
        %3756 = vmatprep.subr.bf16.mxu0 %v3458
        %3757 = vmatpush1.bf16.msra.mxu0 %v3457
        %3758 = vmatprep.subr.bf16.mxu0 %v3474
        %3759 = vmatpush1.bf16.msra.mxu0 %v3473
        %3760 = vmatprep.subr.bf16.mxu0 %v3490
        %3761 = vmatpush1.bf16.msra.mxu0 %v3489
        %3762 = vmatprep.subr.bf16.mxu0 %v3506
        %3763 = vmatpush1.bf16.msra.mxu0 %v3505
        %3764 = vmatprep.subr.bf16.mxu0 %v3522
        %3765 = vmatpush1.bf16.msra.mxu0 %v3521
        %3766 = vmatprep.subr.bf16.mxu0 %v3538
        %3767 = vmatpush1.bf16.msra.mxu0 %v3537
        %3768 = vmatprep.subr.bf16.mxu0 0
        %3769 = vmatpush1.bf16.msra.mxu0 0
        %3770 = vmatprep.subr.bf16.mxu0 0
        %3771 = vmatpush1.bf16.msra.mxu0 0
        %3772 = vmatprep.subr.bf16.mxu0 0
        %3773 = vmatpush1.bf16.msra.mxu0 0
        %3774 = vmatprep.subr.bf16.mxu0 0
        %3775 = vmatpush1.bf16.msra.mxu0 0
        %3776 = vmatprep.subr.bf16.mxu0 0
        %3777 = vmatpush1.bf16.msra.mxu0 0
        %3778 = vmatprep.subr.bf16.mxu0 0
        %3779 = vmatpush1.bf16.msra.mxu0 0
        %3780 = vmatprep.subr.bf16.mxu0 0
        %3781 = vmatpush1.bf16.msra.mxu0 0
        %3782 = vmatprep.subr.bf16.mxu0 0
        %3783 = vmatpush1.bf16.msra.mxu0 0
        %3784 = vmatprep.mubr.bf16.mxu0 0
        %3785 = vmatmul.mubr.bf16.gmra.mrb[0].mxu0 %v2823
        %v3786 = vpop.f32.mrb[0].mxu0
        %v3787 = vadd.f32 %v2970, %v3786
        %v3788 = vpop.f32.mrb[0].mxu0
        %v3789 = vadd.f32 %v2974, %v3788
        %v3790 = vpop.f32.mrb[0].mxu0
        %v3791 = vadd.f32 %v2970, %v3790
        %v3792 = vpop.f32.mrb[0].mxu0
        %v3793 = vadd.f32 %v2974, %v3792
        %3794 = vmatprep.mubr.bf16.mxu0 0
        %3795 = vmatmul.mubr.bf16.gmra.mrb[0].mxu0 %v2824
        %v3796 = vpop.f32.mrb[0].mxu0
        %v3797 = vadd.f32 %v2970, %v3796
        %v3798 = vpop.f32.mrb[0].mxu0
        %v3799 = vadd.f32 %v2974, %v3798
        %v3800 = vpop.f32.mrb[0].mxu0
        %v3801 = vadd.f32 %v2970, %v3800
        %v3802 = vpop.f32.mrb[0].mxu0
        %v3803 = vadd.f32 %v2974, %v3802
        %3804 = vmatprep.mubr.bf16.mxu0 0
        %3805 = vmatmul.mubr.bf16.gmra.mrb[0].mxu0 %v2825
        %v3806 = vpop.f32.mrb[0].mxu0
        %v3807 = vadd.f32 %v2970, %v3806
        %v3808 = vpop.f32.mrb[0].mxu0
        %v3809 = vadd.f32 %v2974, %v3808
        %v3810 = vpop.f32.mrb[0].mxu0
        %v3811 = vadd.f32 %v2970, %v3810
        %v3812 = vpop.f32.mrb[0].mxu0
        %v3813 = vadd.f32 %v2974, %v3812
        %3814 = vmatprep.mubr.bf16.mxu0 0
        %3815 = vmatmul.mubr.bf16.gmra.mrb[0].mxu0 %v2826
        %v3816 = vpop.f32.mrb[0].mxu0
        %v3817 = vadd.f32 %v2970, %v3816
        %v3818 = vpop.f32.mrb[0].mxu0
        %v3819 = vadd.f32 %v2974, %v3818
        %v3820 = vpop.f32.mrb[0].mxu0
        %v3821 = vadd.f32 %v2970, %v3820
        %v3822 = vpop.f32.mrb[0].mxu0
        %v3823 = vadd.f32 %v2974, %v3822
        %3824 = vdwg.mxu0
        %3825 = vmatprep.subr.bf16.mxu0 %v3428
        %3826 = vmatpush1.bf16.msra.mxu0 %v3427
        %3827 = vmatprep.subr.bf16.mxu0 %v3444
        %3828 = vmatpush1.bf16.msra.mxu0 %v3443
        %3829 = vmatprep.subr.bf16.mxu0 %v3460
        %3830 = vmatpush1.bf16.msra.mxu0 %v3459
        %3831 = vmatprep.subr.bf16.mxu0 %v3476
        %3832 = vmatpush1.bf16.msra.mxu0 %v3475
        %3833 = vmatprep.subr.bf16.mxu0 %v3492
        %3834 = vmatpush1.bf16.msra.mxu0 %v3491
        %3835 = vmatprep.subr.bf16.mxu0 %v3508
        %3836 = vmatpush1.bf16.msra.mxu0 %v3507
        %3837 = vmatprep.subr.bf16.mxu0 %v3524
        %3838 = vmatpush1.bf16.msra.mxu0 %v3523
        %3839 = vmatprep.subr.bf16.mxu0 %v3540
        %3840 = vmatpush1.bf16.msra.mxu0 %v3539
        %3841 = vmatprep.subr.bf16.mxu0 0
        %3842 = vmatpush1.bf16.msra.mxu0 0
        %3843 = vmatprep.subr.bf16.mxu0 0
        %3844 = vmatpush1.bf16.msra.mxu0 0
        %3845 = vmatprep.subr.bf16.mxu0 0
        %3846 = vmatpush1.bf16.msra.mxu0 0
        %3847 = vmatprep.subr.bf16.mxu0 0
        %3848 = vmatpush1.bf16.msra.mxu0 0
        %3849 = vmatprep.subr.bf16.mxu0 0
        %3850 = vmatpush1.bf16.msra.mxu0 0
        %3851 = vmatprep.subr.bf16.mxu0 0
        %3852 = vmatpush1.bf16.msra.mxu0 0
        %3853 = vmatprep.subr.bf16.mxu0 0
        %3854 = vmatpush1.bf16.msra.mxu0 0
        %3855 = vmatprep.subr.bf16.mxu0 0
        %3856 = vmatpush1.bf16.msra.mxu0 0
        %3857 = vmatprep.mubr.bf16.mxu0 0
        %3858 = vmatmul.mubr.bf16.gmra.mrb[0].mxu0 %v2823
        %v3859 = vpop.f32.mrb[0].mxu0
        %v3860 = vadd.f32 %v2978, %v3859
        %v3861 = vpop.f32.mrb[0].mxu0
        %v3862 = vadd.f32 %v2982, %v3861
        %v3863 = vpop.f32.mrb[0].mxu0
        %v3864 = vadd.f32 %v2978, %v3863
        %v3865 = vpop.f32.mrb[0].mxu0
        %v3866 = vadd.f32 %v2982, %v3865
        %3867 = vmatprep.mubr.bf16.mxu0 0
        %3868 = vmatmul.mubr.bf16.gmra.mrb[0].mxu0 %v2824
        %v3869 = vpop.f32.mrb[0].mxu0
        %v3870 = vadd.f32 %v2978, %v3869
        %v3871 = vpop.f32.mrb[0].mxu0
        %v3872 = vadd.f32 %v2982, %v3871
        %v3873 = vpop.f32.mrb[0].mxu0
        %v3874 = vadd.f32 %v2978, %v3873
        %v3875 = vpop.f32.mrb[0].mxu0
        %v3876 = vadd.f32 %v2982, %v3875
        %3877 = vmatprep.mubr.bf16.mxu0 0
        %3878 = vmatmul.mubr.bf16.gmra.mrb[0].mxu0 %v2825
        %v3879 = vpop.f32.mrb[0].mxu0
        %v3880 = vadd.f32 %v2978, %v3879
        %v3881 = vpop.f32.mrb[0].mxu0
        %v3882 = vadd.f32 %v2982, %v3881
        %v3883 = vpop.f32.mrb[0].mxu0
        %v3884 = vadd.f32 %v2978, %v3883
        %v3885 = vpop.f32.mrb[0].mxu0
        %v3886 = vadd.f32 %v2982, %v3885
        %3887 = vmatprep.mubr.bf16.mxu0 0
        %3888 = vmatmul.mubr.bf16.gmra.mrb[0].mxu0 %v2826
        %v3889 = vpop.f32.mrb[0].mxu0
        %v3890 = vadd.f32 %v2978, %v3889
        %v3891 = vpop.f32.mrb[0].mxu0
        %v3892 = vadd.f32 %v2982, %v3891
        %v3893 = vpop.f32.mrb[0].mxu0
        %v3894 = vadd.f32 %v2978, %v3893
        %v3895 = vpop.f32.mrb[0].mxu0
        %v3896 = vadd.f32 %v2982, %v3895
        %3897 = vdwg.mxu0
        %3898 = vmatprep.subr.bf16.mxu0 %v3430
        %3899 = vmatpush1.bf16.msra.mxu0 %v3429
        %3900 = vmatprep.subr.bf16.mxu0 %v3446
        %3901 = vmatpush1.bf16.msra.mxu0 %v3445
        %3902 = vmatprep.subr.bf16.mxu0 %v3462
        %3903 = vmatpush1.bf16.msra.mxu0 %v3461
        %3904 = vmatprep.subr.bf16.mxu0 %v3478
        %3905 = vmatpush1.bf16.msra.mxu0 %v3477
        %3906 = vmatprep.subr.bf16.mxu0 %v3494
        %3907 = vmatpush1.bf16.msra.mxu0 %v3493
        %3908 = vmatprep.subr.bf16.mxu0 %v3510
        %3909 = vmatpush1.bf16.msra.mxu0 %v3509
        %3910 = vmatprep.subr.bf16.mxu0 %v3526
        %3911 = vmatpush1.bf16.msra.mxu0 %v3525
        %3912 = vmatprep.subr.bf16.mxu0 %v3542
        %3913 = vmatpush1.bf16.msra.mxu0 %v3541
        %3914 = vmatprep.subr.bf16.mxu0 0
        %3915 = vmatpush1.bf16.msra.mxu0 0
        %3916 = vmatprep.subr.bf16.mxu0 0
        %3917 = vmatpush1.bf16.msra.mxu0 0
        %3918 = vmatprep.subr.bf16.mxu0 0
        %3919 = vmatpush1.bf16.msra.mxu0 0
        %3920 = vmatprep.subr.bf16.mxu0 0
        %3921 = vmatpush1.bf16.msra.mxu0 0
        %3922 = vmatprep.subr.bf16.mxu0 0
        %3923 = vmatpush1.bf16.msra.mxu0 0
        %3924 = vmatprep.subr.bf16.mxu0 0
        %3925 = vmatpush1.bf16.msra.mxu0 0
        %3926 = vmatprep.subr.bf16.mxu0 0
        %3927 = vmatpush1.bf16.msra.mxu0 0
        %3928 = vmatprep.subr.bf16.mxu0 0
        %3929 = vmatpush1.bf16.msra.mxu0 0
        %3930 = vmatprep.mubr.bf16.mxu0 0
        %3931 = vmatmul.mubr.bf16.gmra.mrb[0].mxu0 %v2823
        %v3932 = vpop.f32.mrb[0].mxu0
        %v3933 = vadd.f32 %v2986, %v3932
        %v3934 = vpop.f32.mrb[0].mxu0
        %v3935 = vadd.f32 %v2990, %v3934
        %v3936 = vpop.f32.mrb[0].mxu0
        %v3937 = vadd.f32 %v2986, %v3936
        %v3938 = vpop.f32.mrb[0].mxu0
        %v3939 = vadd.f32 %v2990, %v3938
        %3940 = vmatprep.mubr.bf16.mxu0 0
        %3941 = vmatmul.mubr.bf16.gmra.mrb[0].mxu0 %v2824
        %v3942 = vpop.f32.mrb[0].mxu0
        %v3943 = vadd.f32 %v2986, %v3942
        %v3944 = vpop.f32.mrb[0].mxu0
        %v3945 = vadd.f32 %v2990, %v3944
        %v3946 = vpop.f32.mrb[0].mxu0
        %v3947 = vadd.f32 %v2986, %v3946
        %v3948 = vpop.f32.mrb[0].mxu0
        %v3949 = vadd.f32 %v2990, %v3948
        %3950 = vmatprep.mubr.bf16.mxu0 0
        %3951 = vmatmul.mubr.bf16.gmra.mrb[0].mxu0 %v2825
        %v3952 = vpop.f32.mrb[0].mxu0
        %v3953 = vadd.f32 %v2986, %v3952
        %v3954 = vpop.f32.mrb[0].mxu0
        %v3955 = vadd.f32 %v2990, %v3954
        %v3956 = vpop.f32.mrb[0].mxu0
        %v3957 = vadd.f32 %v2986, %v3956
        %v3958 = vpop.f32.mrb[0].mxu0
        %v3959 = vadd.f32 %v2990, %v3958
        %3960 = vmatprep.mubr.bf16.mxu0 0
        %3961 = vmatmul.mubr.bf16.gmra.mrb[0].mxu0 %v2826
        %v3962 = vpop.f32.mrb[0].mxu0
        %v3963 = vadd.f32 %v2986, %v3962
        %v3964 = vpop.f32.mrb[0].mxu0
        %v3965 = vadd.f32 %v2990, %v3964
        %v3966 = vpop.f32.mrb[0].mxu0
        %v3967 = vadd.f32 %v2986, %v3966
        %v3968 = vpop.f32.mrb[0].mxu0
        %v3969 = vadd.f32 %v2990, %v3968
        %3970 = vdwg.mxu0
        %3971 = vmatprep.subr.bf16.mxu0 %v3432
        %3972 = vmatpush1.bf16.msra.mxu0 %v3431
        %3973 = vmatprep.subr.bf16.mxu0 %v3448
        %3974 = vmatpush1.bf16.msra.mxu0 %v3447
        %3975 = vmatprep.subr.bf16.mxu0 %v3464
        %3976 = vmatpush1.bf16.msra.mxu0 %v3463
        %3977 = vmatprep.subr.bf16.mxu0 %v3480
        %3978 = vmatpush1.bf16.msra.mxu0 %v3479
        %3979 = vmatprep.subr.bf16.mxu0 %v3496
        %3980 = vmatpush1.bf16.msra.mxu0 %v3495
        %3981 = vmatprep.subr.bf16.mxu0 %v3512
        %3982 = vmatpush1.bf16.msra.mxu0 %v3511
        %3983 = vmatprep.subr.bf16.mxu0 %v3528
        %3984 = vmatpush1.bf16.msra.mxu0 %v3527
        %3985 = vmatprep.subr.bf16.mxu0 %v3544
        %3986 = vmatpush1.bf16.msra.mxu0 %v3543
        %3987 = vmatprep.subr.bf16.mxu0 0
        %3988 = vmatpush1.bf16.msra.mxu0 0
        %3989 = vmatprep.subr.bf16.mxu0 0
        %3990 = vmatpush1.bf16.msra.mxu0 0
        %3991 = vmatprep.subr.bf16.mxu0 0
        %3992 = vmatpush1.bf16.msra.mxu0 0
        %3993 = vmatprep.subr.bf16.mxu0 0
        %3994 = vmatpush1.bf16.msra.mxu0 0
        %3995 = vmatprep.subr.bf16.mxu0 0
        %3996 = vmatpush1.bf16.msra.mxu0 0
        %3997 = vmatprep.subr.bf16.mxu0 0
        %3998 = vmatpush1.bf16.msra.mxu0 0
        %3999 = vmatprep.subr.bf16.mxu0 0
        %4000 = vmatpush1.bf16.msra.mxu0 0
        %4001 = vmatprep.subr.bf16.mxu0 0
        %4002 = vmatpush1.bf16.msra.mxu0 0
        %4003 = vmatprep.mubr.bf16.mxu0 0
        %4004 = vmatmul.mubr.bf16.gmra.mrb[0].mxu0 %v2823
        %v4005 = vpop.f32.mrb[0].mxu0
        %v4006 = vadd.f32 %v2994, %v4005
        %v4007 = vpop.f32.mrb[0].mxu0
        %v4008 = vadd.f32 %v2998, %v4007
        %v4009 = vpop.f32.mrb[0].mxu0
        %v4010 = vadd.f32 %v2994, %v4009
        %v4011 = vpop.f32.mrb[0].mxu0
        %v4012 = vadd.f32 %v2998, %v4011
        %4013 = vmatprep.mubr.bf16.mxu0 0
        %4014 = vmatmul.mubr.bf16.gmra.mrb[0].mxu0 %v2824
        %v4015 = vpop.f32.mrb[0].mxu0
        %v4016 = vadd.f32 %v2994, %v4015
        %v4017 = vpop.f32.mrb[0].mxu0
        %v4018 = vadd.f32 %v2998, %v4017
        %v4019 = vpop.f32.mrb[0].mxu0
        %v4020 = vadd.f32 %v2994, %v4019
        %v4021 = vpop.f32.mrb[0].mxu0
        %v4022 = vadd.f32 %v2998, %v4021
        %4023 = vmatprep.mubr.bf16.mxu0 0
        %4024 = vmatmul.mubr.bf16.gmra.mrb[0].mxu0 %v2825
        %v4025 = vpop.f32.mrb[0].mxu0
        %v4026 = vadd.f32 %v2994, %v4025
        %v4027 = vpop.f32.mrb[0].mxu0
        %v4028 = vadd.f32 %v2998, %v4027
        %v4029 = vpop.f32.mrb[0].mxu0
        %v4030 = vadd.f32 %v2994, %v4029
        %v4031 = vpop.f32.mrb[0].mxu0
        %v4032 = vadd.f32 %v2998, %v4031
        %4033 = vmatprep.mubr.bf16.mxu0 0
        %4034 = vmatmul.mubr.bf16.gmra.mrb[0].mxu0 %v2826
        %v4035 = vpop.f32.mrb[0].mxu0
        %v4036 = vadd.f32 %v2994, %v4035
        %v4037 = vpop.f32.mrb[0].mxu0
        %v4038 = vadd.f32 %v2998, %v4037
        %v4039 = vpop.f32.mrb[0].mxu0
        %v4040 = vadd.f32 %v2994, %v4039
        %v4041 = vpop.f32.mrb[0].mxu0
        %v4042 = vadd.f32 %v2998, %v4041
        %4043 = vdwg.mxu0
        %4044 = vmatprep.subr.bf16.mxu0 %v3434
        %4045 = vmatpush1.bf16.msra.mxu0 %v3433
        %4046 = vmatprep.subr.bf16.mxu0 %v3450
        %4047 = vmatpush1.bf16.msra.mxu0 %v3449
        %4048 = vmatprep.subr.bf16.mxu0 %v3466
        %4049 = vmatpush1.bf16.msra.mxu0 %v3465
        %4050 = vmatprep.subr.bf16.mxu0 %v3482
        %4051 = vmatpush1.bf16.msra.mxu0 %v3481
        %4052 = vmatprep.subr.bf16.mxu0 %v3498
        %4053 = vmatpush1.bf16.msra.mxu0 %v3497
        %4054 = vmatprep.subr.bf16.mxu0 %v3514
        %4055 = vmatpush1.bf16.msra.mxu0 %v3513
        %4056 = vmatprep.subr.bf16.mxu0 %v3530
        %4057 = vmatpush1.bf16.msra.mxu0 %v3529
        %4058 = vmatprep.subr.bf16.mxu0 %v3546
        %4059 = vmatpush1.bf16.msra.mxu0 %v3545
        %4060 = vmatprep.subr.bf16.mxu0 0
        %4061 = vmatpush1.bf16.msra.mxu0 0
        %4062 = vmatprep.subr.bf16.mxu0 0
        %4063 = vmatpush1.bf16.msra.mxu0 0
        %4064 = vmatprep.subr.bf16.mxu0 0
        %4065 = vmatpush1.bf16.msra.mxu0 0
        %4066 = vmatprep.subr.bf16.mxu0 0
        %4067 = vmatpush1.bf16.msra.mxu0 0
        %4068 = vmatprep.subr.bf16.mxu0 0
        %4069 = vmatpush1.bf16.msra.mxu0 0
        %4070 = vmatprep.subr.bf16.mxu0 0
        %4071 = vmatpush1.bf16.msra.mxu0 0
        %4072 = vmatprep.subr.bf16.mxu0 0
        %4073 = vmatpush1.bf16.msra.mxu0 0
        %4074 = vmatprep.subr.bf16.mxu0 0
        %4075 = vmatpush1.bf16.msra.mxu0 0
        %4076 = vmatprep.mubr.bf16.mxu0 0
        %4077 = vmatmul.mubr.bf16.gmra.mrb[0].mxu0 %v2823
        %v4078 = vpop.f32.mrb[0].mxu0
        %v4079 = vadd.f32 %v3002, %v4078
        %v4080 = vpop.f32.mrb[0].mxu0
        %v4081 = vadd.f32 %v3006, %v4080
        %v4082 = vpop.f32.mrb[0].mxu0
        %v4083 = vadd.f32 %v3002, %v4082
        %v4084 = vpop.f32.mrb[0].mxu0
        %v4085 = vadd.f32 %v3006, %v4084
        %4086 = vmatprep.mubr.bf16.mxu0 0
        %4087 = vmatmul.mubr.bf16.gmra.mrb[0].mxu0 %v2824
        %v4088 = vpop.f32.mrb[0].mxu0
        %v4089 = vadd.f32 %v3002, %v4088
        %v4090 = vpop.f32.mrb[0].mxu0
        %v4091 = vadd.f32 %v3006, %v4090
        %v4092 = vpop.f32.mrb[0].mxu0
        %v4093 = vadd.f32 %v3002, %v4092
        %v4094 = vpop.f32.mrb[0].mxu0
        %v4095 = vadd.f32 %v3006, %v4094
        %4096 = vmatprep.mubr.bf16.mxu0 0
        %4097 = vmatmul.mubr.bf16.gmra.mrb[0].mxu0 %v2825
        %v4098 = vpop.f32.mrb[0].mxu0
        %v4099 = vadd.f32 %v3002, %v4098
        %v4100 = vpop.f32.mrb[0].mxu0
        %v4101 = vadd.f32 %v3006, %v4100
        %v4102 = vpop.f32.mrb[0].mxu0
        %v4103 = vadd.f32 %v3002, %v4102
        %v4104 = vpop.f32.mrb[0].mxu0
        %v4105 = vadd.f32 %v3006, %v4104
        %4106 = vmatprep.mubr.bf16.mxu0 0
        %4107 = vmatmul.mubr.bf16.gmra.mrb[0].mxu0 %v2826
        %v4108 = vpop.f32.mrb[0].mxu0
        %v4109 = vadd.f32 %v3002, %v4108
        %v4110 = vpop.f32.mrb[0].mxu0
        %v4111 = vadd.f32 %v3006, %v4110
        %v4112 = vpop.f32.mrb[0].mxu0
        %v4113 = vadd.f32 %v3002, %v4112
        %v4114 = vpop.f32.mrb[0].mxu0
        %v4115 = vadd.f32 %v3006, %v4114
        %4116 = vdwg.mxu0
        %4117 = vmatprep.subr.bf16.mxu0 %v3436
        %4118 = vmatpush1.bf16.msra.mxu0 %v3435
        %4119 = vmatprep.subr.bf16.mxu0 %v3452
        %4120 = vmatpush1.bf16.msra.mxu0 %v3451
        %4121 = vmatprep.subr.bf16.mxu0 %v3468
        %4122 = vmatpush1.bf16.msra.mxu0 %v3467
        %4123 = vmatprep.subr.bf16.mxu0 %v3484
        %4124 = vmatpush1.bf16.msra.mxu0 %v3483
        %4125 = vmatprep.subr.bf16.mxu0 %v3500
        %4126 = vmatpush1.bf16.msra.mxu0 %v3499
        %4127 = vmatprep.subr.bf16.mxu0 %v3516
        %4128 = vmatpush1.bf16.msra.mxu0 %v3515
        %4129 = vmatprep.subr.bf16.mxu0 %v3532
        %4130 = vmatpush1.bf16.msra.mxu0 %v3531
        %4131 = vmatprep.subr.bf16.mxu0 %v3548
        %4132 = vmatpush1.bf16.msra.mxu0 %v3547
        %4133 = vmatprep.subr.bf16.mxu0 0
        %4134 = vmatpush1.bf16.msra.mxu0 0
        %4135 = vmatprep.subr.bf16.mxu0 0
        %4136 = vmatpush1.bf16.msra.mxu0 0
        %4137 = vmatprep.subr.bf16.mxu0 0
        %4138 = vmatpush1.bf16.msra.mxu0 0
        %4139 = vmatprep.subr.bf16.mxu0 0
        %4140 = vmatpush1.bf16.msra.mxu0 0
        %4141 = vmatprep.subr.bf16.mxu0 0
        %4142 = vmatpush1.bf16.msra.mxu0 0
        %4143 = vmatprep.subr.bf16.mxu0 0
        %4144 = vmatpush1.bf16.msra.mxu0 0
        %4145 = vmatprep.subr.bf16.mxu0 0
        %4146 = vmatpush1.bf16.msra.mxu0 0
        %4147 = vmatprep.subr.bf16.mxu0 0
        %4148 = vmatpush1.bf16.msra.mxu0 0
        %4149 = vmatprep.mubr.bf16.mxu0 0
        %4150 = vmatmul.mubr.bf16.gmra.mrb[0].mxu0 %v2823
        %v4151 = vpop.f32.mrb[0].mxu0
        %v4152 = vadd.f32 %v3010, %v4151
        %v4153 = vpop.f32.mrb[0].mxu0
        %v4154 = vadd.f32 %v3014, %v4153
        %v4155 = vpop.f32.mrb[0].mxu0
        %v4156 = vadd.f32 %v3010, %v4155
        %v4157 = vpop.f32.mrb[0].mxu0
        %v4158 = vadd.f32 %v3014, %v4157
        %4159 = vmatprep.mubr.bf16.mxu0 0
        %4160 = vmatmul.mubr.bf16.gmra.mrb[0].mxu0 %v2824
        %v4161 = vpop.f32.mrb[0].mxu0
        %v4162 = vadd.f32 %v3010, %v4161
        %v4163 = vpop.f32.mrb[0].mxu0
        %v4164 = vadd.f32 %v3014, %v4163
        %v4165 = vpop.f32.mrb[0].mxu0
        %v4166 = vadd.f32 %v3010, %v4165
        %v4167 = vpop.f32.mrb[0].mxu0
        %v4168 = vadd.f32 %v3014, %v4167
        %4169 = vmatprep.mubr.bf16.mxu0 0
        %4170 = vmatmul.mubr.bf16.gmra.mrb[0].mxu0 %v2825
        %v4171 = vpop.f32.mrb[0].mxu0
        %v4172 = vadd.f32 %v3010, %v4171
        %v4173 = vpop.f32.mrb[0].mxu0
        %v4174 = vadd.f32 %v3014, %v4173
        %v4175 = vpop.f32.mrb[0].mxu0
        %v4176 = vadd.f32 %v3010, %v4175
        %v4177 = vpop.f32.mrb[0].mxu0
        %v4178 = vadd.f32 %v3014, %v4177
        %4179 = vmatprep.mubr.bf16.mxu0 0
        %4180 = vmatmul.mubr.bf16.gmra.mrb[0].mxu0 %v2826
        %v4181 = vpop.f32.mrb[0].mxu0
        %v4182 = vadd.f32 %v3010, %v4181
        %v4183 = vpop.f32.mrb[0].mxu0
        %v4184 = vadd.f32 %v3014, %v4183
        %v4185 = vpop.f32.mrb[0].mxu0
        %v4186 = vadd.f32 %v3010, %v4185
        %v4187 = vpop.f32.mrb[0].mxu0
        %v4188 = vadd.f32 %v3014, %v4187
        %4189 = vdwg.mxu0
        %4190 = vmatprep.subr.bf16.mxu0 %v3438
        %4191 = vmatpush1.bf16.msra.mxu0 %v3437
        %4192 = vmatprep.subr.bf16.mxu0 %v3454
        %4193 = vmatpush1.bf16.msra.mxu0 %v3453
        %4194 = vmatprep.subr.bf16.mxu0 %v3470
        %4195 = vmatpush1.bf16.msra.mxu0 %v3469
        %4196 = vmatprep.subr.bf16.mxu0 %v3486
        %4197 = vmatpush1.bf16.msra.mxu0 %v3485
        %4198 = vmatprep.subr.bf16.mxu0 %v3502
        %4199 = vmatpush1.bf16.msra.mxu0 %v3501
        %4200 = vmatprep.subr.bf16.mxu0 %v3518
        %4201 = vmatpush1.bf16.msra.mxu0 %v3517
        %4202 = vmatprep.subr.bf16.mxu0 %v3534
        %4203 = vmatpush1.bf16.msra.mxu0 %v3533
        %4204 = vmatprep.subr.bf16.mxu0 %v3550
        %4205 = vmatpush1.bf16.msra.mxu0 %v3549
        %4206 = vmatprep.subr.bf16.mxu0 0
        %4207 = vmatpush1.bf16.msra.mxu0 0
        %4208 = vmatprep.subr.bf16.mxu0 0
        %4209 = vmatpush1.bf16.msra.mxu0 0
        %4210 = vmatprep.subr.bf16.mxu0 0
        %4211 = vmatpush1.bf16.msra.mxu0 0
        %4212 = vmatprep.subr.bf16.mxu0 0
        %4213 = vmatpush1.bf16.msra.mxu0 0
        %4214 = vmatprep.subr.bf16.mxu0 0
        %4215 = vmatpush1.bf16.msra.mxu0 0
        %4216 = vmatprep.subr.bf16.mxu0 0
        %4217 = vmatpush1.bf16.msra.mxu0 0
        %4218 = vmatprep.subr.bf16.mxu0 0
        %4219 = vmatpush1.bf16.msra.mxu0 0
        %4220 = vmatprep.subr.bf16.mxu0 0
        %4221 = vmatpush1.bf16.msra.mxu0 0
        %4222 = vmatprep.mubr.bf16.mxu0 0
        %4223 = vmatmul.mubr.bf16.gmra.mrb[0].mxu0 %v2823
        %v4224 = vpop.f32.mrb[0].mxu0
        %v4225 = vadd.f32 %v3018, %v4224
        %v4226 = vpop.f32.mrb[0].mxu0
        %v4227 = vadd.f32 %v3022, %v4226
        %v4228 = vpop.f32.mrb[0].mxu0
        %v4229 = vadd.f32 %v3018, %v4228
        %v4230 = vpop.f32.mrb[0].mxu0
        %v4231 = vadd.f32 %v3022, %v4230
        %4232 = vmatprep.mubr.bf16.mxu0 0
        %4233 = vmatmul.mubr.bf16.gmra.mrb[0].mxu0 %v2824
        %v4234 = vpop.f32.mrb[0].mxu0
        %v4235 = vadd.f32 %v3018, %v4234
        %v4236 = vpop.f32.mrb[0].mxu0
        %v4237 = vadd.f32 %v3022, %v4236
        %v4238 = vpop.f32.mrb[0].mxu0
        %v4239 = vadd.f32 %v3018, %v4238
        %v4240 = vpop.f32.mrb[0].mxu0
        %v4241 = vadd.f32 %v3022, %v4240
        %4242 = vmatprep.mubr.bf16.mxu0 0
        %4243 = vmatmul.mubr.bf16.gmra.mrb[0].mxu0 %v2825
        %v4244 = vpop.f32.mrb[0].mxu0
        %v4245 = vadd.f32 %v3018, %v4244
        %v4246 = vpop.f32.mrb[0].mxu0
        %v4247 = vadd.f32 %v3022, %v4246
        %v4248 = vpop.f32.mrb[0].mxu0
        %v4249 = vadd.f32 %v3018, %v4248
        %v4250 = vpop.f32.mrb[0].mxu0
        %v4251 = vadd.f32 %v3022, %v4250
        %4252 = vmatprep.mubr.bf16.mxu0 0
        %4253 = vmatmul.mubr.bf16.gmra.mrb[0].mxu0 %v2826
        %v4254 = vpop.f32.mrb[0].mxu0
        %v4255 = vadd.f32 %v3018, %v4254
        %v4256 = vpop.f32.mrb[0].mxu0
        %v4257 = vadd.f32 %v3022, %v4256
        %v4258 = vpop.f32.mrb[0].mxu0
        %v4259 = vadd.f32 %v3018, %v4258
        %v4260 = vpop.f32.mrb[0].mxu0
        %v4261 = vadd.f32 %v3022, %v4260
        %4262 = vdwg.mxu0
        %v4263 = vmax.f32 %v3714, 0.0
        %v4264 = vmax.f32 %v3716, 0.0
        %v4265 = vmax.f32 %v3787, 0.0
        %v4266 = vmax.f32 %v3789, 0.0
        %v4267 = vmax.f32 %v3860, 0.0
        %v4268 = vmax.f32 %v3862, 0.0
        %v4269 = vmax.f32 %v3933, 0.0
        %v4270 = vmax.f32 %v3935, 0.0
        %v4271 = vmax.f32 %v4006, 0.0
        %v4272 = vmax.f32 %v4008, 0.0
        %v4273 = vmax.f32 %v4079, 0.0
        %v4274 = vmax.f32 %v4081, 0.0
        %v4275 = vmax.f32 %v4152, 0.0
        %v4276 = vmax.f32 %v4154, 0.0
        %v4277 = vmax.f32 %v4225, 0.0
        %v4278 = vmax.f32 %v4227, 0.0
        %v4279 = vmax.f32 %v3718, 0.0
        %v4280 = vmax.f32 %v3720, 0.0
        %v4281 = vmax.f32 %v3791, 0.0
        %v4282 = vmax.f32 %v3793, 0.0
        %v4283 = vmax.f32 %v3864, 0.0
        %v4284 = vmax.f32 %v3866, 0.0
        %v4285 = vmax.f32 %v3937, 0.0
        %v4286 = vmax.f32 %v3939, 0.0
        %v4287 = vmax.f32 %v4010, 0.0
        %v4288 = vmax.f32 %v4012, 0.0
        %v4289 = vmax.f32 %v4083, 0.0
        %v4290 = vmax.f32 %v4085, 0.0
        %v4291 = vmax.f32 %v4156, 0.0
        %v4292 = vmax.f32 %v4158, 0.0
        %v4293 = vmax.f32 %v4229, 0.0
        %v4294 = vmax.f32 %v4231, 0.0
        %v4295 = vmax.f32 %v3724, 0.0
        %v4296 = vmax.f32 %v3726, 0.0
        %v4297 = vmax.f32 %v3797, 0.0
        %v4298 = vmax.f32 %v3799, 0.0
        %v4299 = vmax.f32 %v3870, 0.0
        %v4300 = vmax.f32 %v3872, 0.0
        %v4301 = vmax.f32 %v3943, 0.0
        %v4302 = vmax.f32 %v3945, 0.0
        %v4303 = vmax.f32 %v4016, 0.0
        %v4304 = vmax.f32 %v4018, 0.0
        %v4305 = vmax.f32 %v4089, 0.0
        %v4306 = vmax.f32 %v4091, 0.0
        %v4307 = vmax.f32 %v4162, 0.0
        %v4308 = vmax.f32 %v4164, 0.0
        %v4309 = vmax.f32 %v4235, 0.0
        %v4310 = vmax.f32 %v4237, 0.0
        %v4311 = vmax.f32 %v3728, 0.0
        %v4312 = vmax.f32 %v3730, 0.0
        %v4313 = vmax.f32 %v3801, 0.0
        %v4314 = vmax.f32 %v3803, 0.0
        %v4315 = vmax.f32 %v3874, 0.0
        %v4316 = vmax.f32 %v3876, 0.0
        %v4317 = vmax.f32 %v3947, 0.0
        %v4318 = vmax.f32 %v3949, 0.0
        %v4319 = vmax.f32 %v4020, 0.0
        %v4320 = vmax.f32 %v4022, 0.0
        %v4321 = vmax.f32 %v4093, 0.0
        %v4322 = vmax.f32 %v4095, 0.0
        %v4323 = vmax.f32 %v4166, 0.0
        %v4324 = vmax.f32 %v4168, 0.0
        %v4325 = vmax.f32 %v4239, 0.0
        %v4326 = vmax.f32 %v4241, 0.0
        %v4327 = vmax.f32 %v3734, 0.0
        %v4328 = vmax.f32 %v3736, 0.0
        %v4329 = vmax.f32 %v3807, 0.0
        %v4330 = vmax.f32 %v3809, 0.0
        %v4331 = vmax.f32 %v3880, 0.0
        %v4332 = vmax.f32 %v3882, 0.0
        %v4333 = vmax.f32 %v3953, 0.0
        %v4334 = vmax.f32 %v3955, 0.0
        %v4335 = vmax.f32 %v4026, 0.0
        %v4336 = vmax.f32 %v4028, 0.0
        %v4337 = vmax.f32 %v4099, 0.0
        %v4338 = vmax.f32 %v4101, 0.0
        %v4339 = vmax.f32 %v4172, 0.0
        %v4340 = vmax.f32 %v4174, 0.0
        %v4341 = vmax.f32 %v4245, 0.0
        %v4342 = vmax.f32 %v4247, 0.0
        %v4343 = vmax.f32 %v3738, 0.0
        %v4344 = vmax.f32 %v3740, 0.0
        %v4345 = vmax.f32 %v3811, 0.0
        %v4346 = vmax.f32 %v3813, 0.0
        %v4347 = vmax.f32 %v3884, 0.0
        %v4348 = vmax.f32 %v3886, 0.0
        %v4349 = vmax.f32 %v3957, 0.0
        %v4350 = vmax.f32 %v3959, 0.0
        %v4351 = vmax.f32 %v4030, 0.0
        %v4352 = vmax.f32 %v4032, 0.0
        %v4353 = vmax.f32 %v4103, 0.0
        %v4354 = vmax.f32 %v4105, 0.0
        %v4355 = vmax.f32 %v4176, 0.0
        %v4356 = vmax.f32 %v4178, 0.0
        %v4357 = vmax.f32 %v4249, 0.0
        %v4358 = vmax.f32 %v4251, 0.0
        %v4359 = vmax.f32 %v3744, 0.0
        %v4360 = vmax.f32 %v3746, 0.0
        %v4361 = vmax.f32 %v3817, 0.0
        %v4362 = vmax.f32 %v3819, 0.0
        %v4363 = vmax.f32 %v3890, 0.0
        %v4364 = vmax.f32 %v3892, 0.0
        %v4365 = vmax.f32 %v3963, 0.0
        %v4366 = vmax.f32 %v3965, 0.0
        %v4367 = vmax.f32 %v4036, 0.0
        %v4368 = vmax.f32 %v4038, 0.0
        %v4369 = vmax.f32 %v4109, 0.0
        %v4370 = vmax.f32 %v4111, 0.0
        %v4371 = vmax.f32 %v4182, 0.0
        %v4372 = vmax.f32 %v4184, 0.0
        %v4373 = vmax.f32 %v4255, 0.0
        %v4374 = vmax.f32 %v4257, 0.0
        %v4375 = vmax.f32 %v3748, 0.0
        %v4376 = vmax.f32 %v3750, 0.0
        %v4377 = vmax.f32 %v3821, 0.0
        %v4378 = vmax.f32 %v3823, 0.0
        %v4379 = vmax.f32 %v3894, 0.0
        %v4380 = vmax.f32 %v3896, 0.0
        %v4381 = vmax.f32 %v3967, 0.0
        %v4382 = vmax.f32 %v3969, 0.0
        %v4383 = vmax.f32 %v4040, 0.0
        %v4384 = vmax.f32 %v4042, 0.0
        %v4385 = vmax.f32 %v4113, 0.0
        %v4386 = vmax.f32 %v4115, 0.0
        %v4387 = vmax.f32 %v4186, 0.0
        %v4388 = vmax.f32 %v4188, 0.0
        %v4389 = vmax.f32 %v4259, 0.0
        %v4390 = vmax.f32 %v4261, 0.0
        %v4391 = vpack.c.bf16 %v4279, %v4263
        %v4392 = vpack.c.bf16 %v4280, %v4264
        %v4393 = vpack.c.bf16 %v4281, %v4265
        %v4394 = vpack.c.bf16 %v4282, %v4266
        %v4395 = vpack.c.bf16 %v4283, %v4267
        %v4396 = vpack.c.bf16 %v4284, %v4268
        %v4397 = vpack.c.bf16 %v4285, %v4269
        %v4398 = vpack.c.bf16 %v4286, %v4270
        %v4399 = vpack.c.bf16 %v4287, %v4271
        %v4400 = vpack.c.bf16 %v4288, %v4272
        %v4401 = vpack.c.bf16 %v4289, %v4273
        %v4402 = vpack.c.bf16 %v4290, %v4274
        %v4403 = vpack.c.bf16 %v4291, %v4275
        %v4404 = vpack.c.bf16 %v4292, %v4276
        %v4405 = vpack.c.bf16 %v4293, %v4277
        %v4406 = vpack.c.bf16 %v4294, %v4278
        %v4407 = vpack.c.bf16 %v4311, %v4295
        %v4408 = vpack.c.bf16 %v4312, %v4296
        %v4409 = vpack.c.bf16 %v4313, %v4297
        %v4410 = vpack.c.bf16 %v4314, %v4298
        %v4411 = vpack.c.bf16 %v4315, %v4299
        %v4412 = vpack.c.bf16 %v4316, %v4300
        %v4413 = vpack.c.bf16 %v4317, %v4301
        %v4414 = vpack.c.bf16 %v4318, %v4302
        %v4415 = vpack.c.bf16 %v4319, %v4303
        %v4416 = vpack.c.bf16 %v4320, %v4304
        %v4417 = vpack.c.bf16 %v4321, %v4305
        %v4418 = vpack.c.bf16 %v4322, %v4306
        %v4419 = vpack.c.bf16 %v4323, %v4307
        %v4420 = vpack.c.bf16 %v4324, %v4308
        %v4421 = vpack.c.bf16 %v4325, %v4309
        %v4422 = vpack.c.bf16 %v4326, %v4310
        %v4423 = vpack.c.bf16 %v4343, %v4327
        %v4424 = vpack.c.bf16 %v4344, %v4328
        %v4425 = vpack.c.bf16 %v4345, %v4329
        %v4426 = vpack.c.bf16 %v4346, %v4330
        %v4427 = vpack.c.bf16 %v4347, %v4331
        %v4428 = vpack.c.bf16 %v4348, %v4332
        %v4429 = vpack.c.bf16 %v4349, %v4333
        %v4430 = vpack.c.bf16 %v4350, %v4334
        %v4431 = vpack.c.bf16 %v4351, %v4335
        %v4432 = vpack.c.bf16 %v4352, %v4336
        %v4433 = vpack.c.bf16 %v4353, %v4337
        %v4434 = vpack.c.bf16 %v4354, %v4338
        %v4435 = vpack.c.bf16 %v4355, %v4339
        %v4436 = vpack.c.bf16 %v4356, %v4340
        %v4437 = vpack.c.bf16 %v4357, %v4341
        %v4438 = vpack.c.bf16 %v4358, %v4342
        %v4439 = vpack.c.bf16 %v4375, %v4359
        %v4440 = vpack.c.bf16 %v4376, %v4360
        %v4441 = vpack.c.bf16 %v4377, %v4361
        %v4442 = vpack.c.bf16 %v4378, %v4362
        %v4443 = vpack.c.bf16 %v4379, %v4363
        %v4444 = vpack.c.bf16 %v4380, %v4364
        %v4445 = vpack.c.bf16 %v4381, %v4365
        %v4446 = vpack.c.bf16 %v4382, %v4366
        %v4447 = vpack.c.bf16 %v4383, %v4367
        %v4448 = vpack.c.bf16 %v4384, %v4368
        %v4449 = vpack.c.bf16 %v4385, %v4369
        %v4450 = vpack.c.bf16 %v4386, %v4370
        %v4451 = vpack.c.bf16 %v4387, %v4371
        %v4452 = vpack.c.bf16 %v4388, %v4372
        %v4453 = vpack.c.bf16 %v4389, %v4373
        %v4454 = vpack.c.bf16 %v4390, %v4374
        %v4455 = vld [vmem:[%s672] sm:$0xf]
        %v4456 = vld [vmem:[%s672 + $0x4] sm:$0xf]
        %v4457 = vld [vmem:[%s672 + $0x8] sm:$0xf]
        %v4458 = vld [vmem:[%s672 + $0xc] sm:$0xf]
        %v4459 = vld [vmem:[%s672 + $0x10] sm:$0xf]
        %v4460 = vld [vmem:[%s672 + $0x14] sm:$0xf]
        %v4461 = vld [vmem:[%s672 + $0x18] sm:$0xf]
        %v4462 = vld [vmem:[%s672 + $0x1c] sm:$0xf]
        %v4463 = vld [vmem:[%s672 + $0x20] sm:$0xf]
        %v4464 = vld [vmem:[%s672 + $0x24] sm:$0xf]
        %v4465 = vld [vmem:[%s672 + $0x28] sm:$0xf]
        %v4466 = vld [vmem:[%s672 + $0x2c] sm:$0xf]
        %v4467 = vld [vmem:[%s672 + $0x30] sm:$0xf]
        %v4468 = vld [vmem:[%s672 + $0x34] sm:$0xf]
        %v4469 = vld [vmem:[%s672 + $0x38] sm:$0xf]
        %v4470 = vld [vmem:[%s672 + $0x3c] sm:$0xf]
        %v4471 = vld [vmem:[%s672 + $0x40] sm:$0xf]
        %v4472 = vld [vmem:[%s672 + $0x44] sm:$0xf]
        %v4473 = vld [vmem:[%s672 + $0x48] sm:$0xf]
        %v4474 = vld [vmem:[%s672 + $0x4c] sm:$0xf]
        %v4475 = vld [vmem:[%s672 + $0x50] sm:$0xf]
        %v4476 = vld [vmem:[%s672 + $0x54] sm:$0xf]
        %v4477 = vld [vmem:[%s672 + $0x58] sm:$0xf]
        %v4478 = vld [vmem:[%s672 + $0x5c] sm:$0xf]
        %v4479 = vld [vmem:[%s672 + $0x60] sm:$0xf]
        %v4480 = vld [vmem:[%s672 + $0x64] sm:$0xf]
        %v4481 = vld [vmem:[%s672 + $0x68] sm:$0xf]
        %v4482 = vld [vmem:[%s672 + $0x6c] sm:$0xf]
        %v4483 = vld [vmem:[%s672 + $0x70] sm:$0xf]
        %v4484 = vld [vmem:[%s672 + $0x74] sm:$0xf]
        %v4485 = vld [vmem:[%s672 + $0x78] sm:$0xf]
        %v4486 = vld [vmem:[%s672 + $0x7c] sm:$0xf]
        %v4487 = vld [vmem:[%s672 + $0x80] sm:$0xf]
        %v4488 = vld [vmem:[%s672 + $0x84] sm:$0xf]
        %v4489 = vld [vmem:[%s672 + $0x88] sm:$0xf]
        %v4490 = vld [vmem:[%s672 + $0x8c] sm:$0xf]
        %v4491 = vld [vmem:[%s672 + $0x90] sm:$0xf]
        %v4492 = vld [vmem:[%s672 + $0x94] sm:$0xf]
        %v4493 = vld [vmem:[%s672 + $0x98] sm:$0xf]
        %v4494 = vld [vmem:[%s672 + $0x9c] sm:$0xf]
        %v4495 = vld [vmem:[%s672 + $0xa0] sm:$0xf]
        %v4496 = vld [vmem:[%s672 + $0xa4] sm:$0xf]
        %v4497 = vld [vmem:[%s672 + $0xa8] sm:$0xf]
        %v4498 = vld [vmem:[%s672 + $0xac] sm:$0xf]
        %v4499 = vld [vmem:[%s672 + $0xb0] sm:$0xf]
        %v4500 = vld [vmem:[%s672 + $0xb4] sm:$0xf]
        %v4501 = vld [vmem:[%s672 + $0xb8] sm:$0xf]
        %v4502 = vld [vmem:[%s672 + $0xbc] sm:$0xf]
        %v4503 = vld [vmem:[%s672 + $0xc0] sm:$0xf]
        %v4504 = vld [vmem:[%s672 + $0xc4] sm:$0xf]
        %v4505 = vld [vmem:[%s672 + $0xc8] sm:$0xf]
        %v4506 = vld [vmem:[%s672 + $0xcc] sm:$0xf]
        %v4507 = vld [vmem:[%s672 + $0xd0] sm:$0xf]
        %v4508 = vld [vmem:[%s672 + $0xd4] sm:$0xf]
        %v4509 = vld [vmem:[%s672 + $0xd8] sm:$0xf]
        %v4510 = vld [vmem:[%s672 + $0xdc] sm:$0xf]
        %v4511 = vld [vmem:[%s672 + $0xe0] sm:$0xf]
        %v4512 = vld [vmem:[%s672 + $0xe4] sm:$0xf]
        %v4513 = vld [vmem:[%s672 + $0xe8] sm:$0xf]
        %v4514 = vld [vmem:[%s672 + $0xec] sm:$0xf]
        %v4515 = vld [vmem:[%s672 + $0xf0] sm:$0xf]
        %v4516 = vld [vmem:[%s672 + $0xf4] sm:$0xf]
        %v4517 = vld [vmem:[%s672 + $0xf8] sm:$0xf]
        %v4518 = vld [vmem:[%s672 + $0xfc] sm:$0xf]
        %v4519 = vld [vmem:[%s672 + $0x100] sm:$0xf]
        %v4520 = vld [vmem:[%s672 + $0x104] sm:$0xf]
        %v4521 = vld [vmem:[%s672 + $0x108] sm:$0xf]
        %v4522 = vld [vmem:[%s672 + $0x10c] sm:$0xf]
        %v4523 = vld [vmem:[%s672 + $0x110] sm:$0xf]
        %v4524 = vld [vmem:[%s672 + $0x114] sm:$0xf]
        %v4525 = vld [vmem:[%s672 + $0x118] sm:$0xf]
        %v4526 = vld [vmem:[%s672 + $0x11c] sm:$0xf]
        %v4527 = vld [vmem:[%s672 + $0x120] sm:$0xf]
        %v4528 = vld [vmem:[%s672 + $0x124] sm:$0xf]
        %v4529 = vld [vmem:[%s672 + $0x128] sm:$0xf]
        %v4530 = vld [vmem:[%s672 + $0x12c] sm:$0xf]
        %v4531 = vld [vmem:[%s672 + $0x130] sm:$0xf]
        %v4532 = vld [vmem:[%s672 + $0x134] sm:$0xf]
        %v4533 = vld [vmem:[%s672 + $0x138] sm:$0xf]
        %v4534 = vld [vmem:[%s672 + $0x13c] sm:$0xf]
        %v4535 = vld [vmem:[%s672 + $0x140] sm:$0xf]
        %v4536 = vld [vmem:[%s672 + $0x144] sm:$0xf]
        %v4537 = vld [vmem:[%s672 + $0x148] sm:$0xf]
        %v4538 = vld [vmem:[%s672 + $0x14c] sm:$0xf]
        %v4539 = vld [vmem:[%s672 + $0x150] sm:$0xf]
        %v4540 = vld [vmem:[%s672 + $0x154] sm:$0xf]
        %v4541 = vld [vmem:[%s672 + $0x158] sm:$0xf]
        %v4542 = vld [vmem:[%s672 + $0x15c] sm:$0xf]
        %v4543 = vld [vmem:[%s672 + $0x160] sm:$0xf]
        %v4544 = vld [vmem:[%s672 + $0x164] sm:$0xf]
        %v4545 = vld [vmem:[%s672 + $0x168] sm:$0xf]
        %v4546 = vld [vmem:[%s672 + $0x16c] sm:$0xf]
        %v4547 = vld [vmem:[%s672 + $0x170] sm:$0xf]
        %v4548 = vld [vmem:[%s672 + $0x174] sm:$0xf]
        %v4549 = vld [vmem:[%s672 + $0x178] sm:$0xf]
        %v4550 = vld [vmem:[%s672 + $0x17c] sm:$0xf]
        %v4551 = vld [vmem:[%s672 + $0x180] sm:$0xf]
        %v4552 = vld [vmem:[%s672 + $0x184] sm:$0xf]
        %v4553 = vld [vmem:[%s672 + $0x188] sm:$0xf]
        %v4554 = vld [vmem:[%s672 + $0x18c] sm:$0xf]
        %v4555 = vld [vmem:[%s672 + $0x190] sm:$0xf]
        %v4556 = vld [vmem:[%s672 + $0x194] sm:$0xf]
        %v4557 = vld [vmem:[%s672 + $0x198] sm:$0xf]
        %v4558 = vld [vmem:[%s672 + $0x19c] sm:$0xf]
        %v4559 = vld [vmem:[%s672 + $0x1a0] sm:$0xf]
        %v4560 = vld [vmem:[%s672 + $0x1a4] sm:$0xf]
        %v4561 = vld [vmem:[%s672 + $0x1a8] sm:$0xf]
        %v4562 = vld [vmem:[%s672 + $0x1ac] sm:$0xf]
        %v4563 = vld [vmem:[%s672 + $0x1b0] sm:$0xf]
        %v4564 = vld [vmem:[%s672 + $0x1b4] sm:$0xf]
        %v4565 = vld [vmem:[%s672 + $0x1b8] sm:$0xf]
        %v4566 = vld [vmem:[%s672 + $0x1bc] sm:$0xf]
        %v4567 = vld [vmem:[%s672 + $0x1c0] sm:$0xf]
        %v4568 = vld [vmem:[%s672 + $0x1c4] sm:$0xf]
        %v4569 = vld [vmem:[%s672 + $0x1c8] sm:$0xf]
        %v4570 = vld [vmem:[%s672 + $0x1cc] sm:$0xf]
        %v4571 = vld [vmem:[%s672 + $0x1d0] sm:$0xf]
        %v4572 = vld [vmem:[%s672 + $0x1d4] sm:$0xf]
        %v4573 = vld [vmem:[%s672 + $0x1d8] sm:$0xf]
        %v4574 = vld [vmem:[%s672 + $0x1dc] sm:$0xf]
        %v4575 = vld [vmem:[%s672 + $0x1e0] sm:$0xf]
        %v4576 = vld [vmem:[%s672 + $0x1e4] sm:$0xf]
        %v4577 = vld [vmem:[%s672 + $0x1e8] sm:$0xf]
        %v4578 = vld [vmem:[%s672 + $0x1ec] sm:$0xf]
        %v4579 = vld [vmem:[%s672 + $0x1f0] sm:$0xf]
        %v4580 = vld [vmem:[%s672 + $0x1f4] sm:$0xf]
        %v4581 = vld [vmem:[%s672 + $0x1f8] sm:$0xf]
        %v4582 = vld [vmem:[%s672 + $0x1fc] sm:$0xf]
        %v4583 = vld [vmem:[%s672 + $0x200] sm:$0xf]
        %v4584 = vld [vmem:[%s672 + $0x204] sm:$0xf]
        %v4585 = vld [vmem:[%s672 + $0x208] sm:$0xf]
        %v4586 = vld [vmem:[%s672 + $0x20c] sm:$0xf]
        %v4587 = vld [vmem:[%s672 + $0x210] sm:$0xf]
        %v4588 = vld [vmem:[%s672 + $0x214] sm:$0xf]
        %v4589 = vld [vmem:[%s672 + $0x218] sm:$0xf]
        %v4590 = vld [vmem:[%s672 + $0x21c] sm:$0xf]
        %v4591 = vld [vmem:[%s672 + $0x220] sm:$0xf]
        %v4592 = vld [vmem:[%s672 + $0x224] sm:$0xf]
        %v4593 = vld [vmem:[%s672 + $0x228] sm:$0xf]
        %v4594 = vld [vmem:[%s672 + $0x22c] sm:$0xf]
        %v4595 = vld [vmem:[%s672 + $0x230] sm:$0xf]
        %v4596 = vld [vmem:[%s672 + $0x234] sm:$0xf]
        %v4597 = vld [vmem:[%s672 + $0x238] sm:$0xf]
        %v4598 = vld [vmem:[%s672 + $0x23c] sm:$0xf]
        %v4599 = vld [vmem:[%s672 + $0x240] sm:$0xf]
        %v4600 = vld [vmem:[%s672 + $0x244] sm:$0xf]
        %v4601 = vld [vmem:[%s672 + $0x248] sm:$0xf]
        %v4602 = vld [vmem:[%s672 + $0x24c] sm:$0xf]
        %v4603 = vld [vmem:[%s672 + $0x250] sm:$0xf]
        %v4604 = vld [vmem:[%s672 + $0x254] sm:$0xf]
        %v4605 = vld [vmem:[%s672 + $0x258] sm:$0xf]
        %v4606 = vld [vmem:[%s672 + $0x25c] sm:$0xf]
        %v4607 = vld [vmem:[%s672 + $0x260] sm:$0xf]
        %v4608 = vld [vmem:[%s672 + $0x264] sm:$0xf]
        %v4609 = vld [vmem:[%s672 + $0x268] sm:$0xf]
        %v4610 = vld [vmem:[%s672 + $0x26c] sm:$0xf]
        %v4611 = vld [vmem:[%s672 + $0x270] sm:$0xf]
        %v4612 = vld [vmem:[%s672 + $0x274] sm:$0xf]
        %v4613 = vld [vmem:[%s672 + $0x278] sm:$0xf]
        %v4614 = vld [vmem:[%s672 + $0x27c] sm:$0xf]
        %v4615 = vld [vmem:[%s672 + $0x280] sm:$0xf]
        %v4616 = vld [vmem:[%s672 + $0x284] sm:$0xf]
        %v4617 = vld [vmem:[%s672 + $0x288] sm:$0xf]
        %v4618 = vld [vmem:[%s672 + $0x28c] sm:$0xf]
        %v4619 = vld [vmem:[%s672 + $0x290] sm:$0xf]
        %v4620 = vld [vmem:[%s672 + $0x294] sm:$0xf]
        %v4621 = vld [vmem:[%s672 + $0x298] sm:$0xf]
        %v4622 = vld [vmem:[%s672 + $0x29c] sm:$0xf]
        %v4623 = vld [vmem:[%s672 + $0x2a0] sm:$0xf]
        %v4624 = vld [vmem:[%s672 + $0x2a4] sm:$0xf]
        %v4625 = vld [vmem:[%s672 + $0x2a8] sm:$0xf]
        %v4626 = vld [vmem:[%s672 + $0x2ac] sm:$0xf]
        %v4627 = vld [vmem:[%s672 + $0x2b0] sm:$0xf]
        %v4628 = vld [vmem:[%s672 + $0x2b4] sm:$0xf]
        %v4629 = vld [vmem:[%s672 + $0x2b8] sm:$0xf]
        %v4630 = vld [vmem:[%s672 + $0x2bc] sm:$0xf]
        %v4631 = vld [vmem:[%s672 + $0x2c0] sm:$0xf]
        %v4632 = vld [vmem:[%s672 + $0x2c4] sm:$0xf]
        %v4633 = vld [vmem:[%s672 + $0x2c8] sm:$0xf]
        %v4634 = vld [vmem:[%s672 + $0x2cc] sm:$0xf]
        %v4635 = vld [vmem:[%s672 + $0x2d0] sm:$0xf]
        %v4636 = vld [vmem:[%s672 + $0x2d4] sm:$0xf]
        %v4637 = vld [vmem:[%s672 + $0x2d8] sm:$0xf]
        %v4638 = vld [vmem:[%s672 + $0x2dc] sm:$0xf]
        %v4639 = vld [vmem:[%s672 + $0x2e0] sm:$0xf]
        %v4640 = vld [vmem:[%s672 + $0x2e4] sm:$0xf]
        %v4641 = vld [vmem:[%s672 + $0x2e8] sm:$0xf]
        %v4642 = vld [vmem:[%s672 + $0x2ec] sm:$0xf]
        %v4643 = vld [vmem:[%s672 + $0x2f0] sm:$0xf]
        %v4644 = vld [vmem:[%s672 + $0x2f4] sm:$0xf]
        %v4645 = vld [vmem:[%s672 + $0x2f8] sm:$0xf]
        %v4646 = vld [vmem:[%s672 + $0x2fc] sm:$0xf]
        %v4647 = vld [vmem:[%s672 + $0x300] sm:$0xf]
        %v4648 = vld [vmem:[%s672 + $0x304] sm:$0xf]
        %v4649 = vld [vmem:[%s672 + $0x308] sm:$0xf]
        %v4650 = vld [vmem:[%s672 + $0x30c] sm:$0xf]
        %v4651 = vld [vmem:[%s672 + $0x310] sm:$0xf]
        %v4652 = vld [vmem:[%s672 + $0x314] sm:$0xf]
        %v4653 = vld [vmem:[%s672 + $0x318] sm:$0xf]
        %v4654 = vld [vmem:[%s672 + $0x31c] sm:$0xf]
        %v4655 = vld [vmem:[%s672 + $0x320] sm:$0xf]
        %v4656 = vld [vmem:[%s672 + $0x324] sm:$0xf]
        %v4657 = vld [vmem:[%s672 + $0x328] sm:$0xf]
        %v4658 = vld [vmem:[%s672 + $0x32c] sm:$0xf]
        %v4659 = vld [vmem:[%s672 + $0x330] sm:$0xf]
        %v4660 = vld [vmem:[%s672 + $0x334] sm:$0xf]
        %v4661 = vld [vmem:[%s672 + $0x338] sm:$0xf]
        %v4662 = vld [vmem:[%s672 + $0x33c] sm:$0xf]
        %v4663 = vld [vmem:[%s672 + $0x340] sm:$0xf]
        %v4664 = vld [vmem:[%s672 + $0x344] sm:$0xf]
        %v4665 = vld [vmem:[%s672 + $0x348] sm:$0xf]
        %v4666 = vld [vmem:[%s672 + $0x34c] sm:$0xf]
        %v4667 = vld [vmem:[%s672 + $0x350] sm:$0xf]
        %v4668 = vld [vmem:[%s672 + $0x354] sm:$0xf]
        %v4669 = vld [vmem:[%s672 + $0x358] sm:$0xf]
        %v4670 = vld [vmem:[%s672 + $0x35c] sm:$0xf]
        %v4671 = vld [vmem:[%s672 + $0x360] sm:$0xf]
        %v4672 = vld [vmem:[%s672 + $0x364] sm:$0xf]
        %v4673 = vld [vmem:[%s672 + $0x368] sm:$0xf]
        %v4674 = vld [vmem:[%s672 + $0x36c] sm:$0xf]
        %v4675 = vld [vmem:[%s672 + $0x370] sm:$0xf]
        %v4676 = vld [vmem:[%s672 + $0x374] sm:$0xf]
        %v4677 = vld [vmem:[%s672 + $0x378] sm:$0xf]
        %v4678 = vld [vmem:[%s672 + $0x37c] sm:$0xf]
        %v4679 = vld [vmem:[%s672 + $0x380] sm:$0xf]
        %v4680 = vld [vmem:[%s672 + $0x384] sm:$0xf]
        %v4681 = vld [vmem:[%s672 + $0x388] sm:$0xf]
        %v4682 = vld [vmem:[%s672 + $0x38c] sm:$0xf]
        %v4683 = vld [vmem:[%s672 + $0x390] sm:$0xf]
        %v4684 = vld [vmem:[%s672 + $0x394] sm:$0xf]
        %v4685 = vld [vmem:[%s672 + $0x398] sm:$0xf]
        %v4686 = vld [vmem:[%s672 + $0x39c] sm:$0xf]
        %v4687 = vld [vmem:[%s672 + $0x3a0] sm:$0xf]
        %v4688 = vld [vmem:[%s672 + $0x3a4] sm:$0xf]
        %v4689 = vld [vmem:[%s672 + $0x3a8] sm:$0xf]
        %v4690 = vld [vmem:[%s672 + $0x3ac] sm:$0xf]
        %v4691 = vld [vmem:[%s672 + $0x3b0] sm:$0xf]
        %v4692 = vld [vmem:[%s672 + $0x3b4] sm:$0xf]
        %v4693 = vld [vmem:[%s672 + $0x3b8] sm:$0xf]
        %v4694 = vld [vmem:[%s672 + $0x3bc] sm:$0xf]
        %v4695 = vld [vmem:[%s672 + $0x3c0] sm:$0xf]
        %v4696 = vld [vmem:[%s672 + $0x3c4] sm:$0xf]
        %v4697 = vld [vmem:[%s672 + $0x3c8] sm:$0xf]
        %v4698 = vld [vmem:[%s672 + $0x3cc] sm:$0xf]
        %v4699 = vld [vmem:[%s672 + $0x3d0] sm:$0xf]
        %v4700 = vld [vmem:[%s672 + $0x3d4] sm:$0xf]
        %v4701 = vld [vmem:[%s672 + $0x3d8] sm:$0xf]
        %v4702 = vld [vmem:[%s672 + $0x3dc] sm:$0xf]
        %v4703 = vld [vmem:[%s672 + $0x3e0] sm:$0xf]
        %v4704 = vld [vmem:[%s672 + $0x3e4] sm:$0xf]
        %v4705 = vld [vmem:[%s672 + $0x3e8] sm:$0xf]
        %v4706 = vld [vmem:[%s672 + $0x3ec] sm:$0xf]
        %v4707 = vld [vmem:[%s672 + $0x3f0] sm:$0xf]
        %v4708 = vld [vmem:[%s672 + $0x3f4] sm:$0xf]
        %v4709 = vld [vmem:[%s672 + $0x3f8] sm:$0xf]
        %v4710 = vld [vmem:[%s672 + $0x3fc] sm:$0xf]
        %v4711 = vld [vmem:[%s780] sm:$0x1]
        %v4713 = vlaneseq
        %v4714 = vshrl.u32 %v4713, 7
        %v4715 = vsub.s32 0, %v4714
        %v4716 = vrot.slane %v4711, %v4715
        %v4974 = vunpack.c.l.b16 %v4455
        %v4975 = vunpack.c.l.b16 %v4456
        %v4976 = vunpack.c.l.b16 %v4457
        %v4977 = vunpack.c.l.b16 %v4458
        %v4978 = vunpack.c.l.b16 %v4459
        %v4979 = vunpack.c.l.b16 %v4460
        %v4980 = vunpack.c.l.b16 %v4461
        %v4981 = vunpack.c.l.b16 %v4462
        %v4982 = vunpack.c.l.b16 %v4463
        %v4983 = vunpack.c.l.b16 %v4464
        %v4984 = vunpack.c.l.b16 %v4465
        %v4985 = vunpack.c.l.b16 %v4466
        %v4986 = vunpack.c.l.b16 %v4467
        %v4987 = vunpack.c.l.b16 %v4468
        %v4988 = vunpack.c.l.b16 %v4469
        %v4989 = vunpack.c.l.b16 %v4470
        %v4990 = vunpack.c.l.b16 %v4471
        %v4991 = vunpack.c.l.b16 %v4472
        %v4992 = vunpack.c.l.b16 %v4473
        %v4993 = vunpack.c.l.b16 %v4474
        %v4994 = vunpack.c.l.b16 %v4475
        %v4995 = vunpack.c.l.b16 %v4476
        %v4996 = vunpack.c.l.b16 %v4477
        %v4997 = vunpack.c.l.b16 %v4478
        %v4998 = vunpack.c.l.b16 %v4479
        %v4999 = vunpack.c.l.b16 %v4480
        %v5000 = vunpack.c.l.b16 %v4481
        %v5001 = vunpack.c.l.b16 %v4482
        %v5002 = vunpack.c.l.b16 %v4483
        %v5003 = vunpack.c.l.b16 %v4484
        %v5004 = vunpack.c.l.b16 %v4485
        %v5005 = vunpack.c.l.b16 %v4486
        %v5006 = vunpack.c.l.b16 %v4487
        %v5007 = vunpack.c.l.b16 %v4488
        %v5008 = vunpack.c.l.b16 %v4489
        %v5009 = vunpack.c.l.b16 %v4490
        %v5010 = vunpack.c.l.b16 %v4491
        %v5011 = vunpack.c.l.b16 %v4492
        %v5012 = vunpack.c.l.b16 %v4493
        %v5013 = vunpack.c.l.b16 %v4494
        %v5014 = vunpack.c.l.b16 %v4495
        %v5015 = vunpack.c.l.b16 %v4496
        %v5016 = vunpack.c.l.b16 %v4497
        %v5017 = vunpack.c.l.b16 %v4498
        %v5018 = vunpack.c.l.b16 %v4499
        %v5019 = vunpack.c.l.b16 %v4500
        %v5020 = vunpack.c.l.b16 %v4501
        %v5021 = vunpack.c.l.b16 %v4502
        %v5022 = vunpack.c.l.b16 %v4503
        %v5023 = vunpack.c.l.b16 %v4504
        %v5024 = vunpack.c.l.b16 %v4505
        %v5025 = vunpack.c.l.b16 %v4506
        %v5026 = vunpack.c.l.b16 %v4507
        %v5027 = vunpack.c.l.b16 %v4508
        %v5028 = vunpack.c.l.b16 %v4509
        %v5029 = vunpack.c.l.b16 %v4510
        %v5030 = vunpack.c.l.b16 %v4511
        %v5031 = vunpack.c.l.b16 %v4512
        %v5032 = vunpack.c.l.b16 %v4513
        %v5033 = vunpack.c.l.b16 %v4514
        %v5034 = vunpack.c.l.b16 %v4515
        %v5035 = vunpack.c.l.b16 %v4516
        %v5036 = vunpack.c.l.b16 %v4517
        %v5037 = vunpack.c.l.b16 %v4518
        %v5038 = vunpack.c.l.b16 %v4519
        %v5039 = vunpack.c.l.b16 %v4520
        %v5040 = vunpack.c.l.b16 %v4521
        %v5041 = vunpack.c.l.b16 %v4522
        %v5042 = vunpack.c.l.b16 %v4523
        %v5043 = vunpack.c.l.b16 %v4524
        %v5044 = vunpack.c.l.b16 %v4525
        %v5045 = vunpack.c.l.b16 %v4526
        %v5046 = vunpack.c.l.b16 %v4527
        %v5047 = vunpack.c.l.b16 %v4528
        %v5048 = vunpack.c.l.b16 %v4529
        %v5049 = vunpack.c.l.b16 %v4530
        %v5050 = vunpack.c.l.b16 %v4531
        %v5051 = vunpack.c.l.b16 %v4532
        %v5052 = vunpack.c.l.b16 %v4533
        %v5053 = vunpack.c.l.b16 %v4534
        %v5054 = vunpack.c.l.b16 %v4535
        %v5055 = vunpack.c.l.b16 %v4536
        %v5056 = vunpack.c.l.b16 %v4537
        %v5057 = vunpack.c.l.b16 %v4538
        %v5058 = vunpack.c.l.b16 %v4539
        %v5059 = vunpack.c.l.b16 %v4540
        %v5060 = vunpack.c.l.b16 %v4541
        %v5061 = vunpack.c.l.b16 %v4542
        %v5062 = vunpack.c.l.b16 %v4543
        %v5063 = vunpack.c.l.b16 %v4544
        %v5064 = vunpack.c.l.b16 %v4545
        %v5065 = vunpack.c.l.b16 %v4546
        %v5066 = vunpack.c.l.b16 %v4547
        %v5067 = vunpack.c.l.b16 %v4548
        %v5068 = vunpack.c.l.b16 %v4549
        %v5069 = vunpack.c.l.b16 %v4550
        %v5070 = vunpack.c.l.b16 %v4551
        %v5071 = vunpack.c.l.b16 %v4552
        %v5072 = vunpack.c.l.b16 %v4553
        %v5073 = vunpack.c.l.b16 %v4554
        %v5074 = vunpack.c.l.b16 %v4555
        %v5075 = vunpack.c.l.b16 %v4556
        %v5076 = vunpack.c.l.b16 %v4557
        %v5077 = vunpack.c.l.b16 %v4558
        %v5078 = vunpack.c.l.b16 %v4559
        %v5079 = vunpack.c.l.b16 %v4560
        %v5080 = vunpack.c.l.b16 %v4561
        %v5081 = vunpack.c.l.b16 %v4562
        %v5082 = vunpack.c.l.b16 %v4563
        %v5083 = vunpack.c.l.b16 %v4564
        %v5084 = vunpack.c.l.b16 %v4565
        %v5085 = vunpack.c.l.b16 %v4566
        %v5086 = vunpack.c.l.b16 %v4567
        %v5087 = vunpack.c.l.b16 %v4568
        %v5088 = vunpack.c.l.b16 %v4569
        %v5089 = vunpack.c.l.b16 %v4570
        %v5090 = vunpack.c.l.b16 %v4571
        %v5091 = vunpack.c.l.b16 %v4572
        %v5092 = vunpack.c.l.b16 %v4573
        %v5093 = vunpack.c.l.b16 %v4574
        %v5094 = vunpack.c.l.b16 %v4575
        %v5095 = vunpack.c.l.b16 %v4576
        %v5096 = vunpack.c.l.b16 %v4577
        %v5097 = vunpack.c.l.b16 %v4578
        %v5098 = vunpack.c.l.b16 %v4579
        %v5099 = vunpack.c.l.b16 %v4580
        %v5100 = vunpack.c.l.b16 %v4581
        %v5101 = vunpack.c.l.b16 %v4582
        %v5102 = vunpack.c.l.b16 %v4583
        %v5103 = vunpack.c.l.b16 %v4584
        %v5104 = vunpack.c.l.b16 %v4585
        %v5105 = vunpack.c.l.b16 %v4586
        %v5106 = vunpack.c.l.b16 %v4587
        %v5107 = vunpack.c.l.b16 %v4588
        %v5108 = vunpack.c.l.b16 %v4589
        %v5109 = vunpack.c.l.b16 %v4590
        %v5110 = vunpack.c.l.b16 %v4591
        %v5111 = vunpack.c.l.b16 %v4592
        %v5112 = vunpack.c.l.b16 %v4593
        %v5113 = vunpack.c.l.b16 %v4594
        %v5114 = vunpack.c.l.b16 %v4595
        %v5115 = vunpack.c.l.b16 %v4596
        %v5116 = vunpack.c.l.b16 %v4597
        %v5117 = vunpack.c.l.b16 %v4598
        %v5118 = vunpack.c.l.b16 %v4599
        %v5119 = vunpack.c.l.b16 %v4600
        %v5120 = vunpack.c.l.b16 %v4601
        %v5121 = vunpack.c.l.b16 %v4602
        %v5122 = vunpack.c.l.b16 %v4603
        %v5123 = vunpack.c.l.b16 %v4604
        %v5124 = vunpack.c.l.b16 %v4605
        %v5125 = vunpack.c.l.b16 %v4606
        %v5126 = vunpack.c.l.b16 %v4607
        %v5127 = vunpack.c.l.b16 %v4608
        %v5128 = vunpack.c.l.b16 %v4609
        %v5129 = vunpack.c.l.b16 %v4610
        %v5130 = vunpack.c.l.b16 %v4611
        %v5131 = vunpack.c.l.b16 %v4612
        %v5132 = vunpack.c.l.b16 %v4613
        %v5133 = vunpack.c.l.b16 %v4614
        %v5134 = vunpack.c.l.b16 %v4615
        %v5135 = vunpack.c.l.b16 %v4616
        %v5136 = vunpack.c.l.b16 %v4617
        %v5137 = vunpack.c.l.b16 %v4618
        %v5138 = vunpack.c.l.b16 %v4619
        %v5139 = vunpack.c.l.b16 %v4620
        %v5140 = vunpack.c.l.b16 %v4621
        %v5141 = vunpack.c.l.b16 %v4622
        %v5142 = vunpack.c.l.b16 %v4623
        %v5143 = vunpack.c.l.b16 %v4624
        %v5144 = vunpack.c.l.b16 %v4625
        %v5145 = vunpack.c.l.b16 %v4626
        %v5146 = vunpack.c.l.b16 %v4627
        %v5147 = vunpack.c.l.b16 %v4628
        %v5148 = vunpack.c.l.b16 %v4629
        %v5149 = vunpack.c.l.b16 %v4630
        %v5150 = vunpack.c.l.b16 %v4631
        %v5151 = vunpack.c.l.b16 %v4632
        %v5152 = vunpack.c.l.b16 %v4633
        %v5153 = vunpack.c.l.b16 %v4634
        %v5154 = vunpack.c.l.b16 %v4635
        %v5155 = vunpack.c.l.b16 %v4636
        %v5156 = vunpack.c.l.b16 %v4637
        %v5157 = vunpack.c.l.b16 %v4638
        %v5158 = vunpack.c.l.b16 %v4639
        %v5159 = vunpack.c.l.b16 %v4640
        %v5160 = vunpack.c.l.b16 %v4641
        %v5161 = vunpack.c.l.b16 %v4642
        %v5162 = vunpack.c.l.b16 %v4643
        %v5163 = vunpack.c.l.b16 %v4644
        %v5164 = vunpack.c.l.b16 %v4645
        %v5165 = vunpack.c.l.b16 %v4646
        %v5166 = vunpack.c.l.b16 %v4647
        %v5167 = vunpack.c.l.b16 %v4648
        %v5168 = vunpack.c.l.b16 %v4649
        %v5169 = vunpack.c.l.b16 %v4650
        %v5170 = vunpack.c.l.b16 %v4651
        %v5171 = vunpack.c.l.b16 %v4652
        %v5172 = vunpack.c.l.b16 %v4653
        %v5173 = vunpack.c.l.b16 %v4654
        %v5174 = vunpack.c.l.b16 %v4655
        %v5175 = vunpack.c.l.b16 %v4656
        %v5176 = vunpack.c.l.b16 %v4657
        %v5177 = vunpack.c.l.b16 %v4658
        %v5178 = vunpack.c.l.b16 %v4659
        %v5179 = vunpack.c.l.b16 %v4660
        %v5180 = vunpack.c.l.b16 %v4661
        %v5181 = vunpack.c.l.b16 %v4662
        %v5182 = vunpack.c.l.b16 %v4663
        %v5183 = vunpack.c.l.b16 %v4664
        %v5184 = vunpack.c.l.b16 %v4665
        %v5185 = vunpack.c.l.b16 %v4666
        %v5186 = vunpack.c.l.b16 %v4667
        %v5187 = vunpack.c.l.b16 %v4668
        %v5188 = vunpack.c.l.b16 %v4669
        %v5189 = vunpack.c.l.b16 %v4670
        %v5190 = vunpack.c.l.b16 %v4671
        %v5191 = vunpack.c.l.b16 %v4672
        %v5192 = vunpack.c.l.b16 %v4673
        %v5193 = vunpack.c.l.b16 %v4674
        %v5194 = vunpack.c.l.b16 %v4675
        %v5195 = vunpack.c.l.b16 %v4676
        %v5196 = vunpack.c.l.b16 %v4677
        %v5197 = vunpack.c.l.b16 %v4678
        %v5198 = vunpack.c.l.b16 %v4679
        %v5199 = vunpack.c.l.b16 %v4680
        %v5200 = vunpack.c.l.b16 %v4681
        %v5201 = vunpack.c.l.b16 %v4682
        %v5202 = vunpack.c.l.b16 %v4683
        %v5203 = vunpack.c.l.b16 %v4684
        %v5204 = vunpack.c.l.b16 %v4685
        %v5205 = vunpack.c.l.b16 %v4686
        %v5206 = vunpack.c.l.b16 %v4687
        %v5207 = vunpack.c.l.b16 %v4688
        %v5208 = vunpack.c.l.b16 %v4689
        %v5209 = vunpack.c.l.b16 %v4690
        %v5210 = vunpack.c.l.b16 %v4691
        %v5211 = vunpack.c.l.b16 %v4692
        %v5212 = vunpack.c.l.b16 %v4693
        %v5213 = vunpack.c.l.b16 %v4694
        %v5214 = vunpack.c.l.b16 %v4695
        %v5215 = vunpack.c.l.b16 %v4696
        %v5216 = vunpack.c.l.b16 %v4697
        %v5217 = vunpack.c.l.b16 %v4698
        %v5218 = vunpack.c.l.b16 %v4699
        %v5219 = vunpack.c.l.b16 %v4700
        %v5220 = vunpack.c.l.b16 %v4701
        %v5221 = vunpack.c.l.b16 %v4702
        %v5222 = vunpack.c.l.b16 %v4703
        %v5223 = vunpack.c.l.b16 %v4704
        %v5224 = vunpack.c.l.b16 %v4705
        %v5225 = vunpack.c.l.b16 %v4706
        %v5226 = vunpack.c.l.b16 %v4707
        %v5227 = vunpack.c.l.b16 %v4708
        %v5228 = vunpack.c.l.b16 %v4709
        %v5229 = vunpack.c.l.b16 %v4710
        %v5230 = vpack.c.b16 %v4975, %v4974
        %v5231 = vpack.c.b16 %v4977, %v4976
        %v5232 = vpack.c.b16 %v4979, %v4978
        %v5233 = vpack.c.b16 %v4981, %v4980
        %v5234 = vpack.c.b16 %v4983, %v4982
        %v5235 = vpack.c.b16 %v4985, %v4984
        %v5236 = vpack.c.b16 %v4987, %v4986
        %v5237 = vpack.c.b16 %v4989, %v4988
        %v5238 = vpack.c.b16 %v4991, %v4990
        %v5239 = vpack.c.b16 %v4993, %v4992
        %v5240 = vpack.c.b16 %v4995, %v4994
        %v5241 = vpack.c.b16 %v4997, %v4996
        %v5242 = vpack.c.b16 %v4999, %v4998
        %v5243 = vpack.c.b16 %v5001, %v5000
        %v5244 = vpack.c.b16 %v5003, %v5002
        %v5245 = vpack.c.b16 %v5005, %v5004
        %v5246 = vpack.c.b16 %v5007, %v5006
        %v5247 = vpack.c.b16 %v5009, %v5008
        %v5248 = vpack.c.b16 %v5011, %v5010
        %v5249 = vpack.c.b16 %v5013, %v5012
        %v5250 = vpack.c.b16 %v5015, %v5014
        %v5251 = vpack.c.b16 %v5017, %v5016
        %v5252 = vpack.c.b16 %v5019, %v5018
        %v5253 = vpack.c.b16 %v5021, %v5020
        %v5254 = vpack.c.b16 %v5023, %v5022
        %v5255 = vpack.c.b16 %v5025, %v5024
        %v5256 = vpack.c.b16 %v5027, %v5026
        %v5257 = vpack.c.b16 %v5029, %v5028
        %v5258 = vpack.c.b16 %v5031, %v5030
        %v5259 = vpack.c.b16 %v5033, %v5032
        %v5260 = vpack.c.b16 %v5035, %v5034
        %v5261 = vpack.c.b16 %v5037, %v5036
        %v5262 = vpack.c.b16 %v5039, %v5038
        %v5263 = vpack.c.b16 %v5041, %v5040
        %v5264 = vpack.c.b16 %v5043, %v5042
        %v5265 = vpack.c.b16 %v5045, %v5044
        %v5266 = vpack.c.b16 %v5047, %v5046
        %v5267 = vpack.c.b16 %v5049, %v5048
        %v5268 = vpack.c.b16 %v5051, %v5050
        %v5269 = vpack.c.b16 %v5053, %v5052
        %v5270 = vpack.c.b16 %v5055, %v5054
        %v5271 = vpack.c.b16 %v5057, %v5056
        %v5272 = vpack.c.b16 %v5059, %v5058
        %v5273 = vpack.c.b16 %v5061, %v5060
        %v5274 = vpack.c.b16 %v5063, %v5062
        %v5275 = vpack.c.b16 %v5065, %v5064
        %v5276 = vpack.c.b16 %v5067, %v5066
        %v5277 = vpack.c.b16 %v5069, %v5068
        %v5278 = vpack.c.b16 %v5071, %v5070
        %v5279 = vpack.c.b16 %v5073, %v5072
        %v5280 = vpack.c.b16 %v5075, %v5074
        %v5281 = vpack.c.b16 %v5077, %v5076
        %v5282 = vpack.c.b16 %v5079, %v5078
        %v5283 = vpack.c.b16 %v5081, %v5080
        %v5284 = vpack.c.b16 %v5083, %v5082
        %v5285 = vpack.c.b16 %v5085, %v5084
        %v5286 = vpack.c.b16 %v5087, %v5086
        %v5287 = vpack.c.b16 %v5089, %v5088
        %v5288 = vpack.c.b16 %v5091, %v5090
        %v5289 = vpack.c.b16 %v5093, %v5092
        %v5290 = vpack.c.b16 %v5095, %v5094
        %v5291 = vpack.c.b16 %v5097, %v5096
        %v5292 = vpack.c.b16 %v5099, %v5098
        %v5293 = vpack.c.b16 %v5101, %v5100
        %v5294 = vpack.c.b16 %v5103, %v5102
        %v5295 = vpack.c.b16 %v5105, %v5104
        %v5296 = vpack.c.b16 %v5107, %v5106
        %v5297 = vpack.c.b16 %v5109, %v5108
        %v5298 = vpack.c.b16 %v5111, %v5110
        %v5299 = vpack.c.b16 %v5113, %v5112
        %v5300 = vpack.c.b16 %v5115, %v5114
        %v5301 = vpack.c.b16 %v5117, %v5116
        %v5302 = vpack.c.b16 %v5119, %v5118
        %v5303 = vpack.c.b16 %v5121, %v5120
        %v5304 = vpack.c.b16 %v5123, %v5122
        %v5305 = vpack.c.b16 %v5125, %v5124
        %v5306 = vpack.c.b16 %v5127, %v5126
        %v5307 = vpack.c.b16 %v5129, %v5128
        %v5308 = vpack.c.b16 %v5131, %v5130
        %v5309 = vpack.c.b16 %v5133, %v5132
        %v5310 = vpack.c.b16 %v5135, %v5134
        %v5311 = vpack.c.b16 %v5137, %v5136
        %v5312 = vpack.c.b16 %v5139, %v5138
        %v5313 = vpack.c.b16 %v5141, %v5140
        %v5314 = vpack.c.b16 %v5143, %v5142
        %v5315 = vpack.c.b16 %v5145, %v5144
        %v5316 = vpack.c.b16 %v5147, %v5146
        %v5317 = vpack.c.b16 %v5149, %v5148
        %v5318 = vpack.c.b16 %v5151, %v5150
        %v5319 = vpack.c.b16 %v5153, %v5152
        %v5320 = vpack.c.b16 %v5155, %v5154
        %v5321 = vpack.c.b16 %v5157, %v5156
        %v5322 = vpack.c.b16 %v5159, %v5158
        %v5323 = vpack.c.b16 %v5161, %v5160
        %v5324 = vpack.c.b16 %v5163, %v5162
        %v5325 = vpack.c.b16 %v5165, %v5164
        %v5326 = vpack.c.b16 %v5167, %v5166
        %v5327 = vpack.c.b16 %v5169, %v5168
        %v5328 = vpack.c.b16 %v5171, %v5170
        %v5329 = vpack.c.b16 %v5173, %v5172
        %v5330 = vpack.c.b16 %v5175, %v5174
        %v5331 = vpack.c.b16 %v5177, %v5176
        %v5332 = vpack.c.b16 %v5179, %v5178
        %v5333 = vpack.c.b16 %v5181, %v5180
        %v5334 = vpack.c.b16 %v5183, %v5182
        %v5335 = vpack.c.b16 %v5185, %v5184
        %v5336 = vpack.c.b16 %v5187, %v5186
        %v5337 = vpack.c.b16 %v5189, %v5188
        %v5338 = vpack.c.b16 %v5191, %v5190
        %v5339 = vpack.c.b16 %v5193, %v5192
        %v5340 = vpack.c.b16 %v5195, %v5194
        %v5341 = vpack.c.b16 %v5197, %v5196
        %v5342 = vpack.c.b16 %v5199, %v5198
        %v5343 = vpack.c.b16 %v5201, %v5200
        %v5344 = vpack.c.b16 %v5203, %v5202
        %v5345 = vpack.c.b16 %v5205, %v5204
        %v5346 = vpack.c.b16 %v5207, %v5206
        %v5347 = vpack.c.b16 %v5209, %v5208
        %v5348 = vpack.c.b16 %v5211, %v5210
        %v5349 = vpack.c.b16 %v5213, %v5212
        %v5350 = vpack.c.b16 %v5215, %v5214
        %v5351 = vpack.c.b16 %v5217, %v5216
        %v5352 = vpack.c.b16 %v5219, %v5218
        %v5353 = vpack.c.b16 %v5221, %v5220
        %v5354 = vpack.c.b16 %v5223, %v5222
        %v5355 = vpack.c.b16 %v5225, %v5224
        %v5356 = vpack.c.b16 %v5227, %v5226
        %v5357 = vpack.c.b16 %v5229, %v5228
        %5486 = vmatprep.subr.bf16.mxu0 0
        %5487 = vmatpush1.bf16.msra.mxu0 %v5230
        %5488 = vmatprep.subr.bf16.mxu0 0
        %5489 = vmatpush1.bf16.msra.mxu0 %v5231
        %5490 = vmatprep.subr.bf16.mxu0 0
        %5491 = vmatpush1.bf16.msra.mxu0 %v5232
        %5492 = vmatprep.subr.bf16.mxu0 0
        %5493 = vmatpush1.bf16.msra.mxu0 %v5233
        %5494 = vmatprep.subr.bf16.mxu0 0
        %5495 = vmatpush1.bf16.msra.mxu0 %v5234
        %5496 = vmatprep.subr.bf16.mxu0 0
        %5497 = vmatpush1.bf16.msra.mxu0 %v5235
        %5498 = vmatprep.subr.bf16.mxu0 0
        %5499 = vmatpush1.bf16.msra.mxu0 %v5236
        %5500 = vmatprep.subr.bf16.mxu0 0
        %5501 = vmatpush1.bf16.msra.mxu0 %v5237
        %5502 = vmatprep.subr.bf16.mxu0 0
        %5503 = vmatpush1.bf16.msra.mxu0 %v5238
        %5504 = vmatprep.subr.bf16.mxu0 0
        %5505 = vmatpush1.bf16.msra.mxu0 %v5239
        %5506 = vmatprep.subr.bf16.mxu0 0
        %5507 = vmatpush1.bf16.msra.mxu0 %v5240
        %5508 = vmatprep.subr.bf16.mxu0 0
        %5509 = vmatpush1.bf16.msra.mxu0 %v5241
        %5510 = vmatprep.subr.bf16.mxu0 0
        %5511 = vmatpush1.bf16.msra.mxu0 %v5242
        %5512 = vmatprep.subr.bf16.mxu0 0
        %5513 = vmatpush1.bf16.msra.mxu0 %v5243
        %5514 = vmatprep.subr.bf16.mxu0 0
        %5515 = vmatpush1.bf16.msra.mxu0 %v5244
        %5516 = vmatprep.subr.bf16.mxu0 0
        %5517 = vmatpush1.bf16.msra.mxu0 %v5245
        %5518 = vmatprep.mubr.bf16.mxu0 %v4392
        %5519 = vmatmul.mubr.bf16.gmra.mrb[0].mxu0 %v4391
        %v5520 = vpop.f32.mrb[0].mxu0
        %v5521 = vadd.f32 %v4716, %v5520
        %v5522 = vpop.f32.mrb[0].mxu0
        %v5523 = vpop.f32.mrb[0].mxu0
        %v5524 = vadd.f32 %v4716, %v5523
        %v5525 = vpop.f32.mrb[0].mxu0
        %5526 = vmatprep.mubr.bf16.mxu0 %v4408
        %5527 = vmatmul.mubr.bf16.gmra.mrb[0].mxu0 %v4407
        %v5528 = vpop.f32.mrb[0].mxu0
        %v5529 = vadd.f32 %v4716, %v5528
        %v5530 = vpop.f32.mrb[0].mxu0
        %v5531 = vpop.f32.mrb[0].mxu0
        %v5532 = vadd.f32 %v4716, %v5531
        %v5533 = vpop.f32.mrb[0].mxu0
        %5534 = vmatprep.mubr.bf16.mxu0 %v4424
        %5535 = vmatmul.mubr.bf16.gmra.mrb[0].mxu0 %v4423
        %v5536 = vpop.f32.mrb[0].mxu0
        %v5537 = vadd.f32 %v4716, %v5536
        %v5538 = vpop.f32.mrb[0].mxu0
        %v5539 = vpop.f32.mrb[0].mxu0
        %v5540 = vadd.f32 %v4716, %v5539
        %v5541 = vpop.f32.mrb[0].mxu0
        %5542 = vmatprep.mubr.bf16.mxu0 %v4440
        %5543 = vmatmul.mubr.bf16.gmra.mrb[0].mxu0 %v4439
        %v5544 = vpop.f32.mrb[0].mxu0
        %v5545 = vadd.f32 %v4716, %v5544
        %v5546 = vpop.f32.mrb[0].mxu0
        %v5547 = vpop.f32.mrb[0].mxu0
        %v5548 = vadd.f32 %v4716, %v5547
        %v5549 = vpop.f32.mrb[0].mxu0
        %5550 = vdwg.mxu0
        %5551 = vmatprep.subr.bf16.mxu0 0
        %5552 = vmatpush1.bf16.msra.mxu0 %v5246
        %5553 = vmatprep.subr.bf16.mxu0 0
        %5554 = vmatpush1.bf16.msra.mxu0 %v5247
        %5555 = vmatprep.subr.bf16.mxu0 0
        %5556 = vmatpush1.bf16.msra.mxu0 %v5248
        %5557 = vmatprep.subr.bf16.mxu0 0
        %5558 = vmatpush1.bf16.msra.mxu0 %v5249
        %5559 = vmatprep.subr.bf16.mxu0 0
        %5560 = vmatpush1.bf16.msra.mxu0 %v5250
        %5561 = vmatprep.subr.bf16.mxu0 0
        %5562 = vmatpush1.bf16.msra.mxu0 %v5251
        %5563 = vmatprep.subr.bf16.mxu0 0
        %5564 = vmatpush1.bf16.msra.mxu0 %v5252
        %5565 = vmatprep.subr.bf16.mxu0 0
        %5566 = vmatpush1.bf16.msra.mxu0 %v5253
        %5567 = vmatprep.subr.bf16.mxu0 0
        %5568 = vmatpush1.bf16.msra.mxu0 %v5254
        %5569 = vmatprep.subr.bf16.mxu0 0
        %5570 = vmatpush1.bf16.msra.mxu0 %v5255
        %5571 = vmatprep.subr.bf16.mxu0 0
        %5572 = vmatpush1.bf16.msra.mxu0 %v5256
        %5573 = vmatprep.subr.bf16.mxu0 0
        %5574 = vmatpush1.bf16.msra.mxu0 %v5257
        %5575 = vmatprep.subr.bf16.mxu0 0
        %5576 = vmatpush1.bf16.msra.mxu0 %v5258
        %5577 = vmatprep.subr.bf16.mxu0 0
        %5578 = vmatpush1.bf16.msra.mxu0 %v5259
        %5579 = vmatprep.subr.bf16.mxu0 0
        %5580 = vmatpush1.bf16.msra.mxu0 %v5260
        %5581 = vmatprep.subr.bf16.mxu0 0
        %5582 = vmatpush1.bf16.msra.mxu0 %v5261
        %5583 = vmatprep.mubr.bf16.mxu0 %v4394
        %5584 = vmatmul.mubr.bf16.gmra.mrb[0].mxu0 %v4393
        %v5585 = vpop.f32.mrb[0].mxu0
        %v5586 = vadd.f32 %v5521, %v5585
        %v5587 = vpop.f32.mrb[0].mxu0
        %v5588 = vpop.f32.mrb[0].mxu0
        %v5589 = vadd.f32 %v5524, %v5588
        %v5590 = vpop.f32.mrb[0].mxu0
        %5591 = vmatprep.mubr.bf16.mxu0 %v4410
        %5592 = vmatmul.mubr.bf16.gmra.mrb[0].mxu0 %v4409
        %v5593 = vpop.f32.mrb[0].mxu0
        %v5594 = vadd.f32 %v5529, %v5593
        %v5595 = vpop.f32.mrb[0].mxu0
        %v5596 = vpop.f32.mrb[0].mxu0
        %v5597 = vadd.f32 %v5532, %v5596
        %v5598 = vpop.f32.mrb[0].mxu0
        %5599 = vmatprep.mubr.bf16.mxu0 %v4426
        %5600 = vmatmul.mubr.bf16.gmra.mrb[0].mxu0 %v4425
        %v5601 = vpop.f32.mrb[0].mxu0
        %v5602 = vadd.f32 %v5537, %v5601
        %v5603 = vpop.f32.mrb[0].mxu0
        %v5604 = vpop.f32.mrb[0].mxu0
        %v5605 = vadd.f32 %v5540, %v5604
        %v5606 = vpop.f32.mrb[0].mxu0
        %5607 = vmatprep.mubr.bf16.mxu0 %v4442
        %5608 = vmatmul.mubr.bf16.gmra.mrb[0].mxu0 %v4441
        %v5609 = vpop.f32.mrb[0].mxu0
        %v5610 = vadd.f32 %v5545, %v5609
        %v5611 = vpop.f32.mrb[0].mxu0
        %v5612 = vpop.f32.mrb[0].mxu0
        %v5613 = vadd.f32 %v5548, %v5612
        %v5614 = vpop.f32.mrb[0].mxu0
        %5615 = vdwg.mxu0
        %5616 = vmatprep.subr.bf16.mxu0 0
        %5617 = vmatpush1.bf16.msra.mxu0 %v5262
        %5618 = vmatprep.subr.bf16.mxu0 0
        %5619 = vmatpush1.bf16.msra.mxu0 %v5263
        %5620 = vmatprep.subr.bf16.mxu0 0
        %5621 = vmatpush1.bf16.msra.mxu0 %v5264
        %5622 = vmatprep.subr.bf16.mxu0 0
        %5623 = vmatpush1.bf16.msra.mxu0 %v5265
        %5624 = vmatprep.subr.bf16.mxu0 0
        %5625 = vmatpush1.bf16.msra.mxu0 %v5266
        %5626 = vmatprep.subr.bf16.mxu0 0
        %5627 = vmatpush1.bf16.msra.mxu0 %v5267
        %5628 = vmatprep.subr.bf16.mxu0 0
        %5629 = vmatpush1.bf16.msra.mxu0 %v5268
        %5630 = vmatprep.subr.bf16.mxu0 0
        %5631 = vmatpush1.bf16.msra.mxu0 %v5269
        %5632 = vmatprep.subr.bf16.mxu0 0
        %5633 = vmatpush1.bf16.msra.mxu0 %v5270
        %5634 = vmatprep.subr.bf16.mxu0 0
        %5635 = vmatpush1.bf16.msra.mxu0 %v5271
        %5636 = vmatprep.subr.bf16.mxu0 0
        %5637 = vmatpush1.bf16.msra.mxu0 %v5272
        %5638 = vmatprep.subr.bf16.mxu0 0
        %5639 = vmatpush1.bf16.msra.mxu0 %v5273
        %5640 = vmatprep.subr.bf16.mxu0 0
        %5641 = vmatpush1.bf16.msra.mxu0 %v5274
        %5642 = vmatprep.subr.bf16.mxu0 0
        %5643 = vmatpush1.bf16.msra.mxu0 %v5275
        %5644 = vmatprep.subr.bf16.mxu0 0
        %5645 = vmatpush1.bf16.msra.mxu0 %v5276
        %5646 = vmatprep.subr.bf16.mxu0 0
        %5647 = vmatpush1.bf16.msra.mxu0 %v5277
        %5648 = vmatprep.mubr.bf16.mxu0 %v4396
        %5649 = vmatmul.mubr.bf16.gmra.mrb[0].mxu0 %v4395
        %v5650 = vpop.f32.mrb[0].mxu0
        %v5651 = vadd.f32 %v5586, %v5650
        %v5652 = vpop.f32.mrb[0].mxu0
        %v5653 = vpop.f32.mrb[0].mxu0
        %v5654 = vadd.f32 %v5589, %v5653
        %v5655 = vpop.f32.mrb[0].mxu0
        %5656 = vmatprep.mubr.bf16.mxu0 %v4412
        %5657 = vmatmul.mubr.bf16.gmra.mrb[0].mxu0 %v4411
        %v5658 = vpop.f32.mrb[0].mxu0
        %v5659 = vadd.f32 %v5594, %v5658
        %v5660 = vpop.f32.mrb[0].mxu0
        %v5661 = vpop.f32.mrb[0].mxu0
        %v5662 = vadd.f32 %v5597, %v5661
        %v5663 = vpop.f32.mrb[0].mxu0
        %5664 = vmatprep.mubr.bf16.mxu0 %v4428
        %5665 = vmatmul.mubr.bf16.gmra.mrb[0].mxu0 %v4427
        %v5666 = vpop.f32.mrb[0].mxu0
        %v5667 = vadd.f32 %v5602, %v5666
        %v5668 = vpop.f32.mrb[0].mxu0
        %v5669 = vpop.f32.mrb[0].mxu0
        %v5670 = vadd.f32 %v5605, %v5669
        %v5671 = vpop.f32.mrb[0].mxu0
        %5672 = vmatprep.mubr.bf16.mxu0 %v4444
        %5673 = vmatmul.mubr.bf16.gmra.mrb[0].mxu0 %v4443
        %v5674 = vpop.f32.mrb[0].mxu0
        %v5675 = vadd.f32 %v5610, %v5674
        %v5676 = vpop.f32.mrb[0].mxu0
        %v5677 = vpop.f32.mrb[0].mxu0
        %v5678 = vadd.f32 %v5613, %v5677
        %v5679 = vpop.f32.mrb[0].mxu0
        %5680 = vdwg.mxu0
        %5681 = vmatprep.subr.bf16.mxu0 0
        %5682 = vmatpush1.bf16.msra.mxu0 %v5278
        %5683 = vmatprep.subr.bf16.mxu0 0
        %5684 = vmatpush1.bf16.msra.mxu0 %v5279
        %5685 = vmatprep.subr.bf16.mxu0 0
        %5686 = vmatpush1.bf16.msra.mxu0 %v5280
        %5687 = vmatprep.subr.bf16.mxu0 0
        %5688 = vmatpush1.bf16.msra.mxu0 %v5281
        %5689 = vmatprep.subr.bf16.mxu0 0
        %5690 = vmatpush1.bf16.msra.mxu0 %v5282
        %5691 = vmatprep.subr.bf16.mxu0 0
        %5692 = vmatpush1.bf16.msra.mxu0 %v5283
        %5693 = vmatprep.subr.bf16.mxu0 0
        %5694 = vmatpush1.bf16.msra.mxu0 %v5284
        %5695 = vmatprep.subr.bf16.mxu0 0
        %5696 = vmatpush1.bf16.msra.mxu0 %v5285
        %5697 = vmatprep.subr.bf16.mxu0 0
        %5698 = vmatpush1.bf16.msra.mxu0 %v5286
        %5699 = vmatprep.subr.bf16.mxu0 0
        %5700 = vmatpush1.bf16.msra.mxu0 %v5287
        %5701 = vmatprep.subr.bf16.mxu0 0
        %5702 = vmatpush1.bf16.msra.mxu0 %v5288
        %5703 = vmatprep.subr.bf16.mxu0 0
        %5704 = vmatpush1.bf16.msra.mxu0 %v5289
        %5705 = vmatprep.subr.bf16.mxu0 0
        %5706 = vmatpush1.bf16.msra.mxu0 %v5290
        %5707 = vmatprep.subr.bf16.mxu0 0
        %5708 = vmatpush1.bf16.msra.mxu0 %v5291
        %5709 = vmatprep.subr.bf16.mxu0 0
        %5710 = vmatpush1.bf16.msra.mxu0 %v5292
        %5711 = vmatprep.subr.bf16.mxu0 0
        %5712 = vmatpush1.bf16.msra.mxu0 %v5293
        %5713 = vmatprep.mubr.bf16.mxu0 %v4398
        %5714 = vmatmul.mubr.bf16.gmra.mrb[0].mxu0 %v4397
        %v5715 = vpop.f32.mrb[0].mxu0
        %v5716 = vadd.f32 %v5651, %v5715
        %v5717 = vpop.f32.mrb[0].mxu0
        %v5718 = vpop.f32.mrb[0].mxu0
        %v5719 = vadd.f32 %v5654, %v5718
        %v5720 = vpop.f32.mrb[0].mxu0
        %5721 = vmatprep.mubr.bf16.mxu0 %v4414
        %5722 = vmatmul.mubr.bf16.gmra.mrb[0].mxu0 %v4413
        %v5723 = vpop.f32.mrb[0].mxu0
        %v5724 = vadd.f32 %v5659, %v5723
        %v5725 = vpop.f32.mrb[0].mxu0
        %v5726 = vpop.f32.mrb[0].mxu0
        %v5727 = vadd.f32 %v5662, %v5726
        %v5728 = vpop.f32.mrb[0].mxu0
        %5729 = vmatprep.mubr.bf16.mxu0 %v4430
        %5730 = vmatmul.mubr.bf16.gmra.mrb[0].mxu0 %v4429
        %v5731 = vpop.f32.mrb[0].mxu0
        %v5732 = vadd.f32 %v5667, %v5731
        %v5733 = vpop.f32.mrb[0].mxu0
        %v5734 = vpop.f32.mrb[0].mxu0
        %v5735 = vadd.f32 %v5670, %v5734
        %v5736 = vpop.f32.mrb[0].mxu0
        %5737 = vmatprep.mubr.bf16.mxu0 %v4446
        %5738 = vmatmul.mubr.bf16.gmra.mrb[0].mxu0 %v4445
        %v5739 = vpop.f32.mrb[0].mxu0
        %v5740 = vadd.f32 %v5675, %v5739
        %v5741 = vpop.f32.mrb[0].mxu0
        %v5742 = vpop.f32.mrb[0].mxu0
        %v5743 = vadd.f32 %v5678, %v5742
        %v5744 = vpop.f32.mrb[0].mxu0
        %5745 = vdwg.mxu0
        %5746 = vmatprep.subr.bf16.mxu0 0
        %5747 = vmatpush1.bf16.msra.mxu0 %v5294
        %5748 = vmatprep.subr.bf16.mxu0 0
        %5749 = vmatpush1.bf16.msra.mxu0 %v5295
        %5750 = vmatprep.subr.bf16.mxu0 0
        %5751 = vmatpush1.bf16.msra.mxu0 %v5296
        %5752 = vmatprep.subr.bf16.mxu0 0
        %5753 = vmatpush1.bf16.msra.mxu0 %v5297
        %5754 = vmatprep.subr.bf16.mxu0 0
        %5755 = vmatpush1.bf16.msra.mxu0 %v5298
        %5756 = vmatprep.subr.bf16.mxu0 0
        %5757 = vmatpush1.bf16.msra.mxu0 %v5299
        %5758 = vmatprep.subr.bf16.mxu0 0
        %5759 = vmatpush1.bf16.msra.mxu0 %v5300
        %5760 = vmatprep.subr.bf16.mxu0 0
        %5761 = vmatpush1.bf16.msra.mxu0 %v5301
        %5762 = vmatprep.subr.bf16.mxu0 0
        %5763 = vmatpush1.bf16.msra.mxu0 %v5302
        %5764 = vmatprep.subr.bf16.mxu0 0
        %5765 = vmatpush1.bf16.msra.mxu0 %v5303
        %5766 = vmatprep.subr.bf16.mxu0 0
        %5767 = vmatpush1.bf16.msra.mxu0 %v5304
        %5768 = vmatprep.subr.bf16.mxu0 0
        %5769 = vmatpush1.bf16.msra.mxu0 %v5305
        %5770 = vmatprep.subr.bf16.mxu0 0
        %5771 = vmatpush1.bf16.msra.mxu0 %v5306
        %5772 = vmatprep.subr.bf16.mxu0 0
        %5773 = vmatpush1.bf16.msra.mxu0 %v5307
        %5774 = vmatprep.subr.bf16.mxu0 0
        %5775 = vmatpush1.bf16.msra.mxu0 %v5308
        %5776 = vmatprep.subr.bf16.mxu0 0
        %5777 = vmatpush1.bf16.msra.mxu0 %v5309
        %5778 = vmatprep.mubr.bf16.mxu0 %v4400
        %5779 = vmatmul.mubr.bf16.gmra.mrb[0].mxu0 %v4399
        %v5780 = vpop.f32.mrb[0].mxu0
        %v5781 = vadd.f32 %v5716, %v5780
        %v5782 = vpop.f32.mrb[0].mxu0
        %v5783 = vpop.f32.mrb[0].mxu0
        %v5784 = vadd.f32 %v5719, %v5783
        %v5785 = vpop.f32.mrb[0].mxu0
        %5786 = vmatprep.mubr.bf16.mxu0 %v4416
        %5787 = vmatmul.mubr.bf16.gmra.mrb[0].mxu0 %v4415
        %v5788 = vpop.f32.mrb[0].mxu0
        %v5789 = vadd.f32 %v5724, %v5788
        %v5790 = vpop.f32.mrb[0].mxu0
        %v5791 = vpop.f32.mrb[0].mxu0
        %v5792 = vadd.f32 %v5727, %v5791
        %v5793 = vpop.f32.mrb[0].mxu0
        %5794 = vmatprep.mubr.bf16.mxu0 %v4432
        %5795 = vmatmul.mubr.bf16.gmra.mrb[0].mxu0 %v4431
        %v5796 = vpop.f32.mrb[0].mxu0
        %v5797 = vadd.f32 %v5732, %v5796
        %v5798 = vpop.f32.mrb[0].mxu0
        %v5799 = vpop.f32.mrb[0].mxu0
        %v5800 = vadd.f32 %v5735, %v5799
        %v5801 = vpop.f32.mrb[0].mxu0
        %5802 = vmatprep.mubr.bf16.mxu0 %v4448
        %5803 = vmatmul.mubr.bf16.gmra.mrb[0].mxu0 %v4447
        %v5804 = vpop.f32.mrb[0].mxu0
        %v5805 = vadd.f32 %v5740, %v5804
        %v5806 = vpop.f32.mrb[0].mxu0
        %v5807 = vpop.f32.mrb[0].mxu0
        %v5808 = vadd.f32 %v5743, %v5807
        %v5809 = vpop.f32.mrb[0].mxu0
        %5810 = vdwg.mxu0
        %5811 = vmatprep.subr.bf16.mxu0 0
        %5812 = vmatpush1.bf16.msra.mxu0 %v5310
        %5813 = vmatprep.subr.bf16.mxu0 0
        %5814 = vmatpush1.bf16.msra.mxu0 %v5311
        %5815 = vmatprep.subr.bf16.mxu0 0
        %5816 = vmatpush1.bf16.msra.mxu0 %v5312
        %5817 = vmatprep.subr.bf16.mxu0 0
        %5818 = vmatpush1.bf16.msra.mxu0 %v5313
        %5819 = vmatprep.subr.bf16.mxu0 0
        %5820 = vmatpush1.bf16.msra.mxu0 %v5314
        %5821 = vmatprep.subr.bf16.mxu0 0
        %5822 = vmatpush1.bf16.msra.mxu0 %v5315
        %5823 = vmatprep.subr.bf16.mxu0 0
        %5824 = vmatpush1.bf16.msra.mxu0 %v5316
        %5825 = vmatprep.subr.bf16.mxu0 0
        %5826 = vmatpush1.bf16.msra.mxu0 %v5317
        %5827 = vmatprep.subr.bf16.mxu0 0
        %5828 = vmatpush1.bf16.msra.mxu0 %v5318
        %5829 = vmatprep.subr.bf16.mxu0 0
        %5830 = vmatpush1.bf16.msra.mxu0 %v5319
        %5831 = vmatprep.subr.bf16.mxu0 0
        %5832 = vmatpush1.bf16.msra.mxu0 %v5320
        %5833 = vmatprep.subr.bf16.mxu0 0
        %5834 = vmatpush1.bf16.msra.mxu0 %v5321
        %5835 = vmatprep.subr.bf16.mxu0 0
        %5836 = vmatpush1.bf16.msra.mxu0 %v5322
        %5837 = vmatprep.subr.bf16.mxu0 0
        %5838 = vmatpush1.bf16.msra.mxu0 %v5323
        %5839 = vmatprep.subr.bf16.mxu0 0
        %5840 = vmatpush1.bf16.msra.mxu0 %v5324
        %5841 = vmatprep.subr.bf16.mxu0 0
        %5842 = vmatpush1.bf16.msra.mxu0 %v5325
        %5843 = vmatprep.mubr.bf16.mxu0 %v4402
        %5844 = vmatmul.mubr.bf16.gmra.mrb[0].mxu0 %v4401
        %v5845 = vpop.f32.mrb[0].mxu0
        %v5846 = vadd.f32 %v5781, %v5845
        %v5847 = vpop.f32.mrb[0].mxu0
        %v5848 = vpop.f32.mrb[0].mxu0
        %v5849 = vadd.f32 %v5784, %v5848
        %v5850 = vpop.f32.mrb[0].mxu0
        %5851 = vmatprep.mubr.bf16.mxu0 %v4418
        %5852 = vmatmul.mubr.bf16.gmra.mrb[0].mxu0 %v4417
        %v5853 = vpop.f32.mrb[0].mxu0
        %v5854 = vadd.f32 %v5789, %v5853
        %v5855 = vpop.f32.mrb[0].mxu0
        %v5856 = vpop.f32.mrb[0].mxu0
        %v5857 = vadd.f32 %v5792, %v5856
        %v5858 = vpop.f32.mrb[0].mxu0
        %5859 = vmatprep.mubr.bf16.mxu0 %v4434
        %5860 = vmatmul.mubr.bf16.gmra.mrb[0].mxu0 %v4433
        %v5861 = vpop.f32.mrb[0].mxu0
        %v5862 = vadd.f32 %v5797, %v5861
        %v5863 = vpop.f32.mrb[0].mxu0
        %v5864 = vpop.f32.mrb[0].mxu0
        %v5865 = vadd.f32 %v5800, %v5864
        %v5866 = vpop.f32.mrb[0].mxu0
        %5867 = vmatprep.mubr.bf16.mxu0 %v4450
        %5868 = vmatmul.mubr.bf16.gmra.mrb[0].mxu0 %v4449
        %v5869 = vpop.f32.mrb[0].mxu0
        %v5870 = vadd.f32 %v5805, %v5869
        %v5871 = vpop.f32.mrb[0].mxu0
        %v5872 = vpop.f32.mrb[0].mxu0
        %v5873 = vadd.f32 %v5808, %v5872
        %v5874 = vpop.f32.mrb[0].mxu0
        %5875 = vdwg.mxu0
        %5876 = vmatprep.subr.bf16.mxu0 0
        %5877 = vmatpush1.bf16.msra.mxu0 %v5326
        %5878 = vmatprep.subr.bf16.mxu0 0
        %5879 = vmatpush1.bf16.msra.mxu0 %v5327
        %5880 = vmatprep.subr.bf16.mxu0 0
        %5881 = vmatpush1.bf16.msra.mxu0 %v5328
        %5882 = vmatprep.subr.bf16.mxu0 0
        %5883 = vmatpush1.bf16.msra.mxu0 %v5329
        %5884 = vmatprep.subr.bf16.mxu0 0
        %5885 = vmatpush1.bf16.msra.mxu0 %v5330
        %5886 = vmatprep.subr.bf16.mxu0 0
        %5887 = vmatpush1.bf16.msra.mxu0 %v5331
        %5888 = vmatprep.subr.bf16.mxu0 0
        %5889 = vmatpush1.bf16.msra.mxu0 %v5332
        %5890 = vmatprep.subr.bf16.mxu0 0
        %5891 = vmatpush1.bf16.msra.mxu0 %v5333
        %5892 = vmatprep.subr.bf16.mxu0 0
        %5893 = vmatpush1.bf16.msra.mxu0 %v5334
        %5894 = vmatprep.subr.bf16.mxu0 0
        %5895 = vmatpush1.bf16.msra.mxu0 %v5335
        %5896 = vmatprep.subr.bf16.mxu0 0
        %5897 = vmatpush1.bf16.msra.mxu0 %v5336
        %5898 = vmatprep.subr.bf16.mxu0 0
        %5899 = vmatpush1.bf16.msra.mxu0 %v5337
        %5900 = vmatprep.subr.bf16.mxu0 0
        %5901 = vmatpush1.bf16.msra.mxu0 %v5338
        %5902 = vmatprep.subr.bf16.mxu0 0
        %5903 = vmatpush1.bf16.msra.mxu0 %v5339
        %5904 = vmatprep.subr.bf16.mxu0 0
        %5905 = vmatpush1.bf16.msra.mxu0 %v5340
        %5906 = vmatprep.subr.bf16.mxu0 0
        %5907 = vmatpush1.bf16.msra.mxu0 %v5341
        %5908 = vmatprep.mubr.bf16.mxu0 %v4404
        %5909 = vmatmul.mubr.bf16.gmra.mrb[0].mxu0 %v4403
        %v5910 = vpop.f32.mrb[0].mxu0
        %v5911 = vadd.f32 %v5846, %v5910
        %v5912 = vpop.f32.mrb[0].mxu0
        %v5913 = vpop.f32.mrb[0].mxu0
        %v5914 = vadd.f32 %v5849, %v5913
        %v5915 = vpop.f32.mrb[0].mxu0
        %5916 = vmatprep.mubr.bf16.mxu0 %v4420
        %5917 = vmatmul.mubr.bf16.gmra.mrb[0].mxu0 %v4419
        %v5918 = vpop.f32.mrb[0].mxu0
        %v5919 = vadd.f32 %v5854, %v5918
        %v5920 = vpop.f32.mrb[0].mxu0
        %v5921 = vpop.f32.mrb[0].mxu0
        %v5922 = vadd.f32 %v5857, %v5921
        %v5923 = vpop.f32.mrb[0].mxu0
        %5924 = vmatprep.mubr.bf16.mxu0 %v4436
        %5925 = vmatmul.mubr.bf16.gmra.mrb[0].mxu0 %v4435
        %v5926 = vpop.f32.mrb[0].mxu0
        %v5927 = vadd.f32 %v5862, %v5926
        %v5928 = vpop.f32.mrb[0].mxu0
        %v5929 = vpop.f32.mrb[0].mxu0
        %v5930 = vadd.f32 %v5865, %v5929
        %v5931 = vpop.f32.mrb[0].mxu0
        %5932 = vmatprep.mubr.bf16.mxu0 %v4452
        %5933 = vmatmul.mubr.bf16.gmra.mrb[0].mxu0 %v4451
        %v5934 = vpop.f32.mrb[0].mxu0
        %v5935 = vadd.f32 %v5870, %v5934
        %v5936 = vpop.f32.mrb[0].mxu0
        %v5937 = vpop.f32.mrb[0].mxu0
        %v5938 = vadd.f32 %v5873, %v5937
        %v5939 = vpop.f32.mrb[0].mxu0
        %5940 = vdwg.mxu0
        %5941 = vmatprep.subr.bf16.mxu0 0
        %5942 = vmatpush1.bf16.msra.mxu0 %v5342
        %5943 = vmatprep.subr.bf16.mxu0 0
        %5944 = vmatpush1.bf16.msra.mxu0 %v5343
        %5945 = vmatprep.subr.bf16.mxu0 0
        %5946 = vmatpush1.bf16.msra.mxu0 %v5344
        %5947 = vmatprep.subr.bf16.mxu0 0
        %5948 = vmatpush1.bf16.msra.mxu0 %v5345
        %5949 = vmatprep.subr.bf16.mxu0 0
        %5950 = vmatpush1.bf16.msra.mxu0 %v5346
        %5951 = vmatprep.subr.bf16.mxu0 0
        %5952 = vmatpush1.bf16.msra.mxu0 %v5347
        %5953 = vmatprep.subr.bf16.mxu0 0
        %5954 = vmatpush1.bf16.msra.mxu0 %v5348
        %5955 = vmatprep.subr.bf16.mxu0 0
        %5956 = vmatpush1.bf16.msra.mxu0 %v5349
        %5957 = vmatprep.subr.bf16.mxu0 0
        %5958 = vmatpush1.bf16.msra.mxu0 %v5350
        %5959 = vmatprep.subr.bf16.mxu0 0
        %5960 = vmatpush1.bf16.msra.mxu0 %v5351
        %5961 = vmatprep.subr.bf16.mxu0 0
        %5962 = vmatpush1.bf16.msra.mxu0 %v5352
        %5963 = vmatprep.subr.bf16.mxu0 0
        %5964 = vmatpush1.bf16.msra.mxu0 %v5353
        %5965 = vmatprep.subr.bf16.mxu0 0
        %5966 = vmatpush1.bf16.msra.mxu0 %v5354
        %5967 = vmatprep.subr.bf16.mxu0 0
        %5968 = vmatpush1.bf16.msra.mxu0 %v5355
        %5969 = vmatprep.subr.bf16.mxu0 0
        %5970 = vmatpush1.bf16.msra.mxu0 %v5356
        %5971 = vmatprep.subr.bf16.mxu0 0
        %5972 = vmatpush1.bf16.msra.mxu0 %v5357
        %5973 = vmatprep.mubr.bf16.mxu0 %v4406
        %5974 = vmatmul.mubr.bf16.gmra.mrb[0].mxu0 %v4405
        %v5975 = vpop.f32.mrb[0].mxu0
        %v5976 = vadd.f32 %v5911, %v5975
        %v5977 = vpop.f32.mrb[0].mxu0
        %v5978 = vpop.f32.mrb[0].mxu0
        %v5979 = vadd.f32 %v5914, %v5978
        %v5980 = vpop.f32.mrb[0].mxu0
        %5981 = vmatprep.mubr.bf16.mxu0 %v4422
        %5982 = vmatmul.mubr.bf16.gmra.mrb[0].mxu0 %v4421
        %v5983 = vpop.f32.mrb[0].mxu0
        %v5984 = vadd.f32 %v5919, %v5983
        %v5985 = vpop.f32.mrb[0].mxu0
        %v5986 = vpop.f32.mrb[0].mxu0
        %v5987 = vadd.f32 %v5922, %v5986
        %v5988 = vpop.f32.mrb[0].mxu0
        %5989 = vmatprep.mubr.bf16.mxu0 %v4438
        %5990 = vmatmul.mubr.bf16.gmra.mrb[0].mxu0 %v4437
        %v5991 = vpop.f32.mrb[0].mxu0
        %v5992 = vadd.f32 %v5927, %v5991
        %v5993 = vpop.f32.mrb[0].mxu0
        %v5994 = vpop.f32.mrb[0].mxu0
        %v5995 = vadd.f32 %v5930, %v5994
        %v5996 = vpop.f32.mrb[0].mxu0
        %5997 = vmatprep.mubr.bf16.mxu0 %v4454
        %5998 = vmatmul.mubr.bf16.gmra.mrb[0].mxu0 %v4453
        %v5999 = vpop.f32.mrb[0].mxu0
        %v6000 = vadd.f32 %v5935, %v5999
        %v6001 = vpop.f32.mrb[0].mxu0
        %v6002 = vpop.f32.mrb[0].mxu0
        %v6003 = vadd.f32 %v5938, %v6002
        %v6004 = vpop.f32.mrb[0].mxu0
        %6005 = vdwg.mxu0
        %v6006 = vadd.f32 %v2815, %v5976
        %v6007 = vadd.f32 %v2816, %v5979
        %v6008 = vadd.f32 %v2817, %v5984
        %v6009 = vadd.f32 %v2818, %v5987
        %v6010 = vadd.f32 %v2819, %v5992
        %v6011 = vadd.f32 %v2820, %v5995
        %v6012 = vadd.f32 %v2821, %v6000
        %v6013 = vadd.f32 %v2822, %v6003
        %v6014 = vld [vmem:[%s783] sm:$0x1]
        %v6015 = vld [vmem:[%s786] sm:$0x1]
        %6016 = vadd.xlane.f32.xlu0 %v6006
        %v6017 = vpop.xlane.xlu0 %6016
        %6018 = vadd.xlane.f32.xlu0 %v6007
        %v6019 = vpop.xlane.xlu0 %6018
        %6020 = vadd.xlane.f32.xlu0 %v6008
        %v6021 = vpop.xlane.xlu0 %6020
        %6022 = vadd.xlane.f32.xlu0 %v6009
        %v6023 = vpop.xlane.xlu0 %6022
        %6024 = vadd.xlane.f32.xlu0 %v6010
        %v6025 = vpop.xlane.xlu0 %6024
        %6026 = vadd.xlane.f32.xlu0 %v6011
        %v6027 = vpop.xlane.xlu0 %6026
        %6028 = vadd.xlane.f32.xlu0 %v6012
        %v6029 = vpop.xlane.xlu0 %6028
        %6030 = vadd.xlane.f32.xlu0 %v6013
        %v6031 = vpop.xlane.xlu0 %6030
        %v6032 = vmul.f32 %v6017, %v2722
        %v6033 = vmul.f32 %v6019, %v2722
        %v6034 = vmul.f32 %v6021, %v2722
        %v6035 = vmul.f32 %v6023, %v2722
        %v6036 = vmul.f32 %v6025, %v2722
        %v6037 = vmul.f32 %v6027, %v2722
        %v6038 = vmul.f32 %v6029, %v2722
        %v6039 = vmul.f32 %v6031, %v2722
        %v6040 = vsub.f32 %v6006, %v6032
        %v6041 = vsub.f32 %v6007, %v6033
        %v6042 = vsub.f32 %v6008, %v6034
        %v6043 = vsub.f32 %v6009, %v6035
        %v6044 = vsub.f32 %v6010, %v6036
        %v6045 = vsub.f32 %v6011, %v6037
        %v6046 = vsub.f32 %v6012, %v6038
        %v6047 = vsub.f32 %v6013, %v6039
        %v6048 = vmul.f32 %v6040, %v6040
        %v6049 = vmul.f32 %v6041, %v6041
        %v6050 = vmul.f32 %v6042, %v6042
        %v6051 = vmul.f32 %v6043, %v6043
        %v6052 = vmul.f32 %v6044, %v6044
        %v6053 = vmul.f32 %v6045, %v6045
        %v6054 = vmul.f32 %v6046, %v6046
        %v6055 = vmul.f32 %v6047, %v6047
        %6056 = vadd.xlane.f32.xlu0 %v6048
        %v6057 = vpop.xlane.xlu0 %6056
        %6058 = vadd.xlane.f32.xlu0 %v6049
        %v6059 = vpop.xlane.xlu0 %6058
        %6060 = vadd.xlane.f32.xlu0 %v6050
        %v6061 = vpop.xlane.xlu0 %6060
        %6062 = vadd.xlane.f32.xlu0 %v6051
        %v6063 = vpop.xlane.xlu0 %6062
        %6064 = vadd.xlane.f32.xlu0 %v6052
        %v6065 = vpop.xlane.xlu0 %6064
        %6066 = vadd.xlane.f32.xlu0 %v6053
        %v6067 = vpop.xlane.xlu0 %6066
        %6068 = vadd.xlane.f32.xlu0 %v6054
        %v6069 = vpop.xlane.xlu0 %6068
        %6070 = vadd.xlane.f32.xlu0 %v6055
        %v6071 = vpop.xlane.xlu0 %6070
        %v6072 = vmul.f32 %v6057, %v2722
        %v6073 = vmul.f32 %v6059, %v2722
        %v6074 = vmul.f32 %v6061, %v2722
        %v6075 = vmul.f32 %v6063, %v2722
        %v6076 = vmul.f32 %v6065, %v2722
        %v6077 = vmul.f32 %v6067, %v2722
        %v6078 = vmul.f32 %v6069, %v2722
        %v6079 = vmul.f32 %v6071, %v2722
        %v6080 = vadd.f32 %v6072, 1e-05
        %v6081 = vadd.f32 %v6073, 1e-05
        %v6082 = vadd.f32 %v6074, 1e-05
        %v6083 = vadd.f32 %v6075, 1e-05
        %v6084 = vadd.f32 %v6076, 1e-05
        %v6085 = vadd.f32 %v6077, 1e-05
        %v6086 = vadd.f32 %v6078, 1e-05
        %v6087 = vadd.f32 %v6079, 1e-05
        %v6088 = vrsqrt.pop %v6080
        %v6089 = vrsqrt.pop %v6081
        %v6090 = vrsqrt.pop %v6082
        %v6091 = vrsqrt.pop %v6083
        %v6092 = vrsqrt.pop %v6084
        %v6093 = vrsqrt.pop %v6085
        %v6094 = vrsqrt.pop %v6086
        %v6095 = vrsqrt.pop %v6087
        %v6096 = vmul.f32 %v6040, %v6088
        %v6097 = vmul.f32 %v6041, %v6089
        %v6098 = vmul.f32 %v6042, %v6090
        %v6099 = vmul.f32 %v6043, %v6091
        %v6100 = vmul.f32 %v6044, %v6092
        %v6101 = vmul.f32 %v6045, %v6093
        %v6102 = vmul.f32 %v6046, %v6094
        %v6103 = vmul.f32 %v6047, %v6095
        %v6105 = vlaneseq
        %v6106 = vshrl.u32 %v6105, 7
        %v6107 = vsub.s32 0, %v6106
        %v6108 = vrot.slane %v6014, %v6107
        %v6110 = vmul.f32 %v6096, %v6108
        %v6111 = vmul.f32 %v6097, %v6108
        %v6112 = vmul.f32 %v6098, %v6108
        %v6113 = vmul.f32 %v6099, %v6108
        %v6114 = vmul.f32 %v6100, %v6108
        %v6115 = vmul.f32 %v6101, %v6108
        %v6116 = vmul.f32 %v6102, %v6108
        %v6117 = vmul.f32 %v6103, %v6108
        %v6119 = vlaneseq
        %v6120 = vshrl.u32 %v6119, 7
        %v6121 = vsub.s32 0, %v6120
        %v6122 = vrot.slane %v6015, %v6121
        %v6124 = vadd.f32 %v6110, %v6122
        %v6125 = vadd.f32 %v6111, %v6122
        %v6126 = vadd.f32 %v6112, %v6122
        %v6127 = vadd.f32 %v6113, %v6122
        %v6128 = vadd.f32 %v6114, %v6122
        %v6129 = vadd.f32 %v6115, %v6122
        %v6130 = vadd.f32 %v6116, %v6122
        %v6131 = vadd.f32 %v6117, %v6122
        %6132 = vst [vmem:[#allocation2] sm:$0xff] %v6124
        %6133 = vst [vmem:[#allocation2 + $0x8] sm:$0xff] %v6125
        %6134 = vst [vmem:[#allocation2 + $0x10] sm:$0xff] %v6126
        %6135 = vst [vmem:[#allocation2 + $0x18] sm:$0xff] %v6127
        %6136 = vst [vmem:[#allocation2 + $0x20] sm:$0xff] %v6128
        %6137 = vst [vmem:[#allocation2 + $0x28] sm:$0xff] %v6129
        %6138 = vst [vmem:[#allocation2 + $0x30] sm:$0xff] %v6130
        %6139 = vst [vmem:[#allocation2 + $0x38] sm:$0xff] %v6131
        %p6140 = scmp.eq.s32.totalorder %s36, 1
        // Predicated region
        $region109: #{dinn_forward.1} parent=79 // pred_check
          %p6141 = pneg %p6140
        $region110: #{dinn_forward.1} parent=79 // pred_check_branch
          %6143 = sbr.rel (%p6141) target = $region112
        $region111: #{dinn_forward.1} parent=79 // pred_region
          %v6144 = vpack.c.bf16 %v6125, %v6124
          %v6145 = vpack.c.bf16 %v6127, %v6126
          %v6146 = vpack.c.bf16 %v6129, %v6128
          %v6147 = vpack.c.bf16 %v6131, %v6130
          %v6148 = vld [vmem:[#allocation11] sm:$0xf]
          %v6149 = vld [vmem:[#allocation11 + $0x4] sm:$0xf]
          %v6150 = vld [vmem:[#allocation11 + $0x8] sm:$0xf]
          %v6151 = vld [vmem:[#allocation11 + $0xc] sm:$0xf]
          %v6152 = vld [vmem:[#allocation11 + $0x10] sm:$0xf]
          %v6153 = vld [vmem:[#allocation11 + $0x14] sm:$0xf]
          %v6154 = vld [vmem:[#allocation11 + $0x18] sm:$0xf]
          %v6155 = vld [vmem:[#allocation11 + $0x1c] sm:$0xf]
          %v6156 = vld [vmem:[#allocation11 + $0x20] sm:$0xf]
          %v6157 = vld [vmem:[#allocation11 + $0x24] sm:$0xf]
          %v6158 = vld [vmem:[#allocation11 + $0x28] sm:$0xf]
          %v6159 = vld [vmem:[#allocation11 + $0x2c] sm:$0xf]
          %v6160 = vld [vmem:[#allocation11 + $0x30] sm:$0xf]
          %v6161 = vld [vmem:[#allocation11 + $0x34] sm:$0xf]
          %v6162 = vld [vmem:[#allocation11 + $0x38] sm:$0xf]
          %v6163 = vld [vmem:[#allocation11 + $0x3c] sm:$0xf]
          %v6164 = vld [vmem:[%s14] sm:$0x1]
          %v6166 = vlaneseq
          %v6167 = vshrl.u32 %v6166, 7
          %v6168 = vsub.s32 0, %v6167
          %v6169 = vrot.slane %v6164, %v6168
          %v6187 = vunpack.c.l.b16 %v6148
          %v6188 = vunpack.c.l.b16 %v6149
          %v6189 = vunpack.c.l.b16 %v6150
          %v6190 = vunpack.c.l.b16 %v6151
          %v6191 = vunpack.c.l.b16 %v6152
          %v6192 = vunpack.c.l.b16 %v6153
          %v6193 = vunpack.c.l.b16 %v6154
          %v6194 = vunpack.c.l.b16 %v6155
          %v6195 = vunpack.c.l.b16 %v6156
          %v6196 = vunpack.c.l.b16 %v6157
          %v6197 = vunpack.c.l.b16 %v6158
          %v6198 = vunpack.c.l.b16 %v6159
          %v6199 = vunpack.c.l.b16 %v6160
          %v6200 = vunpack.c.l.b16 %v6161
          %v6201 = vunpack.c.l.b16 %v6162
          %v6202 = vunpack.c.l.b16 %v6163
          %v6203 = vpack.c.b16 %v6188, %v6187
          %v6204 = vpack.c.b16 %v6190, %v6189
          %v6205 = vpack.c.b16 %v6192, %v6191
          %v6206 = vpack.c.b16 %v6194, %v6193
          %v6207 = vpack.c.b16 %v6196, %v6195
          %v6208 = vpack.c.b16 %v6198, %v6197
          %v6209 = vpack.c.b16 %v6200, %v6199
          %v6210 = vpack.c.b16 %v6202, %v6201
          %6219 = vmatprep.subr.bf16.mxu0 0
          %6220 = vmatpush1.bf16.msra.mxu0 %v6203
          %6221 = vmatprep.subr.bf16.mxu0 0
          %6222 = vmatpush1.bf16.msra.mxu0 %v6204
          %6223 = vmatprep.subr.bf16.mxu0 0
          %6224 = vmatpush1.bf16.msra.mxu0 %v6205
          %6225 = vmatprep.subr.bf16.mxu0 0
          %6226 = vmatpush1.bf16.msra.mxu0 %v6206
          %6227 = vmatprep.subr.bf16.mxu0 0
          %6228 = vmatpush1.bf16.msra.mxu0 %v6207
          %6229 = vmatprep.subr.bf16.mxu0 0
          %6230 = vmatpush1.bf16.msra.mxu0 %v6208
          %6231 = vmatprep.subr.bf16.mxu0 0
          %6232 = vmatpush1.bf16.msra.mxu0 %v6209
          %6233 = vmatprep.subr.bf16.mxu0 0
          %6234 = vmatpush1.bf16.msra.mxu0 %v6210
          %6235 = vmatprep.subr.bf16.mxu0 0
          %6236 = vmatpush1.bf16.msra.mxu0 0
          %6237 = vmatprep.subr.bf16.mxu0 0
          %6238 = vmatpush1.bf16.msra.mxu0 0
          %6239 = vmatprep.subr.bf16.mxu0 0
          %6240 = vmatpush1.bf16.msra.mxu0 0
          %6241 = vmatprep.subr.bf16.mxu0 0
          %6242 = vmatpush1.bf16.msra.mxu0 0
          %6243 = vmatprep.subr.bf16.mxu0 0
          %6244 = vmatpush1.bf16.msra.mxu0 0
          %6245 = vmatprep.subr.bf16.mxu0 0
          %6246 = vmatpush1.bf16.msra.mxu0 0
          %6247 = vmatprep.subr.bf16.mxu0 0
          %6248 = vmatpush1.bf16.msra.mxu0 0
          %6249 = vmatprep.subr.bf16.mxu0 0
          %6250 = vmatpush1.bf16.msra.mxu0 0
          %6251 = vmatprep.mubr.bf16.mxu0 0
          %6252 = vmatmul.mubr.bf16.gmra.mrb[0].mxu0 %v6144
          %v6253 = vpop.f32.mrb[0].mxu0
          %v6254 = vadd.f32 %v6169, %v6253
          %v6255 = vpop.f32.mrb[0].mxu0
          %v6256 = vpop.f32.mrb[0].mxu0
          %v6257 = vadd.f32 %v6169, %v6256
          %v6258 = vpop.f32.mrb[0].mxu0
          %6259 = vmatprep.mubr.bf16.mxu0 0
          %6260 = vmatmul.mubr.bf16.gmra.mrb[0].mxu0 %v6145
          %v6261 = vpop.f32.mrb[0].mxu0
          %v6262 = vadd.f32 %v6169, %v6261
          %v6263 = vpop.f32.mrb[0].mxu0
          %v6264 = vpop.f32.mrb[0].mxu0
          %v6265 = vadd.f32 %v6169, %v6264
          %v6266 = vpop.f32.mrb[0].mxu0
          %6267 = vmatprep.mubr.bf16.mxu0 0
          %6268 = vmatmul.mubr.bf16.gmra.mrb[0].mxu0 %v6146
          %v6269 = vpop.f32.mrb[0].mxu0
          %v6270 = vadd.f32 %v6169, %v6269
          %v6271 = vpop.f32.mrb[0].mxu0
          %v6272 = vpop.f32.mrb[0].mxu0
          %v6273 = vadd.f32 %v6169, %v6272
          %v6274 = vpop.f32.mrb[0].mxu0
          %6275 = vmatprep.mubr.bf16.mxu0 0
          %6276 = vmatmul.mubr.bf16.gmra.mrb[0].mxu0 %v6147
          %v6277 = vpop.f32.mrb[0].mxu0
          %v6278 = vadd.f32 %v6169, %v6277
          %v6279 = vpop.f32.mrb[0].mxu0
          %v6280 = vpop.f32.mrb[0].mxu0
          %v6281 = vadd.f32 %v6169, %v6280
          %v6282 = vpop.f32.mrb[0].mxu0
          %6283 = vdwg.mxu0
          %v6284 = vadd.f32 %v6254, %v6257
          %v6285 = vadd.f32 %v6284, %v6262
          %v6286 = vadd.f32 %v6285, %v6265
          %v6287 = vadd.f32 %v6286, %v6270
          %v6288 = vadd.f32 %v6287, %v6273
          %v6289 = vadd.f32 %v6288, %v6278
          %v6290 = vadd.f32 %v6289, %v6281
          %v6291 = vrot.slane %v6290, 4
          %v6292 = vadd.f32 %v6290, %v6291
          %v6293 = vrot.slane %v6292, 2
          %v6294 = vadd.f32 %v6292, %v6293
          %v6295 = vrot.slane %v6294, 1
          %v6296 = vadd.f32 %v6294, %v6295
          %v6297 = vrcp.pop 64.0
          %v6298 = vmul.f32 %v6296, %v6297
          %v6299 = vsub.f32 %v6254, %v6298
          %v6300 = vsub.f32 %v6257, %v6298
          %v6301 = vsub.f32 %v6262, %v6298
          %v6302 = vsub.f32 %v6265, %v6298
          %v6303 = vsub.f32 %v6270, %v6298
          %v6304 = vsub.f32 %v6273, %v6298
          %v6305 = vsub.f32 %v6278, %v6298
          %v6306 = vsub.f32 %v6281, %v6298
          %6307 = vxpose.xlu0.b32.start [1/16] %v6299, 128
          %6308 = vxpose.xlu0.b32.cont [2/16] %v6300, 128
          %6309 = vxpose.xlu0.b32.cont [3/16] %v6301, 128
          %6310 = vxpose.xlu0.b32.cont [4/16] %v6302, 128
          %6311 = vxpose.xlu0.b32.cont [5/16] %v6303, 128
          %6312 = vxpose.xlu0.b32.cont [6/16] %v6304, 128
          %6313 = vxpose.xlu0.b32.cont [7/16] %v6305, 128
          %6314 = vxpose.xlu0.b32.cont [8/16] %v6306, 128
          %6315 = vxpose.xlu0.b32.cont [9/16] 0.0, 128
          %6316 = vxpose.xlu0.b32.cont [10/16] 0.0, 128
          %6317 = vxpose.xlu0.b32.cont [11/16] 0.0, 128
          %6318 = vxpose.xlu0.b32.cont [12/16] 0.0, 128
          %6319 = vxpose.xlu0.b32.cont [13/16] 0.0, 128
          %6320 = vxpose.xlu0.b32.cont [14/16] 0.0, 128
          %6321 = vxpose.xlu0.b32.cont [15/16] 0.0, 128
          %6322 = vxpose.xlu0.b32.end [16/16] 0.0, 128
          %v6323 = vpop.trf.xlu0
          %v6324 = vpop.trf.xlu0
          %v6325 = vpop.trf.xlu0
          %v6326 = vpop.trf.xlu0
          %v6327 = vpop.trf.xlu0
          %v6328 = vpop.trf.xlu0
          %v6329 = vpop.trf.xlu0
          %v6330 = vpop.trf.xlu0
          %v6331 = vpop.trf.xlu0
          %v6332 = vpop.trf.xlu0
          %v6333 = vpop.trf.xlu0
          %v6334 = vpop.trf.xlu0
          %v6335 = vpop.trf.xlu0
          %v6336 = vpop.trf.xlu0
          %v6337 = vpop.trf.xlu0
          %v6338 = vpop.trf.xlu0
          %v6340 = vsel %vm1253, %v6323, 0
          %v6343 = vsel %vm1253, %v6324, 0
          %v6346 = vsel %vm1253, %v6325, 0
          %v6349 = vsel %vm1253, %v6326, 0
          %v6352 = vsel %vm1253, %v6327, 0
          %v6355 = vsel %vm1253, %v6328, 0
          %v6358 = vsel %vm1253, %v6329, 0
          %v6361 = vsel %vm1253, %v6330, 0
          %v6364 = vsel %vm1253, %v6331, 0
          %v6367 = vsel %vm1253, %v6332, 0
          %v6370 = vsel %vm1253, %v6333, 0
          %v6373 = vsel %vm1253, %v6334, 0
          %v6376 = vsel %vm1253, %v6335, 0
          %v6379 = vsel %vm1253, %v6336, 0
          %v6382 = vsel %vm1253, %v6337, 0
          %v6385 = vsel %vm1253, %v6338, 0
          %6387 = vmatprep.subr.mxu0 0.0
          %6388 = vmatpush1.msra.mxu0 %v6299
          %6389 = vmatprep.subr.mxu0 0.0
          %6390 = vmatpush1.msra.mxu0 %v6300
          %6391 = vmatprep.subr.mxu0 0.0
          %6392 = vmatpush1.msra.mxu0 %v6301
          %6393 = vmatprep.subr.mxu0 0.0
          %6394 = vmatpush1.msra.mxu0 %v6302
          %6395 = vmatprep.subr.mxu0 0.0
          %6396 = vmatpush1.msra.mxu0 %v6303
          %6397 = vmatprep.subr.mxu0 0.0
          %6398 = vmatpush1.msra.mxu0 %v6304
          %6399 = vmatprep.subr.mxu0 0.0
          %6400 = vmatpush1.msra.mxu0 %v6305
          %6401 = vmatprep.subr.mxu0 0.0
          %6402 = vmatpush1.msra.mxu0 %v6306
          %6403 = vmatprep.subr.mxu0 0.0
          %6404 = vmatpush1.msra.mxu0 0.0
          %6405 = vmatprep.subr.mxu0 0.0
          %6406 = vmatpush1.msra.mxu0 0.0
          %6407 = vmatprep.subr.mxu0 0.0
          %6408 = vmatpush1.msra.mxu0 0.0
          %6409 = vmatprep.subr.mxu0 0.0
          %6410 = vmatpush1.msra.mxu0 0.0
          %6411 = vmatprep.subr.mxu0 0.0
          %6412 = vmatpush1.msra.mxu0 0.0
          %6413 = vmatprep.subr.mxu0 0.0
          %6414 = vmatpush1.msra.mxu0 0.0
          %6415 = vmatprep.subr.mxu0 0.0
          %6416 = vmatpush1.msra.mxu0 0.0
          %6417 = vmatprep.subr.mxu0 0.0
          %6418 = vmatpush1.msra.mxu0 0.0
          %6419 = vmatprep.subr.mxu0 0.0
          %6420 = vmatpush1.msra.mxu0 0.0
          %6421 = vmatprep.subr.mxu0 0.0
          %6422 = vmatpush1.msra.mxu0 0.0
          %6423 = vmatprep.subr.mxu0 0.0
          %6424 = vmatpush1.msra.mxu0 0.0
          %6425 = vmatprep.subr.mxu0 0.0
          %6426 = vmatpush1.msra.mxu0 0.0
          %6427 = vmatprep.subr.mxu0 0.0
          %6428 = vmatpush1.msra.mxu0 0.0
          %6429 = vmatprep.subr.mxu0 0.0
          %6430 = vmatpush1.msra.mxu0 0.0
          %6431 = vmatprep.subr.mxu0 0.0
          %6432 = vmatpush1.msra.mxu0 0.0
          %6433 = vmatprep.subr.mxu0 0.0
          %6434 = vmatpush1.msra.mxu0 0.0
          %6435 = vmatprep.subr.mxu0 0.0
          %6436 = vmatpush1.msra.mxu0 0.0
          %6437 = vmatprep.subr.mxu0 0.0
          %6438 = vmatpush1.msra.mxu0 0.0
          %6439 = vmatprep.subr.mxu0 0.0
          %6440 = vmatpush1.msra.mxu0 0.0
          %6441 = vmatprep.subr.mxu0 0.0
          %6442 = vmatpush1.msra.mxu0 0.0
          %6443 = vmatprep.subr.mxu0 0.0
          %6444 = vmatpush1.msra.mxu0 0.0
          %6445 = vmatprep.subr.mxu0 0.0
          %6446 = vmatpush1.msra.mxu0 0.0
          %6447 = vmatprep.subr.mxu0 0.0
          %6448 = vmatpush1.msra.mxu0 0.0
          %6449 = vmatprep.subr.mxu0 0.0
          %6450 = vmatpush1.msra.mxu0 0.0
          %6451 = vmatprep.mubr.f32.mxu0 0.0
          %6452 = vmatmul.mubr.f32.gmra.mrb[0].mxu0 %v6340
          %v6453 = vpop.f32.mrb[0].mxu0
          %v6454 = vadd.f32 0.0, %v6453
          %v6455 = vpop.f32.mrb[0].mxu0
          %6456 = vmatprep.mubr.f32.mxu0 0.0
          %6457 = vmatmul.mubr.f32.gmra.mrb[0].mxu0 %v6343
          %v6458 = vpop.f32.mrb[0].mxu0
          %v6459 = vadd.f32 0.0, %v6458
          %v6460 = vpop.f32.mrb[0].mxu0
          %6461 = vmatprep.mubr.f32.mxu0 0.0
          %6462 = vmatmul.mubr.f32.gmra.mrb[0].mxu0 %v6346
          %v6463 = vpop.f32.mrb[0].mxu0
          %v6464 = vadd.f32 0.0, %v6463
          %v6465 = vpop.f32.mrb[0].mxu0
          %6466 = vmatprep.mubr.f32.mxu0 0.0
          %6467 = vmatmul.mubr.f32.gmra.mrb[0].mxu0 %v6349
          %v6468 = vpop.f32.mrb[0].mxu0
          %v6469 = vadd.f32 0.0, %v6468
          %v6470 = vpop.f32.mrb[0].mxu0
          %6471 = vmatprep.mubr.f32.mxu0 0.0
          %6472 = vmatmul.mubr.f32.gmra.mrb[0].mxu0 %v6352
          %v6473 = vpop.f32.mrb[0].mxu0
          %v6474 = vadd.f32 0.0, %v6473
          %v6475 = vpop.f32.mrb[0].mxu0
          %6476 = vmatprep.mubr.f32.mxu0 0.0
          %6477 = vmatmul.mubr.f32.gmra.mrb[0].mxu0 %v6355
          %v6478 = vpop.f32.mrb[0].mxu0
          %v6479 = vadd.f32 0.0, %v6478
          %v6480 = vpop.f32.mrb[0].mxu0
          %6481 = vmatprep.mubr.f32.mxu0 0.0
          %6482 = vmatmul.mubr.f32.gmra.mrb[0].mxu0 %v6358
          %v6483 = vpop.f32.mrb[0].mxu0
          %v6484 = vadd.f32 0.0, %v6483
          %v6485 = vpop.f32.mrb[0].mxu0
          %6486 = vmatprep.mubr.f32.mxu0 0.0
          %6487 = vmatmul.mubr.f32.gmra.mrb[0].mxu0 %v6361
          %v6488 = vpop.f32.mrb[0].mxu0
          %v6489 = vadd.f32 0.0, %v6488
          %v6490 = vpop.f32.mrb[0].mxu0
          %6491 = vmatprep.mubr.f32.mxu0 0.0
          %6492 = vmatmul.mubr.f32.gmra.mrb[0].mxu0 %v6364
          %v6493 = vpop.f32.mrb[0].mxu0
          %v6494 = vadd.f32 0.0, %v6493
          %v6495 = vpop.f32.mrb[0].mxu0
          %6496 = vmatprep.mubr.f32.mxu0 0.0
          %6497 = vmatmul.mubr.f32.gmra.mrb[0].mxu0 %v6367
          %v6498 = vpop.f32.mrb[0].mxu0
          %v6499 = vadd.f32 0.0, %v6498
          %v6500 = vpop.f32.mrb[0].mxu0
          %6501 = vmatprep.mubr.f32.mxu0 0.0
          %6502 = vmatmul.mubr.f32.gmra.mrb[0].mxu0 %v6370
          %v6503 = vpop.f32.mrb[0].mxu0
          %v6504 = vadd.f32 0.0, %v6503
          %v6505 = vpop.f32.mrb[0].mxu0
          %6506 = vmatprep.mubr.f32.mxu0 0.0
          %6507 = vmatmul.mubr.f32.gmra.mrb[0].mxu0 %v6373
          %v6508 = vpop.f32.mrb[0].mxu0
          %v6509 = vadd.f32 0.0, %v6508
          %v6510 = vpop.f32.mrb[0].mxu0
          %6511 = vmatprep.mubr.f32.mxu0 0.0
          %6512 = vmatmul.mubr.f32.gmra.mrb[0].mxu0 %v6376
          %v6513 = vpop.f32.mrb[0].mxu0
          %v6514 = vadd.f32 0.0, %v6513
          %v6515 = vpop.f32.mrb[0].mxu0
          %6516 = vmatprep.mubr.f32.mxu0 0.0
          %6517 = vmatmul.mubr.f32.gmra.mrb[0].mxu0 %v6379
          %v6518 = vpop.f32.mrb[0].mxu0
          %v6519 = vadd.f32 0.0, %v6518
          %v6520 = vpop.f32.mrb[0].mxu0
          %6521 = vmatprep.mubr.f32.mxu0 0.0
          %6522 = vmatmul.mubr.f32.gmra.mrb[0].mxu0 %v6382
          %v6523 = vpop.f32.mrb[0].mxu0
          %v6524 = vadd.f32 0.0, %v6523
          %v6525 = vpop.f32.mrb[0].mxu0
          %6526 = vmatprep.mubr.f32.mxu0 0.0
          %6527 = vmatmul.mubr.f32.gmra.mrb[0].mxu0 %v6385
          %v6528 = vpop.f32.mrb[0].mxu0
          %v6529 = vadd.f32 0.0, %v6528
          %v6530 = vpop.f32.mrb[0].mxu0
          %6531 = vdwg.mxu0
          %v6532 = vrcp.pop 63.0
          %v6533 = vmul.f32 %v6454, %v6532
          %v6534 = vmul.f32 %v6459, %v6532
          %v6535 = vmul.f32 %v6464, %v6532
          %v6536 = vmul.f32 %v6469, %v6532
          %v6537 = vmul.f32 %v6474, %v6532
          %v6538 = vmul.f32 %v6479, %v6532
          %v6539 = vmul.f32 %v6484, %v6532
          %v6540 = vmul.f32 %v6489, %v6532
          %v6541 = vmul.f32 %v6494, %v6532
          %v6542 = vmul.f32 %v6499, %v6532
          %v6543 = vmul.f32 %v6504, %v6532
          %v6544 = vmul.f32 %v6509, %v6532
          %v6545 = vmul.f32 %v6514, %v6532
          %v6546 = vmul.f32 %v6519, %v6532
          %v6547 = vmul.f32 %v6524, %v6532
          %v6548 = vmul.f32 %v6529, %v6532
          %6549 = vst [vmem:[%s15] sm:$0xff] %v6533
          %6550 = vst [vmem:[%s15 + $0x8] sm:$0xff] %v6534
          %6551 = vst [vmem:[%s15 + $0x10] sm:$0xff] %v6535
          %6552 = vst [vmem:[%s15 + $0x18] sm:$0xff] %v6536
          %6553 = vst [vmem:[%s15 + $0x20] sm:$0xff] %v6537
          %6554 = vst [vmem:[%s15 + $0x28] sm:$0xff] %v6538
          %6555 = vst [vmem:[%s15 + $0x30] sm:$0xff] %v6539
          %6556 = vst [vmem:[%s15 + $0x38] sm:$0xff] %v6540
          %6557 = vst [vmem:[%s15 + $0x40] sm:$0xff] %v6541
          %6558 = vst [vmem:[%s15 + $0x48] sm:$0xff] %v6542
          %6559 = vst [vmem:[%s15 + $0x50] sm:$0xff] %v6543
          %6560 = vst [vmem:[%s15 + $0x58] sm:$0xff] %v6544
          %6561 = vst [vmem:[%s15 + $0x60] sm:$0xff] %v6545
          %6562 = vst [vmem:[%s15 + $0x68] sm:$0xff] %v6546
          %6563 = vst [vmem:[%s15 + $0x70] sm:$0xff] %v6547
          %6564 = vst [vmem:[%s15 + $0x78] sm:$0xff] %v6548
          %6565 = vst [vmem:[%s16] sm:$0x1] %v6298
        $region112: #{dinn_forward.1} parent=79 // pred_fallthru
          _
        // Predicated region
        $region113: #{dinn_forward.1} parent=79 // pred_check
          %p6566 = pneg %p424
        $region114: #{dinn_forward.1} parent=79 // pred_check_branch
          %6568 = sbr.rel (%p6566) target = $region116
        $region115: #{dinn_forward.1} parent=79 // pred_region
          _
        $region116: #{dinn_forward.1} parent=79 // pred_fallthru
          _
        // Predicated region
        $region117: #{dinn_forward.1} parent=79 // pred_check
          %p6569 = pneg %p445
        $region118: #{dinn_forward.1} parent=79 // pred_check_branch
          %6571 = sbr.rel (%p6569) target = $region120
        $region119: #{dinn_forward.1} parent=79 // pred_region
          _
        $region120: #{dinn_forward.1} parent=79 // pred_fallthru
          _
        // Predicated region
        $region121: #{dinn_forward.1} parent=79 // pred_check
          %p6572 = pneg %p424
        $region122: #{dinn_forward.1} parent=79 // pred_check_branch
          %6574 = sbr.rel (%p6572) target = $region124
        $region123: #{dinn_forward.1} parent=79 // pred_region
          _
        $region124: #{dinn_forward.1} parent=79 // pred_fallthru
          _
        // Predicated region
        $region125: #{dinn_forward.1} parent=79 // pred_check
          %p6575 = pneg %p445
        $region126: #{dinn_forward.1} parent=79 // pred_check_branch
          %6577 = sbr.rel (%p6575) target = $region128
        $region127: #{dinn_forward.1} parent=79 // pred_region
          _
        $region128: #{dinn_forward.1} parent=79 // pred_fallthru
          _
      $region80: #{dinn_forward.1} parent=5 // pred_fallthru
        _
      %p6578 = scmp.le.s32.totalorder 2, %s31
      // Predicated region
      $region129: #{dinn_forward.1} parent=5 // pred_check
        %p6579 = pneg %p6578
      $region130: #{dinn_forward.1} parent=5 // pred_check_branch
        %6581 = sbr.rel (%p6579) target = $region132
      $region131: #{dinn_forward.1} parent=5 // pred_region
        %s6582 = ssub.s32 %s31, 2
      $region132: #{dinn_forward.1} parent=5 // pred_fallthru
        _
    $region6: #{dinn_forward.1} parent=1 // loop_footer
      %s35 = sadd.s32 1, %s31
    $region7: #{dinn_forward.1} parent=1 // loop_footer_branch
      %30 = sbr.rel target = $region3
    $region8: #{dinn_forward.1} parent=1 // loop_exit
      _
    %6583 = vsyncpa [#allocation4], 1
    %s6584 = scalar_lea.sflag [#allocation4], 1
    %6585 = vsyncpa %s6584, 1
    %6586 = vsyncpa [#allocation6], 1
    %s6587 = scalar_lea.sflag [#allocation6], 1
    %6588 = vsyncpa %s6587, 1
    %6589 = vsyncpa [#allocation9], 1
    %s6590 = scalar_lea.sflag [#allocation9], 1
    %6591 = vsyncpa %s6590, 1
    %6592 = vsyncpa [#allocation12], 1

</llo_original>
